<compile_context>
chip_gen: v7x
topology: tpu7x:2x2x1
jax: 0.10.0
libtpu: 0.0.40
codegen_flags: <defaults>
</compile_context>

<pallas_src>
import functools

import jax
import jax.numpy as jnp
import numpy as np
from jax import lax
from jax.experimental import pallas as pl
from jax.experimental.pallas import tpu as pltpu

BN_EPS = 1e-5
LANE = 128


def _round_up(x, m):
    return ((x + m - 1) // m) * m


def _largest_divisor_leq(n, cap):
    d = max(1, min(n, cap))
    while n % d:
        d -= 1
    return d


@functools.lru_cache(maxsize=1)
def _vmem_limit_bytes():
    """Generation-aware scoped-VMEM limit (v5e/v6e ~96 MiB, v7x ~48 MiB)."""
    cap = 64 * 1024 * 1024
    try:
        info = pltpu.get_tpu_info()
        cap = int(getattr(info, "vmem_capacity_bytes", cap))
    except Exception:
        pass
    return int(min(cap * 3 // 4, 100 * 1024 * 1024))


def _cout_tile(cp_out):
    """Cout tile: matmul N width / megacore 'parallel' axis granularity."""
    return 256 if cp_out % 256 == 0 else min(cp_out, 128)


# ---------------------------------------------------------------------------
# In-kernel helpers
# ---------------------------------------------------------------------------
def _pad_hw1(x):
    """Zero-pad a (H, W, C) tile by 1 on both spatial dims, in registers."""
    H, W, C = x.shape
    zr = jnp.zeros((1, W, C), x.dtype)
    xh = jnp.concatenate([zr, x, zr], axis=0)          # (H+2, W, C)
    zc = jnp.zeros((H + 2, 1, C), x.dtype)
    return jnp.concatenate([zc, xh, zc], axis=1)       # (H+2, W+2, C)


def _conv3x3_taps(xp, w_ref, H, W, Cout):
    """9 accumulated per-tap MXU dots; xp is the (H+2, W+2, Cin) halo'd tile."""
    Cin = xp.shape[-1]
    acc = jnp.zeros((H * W, Cout), jnp.float32)
    for kh in range(3):
        row = xp[kh:kh + H]                             # (H, W+2, Cin) -- free slice
        for kw in range(3):
            # TODO(synk): pltpu.roll on W would keep these sublane-aligned.
            slab = row[:, kw:kw + W, :].reshape(H * W, Cin)
            acc += jnp.dot(slab, w_ref[kh * 3 + kw],
                           preferred_element_type=jnp.float32)
    return acc


# ---------------------------------------------------------------------------
# Pass A: conv1 + per-channel sum / sum-of-squares accumulation
# ---------------------------------------------------------------------------
def _conv_stats_kernel(x_ref, w_ref, yc_ref, s_ref, ss_ref):
    """x_ref : (1, H, W, Cin)  bf16  unpadded NHWC input tile
       w_ref : (9, Cin, TCO)   bf16  tap-major conv weight tile
       yc_ref: (1, H, W, TCO)  bf16  raw conv output (pre-BN)
       s_ref : (1, TCO)        f32   running sum   (VMEM-resident over N)
       ss_ref: (1, TCO)        f32   running sumsq (VMEM-resident over N)"""
    @pl.when(pl.program_id(1) == 0)
    def _init():
        s_ref[...] = jnp.zeros_like(s_ref)
        ss_ref[...] = jnp.zeros_like(ss_ref)

    _, H, W, _ = x_ref.shape
    Cout = yc_ref.shape[3]

    xp = _pad_hw1(x_ref[0])                                   # halo built in VMEM
    acc = _conv3x3_taps(xp, w_ref, H, W, Cout)                # f32 accumulator

    yc_ref[...] = acc.reshape(1, H, W, Cout).astype(yc_ref.dtype)
    s_ref[...] += jnp.sum(acc, axis=0, keepdims=True)
    ss_ref[...] += jnp.sum(acc * acc, axis=0, keepdims=True)


def _conv_stats(x, w):
    N, H, W, Cin = x.shape
    Cout = w.shape[2]
    tco = _cout_tile(Cout)
    return pl.pallas_call(
        _conv_stats_kernel,
        out_shape=(
            jax.ShapeDtypeStruct((N, H, W, Cout), jnp.bfloat16),
            jax.ShapeDtypeStruct((1, Cout), jnp.float32),
            jax.ShapeDtypeStruct((1, Cout), jnp.float32),
        ),
        grid=(Cout // tco, N),
        in_specs=[
            pl.BlockSpec((1, H, W, Cin), lambda co, n: (n, 0, 0, 0)),
            pl.BlockSpec((9, Cin, tco), lambda co, n: (0, 0, co)),
        ],
        out_specs=(
            pl.BlockSpec((1, H, W, tco), lambda co, n: (n, 0, 0, co)),
            pl.BlockSpec((1, tco), lambda co, n: (0, co)),      # resident accumulator
            pl.BlockSpec((1, tco), lambda co, n: (0, co)),      # resident accumulator
        ),
        compiler_params=pltpu.CompilerParams(
            dimension_semantics=("parallel", "arbitrary"),      # co split -> megacore
            vmem_limit_bytes=_vmem_limit_bytes()),
    )(x, w)


# ---------------------------------------------------------------------------
# Pass B (fused): BN1 (batch stats) + ReLU + conv2 + stats2 -- `h` never in HBM
# ---------------------------------------------------------------------------
def _bn_relu_conv_stats_kernel(yc1_ref, s1_ref, ss1_ref, g1_ref, b1_ref,
                               w_ref, yc2_ref, s2_ref, ss2_ref, *, count):
    @pl.when(pl.program_id(1) == 0)
    def _init():
        s2_ref[...] = jnp.zeros_like(s2_ref)
        ss2_ref[...] = jnp.zeros_like(ss2_ref)

    _, H, W, C = yc1_ref.shape
    Cout = yc2_ref.shape[3]

    # BatchNorm1 (train-mode batch statistics) + ReLU, all math in f32.
    inv_n = jnp.float32(1.0 / count)
    mean = s1_ref[...] * inv_n
    var = jnp.maximum(ss1_ref[...] * inv_n - mean * mean, 0.0)
    scale = g1_ref[...] * lax.rsqrt(var + BN_EPS)               # (1, C)
    shift = b1_ref[...] - mean * scale                          # (1, C)
    y = yc1_ref[...].astype(jnp.float32)                        # (1, H, W, C)
    h = jnp.maximum(y * scale.reshape(1, 1, 1, C)
                    + shift.reshape(1, 1, 1, C), 0.0)

    # Fuse directly into conv2: halo'd bf16 tile built in registers.
    hp = _pad_hw1(h[0].astype(jnp.bfloat16))
    acc = _conv3x3_taps(hp, w_ref, H, W, Cout)

    yc2_ref[...] = acc.reshape(1, H, W, Cout).astype(yc2_ref.dtype)
    s2_ref[...] += jnp.sum(acc, axis=0, keepdims=True)
    ss2_ref[...] += jnp.sum(acc * acc, axis=0, keepdims=True)


def _bn_relu_conv_stats(yc1, s1, ss1, gamma1, beta1, w, *, count):
    N, H, W, C = yc1.shape
    Cout = w.shape[2]
    tco = _cout_tile(Cout)
    kernel = functools.partial(_bn_relu_conv_stats_kernel, count=count)
    return pl.pallas_call(
        kernel,
        out_shape=(
            jax.ShapeDtypeStruct((N, H, W, Cout), jnp.bfloat16),
            jax.ShapeDtypeStruct((1, Cout), jnp.float32),
            jax.ShapeDtypeStruct((1, Cout), jnp.float32),
        ),
        grid=(Cout // tco, N),
        in_specs=[
            pl.BlockSpec((1, H, W, C), lambda co, n: (n, 0, 0, 0)),
            pl.BlockSpec((1, C), lambda co, n: (0, 0)),
            pl.BlockSpec((1, C), lambda co, n: (0, 0)),
            pl.BlockSpec((1, C), lambda co, n: (0, 0)),
            pl.BlockSpec((1, C), lambda co, n: (0, 0)),
            pl.BlockSpec((9, C, tco), lambda co, n: (0, 0, co)),
        ],
        out_specs=(
            pl.BlockSpec((1, H, W, tco), lambda co, n: (n, 0, 0, co)),
            pl.BlockSpec((1, tco), lambda co, n: (0, co)),
            pl.BlockSpec((1, tco), lambda co, n: (0, co)),
        ),
        compiler_params=pltpu.CompilerParams(
            dimension_semantics=("parallel", "arbitrary"),
            vmem_limit_bytes=_vmem_limit_bytes()),
    )(yc1, s1, ss1, gamma1, beta1, w)


# ---------------------------------------------------------------------------
# Pass C: final BatchNorm + ReLU (memory-bound, row-tiled, fully parallel)
# ---------------------------------------------------------------------------
def _bn_relu_kernel(yc_ref, s_ref, ss_ref, g_ref, b_ref, out_ref, *, count):
    _, _, _, C = yc_ref.shape
    inv_n = jnp.float32(1.0 / count)
    mean = s_ref[...] * inv_n
    var = jnp.maximum(ss_ref[...] * inv_n - mean * mean, 0.0)
    scale = g_ref[...] * lax.rsqrt(var + BN_EPS)
    shift = b_ref[...] - mean * scale
    y = yc_ref[...].astype(jnp.float32)
    out_ref[...] = jnp.maximum(
        y * scale.reshape(1, 1, 1, C) + shift.reshape(1, 1, 1, C), 0.0
    ).astype(out_ref.dtype)


def _bn_relu(yc, s, ss, gamma, beta, *, count):
    N, H, W, C = yc.shape
    th_cap = max(8, (4 * 1024 * 1024) // max(1, W * C * 6))
    TH = _largest_divisor_leq(H, th_cap)        # row tile: deepens the pipeline
    kernel = functools.partial(_bn_relu_kernel, count=count)
    return pl.pallas_call(
        kernel,
        out_shape=jax.ShapeDtypeStruct((N, H, W, C), jnp.float32),
        grid=(N, H // TH),
        in_specs=[
            pl.BlockSpec((1, TH, W, C), lambda n, t: (n, t, 0, 0)),
            pl.BlockSpec((1, C), lambda n, t: (0, 0)),
            pl.BlockSpec((1, C), lambda n, t: (0, 0)),
            pl.BlockSpec((1, C), lambda n, t: (0, 0)),
            pl.BlockSpec((1, C), lambda n, t: (0, 0)),
        ],
        out_specs=pl.BlockSpec((1, TH, W, C), lambda n, t: (n, t, 0, 0)),
        compiler_params=pltpu.CompilerParams(
            dimension_semantics=("parallel", "parallel"),
            vmem_limit_bytes=_vmem_limit_bytes()),
    )(yc, s, ss, gamma, beta)


# ---------------------------------------------------------------------------
# Parameters / public forward / reference
# ---------------------------------------------------------------------------
def init_double_conv_params(key, ch_in, ch_out):
    """Parameters matching nn.Conv2d / nn.BatchNorm2d defaults.  The Pallas
    path uses channel-padded, tap-major (9, Cin, Cout) bf16 weights and no
    conv bias (cancelled by train-mode BN); PyTorch-layout f32 copies (with
    bias) are kept only for the pure-JAX reference."""
    k1, k2, k3, k4 = jax.random.split(key, 4)
    cp_in = _round_up(ch_in, LANE)
    # v6e/v7x MXUs are 256 wide: pad Cout to 256 once the real width exceeds 128.
    cp_out = _round_up(ch_out, 256) if ch_out > LANE else _round_up(ch_out, LANE)

    def conv_init(k_w, k_b, cin, cout, cp_i, cp_o):
        fan_in = cin * 9
        bound = 1.0 / np.sqrt(fan_in)
        w_torch = jax.random.uniform(k_w, (cout, cin, 3, 3), jnp.float32,
                                     -bound, bound)
        b = jax.random.uniform(k_b, (cout,), jnp.float32, -bound, bound)
        # (Cout, Cin, 3, 3) -> (kh, kw, Cin, Cout) -> (9, Cin, Cout), zero-pad
        # channels to the lane width, bf16 for the MXU.
        w = jnp.transpose(w_torch, (2, 3, 1, 0)).reshape(9, cin, cout)
        w = jnp.pad(w, ((0, 0), (0, cp_i - cin), (0, cp_o - cout)))
        return w_torch, b, w.astype(jnp.bfloat16)

    w1_t, b1, w1 = conv_init(k1, k2, ch_in, ch_out, cp_in, cp_out)
    w2_t, b2, w2 = conv_init(k3, k4, ch_out, ch_out, cp_out, cp_out)

    def pad_vec(v, fill):
        # Keep beta pad at 0 and weight pad at 0 so dead channels stay exactly 0.
        return jnp.pad(v, (0, cp_out - ch_out),
                       constant_values=fill).reshape(1, cp_out)

    gamma = jnp.ones((ch_out,), jnp.float32)    # BatchNorm2d default weight
    beta = jnp.zeros((ch_out,), jnp.float32)    # BatchNorm2d default bias
    return dict(
        w1=w1, w2=w2,
        gamma1=pad_vec(gamma, 1.0), beta1=pad_vec(beta, 0.0),
        gamma2=pad_vec(gamma, 1.0), beta2=pad_vec(beta, 0.0),
        # PyTorch-layout copies, used only by the reference implementation.
        w1_torch=w1_t, b1=b1, w2_torch=w2_t, b2=b2,
    )


@jax.jit
def double_conv(x_nchw, params):
    """DoubleConv forward.  Input/output are NCHW f32 to match PyTorch."""
    N, ch_in, H, W = x_nchw.shape
    ch_out = params["w1_torch"].shape[0]
    cp_in = params["w1"].shape[1]
    count = N * H * W                       # BN statistics population size

    # Layout glue: NCHW -> NHWC, channel pad to lane width, bf16 cast.
    x = jnp.transpose(x_nchw, (0, 2, 3, 1))
    x = jnp.pad(x, ((0, 0), (0, 0), (0, 0),
                    (0, cp_in - ch_in))).astype(jnp.bfloat16)

    # Block 1: conv1 + batch stats (bf16 activations, f32 accumulation).
    yc1, s1, ss1 = _conv_stats(x, params["w1"])
    # Block-1 BN+ReLU fused with block-2 conv+stats: `h` never hits HBM.
    yc2, s2, ss2 = _bn_relu_conv_stats(yc1, s1, ss1, params["gamma1"],
                                       params["beta1"], params["w2"],
                                       count=count)
    # Block 2 BN+ReLU: lane-dense f32 final store.
    y = _bn_relu(yc2, s2, ss2, params["gamma2"], params["beta2"], count=count)

    return jnp.transpose(y[..., :ch_out], (0, 3, 1, 2))   # crop, NHWC -> NCHW


def _reference_double_conv(x_nchw, params):
    """Pure-JAX f32 reference (lax.conv, with conv bias) for correctness."""
    def block(x, w_torch, b, gamma, beta):
        cout = w_torch.shape[0]
        y = lax.conv_general_dilated(
            x, w_torch, window_strides=(1, 1), padding=((1, 1), (1, 1)),
            dimension_numbers=("NCHW", "OIHW", "NCHW"))
        y = y + b.reshape(1, cout, 1, 1)
        mean = jnp.mean(y, axis=(0, 2, 3), keepdims=True)
        var = jnp.mean((y - mean) ** 2, axis=(0, 2, 3), keepdims=True)
        y = (y - mean) * lax.rsqrt(var + BN_EPS)
        y = y * gamma.reshape(1, cout, 1, 1) + beta.reshape(1, cout, 1, 1)
        return jnp.maximum(y, 0.0)

    ch_out = params["w1_torch"].shape[0]
    h = block(x_nchw, params["w1_torch"], params["b1"],
              params["gamma1"][0, :ch_out], params["beta1"][0, :ch_out])
    return block(h, params["w2_torch"], params["b2"],
                 params["gamma2"][0, :ch_out], params["beta2"][0, :ch_out])


if __name__ == "__main__":
    key = jax.random.PRNGKey(0)
    k_x, k_p = jax.random.split(key)

    N, CH_IN, CH_OUT, H, W = 2, 4, 8, 16, 16
    x = jax.random.normal(k_x, (N, CH_IN, H, W), jnp.float32)   # NCHW
    params = init_double_conv_params(k_p, CH_IN, CH_OUT)

    out = jax.block_until_ready(double_conv(x, params))
    assert out.shape == (N, CH_OUT, H, W), out.shape

    ref = jax.block_until_ready(_reference_double_conv(x, params))
    # bf16 activations/weights vs. f32 reference -> loose-ish tolerance; still
    # catches any structural bug (wrong tap offset / transpose), which is O(1).
    np.testing.assert_allclose(np.asarray(out), np.asarray(ref),
                               rtol=1e-1, atol=1e-1)

    print("KERNEL_OK")
</pallas_src>

<mosaic_0001>
module attributes {stable_mosaic.version = 11 : i64} {
  func.func @_conv_stats_kernel(%arg0: i32, %arg1: i32, %arg2: memref<1x16x16x128xbf16, #tpu.memory_space<vmem>>, %arg3: memref<9x128x128xbf16, #tpu.memory_space<vmem>>, %arg4: memref<1x16x16x128xbf16, #tpu.memory_space<vmem>>, %arg5: memref<1x128xf32, #tpu.memory_space<vmem>>, %arg6: memref<1x128xf32, #tpu.memory_space<vmem>>) attributes {dimension_semantics = [#tpu.dimension_semantics<parallel>, #tpu.dimension_semantics<arbitrary>], iteration_bounds = array<i64: 1, 2>, scalar_prefetch = 0 : i64, scratch_operands = 0 : i64, tpu.core_type = #tpu.core_type<tc>, window_params = [{transform_indices = @transform_0, window_bounds = array<i64: 1, 16, 16, 128>}, {transform_indices = @transform_1, window_bounds = array<i64: 9, 128, 128>}, {transform_indices = @transform_2, window_bounds = array<i64: 1, 16, 16, 128>}, {transform_indices = @transform_3, window_bounds = array<i64: 1, 128>}, {transform_indices = @transform_4, window_bounds = array<i64: 1, 128>}]} {
    %c0_i32 = arith.constant 0 : i32
    %0 = arith.cmpi eq, %arg1, %c0_i32 : i32
    %1 = arith.extui %0 : i1 to i32
    %c0_i32_0 = arith.constant 0 : i32
    %2 = arith.cmpi ne, %1, %c0_i32_0 : i32
    scf.if %2 {
      %cst_48 = arith.constant 0.000000e+00 : f32
      %81 = vector.broadcast %cst_48 : f32 to vector<1x128xf32>
      %c0_49 = arith.constant 0 : index
      %c0_50 = arith.constant 0 : index
      %82 = vector.load %arg5[%c0_49, %c0_50] : memref<1x128xf32, #tpu.memory_space<vmem>>, vector<1x128xf32>
      tpu.vector_store %arg5[%c0_49, %c0_50], %81 {strides = array<i32>} : memref<1x128xf32, #tpu.memory_space<vmem>>, vector<1x128xf32>,
      %cst_51 = arith.constant 0.000000e+00 : f32
      %83 = vector.broadcast %cst_51 : f32 to vector<1x128xf32>
      %c0_52 = arith.constant 0 : index
      %c0_53 = arith.constant 0 : index
      %84 = vector.load %arg6[%c0_52, %c0_53] : memref<1x128xf32, #tpu.memory_space<vmem>>, vector<1x128xf32>
      tpu.vector_store %arg6[%c0_52, %c0_53], %83 {strides = array<i32>} : memref<1x128xf32, #tpu.memory_space<vmem>>, vector<1x128xf32>,
    } else {
    }
    %c0 = arith.constant 0 : index
    %c0_1 = arith.constant 0 : index
    %c0_2 = arith.constant 0 : index
    %c0_3 = arith.constant 0 : index
    %3 = vector.load %arg2[%c0, %c0_1, %c0_2, %c0_3] : memref<1x16x16x128xbf16, #tpu.memory_space<vmem>>, vector<1x16x16x128xbf16>
    %4 = vector.shape_cast %3 : vector<1x16x16x128xbf16> to vector<16x16x128xbf16>
    %cst = arith.constant 0.000000e+00 : bf16
    %5 = vector.broadcast %cst : bf16 to vector<1x16x128xbf16>
    %6 = tpu.concatenate %5, %4, %5 in 0 : vector<1x16x128xbf16>, vector<16x16x128xbf16>, vector<1x16x128xbf16> -> vector<18x16x128xbf16>
    %cst_4 = arith.constant 0.000000e+00 : bf16
    %7 = vector.broadcast %cst_4 : bf16 to vector<18x1x128xbf16>
    %8 = tpu.concatenate %7, %6, %7 in 1 : vector<18x1x128xbf16>, vector<18x16x128xbf16>, vector<18x1x128xbf16> -> vector<18x18x128xbf16>
    %cst_5 = arith.constant 0.000000e+00 : f32
    %9 = vector.broadcast %cst_5 : f32 to vector<256x128xf32>
    %10 = vector.extract_strided_slice %8 {offsets = [0, 0, 0], sizes = [16, 18, 128], strides = [1, 1, 1]} : vector<18x18x128xbf16> to vector<16x18x128xbf16>
    %11 = vector.extract_strided_slice %10 {offsets = [0, 0, 0], sizes = [16, 16, 128], strides = [1, 1, 1]} : vector<16x18x128xbf16> to vector<16x16x128xbf16>
    %12 = vector.shape_cast %11 : vector<16x16x128xbf16> to vector<256x128xbf16>
    %c0_6 = arith.constant 0 : index
    %c0_7 = arith.constant 0 : index
    %c0_8 = arith.constant 0 : index
    %13 = vector.load %arg3[%c0_6, %c0_7, %c0_8] : memref<9x128x128xbf16, #tpu.memory_space<vmem>>, vector<1x128x128xbf16>
    %14 = vector.shape_cast %13 : vector<1x128x128xbf16> to vector<128x128xbf16>
    %cst_9 = arith.constant dense<0.000000e+00> : vector<256x128xf32>
    %15 = tpu.matmul %12, %14, %cst_9 {dimension_numbers = #tpu.dot_dimension_numbers<[1], [0], [0], [1], [0, 0, 1, 1], [], []>} : vector<256x128xbf16>, vector<128x128xbf16>, vector<256x128xf32> -> vector<256x128xf32>
    %16 = arith.addf %9, %15 : vector<256x128xf32>
    %17 = vector.extract_strided_slice %10 {offsets = [0, 1, 0], sizes = [16, 16, 128], strides = [1, 1, 1]} : vector<16x18x128xbf16> to vector<16x16x128xbf16>
    %18 = vector.shape_cast %17 : vector<16x16x128xbf16> to vector<256x128xbf16>
    %c1 = arith.constant 1 : index
    %c0_10 = arith.constant 0 : index
    %c0_11 = arith.constant 0 : index
    %19 = vector.load %arg3[%c1, %c0_10, %c0_11] : memref<9x128x128xbf16, #tpu.memory_space<vmem>>, vector<1x128x128xbf16>
    %20 = vector.shape_cast %19 : vector<1x128x128xbf16> to vector<128x128xbf16>
    %cst_12 = arith.constant dense<0.000000e+00> : vector<256x128xf32>
    %21 = tpu.matmul %18, %20, %cst_12 {dimension_numbers = #tpu.dot_dimension_numbers<[1], [0], [0], [1], [0, 0, 1, 1], [], []>} : vector<256x128xbf16>, vector<128x128xbf16>, vector<256x128xf32> -> vector<256x128xf32>
    %22 = arith.addf %16, %21 : vector<256x128xf32>
    %23 = vector.extract_strided_slice %10 {offsets = [0, 2, 0], sizes = [16, 16, 128], strides = [1, 1, 1]} : vector<16x18x128xbf16> to vector<16x16x128xbf16>
    %24 = vector.shape_cast %23 : vector<16x16x128xbf16> to vector<256x128xbf16>
    %c2 = arith.constant 2 : index
    %c0_13 = arith.constant 0 : index
    %c0_14 = arith.constant 0 : index
    %25 = vector.load %arg3[%c2, %c0_13, %c0_14] : memref<9x128x128xbf16, #tpu.memory_space<vmem>>, vector<1x128x128xbf16>
    %26 = vector.shape_cast %25 : vector<1x128x128xbf16> to vector<128x128xbf16>
    %cst_15 = arith.constant dense<0.000000e+00> : vector<256x128xf32>
    %27 = tpu.matmul %24, %26, %cst_15 {dimension_numbers = #tpu.dot_dimension_numbers<[1], [0], [0], [1], [0, 0, 1, 1], [], []>} : vector<256x128xbf16>, vector<128x128xbf16>, vector<256x128xf32> -> vector<256x128xf32>
    %28 = arith.addf %22, %27 : vector<256x128xf32>
    %29 = vector.extract_strided_slice %8 {offsets = [1, 0, 0], sizes = [16, 18, 128], strides = [1, 1, 1]} : vector<18x18x128xbf16> to vector<16x18x128xbf16>
    %30 = vector.extract_strided_slice %29 {offsets = [0, 0, 0], sizes = [16, 16, 128], strides = [1, 1, 1]} : vector<16x18x128xbf16> to vector<16x16x128xbf16>
    %31 = vector.shape_cast %30 : vector<16x16x128xbf16> to vector<256x128xbf16>
    %c3 = arith.constant 3 : index
    %c0_16 = arith.constant 0 : index
    %c0_17 = arith.constant 0 : index
    %32 = vector.load %arg3[%c3, %c0_16, %c0_17] : memref<9x128x128xbf16, #tpu.memory_space<vmem>>, vector<1x128x128xbf16>
    %33 = vector.shape_cast %32 : vector<1x128x128xbf16> to vector<128x128xbf16>
    %cst_18 = arith.constant dense<0.000000e+00> : vector<256x128xf32>
    %34 = tpu.matmul %31, %33, %cst_18 {dimension_numbers = #tpu.dot_dimension_numbers<[1], [0], [0], [1], [0, 0, 1, 1], [], []>} : vector<256x128xbf16>, vector<128x128xbf16>, vector<256x128xf32> -> vector<256x128xf32>
    %35 = arith.addf %28, %34 : vector<256x128xf32>
    %36 = vector.extract_strided_slice %29 {offsets = [0, 1, 0], sizes = [16, 16, 128], strides = [1, 1, 1]} : vector<16x18x128xbf16> to vector<16x16x128xbf16>
    %37 = vector.shape_cast %36 : vector<16x16x128xbf16> to vector<256x128xbf16>
    %c4 = arith.constant 4 : index
    %c0_19 = arith.constant 0 : index
    %c0_20 = arith.constant 0 : index
    %38 = vector.load %arg3[%c4, %c0_19, %c0_20] : memref<9x128x128xbf16, #tpu.memory_space<vmem>>, vector<1x128x128xbf16>
    %39 = vector.shape_cast %38 : vector<1x128x128xbf16> to vector<128x128xbf16>
    %cst_21 = arith.constant dense<0.000000e+00> : vector<256x128xf32>
    %40 = tpu.matmul %37, %39, %cst_21 {dimension_numbers = #tpu.dot_dimension_numbers<[1], [0], [0], [1], [0, 0, 1, 1], [], []>} : vector<256x128xbf16>, vector<128x128xbf16>, vector<256x128xf32> -> vector<256x128xf32>
    %41 = arith.addf %35, %40 : vector<256x128xf32>
    %42 = vector.extract_strided_slice %29 {offsets = [0, 2, 0], sizes = [16, 16, 128], strides = [1, 1, 1]} : vector<16x18x128xbf16> to vector<16x16x128xbf16>
    %43 = vector.shape_cast %42 : vector<16x16x128xbf16> to vector<256x128xbf16>
    %c5 = arith.constant 5 : index
    %c0_22 = arith.constant 0 : index
    %c0_23 = arith.constant 0 : index
    %44 = vector.load %arg3[%c5, %c0_22, %c0_23] : memref<9x128x128xbf16, #tpu.memory_space<vmem>>, vector<1x128x128xbf16>
    %45 = vector.shape_cast %44 : vector<1x128x128xbf16> to vector<128x128xbf16>
    %cst_24 = arith.constant dense<0.000000e+00> : vector<256x128xf32>
    %46 = tpu.matmul %43, %45, %cst_24 {dimension_numbers = #tpu.dot_dimension_numbers<[1], [0], [0], [1], [0, 0, 1, 1], [], []>} : vector<256x128xbf16>, vector<128x128xbf16>, vector<256x128xf32> -> vector<256x128xf32>
    %47 = arith.addf %41, %46 : vector<256x128xf32>
    %48 = vector.extract_strided_slice %8 {offsets = [2, 0, 0], sizes = [16, 18, 128], strides = [1, 1, 1]} : vector<18x18x128xbf16> to vector<16x18x128xbf16>
    %49 = vector.extract_strided_slice %48 {offsets = [0, 0, 0], sizes = [16, 16, 128], strides = [1, 1, 1]} : vector<16x18x128xbf16> to vector<16x16x128xbf16>
    %50 = vector.shape_cast %49 : vector<16x16x128xbf16> to vector<256x128xbf16>
    %c6 = arith.constant 6 : index
    %c0_25 = arith.constant 0 : index
    %c0_26 = arith.constant 0 : index
    %51 = vector.load %arg3[%c6, %c0_25, %c0_26] : memref<9x128x128xbf16, #tpu.memory_space<vmem>>, vector<1x128x128xbf16>
    %52 = vector.shape_cast %51 : vector<1x128x128xbf16> to vector<128x128xbf16>
    %cst_27 = arith.constant dense<0.000000e+00> : vector<256x128xf32>
    %53 = tpu.matmul %50, %52, %cst_27 {dimension_numbers = #tpu.dot_dimension_numbers<[1], [0], [0], [1], [0, 0, 1, 1], [], []>} : vector<256x128xbf16>, vector<128x128xbf16>, vector<256x128xf32> -> vector<256x128xf32>
    %54 = arith.addf %47, %53 : vector<256x128xf32>
    %55 = vector.extract_strided_slice %48 {offsets = [0, 1, 0], sizes = [16, 16, 128], strides = [1, 1, 1]} : vector<16x18x128xbf16> to vector<16x16x128xbf16>
    %56 = vector.shape_cast %55 : vector<16x16x128xbf16> to vector<256x128xbf16>
    %c7 = arith.constant 7 : index
    %c0_28 = arith.constant 0 : index
    %c0_29 = arith.constant 0 : index
    %57 = vector.load %arg3[%c7, %c0_28, %c0_29] : memref<9x128x128xbf16, #tpu.memory_space<vmem>>, vector<1x128x128xbf16>
    %58 = vector.shape_cast %57 : vector<1x128x128xbf16> to vector<128x128xbf16>
    %cst_30 = arith.constant dense<0.000000e+00> : vector<256x128xf32>
    %59 = tpu.matmul %56, %58, %cst_30 {dimension_numbers = #tpu.dot_dimension_numbers<[1], [0], [0], [1], [0, 0, 1, 1], [], []>} : vector<256x128xbf16>, vector<128x128xbf16>, vector<256x128xf32> -> vector<256x128xf32>
    %60 = arith.addf %54, %59 : vector<256x128xf32>
    %61 = vector.extract_strided_slice %48 {offsets = [0, 2, 0], sizes = [16, 16, 128], strides = [1, 1, 1]} : vector<16x18x128xbf16> to vector<16x16x128xbf16>
    %62 = vector.shape_cast %61 : vector<16x16x128xbf16> to vector<256x128xbf16>
    %c8 = arith.constant 8 : index
    %c0_31 = arith.constant 0 : index
    %c0_32 = arith.constant 0 : index
    %63 = vector.load %arg3[%c8, %c0_31, %c0_32] : memref<9x128x128xbf16, #tpu.memory_space<vmem>>, vector<1x128x128xbf16>
    %64 = vector.shape_cast %63 : vector<1x128x128xbf16> to vector<128x128xbf16>
    %cst_33 = arith.constant dense<0.000000e+00> : vector<256x128xf32>
    %65 = tpu.matmul %62, %64, %cst_33 {dimension_numbers = #tpu.dot_dimension_numbers<[1], [0], [0], [1], [0, 0, 1, 1], [], []>} : vector<256x128xbf16>, vector<128x128xbf16>, vector<256x128xf32> -> vector<256x128xf32>
    %66 = arith.addf %60, %65 : vector<256x128xf32>
    %67 = vector.shape_cast %66 : vector<256x128xf32> to vector<1x16x16x128xf32>
    %68 = arith.truncf %67 : vector<1x16x16x128xf32> to vector<1x16x16x128xbf16>
    %c0_34 = arith.constant 0 : index
    %c0_35 = arith.constant 0 : index
    %c0_36 = arith.constant 0 : index
    %c0_37 = arith.constant 0 : index
    %69 = vector.load %arg4[%c0_34, %c0_35, %c0_36, %c0_37] : memref<1x16x16x128xbf16, #tpu.memory_space<vmem>>, vector<1x16x16x128xbf16>
    tpu.vector_store %arg4[%c0_34, %c0_35, %c0_36, %c0_37], %68 {strides = array<i32>} : memref<1x16x16x128xbf16, #tpu.memory_space<vmem>>, vector<1x16x16x128xbf16>,
    %c0_38 = arith.constant 0 : index
    %c0_39 = arith.constant 0 : index
    %70 = vector.load %arg5[%c0_38, %c0_39] : memref<1x128xf32, #tpu.memory_space<vmem>>, vector<1x128xf32>
    %cst_40 = arith.constant dense<0.000000e+00> : vector<128xf32>
    %71 = vector.multi_reduction <add>, %66, %cst_40 [0] : vector<256x128xf32> to vector<128xf32>
    %72 = vector.shape_cast %71 : vector<128xf32> to vector<1x128xf32>
    %73 = arith.addf %70, %72 : vector<1x128xf32>
    %c0_41 = arith.constant 0 : index
    %c0_42 = arith.constant 0 : index
    %74 = vector.load %arg5[%c0_41, %c0_42] : memref<1x128xf32, #tpu.memory_space<vmem>>, vector<1x128xf32>
    tpu.vector_store %arg5[%c0_41, %c0_42], %73 {strides = array<i32>} : memref<1x128xf32, #tpu.memory_space<vmem>>, vector<1x128xf32>,
    %c0_43 = arith.constant 0 : index
    %c0_44 = arith.constant 0 : index
    %75 = vector.load %arg6[%c0_43, %c0_44] : memref<1x128xf32, #tpu.memory_space<vmem>>, vector<1x128xf32>
    %76 = arith.mulf %66, %66 : vector<256x128xf32>
    %cst_45 = arith.constant dense<0.000000e+00> : vector<128xf32>
    %77 = vector.multi_reduction <add>, %76, %cst_45 [0] : vector<256x128xf32> to vector<128xf32>
    %78 = vector.shape_cast %77 : vector<128xf32> to vector<1x128xf32>
    %79 = arith.addf %75, %78 : vector<1x128xf32>
    %c0_46 = arith.constant 0 : index
    %c0_47 = arith.constant 0 : index
    %80 = vector.load %arg6[%c0_46, %c0_47] : memref<1x128xf32, #tpu.memory_space<vmem>>, vector<1x128xf32>
    tpu.vector_store %arg6[%c0_46, %c0_47], %79 {strides = array<i32>} : memref<1x128xf32, #tpu.memory_space<vmem>>, vector<1x128xf32>,
    return
  }
  func.func @transform_0(%arg0: i32, %arg1: i32) -> (i32, i32, i32, i32) {
    %c0_i32 = arith.constant 0 : i32
    %c0_i32_0 = arith.constant 0 : i32
    %c0_i32_1 = arith.constant 0 : i32
    %c0_i32_2 = arith.constant 0 : i32
    return %arg1, %c0_i32, %c0_i32_0, %c0_i32_1 : i32, i32, i32, i32
  }
  func.func @transform_1(%arg0: i32, %arg1: i32) -> (i32, i32, i32) {
    %c0_i32 = arith.constant 0 : i32
    %c0_i32_0 = arith.constant 0 : i32
    %c0_i32_1 = arith.constant 0 : i32
    return %c0_i32, %c0_i32_0, %arg0 : i32, i32, i32
  }
  func.func @transform_2(%arg0: i32, %arg1: i32) -> (i32, i32, i32, i32) {
    %c0_i32 = arith.constant 0 : i32
    %c0_i32_0 = arith.constant 0 : i32
    %c0_i32_1 = arith.constant 0 : i32
    return %arg1, %c0_i32, %c0_i32_0, %arg0 : i32, i32, i32, i32
  }
  func.func @transform_3(%arg0: i32, %arg1: i32) -> (i32, i32) {
    %c0_i32 = arith.constant 0 : i32
    %c0_i32_0 = arith.constant 0 : i32
    return %c0_i32, %arg0 : i32, i32
  }
  func.func @transform_4(%arg0: i32, %arg1: i32) -> (i32, i32) {
    %c0_i32 = arith.constant 0 : i32
    %c0_i32_0 = arith.constant 0 : i32
    return %c0_i32, %arg0 : i32, i32
  }
}

module attributes {stable_mosaic.version = 11 : i64} {
  func.func @_bn_relu_conv_stats_kernel(%arg0: i32, %arg1: i32, %arg2: memref<1x16x16x128xbf16, #tpu.memory_space<vmem>>, %arg3: memref<1x128xf32, #tpu.memory_space<vmem>>, %arg4: memref<1x128xf32, #tpu.memory_space<vmem>>, %arg5: memref<1x128xf32, #tpu.memory_space<vmem>>, %arg6: memref<1x128xf32, #tpu.memory_space<vmem>>, %arg7: memref<9x128x128xbf16, #tpu.memory_space<vmem>>, %arg8: memref<1x16x16x128xbf16, #tpu.memory_space<vmem>>, %arg9: memref<1x128xf32, #tpu.memory_space<vmem>>, %arg10: memref<1x128xf32, #tpu.memory_space<vmem>>) attributes {dimension_semantics = [#tpu.dimension_semantics<parallel>, #tpu.dimension_semantics<arbitrary>], iteration_bounds = array<i64: 1, 2>, scalar_prefetch = 0 : i64, scratch_operands = 0 : i64, tpu.core_type = #tpu.core_type<tc>, window_params = [{transform_indices = @transform_0, window_bounds = array<i64: 1, 16, 16, 128>}, {pipeline_mode = #tpu.pipeline_mode<synchronous>, transform_indices = @transform_1, window_bounds = array<i64: 1, 128>}, {pipeline_mode = #tpu.pipeline_mode<synchronous>, transform_indices = @transform_2, window_bounds = array<i64: 1, 128>}, {pipeline_mode = #tpu.pipeline_mode<synchronous>, transform_indices = @transform_3, window_bounds = array<i64: 1, 128>}, {pipeline_mode = #tpu.pipeline_mode<synchronous>, transform_indices = @transform_4, window_bounds = array<i64: 1, 128>}, {transform_indices = @transform_5, window_bounds = array<i64: 9, 128, 128>}, {transform_indices = @transform_6, window_bounds = array<i64: 1, 16, 16, 128>}, {transform_indices = @transform_7, window_bounds = array<i64: 1, 128>}, {transform_indices = @transform_8, window_bounds = array<i64: 1, 128>}]} {
    %c0_i32 = arith.constant 0 : i32
    %0 = arith.cmpi eq, %arg1, %c0_i32 : i32
    %1 = arith.extui %0 : i1 to i32
    %c0_i32_0 = arith.constant 0 : i32
    %2 = arith.cmpi ne, %1, %c0_i32_0 : i32
    scf.if %2 {
      %cst_61 = arith.constant 0.000000e+00 : f32
      %109 = vector.broadcast %cst_61 : f32 to vector<1x128xf32>
      %c0_62 = arith.constant 0 : index
      %c0_63 = arith.constant 0 : index
      %110 = vector.load %arg9[%c0_62, %c0_63] : memref<1x128xf32, #tpu.memory_space<vmem>>, vector<1x128xf32>
      tpu.vector_store %arg9[%c0_62, %c0_63], %109 {strides = array<i32>} : memref<1x128xf32, #tpu.memory_space<vmem>>, vector<1x128xf32>,
      %cst_64 = arith.constant 0.000000e+00 : f32
      %111 = vector.broadcast %cst_64 : f32 to vector<1x128xf32>
      %c0_65 = arith.constant 0 : index
      %c0_66 = arith.constant 0 : index
      %112 = vector.load %arg10[%c0_65, %c0_66] : memref<1x128xf32, #tpu.memory_space<vmem>>, vector<1x128xf32>
      tpu.vector_store %arg10[%c0_65, %c0_66], %111 {strides = array<i32>} : memref<1x128xf32, #tpu.memory_space<vmem>>, vector<1x128xf32>,
    } else {
    }
    %c0 = arith.constant 0 : index
    %c0_1 = arith.constant 0 : index
    %3 = vector.load %arg3[%c0, %c0_1] : memref<1x128xf32, #tpu.memory_space<vmem>>, vector<1x128xf32>
    %cst = arith.constant 0.001953125 : f32
    %4 = vector.broadcast %cst : f32 to vector<1x128xf32>
    %5 = arith.mulf %3, %4 : vector<1x128xf32>
    %c0_2 = arith.constant 0 : index
    %c0_3 = arith.constant 0 : index
    %6 = vector.load %arg4[%c0_2, %c0_3] : memref<1x128xf32, #tpu.memory_space<vmem>>, vector<1x128xf32>
    %cst_4 = arith.constant 0.001953125 : f32
    %7 = vector.broadcast %cst_4 : f32 to vector<1x128xf32>
    %8 = arith.mulf %6, %7 : vector<1x128xf32>
    %9 = arith.mulf %5, %5 : vector<1x128xf32>
    %10 = arith.subf %8, %9 : vector<1x128xf32>
    %cst_5 = arith.constant 0.000000e+00 : f32
    %11 = vector.broadcast %cst_5 : f32 to vector<1x128xf32>
    %12 = arith.maximumf %10, %11 : vector<1x128xf32>
    %c0_6 = arith.constant 0 : index
    %c0_7 = arith.constant 0 : index
    %13 = vector.load %arg5[%c0_6, %c0_7] : memref<1x128xf32, #tpu.memory_space<vmem>>, vector<1x128xf32>
    %cst_8 = arith.constant 9.99999974E-6 : f32
    %14 = vector.broadcast %cst_8 : f32 to vector<1x128xf32>
    %15 = arith.addf %12, %14 : vector<1x128xf32>
    %16 = math.rsqrt %15 : vector<1x128xf32>
    %17 = arith.mulf %13, %16 : vector<1x128xf32>
    %c0_9 = arith.constant 0 : index
    %c0_10 = arith.constant 0 : index
    %18 = vector.load %arg6[%c0_9, %c0_10] : memref<1x128xf32, #tpu.memory_space<vmem>>, vector<1x128xf32>
    %19 = arith.mulf %5, %17 : vector<1x128xf32>
    %20 = arith.subf %18, %19 : vector<1x128xf32>
    %c0_11 = arith.constant 0 : index
    %c0_12 = arith.constant 0 : index
    %c0_13 = arith.constant 0 : index
    %c0_14 = arith.constant 0 : index
    %21 = vector.load %arg2[%c0_11, %c0_12, %c0_13, %c0_14] : memref<1x16x16x128xbf16, #tpu.memory_space<vmem>>, vector<1x16x16x128xbf16>
    %22 = arith.extf %21 : vector<1x16x16x128xbf16> to vector<1x16x16x128xf32>
    %23 = vector.shape_cast %17 : vector<1x128xf32> to vector<1x1x1x128xf32>
    %24 = vector.broadcast %23 : vector<1x1x1x128xf32> to vector<1x16x16x128xf32>
    %25 = arith.mulf %22, %24 : vector<1x16x16x128xf32>
    %26 = vector.shape_cast %20 : vector<1x128xf32> to vector<1x1x1x128xf32>
    %27 = vector.broadcast %26 : vector<1x1x1x128xf32> to vector<1x16x16x128xf32>
    %28 = arith.addf %25, %27 : vector<1x16x16x128xf32>
    %cst_15 = arith.constant 0.000000e+00 : f32
    %29 = vector.broadcast %cst_15 : f32 to vector<1x16x16x128xf32>
    %30 = arith.maximumf %28, %29 : vector<1x16x16x128xf32>
    %31 = vector.shape_cast %30 : vector<1x16x16x128xf32> to vector<16x16x128xf32>
    %32 = arith.truncf %31 : vector<16x16x128xf32> to vector<16x16x128xbf16>
    %cst_16 = arith.constant 0.000000e+00 : bf16
    %33 = vector.broadcast %cst_16 : bf16 to vector<1x16x128xbf16>
    %34 = tpu.concatenate %33, %32, %33 in 0 : vector<1x16x128xbf16>, vector<16x16x128xbf16>, vector<1x16x128xbf16> -> vector<18x16x128xbf16>
    %cst_17 = arith.constant 0.000000e+00 : bf16
    %35 = vector.broadcast %cst_17 : bf16 to vector<18x1x128xbf16>
    %36 = tpu.concatenate %35, %34, %35 in 1 : vector<18x1x128xbf16>, vector<18x16x128xbf16>, vector<18x1x128xbf16> -> vector<18x18x128xbf16>
    %cst_18 = arith.constant 0.000000e+00 : f32
    %37 = vector.broadcast %cst_18 : f32 to vector<256x128xf32>
    %38 = vector.extract_strided_slice %36 {offsets = [0, 0, 0], sizes = [16, 18, 128], strides = [1, 1, 1]} : vector<18x18x128xbf16> to vector<16x18x128xbf16>
    %39 = vector.extract_strided_slice %38 {offsets = [0, 0, 0], sizes = [16, 16, 128], strides = [1, 1, 1]} : vector<16x18x128xbf16> to vector<16x16x128xbf16>
    %40 = vector.shape_cast %39 : vector<16x16x128xbf16> to vector<256x128xbf16>
    %c0_19 = arith.constant 0 : index
    %c0_20 = arith.constant 0 : index
    %c0_21 = arith.constant 0 : index
    %41 = vector.load %arg7[%c0_19, %c0_20, %c0_21] : memref<9x128x128xbf16, #tpu.memory_space<vmem>>, vector<1x128x128xbf16>
    %42 = vector.shape_cast %41 : vector<1x128x128xbf16> to vector<128x128xbf16>
    %cst_22 = arith.constant dense<0.000000e+00> : vector<256x128xf32>
    %43 = tpu.matmul %40, %42, %cst_22 {dimension_numbers = #tpu.dot_dimension_numbers<[1], [0], [0], [1], [0, 0, 1, 1], [], []>} : vector<256x128xbf16>, vector<128x128xbf16>, vector<256x128xf32> -> vector<256x128xf32>
    %44 = arith.addf %37, %43 : vector<256x128xf32>
    %45 = vector.extract_strided_slice %38 {offsets = [0, 1, 0], sizes = [16, 16, 128], strides = [1, 1, 1]} : vector<16x18x128xbf16> to vector<16x16x128xbf16>
    %46 = vector.shape_cast %45 : vector<16x16x128xbf16> to vector<256x128xbf16>
    %c1 = arith.constant 1 : index
    %c0_23 = arith.constant 0 : index
    %c0_24 = arith.constant 0 : index
    %47 = vector.load %arg7[%c1, %c0_23, %c0_24] : memref<9x128x128xbf16, #tpu.memory_space<vmem>>, vector<1x128x128xbf16>
    %48 = vector.shape_cast %47 : vector<1x128x128xbf16> to vector<128x128xbf16>
    %cst_25 = arith.constant dense<0.000000e+00> : vector<256x128xf32>
    %49 = tpu.matmul %46, %48, %cst_25 {dimension_numbers = #tpu.dot_dimension_numbers<[1], [0], [0], [1], [0, 0, 1, 1], [], []>} : vector<256x128xbf16>, vector<128x128xbf16>, vector<256x128xf32> -> vector<256x128xf32>
    %50 = arith.addf %44, %49 : vector<256x128xf32>
    %51 = vector.extract_strided_slice %38 {offsets = [0, 2, 0], sizes = [16, 16, 128], strides = [1, 1, 1]} : vector<16x18x128xbf16> to vector<16x16x128xbf16>
    %52 = vector.shape_cast %51 : vector<16x16x128xbf16> to vector<256x128xbf16>
    %c2 = arith.constant 2 : index
    %c0_26 = arith.constant 0 : index
    %c0_27 = arith.constant 0 : index
    %53 = vector.load %arg7[%c2, %c0_26, %c0_27] : memref<9x128x128xbf16, #tpu.memory_space<vmem>>, vector<1x128x128xbf16>
    %54 = vector.shape_cast %53 : vector<1x128x128xbf16> to vector<128x128xbf16>
    %cst_28 = arith.constant dense<0.000000e+00> : vector<256x128xf32>
    %55 = tpu.matmul %52, %54, %cst_28 {dimension_numbers = #tpu.dot_dimension_numbers<[1], [0], [0], [1], [0, 0, 1, 1], [], []>} : vector<256x128xbf16>, vector<128x128xbf16>, vector<256x128xf32> -> vector<256x128xf32>
    %56 = arith.addf %50, %55 : vector<256x128xf32>
    %57 = vector.extract_strided_slice %36 {offsets = [1, 0, 0], sizes = [16, 18, 128], strides = [1, 1, 1]} : vector<18x18x128xbf16> to vector<16x18x128xbf16>
    %58 = vector.extract_strided_slice %57 {offsets = [0, 0, 0], sizes = [16, 16, 128], strides = [1, 1, 1]} : vector<16x18x128xbf16> to vector<16x16x128xbf16>
    %59 = vector.shape_cast %58 : vector<16x16x128xbf16> to vector<256x128xbf16>
    %c3 = arith.constant 3 : index
    %c0_29 = arith.constant 0 : index
    %c0_30 = arith.constant 0 : index
    %60 = vector.load %arg7[%c3, %c0_29, %c0_30] : memref<9x128x128xbf16, #tpu.memory_space<vmem>>, vector<1x128x128xbf16>
    %61 = vector.shape_cast %60 : vector<1x128x128xbf16> to vector<128x128xbf16>
    %cst_31 = arith.constant dense<0.000000e+00> : vector<256x128xf32>
    %62 = tpu.matmul %59, %61, %cst_31 {dimension_numbers = #tpu.dot_dimension_numbers<[1], [0], [0], [1], [0, 0, 1, 1], [], []>} : vector<256x128xbf16>, vector<128x128xbf16>, vector<256x128xf32> -> vector<256x128xf32>
    %63 = arith.addf %56, %62 : vector<256x128xf32>
    %64 = vector.extract_strided_slice %57 {offsets = [0, 1, 0], sizes = [16, 16, 128], strides = [1, 1, 1]} : vector<16x18x128xbf16> to vector<16x16x128xbf16>
    %65 = vector.shape_cast %64 : vector<16x16x128xbf16> to vector<256x128xbf16>
    %c4 = arith.constant 4 : index
    %c0_32 = arith.constant 0 : index
    %c0_33 = arith.constant 0 : index
    %66 = vector.load %arg7[%c4, %c0_32, %c0_33] : memref<9x128x128xbf16, #tpu.memory_space<vmem>>, vector<1x128x128xbf16>
    %67 = vector.shape_cast %66 : vector<1x128x128xbf16> to vector<128x128xbf16>
    %cst_34 = arith.constant dense<0.000000e+00> : vector<256x128xf32>
    %68 = tpu.matmul %65, %67, %cst_34 {dimension_numbers = #tpu.dot_dimension_numbers<[1], [0], [0], [1], [0, 0, 1, 1], [], []>} : vector<256x128xbf16>, vector<128x128xbf16>, vector<256x128xf32> -> vector<256x128xf32>
    %69 = arith.addf %63, %68 : vector<256x128xf32>
    %70 = vector.extract_strided_slice %57 {offsets = [0, 2, 0], sizes = [16, 16, 128], strides = [1, 1, 1]} : vector<16x18x128xbf16> to vector<16x16x128xbf16>
    %71 = vector.shape_cast %70 : vector<16x16x128xbf16> to vector<256x128xbf16>
    %c5 = arith.constant 5 : index
    %c0_35 = arith.constant 0 : index
    %c0_36 = arith.constant 0 : index
    %72 = vector.load %arg7[%c5, %c0_35, %c0_36] : memref<9x128x128xbf16, #tpu.memory_space<vmem>>, vector<1x128x128xbf16>
    %73 = vector.shape_cast %72 : vector<1x128x128xbf16> to vector<128x128xbf16>
    %cst_37 = arith.constant dense<0.000000e+00> : vector<256x128xf32>
    %74 = tpu.matmul %71, %73, %cst_37 {dimension_numbers = #tpu.dot_dimension_numbers<[1], [0], [0], [1], [0, 0, 1, 1], [], []>} : vector<256x128xbf16>, vector<128x128xbf16>, vector<256x128xf32> -> vector<256x128xf32>
    %75 = arith.addf %69, %74 : vector<256x128xf32>
    %76 = vector.extract_strided_slice %36 {offsets = [2, 0, 0], sizes = [16, 18, 128], strides = [1, 1, 1]} : vector<18x18x128xbf16> to vector<16x18x128xbf16>
    %77 = vector.extract_strided_slice %76 {offsets = [0, 0, 0], sizes = [16, 16, 128], strides = [1, 1, 1]} : vector<16x18x128xbf16> to vector<16x16x128xbf16>
    %78 = vector.shape_cast %77 : vector<16x16x128xbf16> to vector<256x128xbf16>
    %c6 = arith.constant 6 : index
    %c0_38 = arith.constant 0 : index
    %c0_39 = arith.constant 0 : index
    %79 = vector.load %arg7[%c6, %c0_38, %c0_39] : memref<9x128x128xbf16, #tpu.memory_space<vmem>>, vector<1x128x128xbf16>
    %80 = vector.shape_cast %79 : vector<1x128x128xbf16> to vector<128x128xbf16>
    %cst_40 = arith.constant dense<0.000000e+00> : vector<256x128xf32>
    %81 = tpu.matmul %78, %80, %cst_40 {dimension_numbers = #tpu.dot_dimension_numbers<[1], [0], [0], [1], [0, 0, 1, 1], [], []>} : vector<256x128xbf16>, vector<128x128xbf16>, vector<256x128xf32> -> vector<256x128xf32>
    %82 = arith.addf %75, %81 : vector<256x128xf32>
    %83 = vector.extract_strided_slice %76 {offsets = [0, 1, 0], sizes = [16, 16, 128], strides = [1, 1, 1]} : vector<16x18x128xbf16> to vector<16x16x128xbf16>
    %84 = vector.shape_cast %83 : vector<16x16x128xbf16> to vector<256x128xbf16>
    %c7 = arith.constant 7 : index
    %c0_41 = arith.constant 0 : index
    %c0_42 = arith.constant 0 : index
    %85 = vector.load %arg7[%c7, %c0_41, %c0_42] : memref<9x128x128xbf16, #tpu.memory_space<vmem>>, vector<1x128x128xbf16>
    %86 = vector.shape_cast %85 : vector<1x128x128xbf16> to vector<128x128xbf16>
    %cst_43 = arith.constant dense<0.000000e+00> : vector<256x128xf32>
    %87 = tpu.matmul %84, %86, %cst_43 {dimension_numbers = #tpu.dot_dimension_numbers<[1], [0], [0], [1], [0, 0, 1, 1], [], []>} : vector<256x128xbf16>, vector<128x128xbf16>, vector<256x128xf32> -> vector<256x128xf32>
    %88 = arith.addf %82, %87 : vector<256x128xf32>
    %89 = vector.extract_strided_slice %76 {offsets = [0, 2, 0], sizes = [16, 16, 128], strides = [1, 1, 1]} : vector<16x18x128xbf16> to vector<16x16x128xbf16>
    %90 = vector.shape_cast %89 : vector<16x16x128xbf16> to vector<256x128xbf16>
    %c8 = arith.constant 8 : index
    %c0_44 = arith.constant 0 : index
    %c0_45 = arith.constant 0 : index
    %91 = vector.load %arg7[%c8, %c0_44, %c0_45] : memref<9x128x128xbf16, #tpu.memory_space<vmem>>, vector<1x128x128xbf16>
    %92 = vector.shape_cast %91 : vector<1x128x128xbf16> to vector<128x128xbf16>
    %cst_46 = arith.constant dense<0.000000e+00> : vector<256x128xf32>
    %93 = tpu.matmul %90, %92, %cst_46 {dimension_numbers = #tpu.dot_dimension_numbers<[1], [0], [0], [1], [0, 0, 1, 1], [], []>} : vector<256x128xbf16>, vector<128x128xbf16>, vector<256x128xf32> -> vector<256x128xf32>
    %94 = arith.addf %88, %93 : vector<256x128xf32>
    %95 = vector.shape_cast %94 : vector<256x128xf32> to vector<1x16x16x128xf32>
    %96 = arith.truncf %95 : vector<1x16x16x128xf32> to vector<1x16x16x128xbf16>
    %c0_47 = arith.constant 0 : index
    %c0_48 = arith.constant 0 : index
    %c0_49 = arith.constant 0 : index
    %c0_50 = arith.constant 0 : index
    %97 = vector.load %arg8[%c0_47, %c0_48, %c0_49, %c0_50] : memref<1x16x16x128xbf16, #tpu.memory_space<vmem>>, vector<1x16x16x128xbf16>
    tpu.vector_store %arg8[%c0_47, %c0_48, %c0_49, %c0_50], %96 {strides = array<i32>} : memref<1x16x16x128xbf16, #tpu.memory_space<vmem>>, vector<1x16x16x128xbf16>,
    %c0_51 = arith.constant 0 : index
    %c0_52 = arith.constant 0 : index
    %98 = vector.load %arg9[%c0_51, %c0_52] : memref<1x128xf32, #tpu.memory_space<vmem>>, vector<1x128xf32>
    %cst_53 = arith.constant dense<0.000000e+00> : vector<128xf32>
    %99 = vector.multi_reduction <add>, %94, %cst_53 [0] : vector<256x128xf32> to vector<128xf32>
    %100 = vector.shape_cast %99 : vector<128xf32> to vector<1x128xf32>
    %101 = arith.addf %98, %100 : vector<1x128xf32>
    %c0_54 = arith.constant 0 : index
    %c0_55 = arith.constant 0 : index
    %102 = vector.load %arg9[%c0_54, %c0_55] : memref<1x128xf32, #tpu.memory_space<vmem>>, vector<1x128xf32>
    tpu.vector_store %arg9[%c0_54, %c0_55], %101 {strides = array<i32>} : memref<1x128xf32, #tpu.memory_space<vmem>>, vector<1x128xf32>,
    %c0_56 = arith.constant 0 : index
    %c0_57 = arith.constant 0 : index
    %103 = vector.load %arg10[%c0_56, %c0_57] : memref<1x128xf32, #tpu.memory_space<vmem>>, vector<1x128xf32>
    %104 = arith.mulf %94, %94 : vector<256x128xf32>
    %cst_58 = arith.constant dense<0.000000e+00> : vector<128xf32>
    %105 = vector.multi_reduction <add>, %104, %cst_58 [0] : vector<256x128xf32> to vector<128xf32>
    %106 = vector.shape_cast %105 : vector<128xf32> to vector<1x128xf32>
    %107 = arith.addf %103, %106 : vector<1x128xf32>
    %c0_59 = arith.constant 0 : index
    %c0_60 = arith.constant 0 : index
    %108 = vector.load %arg10[%c0_59, %c0_60] : memref<1x128xf32, #tpu.memory_space<vmem>>, vector<1x128xf32>
    tpu.vector_store %arg10[%c0_59, %c0_60], %107 {strides = array<i32>} : memref<1x128xf32, #tpu.memory_space<vmem>>, vector<1x128xf32>,
    return
  }
  func.func @transform_0(%arg0: i32, %arg1: i32) -> (i32, i32, i32, i32) {
    %c0_i32 = arith.constant 0 : i32
    %c0_i32_0 = arith.constant 0 : i32
    %c0_i32_1 = arith.constant 0 : i32
    %c0_i32_2 = arith.constant 0 : i32
    return %arg1, %c0_i32, %c0_i32_0, %c0_i32_1 : i32, i32, i32, i32
  }
  func.func @transform_1(%arg0: i32, %arg1: i32) -> (i32, i32) {
    %c0_i32 = arith.constant 0 : i32
    %c0_i32_0 = arith.constant 0 : i32
    %c0_i32_1 = arith.constant 0 : i32
    return %c0_i32, %c0_i32_0 : i32, i32
  }
  func.func @transform_2(%arg0: i32, %arg1: i32) -> (i32, i32) {
    %c0_i32 = arith.constant 0 : i32
    %c0_i32_0 = arith.constant 0 : i32
    %c0_i32_1 = arith.constant 0 : i32
    return %c0_i32, %c0_i32_0 : i32, i32
  }
  func.func @transform_3(%arg0: i32, %arg1: i32) -> (i32, i32) {
    %c0_i32 = arith.constant 0 : i32
    %c0_i32_0 = arith.constant 0 : i32
    %c0_i32_1 = arith.constant 0 : i32
    return %c0_i32, %c0_i32_0 : i32, i32
  }
  func.func @transform_4(%arg0: i32, %arg1: i32) -> (i32, i32) {
    %c0_i32 = arith.constant 0 : i32
    %c0_i32_0 = arith.constant 0 : i32
    %c0_i32_1 = arith.constant 0 : i32
    return %c0_i32, %c0_i32_0 : i32, i32
  }
  func.func @transform_5(%arg0: i32, %arg1: i32) -> (i32, i32, i32) {
    %c0_i32 = arith.constant 0 : i32
    %c0_i32_0 = arith.constant 0 : i32
    %c0_i32_1 = arith.constant 0 : i32
    return %c0_i32, %c0_i32_0, %arg0 : i32, i32, i32
  }
  func.func @transform_6(%arg0: i32, %arg1: i32) -> (i32, i32, i32, i32) {
    %c0_i32 = arith.constant 0 : i32
    %c0_i32_0 = arith.constant 0 : i32
    %c0_i32_1 = arith.constant 0 : i32
    return %arg1, %c0_i32, %c0_i32_0, %arg0 : i32, i32, i32, i32
  }
  func.func @transform_7(%arg0: i32, %arg1: i32) -> (i32, i32) {
    %c0_i32 = arith.constant 0 : i32
    %c0_i32_0 = arith.constant 0 : i32
    return %c0_i32, %arg0 : i32, i32
  }
  func.func @transform_8(%arg0: i32, %arg1: i32) -> (i32, i32) {
    %c0_i32 = arith.constant 0 : i32
    %c0_i32_0 = arith.constant 0 : i32
    return %c0_i32, %arg0 : i32, i32
  }
}

module attributes {stable_mosaic.version = 11 : i64} {
  func.func @_bn_relu_kernel(%arg0: i32, %arg1: i32, %arg2: memref<1x16x16x128xbf16, #tpu.memory_space<vmem>>, %arg3: memref<1x128xf32, #tpu.memory_space<vmem>>, %arg4: memref<1x128xf32, #tpu.memory_space<vmem>>, %arg5: memref<1x128xf32, #tpu.memory_space<vmem>>, %arg6: memref<1x128xf32, #tpu.memory_space<vmem>>, %arg7: memref<1x16x16x128xf32, #tpu.memory_space<vmem>>) attributes {dimension_semantics = [#tpu.dimension_semantics<parallel>, #tpu.dimension_semantics<parallel>], iteration_bounds = array<i64: 2, 1>, scalar_prefetch = 0 : i64, scratch_operands = 0 : i64, tpu.core_type = #tpu.core_type<tc>, window_params = [{transform_indices = @transform_0, window_bounds = array<i64: 1, 16, 16, 128>}, {pipeline_mode = #tpu.pipeline_mode<synchronous>, transform_indices = @transform_1, window_bounds = array<i64: 1, 128>}, {pipeline_mode = #tpu.pipeline_mode<synchronous>, transform_indices = @transform_2, window_bounds = array<i64: 1, 128>}, {pipeline_mode = #tpu.pipeline_mode<synchronous>, transform_indices = @transform_3, window_bounds = array<i64: 1, 128>}, {pipeline_mode = #tpu.pipeline_mode<synchronous>, transform_indices = @transform_4, window_bounds = array<i64: 1, 128>}, {transform_indices = @transform_5, window_bounds = array<i64: 1, 16, 16, 128>}]} {
    %c0 = arith.constant 0 : index
    %c0_0 = arith.constant 0 : index
    %0 = vector.load %arg3[%c0, %c0_0] : memref<1x128xf32, #tpu.memory_space<vmem>>, vector<1x128xf32>
    %cst = arith.constant 0.001953125 : f32
    %1 = vector.broadcast %cst : f32 to vector<1x128xf32>
    %2 = arith.mulf %0, %1 : vector<1x128xf32>
    %c0_1 = arith.constant 0 : index
    %c0_2 = arith.constant 0 : index
    %3 = vector.load %arg4[%c0_1, %c0_2] : memref<1x128xf32, #tpu.memory_space<vmem>>, vector<1x128xf32>
    %cst_3 = arith.constant 0.001953125 : f32
    %4 = vector.broadcast %cst_3 : f32 to vector<1x128xf32>
    %5 = arith.mulf %3, %4 : vector<1x128xf32>
    %6 = arith.mulf %2, %2 : vector<1x128xf32>
    %7 = arith.subf %5, %6 : vector<1x128xf32>
    %cst_4 = arith.constant 0.000000e+00 : f32
    %8 = vector.broadcast %cst_4 : f32 to vector<1x128xf32>
    %9 = arith.maximumf %7, %8 : vector<1x128xf32>
    %c0_5 = arith.constant 0 : index
    %c0_6 = arith.constant 0 : index
    %10 = vector.load %arg5[%c0_5, %c0_6] : memref<1x128xf32, #tpu.memory_space<vmem>>, vector<1x128xf32>
    %cst_7 = arith.constant 9.99999974E-6 : f32
    %11 = vector.broadcast %cst_7 : f32 to vector<1x128xf32>
    %12 = arith.addf %9, %11 : vector<1x128xf32>
    %13 = math.rsqrt %12 : vector<1x128xf32>
    %14 = arith.mulf %10, %13 : vector<1x128xf32>
    %c0_8 = arith.constant 0 : index
    %c0_9 = arith.constant 0 : index
    %15 = vector.load %arg6[%c0_8, %c0_9] : memref<1x128xf32, #tpu.memory_space<vmem>>, vector<1x128xf32>
    %16 = arith.mulf %2, %14 : vector<1x128xf32>
    %17 = arith.subf %15, %16 : vector<1x128xf32>
    %c0_10 = arith.constant 0 : index
    %c0_11 = arith.constant 0 : index
    %c0_12 = arith.constant 0 : index
    %c0_13 = arith.constant 0 : index
    %18 = vector.load %arg2[%c0_10, %c0_11, %c0_12, %c0_13] : memref<1x16x16x128xbf16, #tpu.memory_space<vmem>>, vector<1x16x16x128xbf16>
    %19 = arith.extf %18 : vector<1x16x16x128xbf16> to vector<1x16x16x128xf32>
    %20 = vector.shape_cast %14 : vector<1x128xf32> to vector<1x1x1x128xf32>
    %21 = vector.broadcast %20 : vector<1x1x1x128xf32> to vector<1x16x16x128xf32>
    %22 = arith.mulf %19, %21 : vector<1x16x16x128xf32>
    %23 = vector.shape_cast %17 : vector<1x128xf32> to vector<1x1x1x128xf32>
    %24 = vector.broadcast %23 : vector<1x1x1x128xf32> to vector<1x16x16x128xf32>
    %25 = arith.addf %22, %24 : vector<1x16x16x128xf32>
    %cst_14 = arith.constant 0.000000e+00 : f32
    %26 = vector.broadcast %cst_14 : f32 to vector<1x16x16x128xf32>
    %27 = arith.maximumf %25, %26 : vector<1x16x16x128xf32>
    %c0_15 = arith.constant 0 : index
    %c0_16 = arith.constant 0 : index
    %c0_17 = arith.constant 0 : index
    %c0_18 = arith.constant 0 : index
    %28 = vector.load %arg7[%c0_15, %c0_16, %c0_17, %c0_18] : memref<1x16x16x128xf32, #tpu.memory_space<vmem>>, vector<1x16x16x128xf32>
    tpu.vector_store %arg7[%c0_15, %c0_16, %c0_17, %c0_18], %27 {strides = array<i32>} : memref<1x16x16x128xf32, #tpu.memory_space<vmem>>, vector<1x16x16x128xf32>,
    return
  }
  func.func @transform_0(%arg0: i32, %arg1: i32) -> (i32, i32, i32, i32) {
    %c0_i32 = arith.constant 0 : i32
    %c0_i32_0 = arith.constant 0 : i32
    %c0_i32_1 = arith.constant 0 : i32
    return %arg0, %arg1, %c0_i32, %c0_i32_0 : i32, i32, i32, i32
  }
  func.func @transform_1(%arg0: i32, %arg1: i32) -> (i32, i32) {
    %c0_i32 = arith.constant 0 : i32
    %c0_i32_0 = arith.constant 0 : i32
    %c0_i32_1 = arith.constant 0 : i32
    return %c0_i32, %c0_i32_0 : i32, i32
  }
  func.func @transform_2(%arg0: i32, %arg1: i32) -> (i32, i32) {
    %c0_i32 = arith.constant 0 : i32
    %c0_i32_0 = arith.constant 0 : i32
    %c0_i32_1 = arith.constant 0 : i32
    return %c0_i32, %c0_i32_0 : i32, i32
  }
  func.func @transform_3(%arg0: i32, %arg1: i32) -> (i32, i32) {
    %c0_i32 = arith.constant 0 : i32
    %c0_i32_0 = arith.constant 0 : i32
    %c0_i32_1 = arith.constant 0 : i32
    return %c0_i32, %c0_i32_0 : i32, i32
  }
  func.func @transform_4(%arg0: i32, %arg1: i32) -> (i32, i32) {
    %c0_i32 = arith.constant 0 : i32
    %c0_i32_0 = arith.constant 0 : i32
    %c0_i32_1 = arith.constant 0 : i32
    return %c0_i32, %c0_i32_0 : i32, i32
  }
  func.func @transform_5(%arg0: i32, %arg1: i32) -> (i32, i32, i32, i32) {
    %c0_i32 = arith.constant 0 : i32
    %c0_i32_0 = arith.constant 0 : i32
    %c0_i32_1 = arith.constant 0 : i32
    return %arg0, %arg1, %c0_i32, %c0_i32_0 : i32, i32, i32, i32
  }
}

</mosaic_0001>

<llo_original>
// kernel: double_conv.5
$region0: #{double_conv.5}
  #allocation0 [shape = 'u32[]', space=smem, size = 0x4, offset = 0x4, fixed_abs, tag = 'smem constant byte address 0x4 - core index']
  #allocation1 [shape = 'u32[144,128]{1,0:T(1,128)}', space=vmem, size = 0x12000, scoped, tag = 'internal scratch']
  %s0 = inlined_call_operand.vmem [shape: bf16[2,16,16,128], index: 0, kind: input, shape index: {}]
  %s1 = inlined_call_operand.vmem [shape: f32[1,128], index: 1, kind: input, shape index: {}]
  %s2 = inlined_call_operand.vmem [shape: f32[1,128], index: 2, kind: input, shape index: {}]
  %s3 = inlined_call_operand.vmem [shape: f32[1,128], index: 3, kind: input, shape index: {}]
  %s4 = inlined_call_operand.vmem [shape: f32[1,128], index: 4, kind: input, shape index: {}]
  %s5 = inlined_call_operand.vmem [shape: f32[2,16,16,128], index: 5, kind: output, shape index: {}]
  %s6 = sld [smem:[#allocation0]]
  $region53: #{double_conv.5} parent=0
    _
  %s8 = ssub.s32 1, %s6
  %s9 = scalar_select 0, %s8, %s6
  loop: start=0, step=1, limit=4
  $region2: #{double_conv.5} parent=0 // loop_pre_header
    _
  $region3: #{double_conv.5} parent=0 // loop_header
    %s11 = sphi 0, %s15
    %p12 = scmp.ge.s32.totalorder %s11, 4
    %s18 = sphi 0, %s30
    %s19 = sphi 0, %s26
    %s20 = sphi 0, %s18
    %s21 = sphi 0, %s19
    %s22 = sphi 0, %s20
    %s23 = sphi 0, %s21
    %s35 = sphi 0, %s37
    %s38 = sphi 0, %s35
    %s39 = sphi 0, %s38
    %s55 = sphi 0, %s39
    %s59 = sphi 0, %s59
    %s61 = sphi 0, %s59
    %s62 = sphi 0, %s61
    %s76 = sphi 0, %s62
    %s80 = sphi 0, %s80
    %s82 = sphi 0, %s80
    %s83 = sphi 0, %s82
    %s97 = sphi 0, %s83
    %s101 = sphi 0, %s101
    %s103 = sphi 0, %s101
    %s104 = sphi 0, %s103
    %s118 = sphi 0, %s104
    %s122 = sphi 0, %s122
    %s124 = sphi 0, %s122
    %s125 = sphi 0, %s124
    %s139 = sphi 0, %s125
    %s147 = sphi 0, %s149
    %s150 = sphi 0, %s147
    %s151 = sphi 0, %s150
    %s167 = sphi 0, %s151
  $region4: #{double_conv.5} parent=0 // loop_header_branch
    %14 = sbr.rel (%p12) target = $region8
  $region5: #{double_conv.5} parent=0 // loop_body
    %s16 = ssub.s32 %s11, 1
    %s17 = ssub.s32 %s11, 2
    %s24 = sadd.s32 1, %s19
    %p25 = scmp.ge.s32.totalorder %s24, 1
    %s26 = scalar_select %p25, 0, %s24
    %s27 = sadd.s32 1, %s18
    %s28 = scalar_select %p25, %s27, %s18
    %p29 = scmp.ge.s32.totalorder %s28, 2
    %s30 = scalar_select %p29, 0, %s28
    %s31 = ssub.s32 %s18, %s30
    %s32 = ssub.s32 %s19, %s26
    %s33 = sor.u32 %s31, %s32
    %p34 = scmp.eq.s32.totalorder %s33, 0
    %s36 = sadd.s32 %s35, 1
    %s37 = scalar_select %p34, %s35, %s36
    %p40 = pneg %p34
    %p41 = scmp.eq.s32.totalorder %s11, 1
    %p42 = por %p40, %p41
    %p43 = scmp.ne.s32.totalorder %s35, %s38
    %p44 = scmp.eq.s32.totalorder %s11, 0
    %p45 = por %p43, %p44
    %p46 = scmp.ne.s32.totalorder %s35, %s38
    %p47 = scmp.eq.s32.totalorder %s16, 1
    %p48 = por %p46, %p47
    %p49 = scmp.ne.s32.totalorder %s38, %s39
    %p50 = scmp.eq.s32.totalorder %s16, 0
    %p51 = por %p49, %p50
    %p52 = scmp.ne.s32.totalorder %s38, %s39
    %p53 = scmp.eq.s32.totalorder %s17, 1
    %p54 = por %p52, %p53
    %p56 = scmp.ne.s32.totalorder %s39, %s55
    %p57 = scmp.eq.s32.totalorder %s17, 0
    %p58 = por %p56, %p57
    %s60 = sadd.s32 %s59, 1
    %p63 = scmp.eq.s32.totalorder %s11, 1
    %p64 = scmp.ne.s32.totalorder %s59, %s61
    %p65 = scmp.eq.s32.totalorder %s11, 0
    %p66 = por %p64, %p65
    %p67 = scmp.ne.s32.totalorder %s59, %s61
    %p68 = scmp.eq.s32.totalorder %s16, 1
    %p69 = por %p67, %p68
    %p70 = scmp.ne.s32.totalorder %s61, %s62
    %p71 = scmp.eq.s32.totalorder %s16, 0
    %p72 = por %p70, %p71
    %p73 = scmp.ne.s32.totalorder %s61, %s62
    %p74 = scmp.eq.s32.totalorder %s17, 1
    %p75 = por %p73, %p74
    %p77 = scmp.ne.s32.totalorder %s62, %s76
    %p78 = scmp.eq.s32.totalorder %s17, 0
    %p79 = por %p77, %p78
    %s81 = sadd.s32 %s80, 1
    %p84 = scmp.eq.s32.totalorder %s11, 1
    %p85 = scmp.ne.s32.totalorder %s80, %s82
    %p86 = scmp.eq.s32.totalorder %s11, 0
    %p87 = por %p85, %p86
    %p88 = scmp.ne.s32.totalorder %s80, %s82
    %p89 = scmp.eq.s32.totalorder %s16, 1
    %p90 = por %p88, %p89
    %p91 = scmp.ne.s32.totalorder %s82, %s83
    %p92 = scmp.eq.s32.totalorder %s16, 0
    %p93 = por %p91, %p92
    %p94 = scmp.ne.s32.totalorder %s82, %s83
    %p95 = scmp.eq.s32.totalorder %s17, 1
    %p96 = por %p94, %p95
    %p98 = scmp.ne.s32.totalorder %s83, %s97
    %p99 = scmp.eq.s32.totalorder %s17, 0
    %p100 = por %p98, %p99
    %s102 = sadd.s32 %s101, 1
    %p105 = scmp.eq.s32.totalorder %s11, 1
    %p106 = scmp.ne.s32.totalorder %s101, %s103
    %p107 = scmp.eq.s32.totalorder %s11, 0
    %p108 = por %p106, %p107
    %p109 = scmp.ne.s32.totalorder %s101, %s103
    %p110 = scmp.eq.s32.totalorder %s16, 1
    %p111 = por %p109, %p110
    %p112 = scmp.ne.s32.totalorder %s103, %s104
    %p113 = scmp.eq.s32.totalorder %s16, 0
    %p114 = por %p112, %p113
    %p115 = scmp.ne.s32.totalorder %s103, %s104
    %p116 = scmp.eq.s32.totalorder %s17, 1
    %p117 = por %p115, %p116
    %p119 = scmp.ne.s32.totalorder %s104, %s118
    %p120 = scmp.eq.s32.totalorder %s17, 0
    %p121 = por %p119, %p120
    %s123 = sadd.s32 %s122, 1
    %p126 = scmp.eq.s32.totalorder %s11, 1
    %p127 = scmp.ne.s32.totalorder %s122, %s124
    %p128 = scmp.eq.s32.totalorder %s11, 0
    %p129 = por %p127, %p128
    %p130 = scmp.ne.s32.totalorder %s122, %s124
    %p131 = scmp.eq.s32.totalorder %s16, 1
    %p132 = por %p130, %p131
    %p133 = scmp.ne.s32.totalorder %s124, %s125
    %p134 = scmp.eq.s32.totalorder %s16, 0
    %p135 = por %p133, %p134
    %p136 = scmp.ne.s32.totalorder %s124, %s125
    %p137 = scmp.eq.s32.totalorder %s17, 1
    %p138 = por %p136, %p137
    %p140 = scmp.ne.s32.totalorder %s125, %s139
    %p141 = scmp.eq.s32.totalorder %s17, 0
    %p142 = por %p140, %p141
    %s143 = ssub.s32 %s18, %s30
    %s144 = ssub.s32 %s19, %s26
    %s145 = sor.u32 %s143, %s144
    %p146 = scmp.eq.s32.totalorder %s145, 0
    %s148 = sadd.s32 %s147, 1
    %s149 = scalar_select %p146, %s147, %s148
    %p152 = pneg %p146
    %p153 = scmp.eq.s32.totalorder %s11, 1
    %p154 = por %p152, %p153
    %p155 = scmp.ne.s32.totalorder %s147, %s150
    %p156 = scmp.eq.s32.totalorder %s11, 0
    %p157 = por %p155, %p156
    %p158 = scmp.ne.s32.totalorder %s147, %s150
    %p159 = scmp.eq.s32.totalorder %s16, 1
    %p160 = por %p158, %p159
    %p161 = scmp.ne.s32.totalorder %s150, %s151
    %p162 = scmp.eq.s32.totalorder %s16, 0
    %p163 = por %p161, %p162
    %p164 = scmp.ne.s32.totalorder %s150, %s151
    %p165 = scmp.eq.s32.totalorder %s17, 1
    %p166 = por %p164, %p165
    %p168 = scmp.ne.s32.totalorder %s151, %s167
    %p169 = scmp.eq.s32.totalorder %s17, 0
    %p170 = por %p168, %p169
    %p171 = scmp.le.s32.totalorder 1, %s11
    %p172 = scmp.lt.s32.totalorder %s11, 3
    %p173 = pnand %p171, %p172
    %p174 = pneg %p173
    // Predicated region
    $region9: #{double_conv.5} parent=5 // pred_check
      _
    $region10: #{double_conv.5} parent=5 // pred_check_branch
      %176 = sbr.rel (%p173) target = $region12
    $region11: #{double_conv.5} parent=5 // pred_region
      %s177 = ssub.s32 %s11, 1
      // Predicated region
      $region13: #{double_conv.5} parent=11 // pred_check
        %p178 = pneg %p72
      $region14: #{double_conv.5} parent=11 // pred_check_branch
        %180 = sbr.rel (%p178) target = $region16
      $region15: #{double_conv.5} parent=11 // pred_region
        _
      $region16: #{double_conv.5} parent=11 // pred_fallthru
        _
      // Predicated region
      $region17: #{double_conv.5} parent=11 // pred_check
        %p181 = pneg %p93
      $region18: #{double_conv.5} parent=11 // pred_check_branch
        %183 = sbr.rel (%p181) target = $region20
      $region19: #{double_conv.5} parent=11 // pred_region
        _
      $region20: #{double_conv.5} parent=11 // pred_fallthru
        _
      // Predicated region
      $region21: #{double_conv.5} parent=11 // pred_check
        %p184 = pneg %p114
      $region22: #{double_conv.5} parent=11 // pred_check_branch
        %186 = sbr.rel (%p184) target = $region24
      $region23: #{double_conv.5} parent=11 // pred_region
        _
      $region24: #{double_conv.5} parent=11 // pred_fallthru
        _
      // Predicated region
      $region25: #{double_conv.5} parent=11 // pred_check
        %p187 = pneg %p135
      $region26: #{double_conv.5} parent=11 // pred_check_branch
        %189 = sbr.rel (%p187) target = $region28
      $region27: #{double_conv.5} parent=11 // pred_region
        _
      $region28: #{double_conv.5} parent=11 // pred_fallthru
        _
    $region12: #{double_conv.5} parent=5 // pred_fallthru
      _
    %p190 = scmp.lt.s32.totalorder %s11, 2
    // Predicated region
    $region29: #{double_conv.5} parent=5 // pred_check
      %p191 = pneg %p190
    $region30: #{double_conv.5} parent=5 // pred_check_branch
      %193 = sbr.rel (%p191) target = $region32
    $region31: #{double_conv.5} parent=5 // pred_region
      // Predicated region
      $region33: #{double_conv.5} parent=31 // pred_check
        %p194 = pneg %p45
      $region34: #{double_conv.5} parent=31 // pred_check_branch
        %196 = sbr.rel (%p194) target = $region36
      $region35: #{double_conv.5} parent=31 // pred_region
        %s197 = smul.u32 16, %s19
        %p198 = scmp.lt.s32.totalorder %s18, 1
        %s199 = scalar_select %p198, %s18, 1
        %p200 = scmp.lt.s32.totalorder %s197, 15
        %s201 = scalar_select %p200, %s197, 15
        %s202 = smul.addr %s201, 2
        %s203 = smul.addr %s199, 32
        %s204 = sadd.s32 %s202, %s203
        %s205 = smul.addr %s204, 4
        %s206 = scalar_lea.vmem %s0, %s205
        %s207 = smul.u32 16, %s19
      $region36: #{double_conv.5} parent=31 // pred_fallthru
        _
    $region32: #{double_conv.5} parent=5 // pred_fallthru
      _
    %p208 = scmp.le.s32.totalorder 1, %s11
    %p209 = scmp.lt.s32.totalorder %s11, 3
    %p210 = pnand %p208, %p209
    %p211 = pneg %p210
    // Predicated region
    $region37: #{double_conv.5} parent=5 // pred_check
      _
    $region38: #{double_conv.5} parent=5 // pred_check_branch
      %213 = sbr.rel (%p210) target = $region40
    $region39: #{double_conv.5} parent=5 // pred_region
      %s214 = ssub.s32 %s11, 1
      %s215 = smul.u32 16, %s21
      %p216 = scmp.lt.s32.totalorder %s20, 1
      %s217 = scalar_select %p216, %s20, 1
      %p218 = scmp.lt.s32.totalorder %s215, 15
      %s219 = scalar_select %p218, %s215, 15
      %s220 = smul.addr %s219, 2
      %s221 = smul.addr %s217, 32
      %s222 = sadd.s32 %s220, %s221
      %s223 = smul.addr %s222, 4
      %s224 = scalar_lea.vmem %s0, %s223
      %p225 = pneg %p51
      %p226 = pneg %p48
      %p227 = pneg %p72
      %p228 = pneg %p69
      %p229 = pneg %p93
      %p230 = pneg %p90
      %p231 = pneg %p114
      %p232 = pneg %p111
      %p233 = pneg %p135
      %p234 = pneg %p132
      %p235 = pneg %p163
      %p236 = pneg %p160
      %s237 = smul.u32 16, %s21
      %p238 = scmp.lt.s32.totalorder %s20, 1
      %s239 = scalar_select %p238, %s20, 1
      %p240 = scmp.lt.s32.totalorder %s237, 15
      %s241 = scalar_select %p240, %s237, 15
      %s242 = smul.addr %s241, 2
      %s243 = smul.addr %s239, 32
      %s244 = sadd.s32 %s242, %s243
      %s245 = smul.addr %s244, 8
      %s246 = scalar_lea.vmem %s5, %s245
      %s247 = smul.u32 16, %s21
      %p248 = scmp.lt.s32.totalorder %s20, 1
      %s249 = scalar_select %p248, %s20, 1
      %p250 = scmp.lt.s32.totalorder %s247, 15
      %s251 = scalar_select %p250, %s247, 15
      %s252 = smul.addr %s251, 2
      %s253 = smul.addr %s249, 32
      %s254 = sadd.s32 %s252, %s253
      %s255 = smul.addr %s254, 4
      %s256 = scalar_lea.vmem %s0, %s255
      %s257 = smul.u32 16, %s21
      %s258 = smul.u32 16, %s21
      %p259 = scmp.lt.s32.totalorder %s20, 1
      %s260 = scalar_select %p259, %s20, 1
      %p261 = scmp.lt.s32.totalorder %s258, 15
      %s262 = scalar_select %p261, %s258, 15
      %s263 = smul.addr %s262, 2
      %s264 = smul.addr %s260, 32
      %s265 = sadd.s32 %s263, %s264
      %s266 = smul.addr %s265, 8
      %s267 = scalar_lea.vmem %s5, %s266
      %s268 = smul.u32 16, %s21
      %v269 = vld [vmem:[%s1] sm:$0x1]
      %v270 = vmul.f32 %v269, 0.001953125
      %v271 = vld [vmem:[%s2] sm:$0x1]
      %v272 = vmul.f32 %v271, 0.001953125
      %v273 = vmul.f32 %v270, %v270
      %v274 = vsub.f32 %v272, %v273
      %v275 = vmax.f32 %v274, 0.0
      %v276 = vld [vmem:[%s3] sm:$0x1]
      %v277 = vadd.f32 %v275, 1e-05
      %v278 = vrsqrt.pop %v277
      %v279 = vmul.f32 %v276, %v278
      %v280 = vld [vmem:[%s4] sm:$0x1]
      %v281 = vmul.f32 %v270, %v279
      %v282 = vsub.f32 %v280, %v281
      %v283 = vld [vmem:[%s256] sm:$0xf]
      %v284 = vld [vmem:[%s256 + $0x4] sm:$0xf]
      %v285 = vld [vmem:[%s256 + $0x8] sm:$0xf]
      %v286 = vld [vmem:[%s256 + $0xc] sm:$0xf]
      %v287 = vld [vmem:[%s256 + $0x10] sm:$0xf]
      %v288 = vld [vmem:[%s256 + $0x14] sm:$0xf]
      %v289 = vld [vmem:[%s256 + $0x18] sm:$0xf]
      %v290 = vld [vmem:[%s256 + $0x1c] sm:$0xf]
      %v291 = vld [vmem:[%s256 + $0x20] sm:$0xf]
      %v292 = vld [vmem:[%s256 + $0x24] sm:$0xf]
      %v293 = vld [vmem:[%s256 + $0x28] sm:$0xf]
      %v294 = vld [vmem:[%s256 + $0x2c] sm:$0xf]
      %v295 = vld [vmem:[%s256 + $0x30] sm:$0xf]
      %v296 = vld [vmem:[%s256 + $0x34] sm:$0xf]
      %v297 = vld [vmem:[%s256 + $0x38] sm:$0xf]
      %v298 = vld [vmem:[%s256 + $0x3c] sm:$0xf]
      %v299 = vld [vmem:[%s256 + $0x40] sm:$0xf]
      %v300 = vld [vmem:[%s256 + $0x44] sm:$0xf]
      %v301 = vld [vmem:[%s256 + $0x48] sm:$0xf]
      %v302 = vld [vmem:[%s256 + $0x4c] sm:$0xf]
      %v303 = vld [vmem:[%s256 + $0x50] sm:$0xf]
      %v304 = vld [vmem:[%s256 + $0x54] sm:$0xf]
      %v305 = vld [vmem:[%s256 + $0x58] sm:$0xf]
      %v306 = vld [vmem:[%s256 + $0x5c] sm:$0xf]
      %v307 = vld [vmem:[%s256 + $0x60] sm:$0xf]
      %v308 = vld [vmem:[%s256 + $0x64] sm:$0xf]
      %v309 = vld [vmem:[%s256 + $0x68] sm:$0xf]
      %v310 = vld [vmem:[%s256 + $0x6c] sm:$0xf]
      %v311 = vld [vmem:[%s256 + $0x70] sm:$0xf]
      %v312 = vld [vmem:[%s256 + $0x74] sm:$0xf]
      %v313 = vld [vmem:[%s256 + $0x78] sm:$0xf]
      %v314 = vld [vmem:[%s256 + $0x7c] sm:$0xf]
      %v315 = vunpack.c.l.bf16 %v283
      %v316 = vunpack.c.l.bf16 %v284
      %v317 = vunpack.c.l.bf16 %v285
      %v318 = vunpack.c.l.bf16 %v286
      %v319 = vunpack.c.l.bf16 %v287
      %v320 = vunpack.c.l.bf16 %v288
      %v321 = vunpack.c.l.bf16 %v289
      %v322 = vunpack.c.l.bf16 %v290
      %v323 = vunpack.c.l.bf16 %v291
      %v324 = vunpack.c.l.bf16 %v292
      %v325 = vunpack.c.l.bf16 %v293
      %v326 = vunpack.c.l.bf16 %v294
      %v327 = vunpack.c.l.bf16 %v295
      %v328 = vunpack.c.l.bf16 %v296
      %v329 = vunpack.c.l.bf16 %v297
      %v330 = vunpack.c.l.bf16 %v298
      %v331 = vunpack.c.l.bf16 %v299
      %v332 = vunpack.c.l.bf16 %v300
      %v333 = vunpack.c.l.bf16 %v301
      %v334 = vunpack.c.l.bf16 %v302
      %v335 = vunpack.c.l.bf16 %v303
      %v336 = vunpack.c.l.bf16 %v304
      %v337 = vunpack.c.l.bf16 %v305
      %v338 = vunpack.c.l.bf16 %v306
      %v339 = vunpack.c.l.bf16 %v307
      %v340 = vunpack.c.l.bf16 %v308
      %v341 = vunpack.c.l.bf16 %v309
      %v342 = vunpack.c.l.bf16 %v310
      %v343 = vunpack.c.l.bf16 %v311
      %v344 = vunpack.c.l.bf16 %v312
      %v345 = vunpack.c.l.bf16 %v313
      %v346 = vunpack.c.l.bf16 %v314
      %v348 = vlaneseq
      %v349 = vshrl.u32 %v348, 7
      %v350 = vsub.s32 0, %v349
      %v351 = vrot.slane %v279, %v350
      %v353 = vmul.f32 %v315, %v351
      %v354 = vmul.f32 %v316, %v351
      %v355 = vmul.f32 %v317, %v351
      %v356 = vmul.f32 %v318, %v351
      %v357 = vmul.f32 %v319, %v351
      %v358 = vmul.f32 %v320, %v351
      %v359 = vmul.f32 %v321, %v351
      %v360 = vmul.f32 %v322, %v351
      %v361 = vmul.f32 %v323, %v351
      %v362 = vmul.f32 %v324, %v351
      %v363 = vmul.f32 %v325, %v351
      %v364 = vmul.f32 %v326, %v351
      %v365 = vmul.f32 %v327, %v351
      %v366 = vmul.f32 %v328, %v351
      %v367 = vmul.f32 %v329, %v351
      %v368 = vmul.f32 %v330, %v351
      %v369 = vmul.f32 %v331, %v351
      %v370 = vmul.f32 %v332, %v351
      %v371 = vmul.f32 %v333, %v351
      %v372 = vmul.f32 %v334, %v351
      %v373 = vmul.f32 %v335, %v351
      %v374 = vmul.f32 %v336, %v351
      %v375 = vmul.f32 %v337, %v351
      %v376 = vmul.f32 %v338, %v351
      %v377 = vmul.f32 %v339, %v351
      %v378 = vmul.f32 %v340, %v351
      %v379 = vmul.f32 %v341, %v351
      %v380 = vmul.f32 %v342, %v351
      %v381 = vmul.f32 %v343, %v351
      %v382 = vmul.f32 %v344, %v351
      %v383 = vmul.f32 %v345, %v351
      %v384 = vmul.f32 %v346, %v351
      %v386 = vlaneseq
      %v387 = vshrl.u32 %v386, 7
      %v388 = vsub.s32 0, %v387
      %v389 = vrot.slane %v282, %v388
      %v391 = vadd.f32 %v353, %v389
      %v392 = vadd.f32 %v354, %v389
      %v393 = vadd.f32 %v355, %v389
      %v394 = vadd.f32 %v356, %v389
      %v395 = vadd.f32 %v357, %v389
      %v396 = vadd.f32 %v358, %v389
      %v397 = vadd.f32 %v359, %v389
      %v398 = vadd.f32 %v360, %v389
      %v399 = vadd.f32 %v361, %v389
      %v400 = vadd.f32 %v362, %v389
      %v401 = vadd.f32 %v363, %v389
      %v402 = vadd.f32 %v364, %v389
      %v403 = vadd.f32 %v365, %v389
      %v404 = vadd.f32 %v366, %v389
      %v405 = vadd.f32 %v367, %v389
      %v406 = vadd.f32 %v368, %v389
      %v407 = vadd.f32 %v369, %v389
      %v408 = vadd.f32 %v370, %v389
      %v409 = vadd.f32 %v371, %v389
      %v410 = vadd.f32 %v372, %v389
      %v411 = vadd.f32 %v373, %v389
      %v412 = vadd.f32 %v374, %v389
      %v413 = vadd.f32 %v375, %v389
      %v414 = vadd.f32 %v376, %v389
      %v415 = vadd.f32 %v377, %v389
      %v416 = vadd.f32 %v378, %v389
      %v417 = vadd.f32 %v379, %v389
      %v418 = vadd.f32 %v380, %v389
      %v419 = vadd.f32 %v381, %v389
      %v420 = vadd.f32 %v382, %v389
      %v421 = vadd.f32 %v383, %v389
      %v422 = vadd.f32 %v384, %v389
      %v423 = vmax.f32 %v391, 0.0
      %v424 = vmax.f32 %v392, 0.0
      %v425 = vmax.f32 %v393, 0.0
      %v426 = vmax.f32 %v394, 0.0
      %v427 = vmax.f32 %v395, 0.0
      %v428 = vmax.f32 %v396, 0.0
      %v429 = vmax.f32 %v397, 0.0
      %v430 = vmax.f32 %v398, 0.0
      %v431 = vmax.f32 %v399, 0.0
      %v432 = vmax.f32 %v400, 0.0
      %v433 = vmax.f32 %v401, 0.0
      %v434 = vmax.f32 %v402, 0.0
      %v435 = vmax.f32 %v403, 0.0
      %v436 = vmax.f32 %v404, 0.0
      %v437 = vmax.f32 %v405, 0.0
      %v438 = vmax.f32 %v406, 0.0
      %v439 = vmax.f32 %v407, 0.0
      %v440 = vmax.f32 %v408, 0.0
      %v441 = vmax.f32 %v409, 0.0
      %v442 = vmax.f32 %v410, 0.0
      %v443 = vmax.f32 %v411, 0.0
      %v444 = vmax.f32 %v412, 0.0
      %v445 = vmax.f32 %v413, 0.0
      %v446 = vmax.f32 %v414, 0.0
      %v447 = vmax.f32 %v415, 0.0
      %v448 = vmax.f32 %v416, 0.0
      %v449 = vmax.f32 %v417, 0.0
      %v450 = vmax.f32 %v418, 0.0
      %v451 = vmax.f32 %v419, 0.0
      %v452 = vmax.f32 %v420, 0.0
      %v453 = vmax.f32 %v421, 0.0
      %v454 = vmax.f32 %v422, 0.0
      %455 = vst [vmem:[%s267] sm:$0xff] %v423
      %456 = vst [vmem:[%s267 + $0x8] sm:$0xff] %v424
      %457 = vst [vmem:[%s267 + $0x10] sm:$0xff] %v425
      %458 = vst [vmem:[%s267 + $0x18] sm:$0xff] %v426
      %459 = vst [vmem:[%s267 + $0x20] sm:$0xff] %v427
      %460 = vst [vmem:[%s267 + $0x28] sm:$0xff] %v428
      %461 = vst [vmem:[%s267 + $0x30] sm:$0xff] %v429
      %462 = vst [vmem:[%s267 + $0x38] sm:$0xff] %v430
      %463 = vst [vmem:[%s267 + $0x40] sm:$0xff] %v431
      %464 = vst [vmem:[%s267 + $0x48] sm:$0xff] %v432
      %465 = vst [vmem:[%s267 + $0x50] sm:$0xff] %v433
      %466 = vst [vmem:[%s267 + $0x58] sm:$0xff] %v434
      %467 = vst [vmem:[%s267 + $0x60] sm:$0xff] %v435
      %468 = vst [vmem:[%s267 + $0x68] sm:$0xff] %v436
      %469 = vst [vmem:[%s267 + $0x70] sm:$0xff] %v437
      %470 = vst [vmem:[%s267 + $0x78] sm:$0xff] %v438
      %471 = vst [vmem:[%s267 + $0x80] sm:$0xff] %v439
      %472 = vst [vmem:[%s267 + $0x88] sm:$0xff] %v440
      %473 = vst [vmem:[%s267 + $0x90] sm:$0xff] %v441
      %474 = vst [vmem:[%s267 + $0x98] sm:$0xff] %v442
      %475 = vst [vmem:[%s267 + $0xa0] sm:$0xff] %v443
      %476 = vst [vmem:[%s267 + $0xa8] sm:$0xff] %v444
      %477 = vst [vmem:[%s267 + $0xb0] sm:$0xff] %v445
      %478 = vst [vmem:[%s267 + $0xb8] sm:$0xff] %v446
      %479 = vst [vmem:[%s267 + $0xc0] sm:$0xff] %v447
      %480 = vst [vmem:[%s267 + $0xc8] sm:$0xff] %v448
      %481 = vst [vmem:[%s267 + $0xd0] sm:$0xff] %v449
      %482 = vst [vmem:[%s267 + $0xd8] sm:$0xff] %v450
      %483 = vst [vmem:[%s267 + $0xe0] sm:$0xff] %v451
      %484 = vst [vmem:[%s267 + $0xe8] sm:$0xff] %v452
      %485 = vst [vmem:[%s267 + $0xf0] sm:$0xff] %v453
      %486 = vst [vmem:[%s267 + $0xf8] sm:$0xff] %v454
      %s487 = smul.u32 16, %s21
      %p488 = scmp.lt.s32.totalorder %s20, 1
      %s489 = scalar_select %p488, %s20, 1
      %p490 = scmp.lt.s32.totalorder %s487, 15
      %s491 = scalar_select %p490, %s487, 15
      %s492 = smul.addr %s491, 2
      %s493 = smul.addr %s489, 32
      %s494 = sadd.s32 %s492, %s493
      %s495 = smul.addr %s494, 8
      %s496 = scalar_lea.vmem %s5, %s495
      // Predicated region
      $region41: #{double_conv.5} parent=39 // pred_check
        %p497 = pneg %p160
      $region42: #{double_conv.5} parent=39 // pred_check_branch
        %499 = sbr.rel (%p497) target = $region44
      $region43: #{double_conv.5} parent=39 // pred_region
        %s500 = smul.u32 16, %s21
      $region44: #{double_conv.5} parent=39 // pred_fallthru
        _
    $region40: #{double_conv.5} parent=5 // pred_fallthru
      _
    %p501 = scmp.le.s32.totalorder 2, %s11
    // Predicated region
    $region45: #{double_conv.5} parent=5 // pred_check
      %p502 = pneg %p501
    $region46: #{double_conv.5} parent=5 // pred_check_branch
      %504 = sbr.rel (%p502) target = $region48
    $region47: #{double_conv.5} parent=5 // pred_region
      %s505 = ssub.s32 %s11, 2
      // Predicated region
      $region49: #{double_conv.5} parent=47 // pred_check
        %p506 = pneg %p166
      $region50: #{double_conv.5} parent=47 // pred_check_branch
        %508 = sbr.rel (%p506) target = $region52
      $region51: #{double_conv.5} parent=47 // pred_region
        %s509 = smul.u32 16, %s23
        %p510 = scmp.lt.s32.totalorder %s22, 1
        %s511 = scalar_select %p510, %s22, 1
        %p512 = scmp.lt.s32.totalorder %s509, 15
        %s513 = scalar_select %p512, %s509, 15
        %s514 = smul.addr %s513, 2
        %s515 = smul.addr %s511, 32
        %s516 = sadd.s32 %s514, %s515
        %s517 = smul.addr %s516, 8
        %s518 = scalar_lea.vmem %s5, %s517
      $region52: #{double_conv.5} parent=47 // pred_fallthru
        _
    $region48: #{double_conv.5} parent=5 // pred_fallthru
      _
  $region6: #{double_conv.5} parent=0 // loop_footer
    %s15 = sadd.s32 1, %s11
  $region7: #{double_conv.5} parent=0 // loop_footer_branch
    %10 = sbr.rel target = $region3
  $region8: #{double_conv.5} parent=0 // loop_exit
    _

// kernel: double_conv.3
$region0: #{double_conv.3}
  #allocation0 [shape = 'u32[]', space=smem, size = 0x4, offset = 0x4, fixed_abs, tag = 'smem constant byte address 0x4 - core index']
  #allocation1 [shape = 'u32[144,128]{1,0:T(1,128)}', space=vmem, size = 0x12000, scoped, tag = 'internal scratch']
  %s0 = inlined_call_operand.vmem [shape: bf16[2,16,16,128], index: 0, kind: input, shape index: {}]
  %s1 = inlined_call_operand.vmem [shape: bf16[9,128,128], index: 1, kind: input, shape index: {}]
  %s2 = inlined_call_operand.vmem [shape: bf16[2,16,16,128], index: 2, kind: output, shape index: {0}]
  %s3 = inlined_call_operand.vmem [shape: f32[1,128], index: 3, kind: output, shape index: {1}]
  %s4 = inlined_call_operand.vmem [shape: f32[1,128], index: 4, kind: output, shape index: {2}]
  %5 = xla_tuple %s2, %s3, %s4
  %s6 = sld [smem:[#allocation0]]
  $region61: #{double_conv.3} parent=0
    _
  %s8 = ssub.s32 1, %s6
  %s9 = scalar_select 0, %s8, %s6
  loop: start=0, step=1, limit=4
  $region2: #{double_conv.3} parent=0 // loop_pre_header
    _
  $region3: #{double_conv.3} parent=0 // loop_header
    %s11 = sphi 0, %s15
    %p12 = scmp.ge.s32.totalorder %s11, 4
    %s18 = sphi 0, %s30
    %s19 = sphi 0, %s26
    %s20 = sphi 0, %s18
    %s21 = sphi 0, %s19
    %s22 = sphi 0, %s20
    %s23 = sphi 0, %s21
    %s33 = sphi 0, %s35
    %s36 = sphi 0, %s33
    %s37 = sphi 0, %s36
    %s53 = sphi 0, %s37
    %s59 = sphi 0, %s61
    %s62 = sphi 0, %s59
    %s63 = sphi 0, %s62
    %s79 = sphi 0, %s63
    %s87 = sphi 0, %s89
    %s90 = sphi 0, %s87
    %s91 = sphi 0, %s90
    %s107 = sphi 0, %s91
    %s113 = sphi 0, %s115
    %s116 = sphi 0, %s113
    %s117 = sphi 0, %s116
    %s133 = sphi 0, %s117
    %s139 = sphi 0, %s141
    %s142 = sphi 0, %s139
    %s143 = sphi 0, %s142
    %s159 = sphi 0, %s143
  $region4: #{double_conv.3} parent=0 // loop_header_branch
    %14 = sbr.rel (%p12) target = $region8
  $region5: #{double_conv.3} parent=0 // loop_body
    %s16 = ssub.s32 %s11, 1
    %s17 = ssub.s32 %s11, 2
    %s24 = sadd.s32 1, %s19
    %p25 = scmp.ge.s32.totalorder %s24, 2
    %s26 = scalar_select %p25, 0, %s24
    %s27 = sadd.s32 1, %s18
    %s28 = scalar_select %p25, %s27, %s18
    %p29 = scmp.ge.s32.totalorder %s28, 1
    %s30 = scalar_select %p29, 0, %s28
    %s31 = ssub.s32 %s19, %s26
    %p32 = scmp.eq.s32.totalorder %s31, 0
    %s34 = sadd.s32 %s33, 1
    %s35 = scalar_select %p32, %s33, %s34
    %p38 = pneg %p32
    %p39 = scmp.eq.s32.totalorder %s11, 1
    %p40 = por %p38, %p39
    %p41 = scmp.ne.s32.totalorder %s33, %s36
    %p42 = scmp.eq.s32.totalorder %s11, 0
    %p43 = por %p41, %p42
    %p44 = scmp.ne.s32.totalorder %s33, %s36
    %p45 = scmp.eq.s32.totalorder %s16, 1
    %p46 = por %p44, %p45
    %p47 = scmp.ne.s32.totalorder %s36, %s37
    %p48 = scmp.eq.s32.totalorder %s16, 0
    %p49 = por %p47, %p48
    %p50 = scmp.ne.s32.totalorder %s36, %s37
    %p51 = scmp.eq.s32.totalorder %s17, 1
    %p52 = por %p50, %p51
    %p54 = scmp.ne.s32.totalorder %s37, %s53
    %p55 = scmp.eq.s32.totalorder %s17, 0
    %p56 = por %p54, %p55
    %s57 = ssub.s32 %s18, %s30
    %p58 = scmp.eq.s32.totalorder %s57, 0
    %s60 = sadd.s32 %s59, 1
    %s61 = scalar_select %p58, %s59, %s60
    %p64 = pneg %p58
    %p65 = scmp.eq.s32.totalorder %s11, 1
    %p66 = por %p64, %p65
    %p67 = scmp.ne.s32.totalorder %s59, %s62
    %p68 = scmp.eq.s32.totalorder %s11, 0
    %p69 = por %p67, %p68
    %p70 = scmp.ne.s32.totalorder %s59, %s62
    %p71 = scmp.eq.s32.totalorder %s16, 1
    %p72 = por %p70, %p71
    %p73 = scmp.ne.s32.totalorder %s62, %s63
    %p74 = scmp.eq.s32.totalorder %s16, 0
    %p75 = por %p73, %p74
    %p76 = scmp.ne.s32.totalorder %s62, %s63
    %p77 = scmp.eq.s32.totalorder %s17, 1
    %p78 = por %p76, %p77
    %p80 = scmp.ne.s32.totalorder %s63, %s79
    %p81 = scmp.eq.s32.totalorder %s17, 0
    %p82 = por %p80, %p81
    %s83 = ssub.s32 %s19, %s26
    %s84 = ssub.s32 %s18, %s30
    %s85 = sor.u32 %s83, %s84
    %p86 = scmp.eq.s32.totalorder %s85, 0
    %s88 = sadd.s32 %s87, 1
    %s89 = scalar_select %p86, %s87, %s88
    %p92 = pneg %p86
    %p93 = scmp.eq.s32.totalorder %s11, 1
    %p94 = por %p92, %p93
    %p95 = scmp.ne.s32.totalorder %s87, %s90
    %p96 = scmp.eq.s32.totalorder %s11, 0
    %p97 = por %p95, %p96
    %p98 = scmp.ne.s32.totalorder %s87, %s90
    %p99 = scmp.eq.s32.totalorder %s16, 1
    %p100 = por %p98, %p99
    %p101 = scmp.ne.s32.totalorder %s90, %s91
    %p102 = scmp.eq.s32.totalorder %s16, 0
    %p103 = por %p101, %p102
    %p104 = scmp.ne.s32.totalorder %s90, %s91
    %p105 = scmp.eq.s32.totalorder %s17, 1
    %p106 = por %p104, %p105
    %p108 = scmp.ne.s32.totalorder %s91, %s107
    %p109 = scmp.eq.s32.totalorder %s17, 0
    %p110 = por %p108, %p109
    %s111 = ssub.s32 %s18, %s30
    %p112 = scmp.eq.s32.totalorder %s111, 0
    %s114 = sadd.s32 %s113, 1
    %s115 = scalar_select %p112, %s113, %s114
    %p118 = pneg %p112
    %p119 = scmp.eq.s32.totalorder %s11, 1
    %p120 = por %p118, %p119
    %p121 = scmp.ne.s32.totalorder %s113, %s116
    %p122 = scmp.eq.s32.totalorder %s11, 0
    %p123 = por %p121, %p122
    %p124 = scmp.ne.s32.totalorder %s113, %s116
    %p125 = scmp.eq.s32.totalorder %s16, 1
    %p126 = por %p124, %p125
    %p127 = scmp.ne.s32.totalorder %s116, %s117
    %p128 = scmp.eq.s32.totalorder %s16, 0
    %p129 = por %p127, %p128
    %p130 = scmp.ne.s32.totalorder %s116, %s117
    %p131 = scmp.eq.s32.totalorder %s17, 1
    %p132 = por %p130, %p131
    %p134 = scmp.ne.s32.totalorder %s117, %s133
    %p135 = scmp.eq.s32.totalorder %s17, 0
    %p136 = por %p134, %p135
    %s137 = ssub.s32 %s18, %s30
    %p138 = scmp.eq.s32.totalorder %s137, 0
    %s140 = sadd.s32 %s139, 1
    %s141 = scalar_select %p138, %s139, %s140
    %p144 = pneg %p138
    %p145 = scmp.eq.s32.totalorder %s11, 1
    %p146 = por %p144, %p145
    %p147 = scmp.ne.s32.totalorder %s139, %s142
    %p148 = scmp.eq.s32.totalorder %s11, 0
    %p149 = por %p147, %p148
    %p150 = scmp.ne.s32.totalorder %s139, %s142
    %p151 = scmp.eq.s32.totalorder %s16, 1
    %p152 = por %p150, %p151
    %p153 = scmp.ne.s32.totalorder %s142, %s143
    %p154 = scmp.eq.s32.totalorder %s16, 0
    %p155 = por %p153, %p154
    %p156 = scmp.ne.s32.totalorder %s142, %s143
    %p157 = scmp.eq.s32.totalorder %s17, 1
    %p158 = por %p156, %p157
    %p160 = scmp.ne.s32.totalorder %s143, %s159
    %p161 = scmp.eq.s32.totalorder %s17, 0
    %p162 = por %p160, %p161
    %p163 = scmp.le.s32.totalorder 1, %s11
    %p164 = scmp.lt.s32.totalorder %s11, 3
    %p165 = pnand %p163, %p164
    %p166 = pneg %p165
    // Predicated region
    $region9: #{double_conv.3} parent=5 // pred_check
      _
    $region10: #{double_conv.3} parent=5 // pred_check_branch
      %168 = sbr.rel (%p165) target = $region12
    $region11: #{double_conv.3} parent=5 // pred_region
      %s169 = ssub.s32 %s11, 1
      // Predicated region
      $region13: #{double_conv.3} parent=11 // pred_check
        %p170 = pneg %p75
      $region14: #{double_conv.3} parent=11 // pred_check_branch
        %172 = sbr.rel (%p170) target = $region16
      $region15: #{double_conv.3} parent=11 // pred_region
        %p173 = scmp.lt.s32.totalorder %s20, 0
        %s174 = scalar_select %p173, %s20, 0
        %s175 = smul.addr %s174, 4
        %s176 = scalar_lea.vmem %s1, %s175
      $region16: #{double_conv.3} parent=11 // pred_fallthru
        _
    $region12: #{double_conv.3} parent=5 // pred_fallthru
      _
    %p177 = scmp.lt.s32.totalorder %s11, 2
    // Predicated region
    $region17: #{double_conv.3} parent=5 // pred_check
      %p178 = pneg %p177
    $region18: #{double_conv.3} parent=5 // pred_check_branch
      %180 = sbr.rel (%p178) target = $region20
    $region19: #{double_conv.3} parent=5 // pred_region
      // Predicated region
      $region21: #{double_conv.3} parent=19 // pred_check
        %p181 = pneg %p43
      $region22: #{double_conv.3} parent=19 // pred_check_branch
        %183 = sbr.rel (%p181) target = $region24
      $region23: #{double_conv.3} parent=19 // pred_region
        %p184 = scmp.lt.s32.totalorder %s19, 1
        %s185 = scalar_select %p184, %s19, 1
        %s186 = smul.addr %s185, 32
        %s187 = smul.addr %s186, 4
        %s188 = scalar_lea.vmem %s0, %s187
      $region24: #{double_conv.3} parent=19 // pred_fallthru
        _
    $region20: #{double_conv.3} parent=5 // pred_fallthru
      _
    %p189 = scmp.le.s32.totalorder 1, %s11
    %p190 = scmp.lt.s32.totalorder %s11, 3
    %p191 = pnand %p189, %p190
    %p192 = pneg %p191
    // Predicated region
    $region25: #{double_conv.3} parent=5 // pred_check
      _
    $region26: #{double_conv.3} parent=5 // pred_check_branch
      %194 = sbr.rel (%p191) target = $region28
    $region27: #{double_conv.3} parent=5 // pred_region
      %s195 = ssub.s32 %s11, 1
      %p196 = scmp.lt.s32.totalorder %s21, 1
      %s197 = scalar_select %p196, %s21, 1
      %s198 = smul.addr %s197, 32
      %s199 = smul.addr %s198, 4
      %s200 = scalar_lea.vmem %s0, %s199
      %p201 = pneg %p49
      %p202 = pneg %p46
      %p203 = scmp.lt.s32.totalorder %s20, 0
      %s204 = scalar_select %p203, %s20, 0
      %s205 = smul.addr %s204, 4
      %s206 = scalar_lea.vmem %s1, %s205
      %p207 = pneg %p75
      %p208 = pneg %p72
      %p209 = pneg %p103
      %p210 = pneg %p100
      %p211 = scmp.lt.s32.totalorder %s21, 1
      %s212 = scalar_select %p211, %s21, 1
      %p213 = scmp.lt.s32.totalorder %s20, 0
      %s214 = scalar_select %p213, %s20, 0
      %s215 = smul.addr %s212, 32
      %s216 = sadd.s32 %s214, %s215
      %s217 = smul.addr %s216, 4
      %s218 = scalar_lea.vmem %s2, %s217
      %p219 = pneg %p129
      %p220 = pneg %p126
      %p221 = scmp.lt.s32.totalorder %s20, 0
      %s222 = scalar_select %p221, %s20, 0
      %s223 = scalar_lea.vmem %s3, %s222
      %p224 = pneg %p155
      %p225 = pneg %p152
      %p226 = scmp.lt.s32.totalorder %s20, 0
      %s227 = scalar_select %p226, %s20, 0
      %s228 = scalar_lea.vmem %s4, %s227
      %p229 = scmp.lt.s32.totalorder %s21, 1
      %s230 = scalar_select %p229, %s21, 1
      %s231 = smul.addr %s230, 32
      %s232 = smul.addr %s231, 4
      %s233 = scalar_lea.vmem %s0, %s232
      %p234 = scmp.lt.s32.totalorder %s20, 0
      %s235 = scalar_select %p234, %s20, 0
      %s236 = smul.addr %s235, 4
      %s237 = scalar_lea.vmem %s1, %s236
      %p238 = scmp.lt.s32.totalorder %s21, 1
      %s239 = scalar_select %p238, %s21, 1
      %p240 = scmp.lt.s32.totalorder %s20, 0
      %s241 = scalar_select %p240, %s20, 0
      %s242 = smul.addr %s239, 32
      %s243 = sadd.s32 %s241, %s242
      %s244 = smul.addr %s243, 4
      %s245 = scalar_lea.vmem %s2, %s244
      %p246 = scmp.lt.s32.totalorder %s20, 0
      %s247 = scalar_select %p246, %s20, 0
      %s248 = scalar_lea.vmem %s3, %s247
      %p249 = scmp.lt.s32.totalorder %s20, 0
      %s250 = scalar_select %p249, %s20, 0
      %s251 = scalar_lea.vmem %s4, %s250
      %p253 = scmp.eq.s32.totalorder %s21, 0
      // Predicated region
      $region29: #{double_conv.3} parent=27 // pred_check
        %p254 = pneg %p253
      $region30: #{double_conv.3} parent=27 // pred_check_branch
        %256 = sbr.rel (%p254) target = $region32
      $region31: #{double_conv.3} parent=27 // pred_region
        %257 = vst [vmem:[%s248] sm:$0x1] 0.0
        %258 = vst [vmem:[%s251] sm:$0x1] 0.0
      $region32: #{double_conv.3} parent=27 // pred_fallthru
        _
      %v259 = vld [vmem:[%s233] sm:$0xf]
      %v260 = vld [vmem:[%s233 + $0x4] sm:$0xf]
      %v261 = vld [vmem:[%s233 + $0x8] sm:$0xf]
      %v262 = vld [vmem:[%s233 + $0xc] sm:$0xf]
      %v263 = vld [vmem:[%s233 + $0x10] sm:$0xf]
      %v264 = vld [vmem:[%s233 + $0x14] sm:$0xf]
      %v265 = vld [vmem:[%s233 + $0x18] sm:$0xf]
      %v266 = vld [vmem:[%s233 + $0x1c] sm:$0xf]
      %v267 = vld [vmem:[%s233 + $0x20] sm:$0xf]
      %v268 = vld [vmem:[%s233 + $0x24] sm:$0xf]
      %v269 = vld [vmem:[%s233 + $0x28] sm:$0xf]
      %v270 = vld [vmem:[%s233 + $0x2c] sm:$0xf]
      %v271 = vld [vmem:[%s233 + $0x30] sm:$0xf]
      %v272 = vld [vmem:[%s233 + $0x34] sm:$0xf]
      %v273 = vld [vmem:[%s233 + $0x38] sm:$0xf]
      %v274 = vld [vmem:[%s233 + $0x3c] sm:$0xf]
      %v275 = vld [vmem:[%s233 + $0x40] sm:$0xf]
      %v276 = vld [vmem:[%s233 + $0x44] sm:$0xf]
      %v277 = vld [vmem:[%s233 + $0x48] sm:$0xf]
      %v278 = vld [vmem:[%s233 + $0x4c] sm:$0xf]
      %v279 = vld [vmem:[%s233 + $0x50] sm:$0xf]
      %v280 = vld [vmem:[%s233 + $0x54] sm:$0xf]
      %v281 = vld [vmem:[%s233 + $0x58] sm:$0xf]
      %v282 = vld [vmem:[%s233 + $0x5c] sm:$0xf]
      %v283 = vld [vmem:[%s233 + $0x60] sm:$0xf]
      %v284 = vld [vmem:[%s233 + $0x64] sm:$0xf]
      %v285 = vld [vmem:[%s233 + $0x68] sm:$0xf]
      %v286 = vld [vmem:[%s233 + $0x6c] sm:$0xf]
      %v287 = vld [vmem:[%s233 + $0x70] sm:$0xf]
      %v288 = vld [vmem:[%s233 + $0x74] sm:$0xf]
      %v289 = vld [vmem:[%s233 + $0x78] sm:$0xf]
      %v290 = vld [vmem:[%s233 + $0x7c] sm:$0xf]
      %v323 = vunpack.c.l.b16 %v259
      %v324 = vunpack.c.l.b16 %v260
      %v325 = vunpack.c.l.b16 %v261
      %v326 = vunpack.c.l.b16 %v262
      %v327 = vunpack.c.l.b16 %v263
      %v328 = vunpack.c.l.b16 %v264
      %v329 = vunpack.c.l.b16 %v265
      %v330 = vunpack.c.l.b16 %v266
      %v331 = vunpack.c.l.b16 %v267
      %v332 = vunpack.c.l.b16 %v268
      %v333 = vunpack.c.l.b16 %v269
      %v334 = vunpack.c.l.b16 %v270
      %v335 = vunpack.c.l.b16 %v271
      %v336 = vunpack.c.l.b16 %v272
      %v337 = vunpack.c.l.b16 %v273
      %v338 = vunpack.c.l.b16 %v274
      %v339 = vunpack.c.l.b16 %v275
      %v340 = vunpack.c.l.b16 %v276
      %v341 = vunpack.c.l.b16 %v277
      %v342 = vunpack.c.l.b16 %v278
      %v343 = vunpack.c.l.b16 %v279
      %v344 = vunpack.c.l.b16 %v280
      %v345 = vunpack.c.l.b16 %v281
      %v346 = vunpack.c.l.b16 %v282
      %v347 = vunpack.c.l.b16 %v283
      %v348 = vunpack.c.l.b16 %v284
      %v349 = vunpack.c.l.b16 %v285
      %v350 = vunpack.c.l.b16 %v286
      %v351 = vunpack.c.l.b16 %v287
      %v352 = vunpack.c.l.b16 %v288
      %v353 = vunpack.c.l.b16 %v289
      %v354 = vunpack.c.l.b16 %v290
      %v355 = vpack.c.b16 %v324, %v323
      %v356 = vpack.c.b16 %v326, %v325
      %v357 = vpack.c.b16 %v328, %v327
      %v358 = vpack.c.b16 %v330, %v329
      %v359 = vpack.c.b16 %v332, %v331
      %v360 = vpack.c.b16 %v334, %v333
      %v361 = vpack.c.b16 %v336, %v335
      %v362 = vpack.c.b16 %v338, %v337
      %v363 = vpack.c.b16 %v340, %v339
      %v364 = vpack.c.b16 %v342, %v341
      %v365 = vpack.c.b16 %v344, %v343
      %v366 = vpack.c.b16 %v346, %v345
      %v367 = vpack.c.b16 %v348, %v347
      %v368 = vpack.c.b16 %v350, %v349
      %v369 = vpack.c.b16 %v352, %v351
      %v370 = vpack.c.b16 %v354, %v353
      %v372 = vshrl.u32 0, 16
      %v374 = vrot.slane %v372, 7
      %v375 = vshll.u32 0, 16
      %v377 = vor.u32 %v374, %v375
      %v379 = vshrl.u32 %v355, 16
      %v381 = vrot.slane %v379, 7
      %v382 = vshll.u32 %v355, 16
      %v384 = vor.u32 %v381, %v382
      %v386 = vshrl.u32 %v356, 16
      %v388 = vrot.slane %v386, 7
      %v389 = vshll.u32 %v356, 16
      %v391 = vor.u32 %v388, %v389
      %v393 = vshrl.u32 %v357, 16
      %v395 = vrot.slane %v393, 7
      %v396 = vshll.u32 %v357, 16
      %v398 = vor.u32 %v395, %v396
      %v400 = vshrl.u32 %v358, 16
      %v402 = vrot.slane %v400, 7
      %v403 = vshll.u32 %v358, 16
      %v405 = vor.u32 %v402, %v403
      %v407 = vshrl.u32 %v359, 16
      %v409 = vrot.slane %v407, 7
      %v410 = vshll.u32 %v359, 16
      %v412 = vor.u32 %v409, %v410
      %v414 = vshrl.u32 %v360, 16
      %v416 = vrot.slane %v414, 7
      %v417 = vshll.u32 %v360, 16
      %v419 = vor.u32 %v416, %v417
      %v421 = vshrl.u32 %v361, 16
      %v423 = vrot.slane %v421, 7
      %v424 = vshll.u32 %v361, 16
      %v426 = vor.u32 %v423, %v424
      %v428 = vshrl.u32 %v362, 16
      %v430 = vrot.slane %v428, 7
      %v431 = vshll.u32 %v362, 16
      %v433 = vor.u32 %v430, %v431
      %v435 = vshrl.u32 %v363, 16
      %v437 = vrot.slane %v435, 7
      %v438 = vshll.u32 %v363, 16
      %v440 = vor.u32 %v437, %v438
      %v442 = vshrl.u32 %v364, 16
      %v444 = vrot.slane %v442, 7
      %v445 = vshll.u32 %v364, 16
      %v447 = vor.u32 %v444, %v445
      %v449 = vshrl.u32 %v365, 16
      %v451 = vrot.slane %v449, 7
      %v452 = vshll.u32 %v365, 16
      %v454 = vor.u32 %v451, %v452
      %v456 = vshrl.u32 %v366, 16
      %v458 = vrot.slane %v456, 7
      %v459 = vshll.u32 %v366, 16
      %v461 = vor.u32 %v458, %v459
      %v463 = vshrl.u32 %v367, 16
      %v465 = vrot.slane %v463, 7
      %v466 = vshll.u32 %v367, 16
      %v468 = vor.u32 %v465, %v466
      %v470 = vshrl.u32 %v368, 16
      %v472 = vrot.slane %v470, 7
      %v473 = vshll.u32 %v368, 16
      %v475 = vor.u32 %v472, %v473
      %v477 = vshrl.u32 %v369, 16
      %v479 = vrot.slane %v477, 7
      %v480 = vshll.u32 %v369, 16
      %v482 = vor.u32 %v479, %v480
      %v484 = vshrl.u32 %v370, 16
      %v486 = vrot.slane %v484, 7
      %v487 = vshll.u32 %v370, 16
      %v489 = vor.u32 %v486, %v487
      %vm524 = vcmask 1040384
      %vm525 = vsmask.f32 256
      %vm526 = vmand %vm524, %vm525
      %v527 = vsel %vm526, 0, %v377
      %v528 = vsel %vm526, 0, %v384
      %v529 = vsel %vm526, 0, %v391
      %v530 = vsel %vm526, 0, %v398
      %v531 = vsel %vm526, 0, %v405
      %v532 = vsel %vm526, 0, %v412
      %v533 = vsel %vm526, 0, %v419
      %v534 = vsel %vm526, 0, %v426
      %v535 = vsel %vm526, 0, %v433
      %v536 = vsel %vm526, 0, %v440
      %v537 = vsel %vm526, 0, %v447
      %v538 = vsel %vm526, 0, %v454
      %v539 = vsel %vm526, 0, %v461
      %v540 = vsel %vm526, 0, %v468
      %v541 = vsel %vm526, 0, %v475
      %v542 = vsel %vm526, 0, %v482
      %v543 = vsel %vm526, 0, %v489
      %v544 = vsel %vm526, %v374, 0
      %v545 = vsel %vm526, %v381, 0
      %v546 = vsel %vm526, %v388, 0
      %v547 = vsel %vm526, %v395, 0
      %v548 = vsel %vm526, %v402, 0
      %v549 = vsel %vm526, %v409, 0
      %v550 = vsel %vm526, %v416, 0
      %v551 = vsel %vm526, %v423, 0
      %v552 = vsel %vm526, %v430, 0
      %v553 = vsel %vm526, %v437, 0
      %v554 = vsel %vm526, %v444, 0
      %v555 = vsel %vm526, %v451, 0
      %v556 = vsel %vm526, %v458, 0
      %v557 = vsel %vm526, %v465, 0
      %v558 = vsel %vm526, %v472, 0
      %v559 = vsel %vm526, %v479, 0
      %v560 = vsel %vm526, %v486, 0
      %v561 = vld [vmem:[%s237] sm:$0xf]
      %v562 = vld [vmem:[%s237 + $0x4] sm:$0xf]
      %v563 = vld [vmem:[%s237 + $0x8] sm:$0xf]
      %v564 = vld [vmem:[%s237 + $0xc] sm:$0xf]
      %v565 = vld [vmem:[%s237 + $0x10] sm:$0xf]
      %v566 = vld [vmem:[%s237 + $0x14] sm:$0xf]
      %v567 = vld [vmem:[%s237 + $0x18] sm:$0xf]
      %v568 = vld [vmem:[%s237 + $0x1c] sm:$0xf]
      %v569 = vld [vmem:[%s237 + $0x20] sm:$0xf]
      %v570 = vld [vmem:[%s237 + $0x24] sm:$0xf]
      %v571 = vld [vmem:[%s237 + $0x28] sm:$0xf]
      %v572 = vld [vmem:[%s237 + $0x2c] sm:$0xf]
      %v573 = vld [vmem:[%s237 + $0x30] sm:$0xf]
      %v574 = vld [vmem:[%s237 + $0x34] sm:$0xf]
      %v575 = vld [vmem:[%s237 + $0x38] sm:$0xf]
      %v576 = vld [vmem:[%s237 + $0x3c] sm:$0xf]
      %vm577 = vsmask.f32 7424
      %v579 = vshrl.u32 %v527, 16
      %v581 = vshll.u32 %v527, 16
      %v583 = vrot.slane %v581, 1
      %v584 = vor.u32 %v579, %v583
      %v586 = vshll.u32 %v544, 16
      %v588 = vrot.slane %v586, 1
      %v589 = vsel %vm577, %v584, %v588
      %v591 = vshrl.u32 %v528, 16
      %v593 = vshll.u32 %v528, 16
      %v595 = vrot.slane %v593, 1
      %v596 = vor.u32 %v591, %v595
      %v598 = vshll.u32 %v545, 16
      %v600 = vrot.slane %v598, 1
      %v601 = vsel %vm577, %v596, %v600
      %v603 = vshrl.u32 %v529, 16
      %v605 = vshll.u32 %v529, 16
      %v607 = vrot.slane %v605, 1
      %v608 = vor.u32 %v603, %v607
      %v610 = vshll.u32 %v546, 16
      %v612 = vrot.slane %v610, 1
      %v613 = vsel %vm577, %v608, %v612
      %v615 = vshrl.u32 %v530, 16
      %v617 = vshll.u32 %v530, 16
      %v619 = vrot.slane %v617, 1
      %v620 = vor.u32 %v615, %v619
      %v622 = vshll.u32 %v547, 16
      %v624 = vrot.slane %v622, 1
      %v625 = vsel %vm577, %v620, %v624
      %v627 = vshrl.u32 %v531, 16
      %v629 = vshll.u32 %v531, 16
      %v631 = vrot.slane %v629, 1
      %v632 = vor.u32 %v627, %v631
      %v634 = vshll.u32 %v548, 16
      %v636 = vrot.slane %v634, 1
      %v637 = vsel %vm577, %v632, %v636
      %v639 = vshrl.u32 %v532, 16
      %v641 = vshll.u32 %v532, 16
      %v643 = vrot.slane %v641, 1
      %v644 = vor.u32 %v639, %v643
      %v646 = vshll.u32 %v549, 16
      %v648 = vrot.slane %v646, 1
      %v649 = vsel %vm577, %v644, %v648
      %v651 = vshrl.u32 %v533, 16
      %v653 = vshll.u32 %v533, 16
      %v655 = vrot.slane %v653, 1
      %v656 = vor.u32 %v651, %v655
      %v658 = vshll.u32 %v550, 16
      %v660 = vrot.slane %v658, 1
      %v661 = vsel %vm577, %v656, %v660
      %v663 = vshrl.u32 %v534, 16
      %v665 = vshll.u32 %v534, 16
      %v667 = vrot.slane %v665, 1
      %v668 = vor.u32 %v663, %v667
      %v670 = vshll.u32 %v551, 16
      %v672 = vrot.slane %v670, 1
      %v673 = vsel %vm577, %v668, %v672
      %v675 = vshrl.u32 %v535, 16
      %v677 = vshll.u32 %v535, 16
      %v679 = vrot.slane %v677, 1
      %v680 = vor.u32 %v675, %v679
      %v682 = vshll.u32 %v552, 16
      %v684 = vrot.slane %v682, 1
      %v685 = vsel %vm577, %v680, %v684
      %v687 = vshrl.u32 %v536, 16
      %v689 = vshll.u32 %v536, 16
      %v691 = vrot.slane %v689, 1
      %v692 = vor.u32 %v687, %v691
      %v694 = vshll.u32 %v553, 16
      %v696 = vrot.slane %v694, 1
      %v697 = vsel %vm577, %v692, %v696
      %v699 = vshrl.u32 %v537, 16
      %v701 = vshll.u32 %v537, 16
      %v703 = vrot.slane %v701, 1
      %v704 = vor.u32 %v699, %v703
      %v706 = vshll.u32 %v554, 16
      %v708 = vrot.slane %v706, 1
      %v709 = vsel %vm577, %v704, %v708
      %v711 = vshrl.u32 %v538, 16
      %v713 = vshll.u32 %v538, 16
      %v715 = vrot.slane %v713, 1
      %v716 = vor.u32 %v711, %v715
      %v718 = vshll.u32 %v555, 16
      %v720 = vrot.slane %v718, 1
      %v721 = vsel %vm577, %v716, %v720
      %v723 = vshrl.u32 %v539, 16
      %v725 = vshll.u32 %v539, 16
      %v727 = vrot.slane %v725, 1
      %v728 = vor.u32 %v723, %v727
      %v730 = vshll.u32 %v556, 16
      %v732 = vrot.slane %v730, 1
      %v733 = vsel %vm577, %v728, %v732
      %v735 = vshrl.u32 %v540, 16
      %v737 = vshll.u32 %v540, 16
      %v739 = vrot.slane %v737, 1
      %v740 = vor.u32 %v735, %v739
      %v742 = vshll.u32 %v557, 16
      %v744 = vrot.slane %v742, 1
      %v745 = vsel %vm577, %v740, %v744
      %v747 = vshrl.u32 %v541, 16
      %v749 = vshll.u32 %v541, 16
      %v751 = vrot.slane %v749, 1
      %v752 = vor.u32 %v747, %v751
      %v754 = vshll.u32 %v558, 16
      %v756 = vrot.slane %v754, 1
      %v757 = vsel %vm577, %v752, %v756
      %v759 = vshrl.u32 %v542, 16
      %v761 = vshll.u32 %v542, 16
      %v763 = vrot.slane %v761, 1
      %v764 = vor.u32 %v759, %v763
      %v766 = vshll.u32 %v559, 16
      %v768 = vrot.slane %v766, 1
      %v769 = vsel %vm577, %v764, %v768
      %s786 = scalar_lea.vmem %s237, 64
      %v787 = vld [vmem:[%s786] sm:$0xf]
      %v788 = vld [vmem:[%s786 + $0x4] sm:$0xf]
      %v789 = vld [vmem:[%s786 + $0x8] sm:$0xf]
      %v790 = vld [vmem:[%s786 + $0xc] sm:$0xf]
      %v791 = vld [vmem:[%s786 + $0x10] sm:$0xf]
      %v792 = vld [vmem:[%s786 + $0x14] sm:$0xf]
      %v793 = vld [vmem:[%s786 + $0x18] sm:$0xf]
      %v794 = vld [vmem:[%s786 + $0x1c] sm:$0xf]
      %v795 = vld [vmem:[%s786 + $0x20] sm:$0xf]
      %v796 = vld [vmem:[%s786 + $0x24] sm:$0xf]
      %v797 = vld [vmem:[%s786 + $0x28] sm:$0xf]
      %v798 = vld [vmem:[%s786 + $0x2c] sm:$0xf]
      %v799 = vld [vmem:[%s786 + $0x30] sm:$0xf]
      %v800 = vld [vmem:[%s786 + $0x34] sm:$0xf]
      %v801 = vld [vmem:[%s786 + $0x38] sm:$0xf]
      %v802 = vld [vmem:[%s786 + $0x3c] sm:$0xf]
      %v819 = vunpack.c.l.b16 %v787
      %v820 = vunpack.c.l.b16 %v788
      %v821 = vunpack.c.l.b16 %v789
      %v822 = vunpack.c.l.b16 %v790
      %v823 = vunpack.c.l.b16 %v791
      %v824 = vunpack.c.l.b16 %v792
      %v825 = vunpack.c.l.b16 %v793
      %v826 = vunpack.c.l.b16 %v794
      %v827 = vunpack.c.l.b16 %v795
      %v828 = vunpack.c.l.b16 %v796
      %v829 = vunpack.c.l.b16 %v797
      %v830 = vunpack.c.l.b16 %v798
      %v831 = vunpack.c.l.b16 %v799
      %v832 = vunpack.c.l.b16 %v800
      %v833 = vunpack.c.l.b16 %v801
      %v834 = vunpack.c.l.b16 %v802
      %v835 = vpack.c.b16 %v820, %v819
      %v836 = vpack.c.b16 %v822, %v821
      %v837 = vpack.c.b16 %v824, %v823
      %v838 = vpack.c.b16 %v826, %v825
      %v839 = vpack.c.b16 %v828, %v827
      %v840 = vpack.c.b16 %v830, %v829
      %v841 = vpack.c.b16 %v832, %v831
      %v842 = vpack.c.b16 %v834, %v833
      %851 = vmatprep.subr.bf16.mxu0 0
      %852 = vmatpush1.bf16.msra.mxu0 %v835
      %853 = vmatprep.subr.bf16.mxu0 0
      %854 = vmatpush1.bf16.msra.mxu0 %v836
      %855 = vmatprep.subr.bf16.mxu0 0
      %856 = vmatpush1.bf16.msra.mxu0 %v837
      %857 = vmatprep.subr.bf16.mxu0 0
      %858 = vmatpush1.bf16.msra.mxu0 %v838
      %859 = vmatprep.subr.bf16.mxu0 0
      %860 = vmatpush1.bf16.msra.mxu0 %v839
      %861 = vmatprep.subr.bf16.mxu0 0
      %862 = vmatpush1.bf16.msra.mxu0 %v840
      %863 = vmatprep.subr.bf16.mxu0 0
      %864 = vmatpush1.bf16.msra.mxu0 %v841
      %865 = vmatprep.subr.bf16.mxu0 0
      %866 = vmatpush1.bf16.msra.mxu0 %v842
      %867 = vmatprep.subr.bf16.mxu0 0
      %868 = vmatpush1.bf16.msra.mxu0 0
      %869 = vmatprep.subr.bf16.mxu0 0
      %870 = vmatpush1.bf16.msra.mxu0 0
      %871 = vmatprep.subr.bf16.mxu0 0
      %872 = vmatpush1.bf16.msra.mxu0 0
      %873 = vmatprep.subr.bf16.mxu0 0
      %874 = vmatpush1.bf16.msra.mxu0 0
      %875 = vmatprep.subr.bf16.mxu0 0
      %876 = vmatpush1.bf16.msra.mxu0 0
      %877 = vmatprep.subr.bf16.mxu0 0
      %878 = vmatpush1.bf16.msra.mxu0 0
      %879 = vmatprep.subr.bf16.mxu0 0
      %880 = vmatpush1.bf16.msra.mxu0 0
      %881 = vmatprep.subr.bf16.mxu0 0
      %882 = vmatpush1.bf16.msra.mxu0 0
      %883 = vmatprep.mubr.bf16.mxu0 0
      %884 = vmatmul.mubr.bf16.gmra.mrb[0].mxu0 %v589
      %v885 = vpop.f32.mrb[0].mxu0
      %v886 = vadd.f32 0.0, %v885
      %v887 = vpop.f32.mrb[0].mxu0
      %v888 = vpop.f32.mrb[0].mxu0
      %v889 = vadd.f32 0.0, %v888
      %v890 = vpop.f32.mrb[0].mxu0
      %891 = vmatprep.mubr.bf16.mxu0 0
      %892 = vmatmul.mubr.bf16.gmra.mrb[0].mxu0 %v601
      %v893 = vpop.f32.mrb[0].mxu0
      %v894 = vadd.f32 0.0, %v893
      %v895 = vpop.f32.mrb[0].mxu0
      %v896 = vpop.f32.mrb[0].mxu0
      %v897 = vadd.f32 0.0, %v896
      %v898 = vpop.f32.mrb[0].mxu0
      %899 = vmatprep.mubr.bf16.mxu0 0
      %900 = vmatmul.mubr.bf16.gmra.mrb[0].mxu0 %v613
      %v901 = vpop.f32.mrb[0].mxu0
      %v902 = vadd.f32 0.0, %v901
      %v903 = vpop.f32.mrb[0].mxu0
      %v904 = vpop.f32.mrb[0].mxu0
      %v905 = vadd.f32 0.0, %v904
      %v906 = vpop.f32.mrb[0].mxu0
      %907 = vmatprep.mubr.bf16.mxu0 0
      %908 = vmatmul.mubr.bf16.gmra.mrb[0].mxu0 %v625
      %v909 = vpop.f32.mrb[0].mxu0
      %v910 = vadd.f32 0.0, %v909
      %v911 = vpop.f32.mrb[0].mxu0
      %v912 = vpop.f32.mrb[0].mxu0
      %v913 = vadd.f32 0.0, %v912
      %v914 = vpop.f32.mrb[0].mxu0
      %915 = vmatprep.mubr.bf16.mxu0 0
      %916 = vmatmul.mubr.bf16.gmra.mrb[0].mxu0 %v637
      %v917 = vpop.f32.mrb[0].mxu0
      %v918 = vadd.f32 0.0, %v917
      %v919 = vpop.f32.mrb[0].mxu0
      %v920 = vpop.f32.mrb[0].mxu0
      %v921 = vadd.f32 0.0, %v920
      %v922 = vpop.f32.mrb[0].mxu0
      %923 = vmatprep.mubr.bf16.mxu0 0
      %924 = vmatmul.mubr.bf16.gmra.mrb[0].mxu0 %v649
      %v925 = vpop.f32.mrb[0].mxu0
      %v926 = vadd.f32 0.0, %v925
      %v927 = vpop.f32.mrb[0].mxu0
      %v928 = vpop.f32.mrb[0].mxu0
      %v929 = vadd.f32 0.0, %v928
      %v930 = vpop.f32.mrb[0].mxu0
      %931 = vmatprep.mubr.bf16.mxu0 0
      %932 = vmatmul.mubr.bf16.gmra.mrb[0].mxu0 %v661
      %v933 = vpop.f32.mrb[0].mxu0
      %v934 = vadd.f32 0.0, %v933
      %v935 = vpop.f32.mrb[0].mxu0
      %v936 = vpop.f32.mrb[0].mxu0
      %v937 = vadd.f32 0.0, %v936
      %v938 = vpop.f32.mrb[0].mxu0
      %939 = vmatprep.mubr.bf16.mxu0 0
      %940 = vmatmul.mubr.bf16.gmra.mrb[0].mxu0 %v673
      %v941 = vpop.f32.mrb[0].mxu0
      %v942 = vadd.f32 0.0, %v941
      %v943 = vpop.f32.mrb[0].mxu0
      %v944 = vpop.f32.mrb[0].mxu0
      %v945 = vadd.f32 0.0, %v944
      %v946 = vpop.f32.mrb[0].mxu0
      %947 = vmatprep.mubr.bf16.mxu0 0
      %948 = vmatmul.mubr.bf16.gmra.mrb[0].mxu0 %v685
      %v949 = vpop.f32.mrb[0].mxu0
      %v950 = vadd.f32 0.0, %v949
      %v951 = vpop.f32.mrb[0].mxu0
      %v952 = vpop.f32.mrb[0].mxu0
      %v953 = vadd.f32 0.0, %v952
      %v954 = vpop.f32.mrb[0].mxu0
      %955 = vmatprep.mubr.bf16.mxu0 0
      %956 = vmatmul.mubr.bf16.gmra.mrb[0].mxu0 %v697
      %v957 = vpop.f32.mrb[0].mxu0
      %v958 = vadd.f32 0.0, %v957
      %v959 = vpop.f32.mrb[0].mxu0
      %v960 = vpop.f32.mrb[0].mxu0
      %v961 = vadd.f32 0.0, %v960
      %v962 = vpop.f32.mrb[0].mxu0
      %963 = vmatprep.mubr.bf16.mxu0 0
      %964 = vmatmul.mubr.bf16.gmra.mrb[0].mxu0 %v709
      %v965 = vpop.f32.mrb[0].mxu0
      %v966 = vadd.f32 0.0, %v965
      %v967 = vpop.f32.mrb[0].mxu0
      %v968 = vpop.f32.mrb[0].mxu0
      %v969 = vadd.f32 0.0, %v968
      %v970 = vpop.f32.mrb[0].mxu0
      %971 = vmatprep.mubr.bf16.mxu0 0
      %972 = vmatmul.mubr.bf16.gmra.mrb[0].mxu0 %v721
      %v973 = vpop.f32.mrb[0].mxu0
      %v974 = vadd.f32 0.0, %v973
      %v975 = vpop.f32.mrb[0].mxu0
      %v976 = vpop.f32.mrb[0].mxu0
      %v977 = vadd.f32 0.0, %v976
      %v978 = vpop.f32.mrb[0].mxu0
      %979 = vmatprep.mubr.bf16.mxu0 0
      %980 = vmatmul.mubr.bf16.gmra.mrb[0].mxu0 %v733
      %v981 = vpop.f32.mrb[0].mxu0
      %v982 = vadd.f32 0.0, %v981
      %v983 = vpop.f32.mrb[0].mxu0
      %v984 = vpop.f32.mrb[0].mxu0
      %v985 = vadd.f32 0.0, %v984
      %v986 = vpop.f32.mrb[0].mxu0
      %987 = vmatprep.mubr.bf16.mxu0 0
      %988 = vmatmul.mubr.bf16.gmra.mrb[0].mxu0 %v745
      %v989 = vpop.f32.mrb[0].mxu0
      %v990 = vadd.f32 0.0, %v989
      %v991 = vpop.f32.mrb[0].mxu0
      %v992 = vpop.f32.mrb[0].mxu0
      %v993 = vadd.f32 0.0, %v992
      %v994 = vpop.f32.mrb[0].mxu0
      %995 = vmatprep.mubr.bf16.mxu0 0
      %996 = vmatmul.mubr.bf16.gmra.mrb[0].mxu0 %v757
      %v997 = vpop.f32.mrb[0].mxu0
      %v998 = vadd.f32 0.0, %v997
      %v999 = vpop.f32.mrb[0].mxu0
      %v1000 = vpop.f32.mrb[0].mxu0
      %v1001 = vadd.f32 0.0, %v1000
      %v1002 = vpop.f32.mrb[0].mxu0
      %1003 = vmatprep.mubr.bf16.mxu0 0
      %1004 = vmatmul.mubr.bf16.gmra.mrb[0].mxu0 %v769
      %v1005 = vpop.f32.mrb[0].mxu0
      %v1006 = vadd.f32 0.0, %v1005
      %v1007 = vpop.f32.mrb[0].mxu0
      %v1008 = vpop.f32.mrb[0].mxu0
      %v1009 = vadd.f32 0.0, %v1008
      %v1010 = vpop.f32.mrb[0].mxu0
      %1011 = vdwg.mxu0
      %v1028 = vunpack.c.l.b16 %v561
      %v1029 = vunpack.c.l.b16 %v562
      %v1030 = vunpack.c.l.b16 %v563
      %v1031 = vunpack.c.l.b16 %v564
      %v1032 = vunpack.c.l.b16 %v565
      %v1033 = vunpack.c.l.b16 %v566
      %v1034 = vunpack.c.l.b16 %v567
      %v1035 = vunpack.c.l.b16 %v568
      %v1036 = vunpack.c.l.b16 %v569
      %v1037 = vunpack.c.l.b16 %v570
      %v1038 = vunpack.c.l.b16 %v571
      %v1039 = vunpack.c.l.b16 %v572
      %v1040 = vunpack.c.l.b16 %v573
      %v1041 = vunpack.c.l.b16 %v574
      %v1042 = vunpack.c.l.b16 %v575
      %v1043 = vunpack.c.l.b16 %v576
      %v1044 = vpack.c.b16 %v1029, %v1028
      %v1045 = vpack.c.b16 %v1031, %v1030
      %v1046 = vpack.c.b16 %v1033, %v1032
      %v1047 = vpack.c.b16 %v1035, %v1034
      %v1048 = vpack.c.b16 %v1037, %v1036
      %v1049 = vpack.c.b16 %v1039, %v1038
      %v1050 = vpack.c.b16 %v1041, %v1040
      %v1051 = vpack.c.b16 %v1043, %v1042
      %1060 = vmatprep.subr.bf16.mxu0 0
      %1061 = vmatpush1.bf16.msra.mxu0 %v1044
      %1062 = vmatprep.subr.bf16.mxu0 0
      %1063 = vmatpush1.bf16.msra.mxu0 %v1045
      %1064 = vmatprep.subr.bf16.mxu0 0
      %1065 = vmatpush1.bf16.msra.mxu0 %v1046
      %1066 = vmatprep.subr.bf16.mxu0 0
      %1067 = vmatpush1.bf16.msra.mxu0 %v1047
      %1068 = vmatprep.subr.bf16.mxu0 0
      %1069 = vmatpush1.bf16.msra.mxu0 %v1048
      %1070 = vmatprep.subr.bf16.mxu0 0
      %1071 = vmatpush1.bf16.msra.mxu0 %v1049
      %1072 = vmatprep.subr.bf16.mxu0 0
      %1073 = vmatpush1.bf16.msra.mxu0 %v1050
      %1074 = vmatprep.subr.bf16.mxu0 0
      %1075 = vmatpush1.bf16.msra.mxu0 %v1051
      %1076 = vmatprep.subr.bf16.mxu0 0
      %1077 = vmatpush1.bf16.msra.mxu0 0
      %1078 = vmatprep.subr.bf16.mxu0 0
      %1079 = vmatpush1.bf16.msra.mxu0 0
      %1080 = vmatprep.subr.bf16.mxu0 0
      %1081 = vmatpush1.bf16.msra.mxu0 0
      %1082 = vmatprep.subr.bf16.mxu0 0
      %1083 = vmatpush1.bf16.msra.mxu0 0
      %1084 = vmatprep.subr.bf16.mxu0 0
      %1085 = vmatpush1.bf16.msra.mxu0 0
      %1086 = vmatprep.subr.bf16.mxu0 0
      %1087 = vmatpush1.bf16.msra.mxu0 0
      %1088 = vmatprep.subr.bf16.mxu0 0
      %1089 = vmatpush1.bf16.msra.mxu0 0
      %1090 = vmatprep.subr.bf16.mxu0 0
      %1091 = vmatpush1.bf16.msra.mxu0 0
      %1092 = vmatprep.mubr.bf16.mxu0 0
      %1093 = vmatmul.mubr.bf16.gmra.mrb[0].mxu0 %v527
      %v1094 = vpop.f32.mrb[0].mxu0
      %v1095 = vadd.f32 %v886, %v1094
      %v1096 = vpop.f32.mrb[0].mxu0
      %v1097 = vpop.f32.mrb[0].mxu0
      %v1098 = vadd.f32 %v889, %v1097
      %v1099 = vpop.f32.mrb[0].mxu0
      %1100 = vmatprep.mubr.bf16.mxu0 0
      %1101 = vmatmul.mubr.bf16.gmra.mrb[0].mxu0 %v528
      %v1102 = vpop.f32.mrb[0].mxu0
      %v1103 = vadd.f32 %v894, %v1102
      %v1104 = vpop.f32.mrb[0].mxu0
      %v1105 = vpop.f32.mrb[0].mxu0
      %v1106 = vadd.f32 %v897, %v1105
      %v1107 = vpop.f32.mrb[0].mxu0
      %1108 = vmatprep.mubr.bf16.mxu0 0
      %1109 = vmatmul.mubr.bf16.gmra.mrb[0].mxu0 %v529
      %v1110 = vpop.f32.mrb[0].mxu0
      %v1111 = vadd.f32 %v902, %v1110
      %v1112 = vpop.f32.mrb[0].mxu0
      %v1113 = vpop.f32.mrb[0].mxu0
      %v1114 = vadd.f32 %v905, %v1113
      %v1115 = vpop.f32.mrb[0].mxu0
      %1116 = vmatprep.mubr.bf16.mxu0 0
      %1117 = vmatmul.mubr.bf16.gmra.mrb[0].mxu0 %v530
      %v1118 = vpop.f32.mrb[0].mxu0
      %v1119 = vadd.f32 %v910, %v1118
      %v1120 = vpop.f32.mrb[0].mxu0
      %v1121 = vpop.f32.mrb[0].mxu0
      %v1122 = vadd.f32 %v913, %v1121
      %v1123 = vpop.f32.mrb[0].mxu0
      %1124 = vmatprep.mubr.bf16.mxu0 0
      %1125 = vmatmul.mubr.bf16.gmra.mrb[0].mxu0 %v531
      %v1126 = vpop.f32.mrb[0].mxu0
      %v1127 = vadd.f32 %v918, %v1126
      %v1128 = vpop.f32.mrb[0].mxu0
      %v1129 = vpop.f32.mrb[0].mxu0
      %v1130 = vadd.f32 %v921, %v1129
      %v1131 = vpop.f32.mrb[0].mxu0
      %1132 = vmatprep.mubr.bf16.mxu0 0
      %1133 = vmatmul.mubr.bf16.gmra.mrb[0].mxu0 %v532
      %v1134 = vpop.f32.mrb[0].mxu0
      %v1135 = vadd.f32 %v926, %v1134
      %v1136 = vpop.f32.mrb[0].mxu0
      %v1137 = vpop.f32.mrb[0].mxu0
      %v1138 = vadd.f32 %v929, %v1137
      %v1139 = vpop.f32.mrb[0].mxu0
      %1140 = vmatprep.mubr.bf16.mxu0 0
      %1141 = vmatmul.mubr.bf16.gmra.mrb[0].mxu0 %v533
      %v1142 = vpop.f32.mrb[0].mxu0
      %v1143 = vadd.f32 %v934, %v1142
      %v1144 = vpop.f32.mrb[0].mxu0
      %v1145 = vpop.f32.mrb[0].mxu0
      %v1146 = vadd.f32 %v937, %v1145
      %v1147 = vpop.f32.mrb[0].mxu0
      %1148 = vmatprep.mubr.bf16.mxu0 0
      %1149 = vmatmul.mubr.bf16.gmra.mrb[0].mxu0 %v534
      %v1150 = vpop.f32.mrb[0].mxu0
      %v1151 = vadd.f32 %v942, %v1150
      %v1152 = vpop.f32.mrb[0].mxu0
      %v1153 = vpop.f32.mrb[0].mxu0
      %v1154 = vadd.f32 %v945, %v1153
      %v1155 = vpop.f32.mrb[0].mxu0
      %1156 = vmatprep.mubr.bf16.mxu0 0
      %1157 = vmatmul.mubr.bf16.gmra.mrb[0].mxu0 %v535
      %v1158 = vpop.f32.mrb[0].mxu0
      %v1159 = vadd.f32 %v950, %v1158
      %v1160 = vpop.f32.mrb[0].mxu0
      %v1161 = vpop.f32.mrb[0].mxu0
      %v1162 = vadd.f32 %v953, %v1161
      %v1163 = vpop.f32.mrb[0].mxu0
      %1164 = vmatprep.mubr.bf16.mxu0 0
      %1165 = vmatmul.mubr.bf16.gmra.mrb[0].mxu0 %v536
      %v1166 = vpop.f32.mrb[0].mxu0
      %v1167 = vadd.f32 %v958, %v1166
      %v1168 = vpop.f32.mrb[0].mxu0
      %v1169 = vpop.f32.mrb[0].mxu0
      %v1170 = vadd.f32 %v961, %v1169
      %v1171 = vpop.f32.mrb[0].mxu0
      %1172 = vmatprep.mubr.bf16.mxu0 0
      %1173 = vmatmul.mubr.bf16.gmra.mrb[0].mxu0 %v537
      %v1174 = vpop.f32.mrb[0].mxu0
      %v1175 = vadd.f32 %v966, %v1174
      %v1176 = vpop.f32.mrb[0].mxu0
      %v1177 = vpop.f32.mrb[0].mxu0
      %v1178 = vadd.f32 %v969, %v1177
      %v1179 = vpop.f32.mrb[0].mxu0
      %1180 = vmatprep.mubr.bf16.mxu0 0
      %1181 = vmatmul.mubr.bf16.gmra.mrb[0].mxu0 %v538
      %v1182 = vpop.f32.mrb[0].mxu0
      %v1183 = vadd.f32 %v974, %v1182
      %v1184 = vpop.f32.mrb[0].mxu0
      %v1185 = vpop.f32.mrb[0].mxu0
      %v1186 = vadd.f32 %v977, %v1185
      %v1187 = vpop.f32.mrb[0].mxu0
      %1188 = vmatprep.mubr.bf16.mxu0 0
      %1189 = vmatmul.mubr.bf16.gmra.mrb[0].mxu0 %v539
      %v1190 = vpop.f32.mrb[0].mxu0
      %v1191 = vadd.f32 %v982, %v1190
      %v1192 = vpop.f32.mrb[0].mxu0
      %v1193 = vpop.f32.mrb[0].mxu0
      %v1194 = vadd.f32 %v985, %v1193
      %v1195 = vpop.f32.mrb[0].mxu0
      %1196 = vmatprep.mubr.bf16.mxu0 0
      %1197 = vmatmul.mubr.bf16.gmra.mrb[0].mxu0 %v540
      %v1198 = vpop.f32.mrb[0].mxu0
      %v1199 = vadd.f32 %v990, %v1198
      %v1200 = vpop.f32.mrb[0].mxu0
      %v1201 = vpop.f32.mrb[0].mxu0
      %v1202 = vadd.f32 %v993, %v1201
      %v1203 = vpop.f32.mrb[0].mxu0
      %1204 = vmatprep.mubr.bf16.mxu0 0
      %1205 = vmatmul.mubr.bf16.gmra.mrb[0].mxu0 %v541
      %v1206 = vpop.f32.mrb[0].mxu0
      %v1207 = vadd.f32 %v998, %v1206
      %v1208 = vpop.f32.mrb[0].mxu0
      %v1209 = vpop.f32.mrb[0].mxu0
      %v1210 = vadd.f32 %v1001, %v1209
      %v1211 = vpop.f32.mrb[0].mxu0
      %1212 = vmatprep.mubr.bf16.mxu0 0
      %1213 = vmatmul.mubr.bf16.gmra.mrb[0].mxu0 %v542
      %v1214 = vpop.f32.mrb[0].mxu0
      %v1215 = vadd.f32 %v1006, %v1214
      %v1216 = vpop.f32.mrb[0].mxu0
      %v1217 = vpop.f32.mrb[0].mxu0
      %v1218 = vadd.f32 %v1009, %v1217
      %v1219 = vpop.f32.mrb[0].mxu0
      %1220 = vdwg.mxu0
      %vm1253 = vcmask 1046528
      %v1254 = vrot.slane %v527, 1
      %v1255 = vrot.slane %v544, 1
      %v1256 = vsel %vm1253, %v1254, %v1255
      %v1257 = vrot.slane %v528, 1
      %v1258 = vrot.slane %v545, 1
      %v1259 = vsel %vm1253, %v1257, %v1258
      %v1260 = vrot.slane %v529, 1
      %v1261 = vrot.slane %v546, 1
      %v1262 = vsel %vm1253, %v1260, %v1261
      %v1263 = vrot.slane %v530, 1
      %v1264 = vrot.slane %v547, 1
      %v1265 = vsel %vm1253, %v1263, %v1264
      %v1266 = vrot.slane %v531, 1
      %v1267 = vrot.slane %v548, 1
      %v1268 = vsel %vm1253, %v1266, %v1267
      %v1269 = vrot.slane %v532, 1
      %v1270 = vrot.slane %v549, 1
      %v1271 = vsel %vm1253, %v1269, %v1270
      %v1272 = vrot.slane %v533, 1
      %v1273 = vrot.slane %v550, 1
      %v1274 = vsel %vm1253, %v1272, %v1273
      %v1275 = vrot.slane %v534, 1
      %v1276 = vrot.slane %v551, 1
      %v1277 = vsel %vm1253, %v1275, %v1276
      %v1278 = vrot.slane %v535, 1
      %v1279 = vrot.slane %v552, 1
      %v1280 = vsel %vm1253, %v1278, %v1279
      %v1281 = vrot.slane %v536, 1
      %v1282 = vrot.slane %v553, 1
      %v1283 = vsel %vm1253, %v1281, %v1282
      %v1284 = vrot.slane %v537, 1
      %v1285 = vrot.slane %v554, 1
      %v1286 = vsel %vm1253, %v1284, %v1285
      %v1287 = vrot.slane %v538, 1
      %v1288 = vrot.slane %v555, 1
      %v1289 = vsel %vm1253, %v1287, %v1288
      %v1290 = vrot.slane %v539, 1
      %v1291 = vrot.slane %v556, 1
      %v1292 = vsel %vm1253, %v1290, %v1291
      %v1293 = vrot.slane %v540, 1
      %v1294 = vrot.slane %v557, 1
      %v1295 = vsel %vm1253, %v1293, %v1294
      %v1296 = vrot.slane %v541, 1
      %v1297 = vrot.slane %v558, 1
      %v1298 = vsel %vm1253, %v1296, %v1297
      %v1299 = vrot.slane %v542, 1
      %v1300 = vrot.slane %v559, 1
      %v1301 = vsel %vm1253, %v1299, %v1300
      %s1318 = scalar_lea.vmem %s237, 128
      %v1319 = vld [vmem:[%s1318] sm:$0xf]
      %v1320 = vld [vmem:[%s1318 + $0x4] sm:$0xf]
      %v1321 = vld [vmem:[%s1318 + $0x8] sm:$0xf]
      %v1322 = vld [vmem:[%s1318 + $0xc] sm:$0xf]
      %v1323 = vld [vmem:[%s1318 + $0x10] sm:$0xf]
      %v1324 = vld [vmem:[%s1318 + $0x14] sm:$0xf]
      %v1325 = vld [vmem:[%s1318 + $0x18] sm:$0xf]
      %v1326 = vld [vmem:[%s1318 + $0x1c] sm:$0xf]
      %v1327 = vld [vmem:[%s1318 + $0x20] sm:$0xf]
      %v1328 = vld [vmem:[%s1318 + $0x24] sm:$0xf]
      %v1329 = vld [vmem:[%s1318 + $0x28] sm:$0xf]
      %v1330 = vld [vmem:[%s1318 + $0x2c] sm:$0xf]
      %v1331 = vld [vmem:[%s1318 + $0x30] sm:$0xf]
      %v1332 = vld [vmem:[%s1318 + $0x34] sm:$0xf]
      %v1333 = vld [vmem:[%s1318 + $0x38] sm:$0xf]
      %v1334 = vld [vmem:[%s1318 + $0x3c] sm:$0xf]
      %v1351 = vunpack.c.l.b16 %v1319
      %v1352 = vunpack.c.l.b16 %v1320
      %v1353 = vunpack.c.l.b16 %v1321
      %v1354 = vunpack.c.l.b16 %v1322
      %v1355 = vunpack.c.l.b16 %v1323
      %v1356 = vunpack.c.l.b16 %v1324
      %v1357 = vunpack.c.l.b16 %v1325
      %v1358 = vunpack.c.l.b16 %v1326
      %v1359 = vunpack.c.l.b16 %v1327
      %v1360 = vunpack.c.l.b16 %v1328
      %v1361 = vunpack.c.l.b16 %v1329
      %v1362 = vunpack.c.l.b16 %v1330
      %v1363 = vunpack.c.l.b16 %v1331
      %v1364 = vunpack.c.l.b16 %v1332
      %v1365 = vunpack.c.l.b16 %v1333
      %v1366 = vunpack.c.l.b16 %v1334
      %v1367 = vpack.c.b16 %v1352, %v1351
      %v1368 = vpack.c.b16 %v1354, %v1353
      %v1369 = vpack.c.b16 %v1356, %v1355
      %v1370 = vpack.c.b16 %v1358, %v1357
      %v1371 = vpack.c.b16 %v1360, %v1359
      %v1372 = vpack.c.b16 %v1362, %v1361
      %v1373 = vpack.c.b16 %v1364, %v1363
      %v1374 = vpack.c.b16 %v1366, %v1365
      %1383 = vmatprep.subr.bf16.mxu0 0
      %1384 = vmatpush1.bf16.msra.mxu0 %v1367
      %1385 = vmatprep.subr.bf16.mxu0 0
      %1386 = vmatpush1.bf16.msra.mxu0 %v1368
      %1387 = vmatprep.subr.bf16.mxu0 0
      %1388 = vmatpush1.bf16.msra.mxu0 %v1369
      %1389 = vmatprep.subr.bf16.mxu0 0
      %1390 = vmatpush1.bf16.msra.mxu0 %v1370
      %1391 = vmatprep.subr.bf16.mxu0 0
      %1392 = vmatpush1.bf16.msra.mxu0 %v1371
      %1393 = vmatprep.subr.bf16.mxu0 0
      %1394 = vmatpush1.bf16.msra.mxu0 %v1372
      %1395 = vmatprep.subr.bf16.mxu0 0
      %1396 = vmatpush1.bf16.msra.mxu0 %v1373
      %1397 = vmatprep.subr.bf16.mxu0 0
      %1398 = vmatpush1.bf16.msra.mxu0 %v1374
      %1399 = vmatprep.subr.bf16.mxu0 0
      %1400 = vmatpush1.bf16.msra.mxu0 0
      %1401 = vmatprep.subr.bf16.mxu0 0
      %1402 = vmatpush1.bf16.msra.mxu0 0
      %1403 = vmatprep.subr.bf16.mxu0 0
      %1404 = vmatpush1.bf16.msra.mxu0 0
      %1405 = vmatprep.subr.bf16.mxu0 0
      %1406 = vmatpush1.bf16.msra.mxu0 0
      %1407 = vmatprep.subr.bf16.mxu0 0
      %1408 = vmatpush1.bf16.msra.mxu0 0
      %1409 = vmatprep.subr.bf16.mxu0 0
      %1410 = vmatpush1.bf16.msra.mxu0 0
      %1411 = vmatprep.subr.bf16.mxu0 0
      %1412 = vmatpush1.bf16.msra.mxu0 0
      %1413 = vmatprep.subr.bf16.mxu0 0
      %1414 = vmatpush1.bf16.msra.mxu0 0
      %1415 = vmatprep.mubr.bf16.mxu0 0
      %1416 = vmatmul.mubr.bf16.gmra.mrb[0].mxu0 %v1256
      %v1417 = vpop.f32.mrb[0].mxu0
      %v1418 = vadd.f32 0.0, %v1417
      %v1419 = vpop.f32.mrb[0].mxu0
      %v1420 = vpop.f32.mrb[0].mxu0
      %v1421 = vadd.f32 0.0, %v1420
      %v1422 = vpop.f32.mrb[0].mxu0
      %1423 = vmatprep.mubr.bf16.mxu0 0
      %1424 = vmatmul.mubr.bf16.gmra.mrb[0].mxu0 %v1259
      %v1425 = vpop.f32.mrb[0].mxu0
      %v1426 = vadd.f32 0.0, %v1425
      %v1427 = vpop.f32.mrb[0].mxu0
      %v1428 = vpop.f32.mrb[0].mxu0
      %v1429 = vadd.f32 0.0, %v1428
      %v1430 = vpop.f32.mrb[0].mxu0
      %1431 = vmatprep.mubr.bf16.mxu0 0
      %1432 = vmatmul.mubr.bf16.gmra.mrb[0].mxu0 %v1262
      %v1433 = vpop.f32.mrb[0].mxu0
      %v1434 = vadd.f32 0.0, %v1433
      %v1435 = vpop.f32.mrb[0].mxu0
      %v1436 = vpop.f32.mrb[0].mxu0
      %v1437 = vadd.f32 0.0, %v1436
      %v1438 = vpop.f32.mrb[0].mxu0
      %1439 = vmatprep.mubr.bf16.mxu0 0
      %1440 = vmatmul.mubr.bf16.gmra.mrb[0].mxu0 %v1265
      %v1441 = vpop.f32.mrb[0].mxu0
      %v1442 = vadd.f32 0.0, %v1441
      %v1443 = vpop.f32.mrb[0].mxu0
      %v1444 = vpop.f32.mrb[0].mxu0
      %v1445 = vadd.f32 0.0, %v1444
      %v1446 = vpop.f32.mrb[0].mxu0
      %1447 = vmatprep.mubr.bf16.mxu0 0
      %1448 = vmatmul.mubr.bf16.gmra.mrb[0].mxu0 %v1268
      %v1449 = vpop.f32.mrb[0].mxu0
      %v1450 = vadd.f32 0.0, %v1449
      %v1451 = vpop.f32.mrb[0].mxu0
      %v1452 = vpop.f32.mrb[0].mxu0
      %v1453 = vadd.f32 0.0, %v1452
      %v1454 = vpop.f32.mrb[0].mxu0
      %1455 = vmatprep.mubr.bf16.mxu0 0
      %1456 = vmatmul.mubr.bf16.gmra.mrb[0].mxu0 %v1271
      %v1457 = vpop.f32.mrb[0].mxu0
      %v1458 = vadd.f32 0.0, %v1457
      %v1459 = vpop.f32.mrb[0].mxu0
      %v1460 = vpop.f32.mrb[0].mxu0
      %v1461 = vadd.f32 0.0, %v1460
      %v1462 = vpop.f32.mrb[0].mxu0
      %1463 = vmatprep.mubr.bf16.mxu0 0
      %1464 = vmatmul.mubr.bf16.gmra.mrb[0].mxu0 %v1274
      %v1465 = vpop.f32.mrb[0].mxu0
      %v1466 = vadd.f32 0.0, %v1465
      %v1467 = vpop.f32.mrb[0].mxu0
      %v1468 = vpop.f32.mrb[0].mxu0
      %v1469 = vadd.f32 0.0, %v1468
      %v1470 = vpop.f32.mrb[0].mxu0
      %1471 = vmatprep.mubr.bf16.mxu0 0
      %1472 = vmatmul.mubr.bf16.gmra.mrb[0].mxu0 %v1277
      %v1473 = vpop.f32.mrb[0].mxu0
      %v1474 = vadd.f32 0.0, %v1473
      %v1475 = vpop.f32.mrb[0].mxu0
      %v1476 = vpop.f32.mrb[0].mxu0
      %v1477 = vadd.f32 0.0, %v1476
      %v1478 = vpop.f32.mrb[0].mxu0
      %1479 = vmatprep.mubr.bf16.mxu0 0
      %1480 = vmatmul.mubr.bf16.gmra.mrb[0].mxu0 %v1280
      %v1481 = vpop.f32.mrb[0].mxu0
      %v1482 = vadd.f32 0.0, %v1481
      %v1483 = vpop.f32.mrb[0].mxu0
      %v1484 = vpop.f32.mrb[0].mxu0
      %v1485 = vadd.f32 0.0, %v1484
      %v1486 = vpop.f32.mrb[0].mxu0
      %1487 = vmatprep.mubr.bf16.mxu0 0
      %1488 = vmatmul.mubr.bf16.gmra.mrb[0].mxu0 %v1283
      %v1489 = vpop.f32.mrb[0].mxu0
      %v1490 = vadd.f32 0.0, %v1489
      %v1491 = vpop.f32.mrb[0].mxu0
      %v1492 = vpop.f32.mrb[0].mxu0
      %v1493 = vadd.f32 0.0, %v1492
      %v1494 = vpop.f32.mrb[0].mxu0
      %1495 = vmatprep.mubr.bf16.mxu0 0
      %1496 = vmatmul.mubr.bf16.gmra.mrb[0].mxu0 %v1286
      %v1497 = vpop.f32.mrb[0].mxu0
      %v1498 = vadd.f32 0.0, %v1497
      %v1499 = vpop.f32.mrb[0].mxu0
      %v1500 = vpop.f32.mrb[0].mxu0
      %v1501 = vadd.f32 0.0, %v1500
      %v1502 = vpop.f32.mrb[0].mxu0
      %1503 = vmatprep.mubr.bf16.mxu0 0
      %1504 = vmatmul.mubr.bf16.gmra.mrb[0].mxu0 %v1289
      %v1505 = vpop.f32.mrb[0].mxu0
      %v1506 = vadd.f32 0.0, %v1505
      %v1507 = vpop.f32.mrb[0].mxu0
      %v1508 = vpop.f32.mrb[0].mxu0
      %v1509 = vadd.f32 0.0, %v1508
      %v1510 = vpop.f32.mrb[0].mxu0
      %1511 = vmatprep.mubr.bf16.mxu0 0
      %1512 = vmatmul.mubr.bf16.gmra.mrb[0].mxu0 %v1292
      %v1513 = vpop.f32.mrb[0].mxu0
      %v1514 = vadd.f32 0.0, %v1513
      %v1515 = vpop.f32.mrb[0].mxu0
      %v1516 = vpop.f32.mrb[0].mxu0
      %v1517 = vadd.f32 0.0, %v1516
      %v1518 = vpop.f32.mrb[0].mxu0
      %1519 = vmatprep.mubr.bf16.mxu0 0
      %1520 = vmatmul.mubr.bf16.gmra.mrb[0].mxu0 %v1295
      %v1521 = vpop.f32.mrb[0].mxu0
      %v1522 = vadd.f32 0.0, %v1521
      %v1523 = vpop.f32.mrb[0].mxu0
      %v1524 = vpop.f32.mrb[0].mxu0
      %v1525 = vadd.f32 0.0, %v1524
      %v1526 = vpop.f32.mrb[0].mxu0
      %1527 = vmatprep.mubr.bf16.mxu0 0
      %1528 = vmatmul.mubr.bf16.gmra.mrb[0].mxu0 %v1298
      %v1529 = vpop.f32.mrb[0].mxu0
      %v1530 = vadd.f32 0.0, %v1529
      %v1531 = vpop.f32.mrb[0].mxu0
      %v1532 = vpop.f32.mrb[0].mxu0
      %v1533 = vadd.f32 0.0, %v1532
      %v1534 = vpop.f32.mrb[0].mxu0
      %1535 = vmatprep.mubr.bf16.mxu0 0
      %1536 = vmatmul.mubr.bf16.gmra.mrb[0].mxu0 %v1301
      %v1537 = vpop.f32.mrb[0].mxu0
      %v1538 = vadd.f32 0.0, %v1537
      %v1539 = vpop.f32.mrb[0].mxu0
      %v1540 = vpop.f32.mrb[0].mxu0
      %v1541 = vadd.f32 0.0, %v1540
      %v1542 = vpop.f32.mrb[0].mxu0
      %1543 = vdwg.mxu0
      %v1544 = vadd.f32 %v1095, %v1418
      %v1545 = vadd.f32 %v1098, %v1421
      %v1546 = vadd.f32 %v1103, %v1426
      %v1547 = vadd.f32 %v1106, %v1429
      %v1548 = vadd.f32 %v1111, %v1434
      %v1549 = vadd.f32 %v1114, %v1437
      %v1550 = vadd.f32 %v1119, %v1442
      %v1551 = vadd.f32 %v1122, %v1445
      %v1552 = vadd.f32 %v1127, %v1450
      %v1553 = vadd.f32 %v1130, %v1453
      %v1554 = vadd.f32 %v1135, %v1458
      %v1555 = vadd.f32 %v1138, %v1461
      %v1556 = vadd.f32 %v1143, %v1466
      %v1557 = vadd.f32 %v1146, %v1469
      %v1558 = vadd.f32 %v1151, %v1474
      %v1559 = vadd.f32 %v1154, %v1477
      %v1560 = vadd.f32 %v1159, %v1482
      %v1561 = vadd.f32 %v1162, %v1485
      %v1562 = vadd.f32 %v1167, %v1490
      %v1563 = vadd.f32 %v1170, %v1493
      %v1564 = vadd.f32 %v1175, %v1498
      %v1565 = vadd.f32 %v1178, %v1501
      %v1566 = vadd.f32 %v1183, %v1506
      %v1567 = vadd.f32 %v1186, %v1509
      %v1568 = vadd.f32 %v1191, %v1514
      %v1569 = vadd.f32 %v1194, %v1517
      %v1570 = vadd.f32 %v1199, %v1522
      %v1571 = vadd.f32 %v1202, %v1525
      %v1572 = vadd.f32 %v1207, %v1530
      %v1573 = vadd.f32 %v1210, %v1533
      %v1574 = vadd.f32 %v1215, %v1538
      %v1575 = vadd.f32 %v1218, %v1541
      %s1576 = scalar_lea.vmem %s237, 192
      %v1577 = vld [vmem:[%s1576] sm:$0xf]
      %v1578 = vld [vmem:[%s1576 + $0x4] sm:$0xf]
      %v1579 = vld [vmem:[%s1576 + $0x8] sm:$0xf]
      %v1580 = vld [vmem:[%s1576 + $0xc] sm:$0xf]
      %v1581 = vld [vmem:[%s1576 + $0x10] sm:$0xf]
      %v1582 = vld [vmem:[%s1576 + $0x14] sm:$0xf]
      %v1583 = vld [vmem:[%s1576 + $0x18] sm:$0xf]
      %v1584 = vld [vmem:[%s1576 + $0x1c] sm:$0xf]
      %v1585 = vld [vmem:[%s1576 + $0x20] sm:$0xf]
      %v1586 = vld [vmem:[%s1576 + $0x24] sm:$0xf]
      %v1587 = vld [vmem:[%s1576 + $0x28] sm:$0xf]
      %v1588 = vld [vmem:[%s1576 + $0x2c] sm:$0xf]
      %v1589 = vld [vmem:[%s1576 + $0x30] sm:$0xf]
      %v1590 = vld [vmem:[%s1576 + $0x34] sm:$0xf]
      %v1591 = vld [vmem:[%s1576 + $0x38] sm:$0xf]
      %v1592 = vld [vmem:[%s1576 + $0x3c] sm:$0xf]
      %v1609 = vunpack.c.l.b16 %v1577
      %v1610 = vunpack.c.l.b16 %v1578
      %v1611 = vunpack.c.l.b16 %v1579
      %v1612 = vunpack.c.l.b16 %v1580
      %v1613 = vunpack.c.l.b16 %v1581
      %v1614 = vunpack.c.l.b16 %v1582
      %v1615 = vunpack.c.l.b16 %v1583
      %v1616 = vunpack.c.l.b16 %v1584
      %v1617 = vunpack.c.l.b16 %v1585
      %v1618 = vunpack.c.l.b16 %v1586
      %v1619 = vunpack.c.l.b16 %v1587
      %v1620 = vunpack.c.l.b16 %v1588
      %v1621 = vunpack.c.l.b16 %v1589
      %v1622 = vunpack.c.l.b16 %v1590
      %v1623 = vunpack.c.l.b16 %v1591
      %v1624 = vunpack.c.l.b16 %v1592
      %v1625 = vpack.c.b16 %v1610, %v1609
      %v1626 = vpack.c.b16 %v1612, %v1611
      %v1627 = vpack.c.b16 %v1614, %v1613
      %v1628 = vpack.c.b16 %v1616, %v1615
      %v1629 = vpack.c.b16 %v1618, %v1617
      %v1630 = vpack.c.b16 %v1620, %v1619
      %v1631 = vpack.c.b16 %v1622, %v1621
      %v1632 = vpack.c.b16 %v1624, %v1623
      %1641 = vmatprep.subr.bf16.mxu0 0
      %1642 = vmatpush1.bf16.msra.mxu0 %v1625
      %1643 = vmatprep.subr.bf16.mxu0 0
      %1644 = vmatpush1.bf16.msra.mxu0 %v1626
      %1645 = vmatprep.subr.bf16.mxu0 0
      %1646 = vmatpush1.bf16.msra.mxu0 %v1627
      %1647 = vmatprep.subr.bf16.mxu0 0
      %1648 = vmatpush1.bf16.msra.mxu0 %v1628
      %1649 = vmatprep.subr.bf16.mxu0 0
      %1650 = vmatpush1.bf16.msra.mxu0 %v1629
      %1651 = vmatprep.subr.bf16.mxu0 0
      %1652 = vmatpush1.bf16.msra.mxu0 %v1630
      %1653 = vmatprep.subr.bf16.mxu0 0
      %1654 = vmatpush1.bf16.msra.mxu0 %v1631
      %1655 = vmatprep.subr.bf16.mxu0 0
      %1656 = vmatpush1.bf16.msra.mxu0 %v1632
      %1657 = vmatprep.subr.bf16.mxu0 0
      %1658 = vmatpush1.bf16.msra.mxu0 0
      %1659 = vmatprep.subr.bf16.mxu0 0
      %1660 = vmatpush1.bf16.msra.mxu0 0
      %1661 = vmatprep.subr.bf16.mxu0 0
      %1662 = vmatpush1.bf16.msra.mxu0 0
      %1663 = vmatprep.subr.bf16.mxu0 0
      %1664 = vmatpush1.bf16.msra.mxu0 0
      %1665 = vmatprep.subr.bf16.mxu0 0
      %1666 = vmatpush1.bf16.msra.mxu0 0
      %1667 = vmatprep.subr.bf16.mxu0 0
      %1668 = vmatpush1.bf16.msra.mxu0 0
      %1669 = vmatprep.subr.bf16.mxu0 0
      %1670 = vmatpush1.bf16.msra.mxu0 0
      %1671 = vmatprep.subr.bf16.mxu0 0
      %1672 = vmatpush1.bf16.msra.mxu0 0
      %1673 = vmatprep.mubr.bf16.mxu0 0
      %1674 = vmatmul.mubr.bf16.gmra.mrb[0].mxu0 %v528
      %v1675 = vpop.f32.mrb[0].mxu0
      %v1676 = vadd.f32 0.0, %v1675
      %v1677 = vpop.f32.mrb[0].mxu0
      %v1678 = vpop.f32.mrb[0].mxu0
      %v1679 = vadd.f32 0.0, %v1678
      %v1680 = vpop.f32.mrb[0].mxu0
      %1681 = vmatprep.mubr.bf16.mxu0 0
      %1682 = vmatmul.mubr.bf16.gmra.mrb[0].mxu0 %v529
      %v1683 = vpop.f32.mrb[0].mxu0
      %v1684 = vadd.f32 0.0, %v1683
      %v1685 = vpop.f32.mrb[0].mxu0
      %v1686 = vpop.f32.mrb[0].mxu0
      %v1687 = vadd.f32 0.0, %v1686
      %v1688 = vpop.f32.mrb[0].mxu0
      %1689 = vmatprep.mubr.bf16.mxu0 0
      %1690 = vmatmul.mubr.bf16.gmra.mrb[0].mxu0 %v530
      %v1691 = vpop.f32.mrb[0].mxu0
      %v1692 = vadd.f32 0.0, %v1691
      %v1693 = vpop.f32.mrb[0].mxu0
      %v1694 = vpop.f32.mrb[0].mxu0
      %v1695 = vadd.f32 0.0, %v1694
      %v1696 = vpop.f32.mrb[0].mxu0
      %1697 = vmatprep.mubr.bf16.mxu0 0
      %1698 = vmatmul.mubr.bf16.gmra.mrb[0].mxu0 %v531
      %v1699 = vpop.f32.mrb[0].mxu0
      %v1700 = vadd.f32 0.0, %v1699
      %v1701 = vpop.f32.mrb[0].mxu0
      %v1702 = vpop.f32.mrb[0].mxu0
      %v1703 = vadd.f32 0.0, %v1702
      %v1704 = vpop.f32.mrb[0].mxu0
      %1705 = vmatprep.mubr.bf16.mxu0 0
      %1706 = vmatmul.mubr.bf16.gmra.mrb[0].mxu0 %v532
      %v1707 = vpop.f32.mrb[0].mxu0
      %v1708 = vadd.f32 0.0, %v1707
      %v1709 = vpop.f32.mrb[0].mxu0
      %v1710 = vpop.f32.mrb[0].mxu0
      %v1711 = vadd.f32 0.0, %v1710
      %v1712 = vpop.f32.mrb[0].mxu0
      %1713 = vmatprep.mubr.bf16.mxu0 0
      %1714 = vmatmul.mubr.bf16.gmra.mrb[0].mxu0 %v533
      %v1715 = vpop.f32.mrb[0].mxu0
      %v1716 = vadd.f32 0.0, %v1715
      %v1717 = vpop.f32.mrb[0].mxu0
      %v1718 = vpop.f32.mrb[0].mxu0
      %v1719 = vadd.f32 0.0, %v1718
      %v1720 = vpop.f32.mrb[0].mxu0
      %1721 = vmatprep.mubr.bf16.mxu0 0
      %1722 = vmatmul.mubr.bf16.gmra.mrb[0].mxu0 %v534
      %v1723 = vpop.f32.mrb[0].mxu0
      %v1724 = vadd.f32 0.0, %v1723
      %v1725 = vpop.f32.mrb[0].mxu0
      %v1726 = vpop.f32.mrb[0].mxu0
      %v1727 = vadd.f32 0.0, %v1726
      %v1728 = vpop.f32.mrb[0].mxu0
      %1729 = vmatprep.mubr.bf16.mxu0 0
      %1730 = vmatmul.mubr.bf16.gmra.mrb[0].mxu0 %v535
      %v1731 = vpop.f32.mrb[0].mxu0
      %v1732 = vadd.f32 0.0, %v1731
      %v1733 = vpop.f32.mrb[0].mxu0
      %v1734 = vpop.f32.mrb[0].mxu0
      %v1735 = vadd.f32 0.0, %v1734
      %v1736 = vpop.f32.mrb[0].mxu0
      %1737 = vmatprep.mubr.bf16.mxu0 0
      %1738 = vmatmul.mubr.bf16.gmra.mrb[0].mxu0 %v536
      %v1739 = vpop.f32.mrb[0].mxu0
      %v1740 = vadd.f32 0.0, %v1739
      %v1741 = vpop.f32.mrb[0].mxu0
      %v1742 = vpop.f32.mrb[0].mxu0
      %v1743 = vadd.f32 0.0, %v1742
      %v1744 = vpop.f32.mrb[0].mxu0
      %1745 = vmatprep.mubr.bf16.mxu0 0
      %1746 = vmatmul.mubr.bf16.gmra.mrb[0].mxu0 %v537
      %v1747 = vpop.f32.mrb[0].mxu0
      %v1748 = vadd.f32 0.0, %v1747
      %v1749 = vpop.f32.mrb[0].mxu0
      %v1750 = vpop.f32.mrb[0].mxu0
      %v1751 = vadd.f32 0.0, %v1750
      %v1752 = vpop.f32.mrb[0].mxu0
      %1753 = vmatprep.mubr.bf16.mxu0 0
      %1754 = vmatmul.mubr.bf16.gmra.mrb[0].mxu0 %v538
      %v1755 = vpop.f32.mrb[0].mxu0
      %v1756 = vadd.f32 0.0, %v1755
      %v1757 = vpop.f32.mrb[0].mxu0
      %v1758 = vpop.f32.mrb[0].mxu0
      %v1759 = vadd.f32 0.0, %v1758
      %v1760 = vpop.f32.mrb[0].mxu0
      %1761 = vmatprep.mubr.bf16.mxu0 0
      %1762 = vmatmul.mubr.bf16.gmra.mrb[0].mxu0 %v539
      %v1763 = vpop.f32.mrb[0].mxu0
      %v1764 = vadd.f32 0.0, %v1763
      %v1765 = vpop.f32.mrb[0].mxu0
      %v1766 = vpop.f32.mrb[0].mxu0
      %v1767 = vadd.f32 0.0, %v1766
      %v1768 = vpop.f32.mrb[0].mxu0
      %1769 = vmatprep.mubr.bf16.mxu0 0
      %1770 = vmatmul.mubr.bf16.gmra.mrb[0].mxu0 %v540
      %v1771 = vpop.f32.mrb[0].mxu0
      %v1772 = vadd.f32 0.0, %v1771
      %v1773 = vpop.f32.mrb[0].mxu0
      %v1774 = vpop.f32.mrb[0].mxu0
      %v1775 = vadd.f32 0.0, %v1774
      %v1776 = vpop.f32.mrb[0].mxu0
      %1777 = vmatprep.mubr.bf16.mxu0 0
      %1778 = vmatmul.mubr.bf16.gmra.mrb[0].mxu0 %v541
      %v1779 = vpop.f32.mrb[0].mxu0
      %v1780 = vadd.f32 0.0, %v1779
      %v1781 = vpop.f32.mrb[0].mxu0
      %v1782 = vpop.f32.mrb[0].mxu0
      %v1783 = vadd.f32 0.0, %v1782
      %v1784 = vpop.f32.mrb[0].mxu0
      %1785 = vmatprep.mubr.bf16.mxu0 0
      %1786 = vmatmul.mubr.bf16.gmra.mrb[0].mxu0 %v542
      %v1787 = vpop.f32.mrb[0].mxu0
      %v1788 = vadd.f32 0.0, %v1787
      %v1789 = vpop.f32.mrb[0].mxu0
      %v1790 = vpop.f32.mrb[0].mxu0
      %v1791 = vadd.f32 0.0, %v1790
      %v1792 = vpop.f32.mrb[0].mxu0
      %1793 = vmatprep.mubr.bf16.mxu0 0
      %1794 = vmatmul.mubr.bf16.gmra.mrb[0].mxu0 %v543
      %v1795 = vpop.f32.mrb[0].mxu0
      %v1796 = vadd.f32 0.0, %v1795
      %v1797 = vpop.f32.mrb[0].mxu0
      %v1798 = vpop.f32.mrb[0].mxu0
      %v1799 = vadd.f32 0.0, %v1798
      %v1800 = vpop.f32.mrb[0].mxu0
      %1801 = vdwg.mxu0
      %v1802 = vadd.f32 %v1544, %v1676
      %v1803 = vadd.f32 %v1545, %v1679
      %v1804 = vadd.f32 %v1546, %v1684
      %v1805 = vadd.f32 %v1547, %v1687
      %v1806 = vadd.f32 %v1548, %v1692
      %v1807 = vadd.f32 %v1549, %v1695
      %v1808 = vadd.f32 %v1550, %v1700
      %v1809 = vadd.f32 %v1551, %v1703
      %v1810 = vadd.f32 %v1552, %v1708
      %v1811 = vadd.f32 %v1553, %v1711
      %v1812 = vadd.f32 %v1554, %v1716
      %v1813 = vadd.f32 %v1555, %v1719
      %v1814 = vadd.f32 %v1556, %v1724
      %v1815 = vadd.f32 %v1557, %v1727
      %v1816 = vadd.f32 %v1558, %v1732
      %v1817 = vadd.f32 %v1559, %v1735
      %v1818 = vadd.f32 %v1560, %v1740
      %v1819 = vadd.f32 %v1561, %v1743
      %v1820 = vadd.f32 %v1562, %v1748
      %v1821 = vadd.f32 %v1563, %v1751
      %v1822 = vadd.f32 %v1564, %v1756
      %v1823 = vadd.f32 %v1565, %v1759
      %v1824 = vadd.f32 %v1566, %v1764
      %v1825 = vadd.f32 %v1567, %v1767
      %v1826 = vadd.f32 %v1568, %v1772
      %v1827 = vadd.f32 %v1569, %v1775
      %v1828 = vadd.f32 %v1570, %v1780
      %v1829 = vadd.f32 %v1571, %v1783
      %v1830 = vadd.f32 %v1572, %v1788
      %v1831 = vadd.f32 %v1573, %v1791
      %v1832 = vadd.f32 %v1574, %v1796
      %v1833 = vadd.f32 %v1575, %v1799
      %v1835 = vshrl.u32 %v543, 16
      %v1837 = vshll.u32 %v543, 16
      %v1839 = vrot.slane %v1837, 1
      %v1840 = vor.u32 %v1835, %v1839
      %v1842 = vshll.u32 %v560, 16
      %v1844 = vrot.slane %v1842, 1
      %v1845 = vsel %vm577, %v1840, %v1844
      %s1847 = scalar_lea.vmem %s237, 256
      %v1848 = vld [vmem:[%s1847] sm:$0xf]
      %v1849 = vld [vmem:[%s1847 + $0x4] sm:$0xf]
      %v1850 = vld [vmem:[%s1847 + $0x8] sm:$0xf]
      %v1851 = vld [vmem:[%s1847 + $0xc] sm:$0xf]
      %v1852 = vld [vmem:[%s1847 + $0x10] sm:$0xf]
      %v1853 = vld [vmem:[%s1847 + $0x14] sm:$0xf]
      %v1854 = vld [vmem:[%s1847 + $0x18] sm:$0xf]
      %v1855 = vld [vmem:[%s1847 + $0x1c] sm:$0xf]
      %v1856 = vld [vmem:[%s1847 + $0x20] sm:$0xf]
      %v1857 = vld [vmem:[%s1847 + $0x24] sm:$0xf]
      %v1858 = vld [vmem:[%s1847 + $0x28] sm:$0xf]
      %v1859 = vld [vmem:[%s1847 + $0x2c] sm:$0xf]
      %v1860 = vld [vmem:[%s1847 + $0x30] sm:$0xf]
      %v1861 = vld [vmem:[%s1847 + $0x34] sm:$0xf]
      %v1862 = vld [vmem:[%s1847 + $0x38] sm:$0xf]
      %v1863 = vld [vmem:[%s1847 + $0x3c] sm:$0xf]
      %v1880 = vunpack.c.l.b16 %v1848
      %v1881 = vunpack.c.l.b16 %v1849
      %v1882 = vunpack.c.l.b16 %v1850
      %v1883 = vunpack.c.l.b16 %v1851
      %v1884 = vunpack.c.l.b16 %v1852
      %v1885 = vunpack.c.l.b16 %v1853
      %v1886 = vunpack.c.l.b16 %v1854
      %v1887 = vunpack.c.l.b16 %v1855
      %v1888 = vunpack.c.l.b16 %v1856
      %v1889 = vunpack.c.l.b16 %v1857
      %v1890 = vunpack.c.l.b16 %v1858
      %v1891 = vunpack.c.l.b16 %v1859
      %v1892 = vunpack.c.l.b16 %v1860
      %v1893 = vunpack.c.l.b16 %v1861
      %v1894 = vunpack.c.l.b16 %v1862
      %v1895 = vunpack.c.l.b16 %v1863
      %v1896 = vpack.c.b16 %v1881, %v1880
      %v1897 = vpack.c.b16 %v1883, %v1882
      %v1898 = vpack.c.b16 %v1885, %v1884
      %v1899 = vpack.c.b16 %v1887, %v1886
      %v1900 = vpack.c.b16 %v1889, %v1888
      %v1901 = vpack.c.b16 %v1891, %v1890
      %v1902 = vpack.c.b16 %v1893, %v1892
      %v1903 = vpack.c.b16 %v1895, %v1894
      %1912 = vmatprep.subr.bf16.mxu0 0
      %1913 = vmatpush1.bf16.msra.mxu0 %v1896
      %1914 = vmatprep.subr.bf16.mxu0 0
      %1915 = vmatpush1.bf16.msra.mxu0 %v1897
      %1916 = vmatprep.subr.bf16.mxu0 0
      %1917 = vmatpush1.bf16.msra.mxu0 %v1898
      %1918 = vmatprep.subr.bf16.mxu0 0
      %1919 = vmatpush1.bf16.msra.mxu0 %v1899
      %1920 = vmatprep.subr.bf16.mxu0 0
      %1921 = vmatpush1.bf16.msra.mxu0 %v1900
      %1922 = vmatprep.subr.bf16.mxu0 0
      %1923 = vmatpush1.bf16.msra.mxu0 %v1901
      %1924 = vmatprep.subr.bf16.mxu0 0
      %1925 = vmatpush1.bf16.msra.mxu0 %v1902
      %1926 = vmatprep.subr.bf16.mxu0 0
      %1927 = vmatpush1.bf16.msra.mxu0 %v1903
      %1928 = vmatprep.subr.bf16.mxu0 0
      %1929 = vmatpush1.bf16.msra.mxu0 0
      %1930 = vmatprep.subr.bf16.mxu0 0
      %1931 = vmatpush1.bf16.msra.mxu0 0
      %1932 = vmatprep.subr.bf16.mxu0 0
      %1933 = vmatpush1.bf16.msra.mxu0 0
      %1934 = vmatprep.subr.bf16.mxu0 0
      %1935 = vmatpush1.bf16.msra.mxu0 0
      %1936 = vmatprep.subr.bf16.mxu0 0
      %1937 = vmatpush1.bf16.msra.mxu0 0
      %1938 = vmatprep.subr.bf16.mxu0 0
      %1939 = vmatpush1.bf16.msra.mxu0 0
      %1940 = vmatprep.subr.bf16.mxu0 0
      %1941 = vmatpush1.bf16.msra.mxu0 0
      %1942 = vmatprep.subr.bf16.mxu0 0
      %1943 = vmatpush1.bf16.msra.mxu0 0
      %1944 = vmatprep.mubr.bf16.mxu0 0
      %1945 = vmatmul.mubr.bf16.gmra.mrb[0].mxu0 %v601
      %v1946 = vpop.f32.mrb[0].mxu0
      %v1947 = vadd.f32 0.0, %v1946
      %v1948 = vpop.f32.mrb[0].mxu0
      %v1949 = vpop.f32.mrb[0].mxu0
      %v1950 = vadd.f32 0.0, %v1949
      %v1951 = vpop.f32.mrb[0].mxu0
      %1952 = vmatprep.mubr.bf16.mxu0 0
      %1953 = vmatmul.mubr.bf16.gmra.mrb[0].mxu0 %v613
      %v1954 = vpop.f32.mrb[0].mxu0
      %v1955 = vadd.f32 0.0, %v1954
      %v1956 = vpop.f32.mrb[0].mxu0
      %v1957 = vpop.f32.mrb[0].mxu0
      %v1958 = vadd.f32 0.0, %v1957
      %v1959 = vpop.f32.mrb[0].mxu0
      %1960 = vmatprep.mubr.bf16.mxu0 0
      %1961 = vmatmul.mubr.bf16.gmra.mrb[0].mxu0 %v625
      %v1962 = vpop.f32.mrb[0].mxu0
      %v1963 = vadd.f32 0.0, %v1962
      %v1964 = vpop.f32.mrb[0].mxu0
      %v1965 = vpop.f32.mrb[0].mxu0
      %v1966 = vadd.f32 0.0, %v1965
      %v1967 = vpop.f32.mrb[0].mxu0
      %1968 = vmatprep.mubr.bf16.mxu0 0
      %1969 = vmatmul.mubr.bf16.gmra.mrb[0].mxu0 %v637
      %v1970 = vpop.f32.mrb[0].mxu0
      %v1971 = vadd.f32 0.0, %v1970
      %v1972 = vpop.f32.mrb[0].mxu0
      %v1973 = vpop.f32.mrb[0].mxu0
      %v1974 = vadd.f32 0.0, %v1973
      %v1975 = vpop.f32.mrb[0].mxu0
      %1976 = vmatprep.mubr.bf16.mxu0 0
      %1977 = vmatmul.mubr.bf16.gmra.mrb[0].mxu0 %v649
      %v1978 = vpop.f32.mrb[0].mxu0
      %v1979 = vadd.f32 0.0, %v1978
      %v1980 = vpop.f32.mrb[0].mxu0
      %v1981 = vpop.f32.mrb[0].mxu0
      %v1982 = vadd.f32 0.0, %v1981
      %v1983 = vpop.f32.mrb[0].mxu0
      %1984 = vmatprep.mubr.bf16.mxu0 0
      %1985 = vmatmul.mubr.bf16.gmra.mrb[0].mxu0 %v661
      %v1986 = vpop.f32.mrb[0].mxu0
      %v1987 = vadd.f32 0.0, %v1986
      %v1988 = vpop.f32.mrb[0].mxu0
      %v1989 = vpop.f32.mrb[0].mxu0
      %v1990 = vadd.f32 0.0, %v1989
      %v1991 = vpop.f32.mrb[0].mxu0
      %1992 = vmatprep.mubr.bf16.mxu0 0
      %1993 = vmatmul.mubr.bf16.gmra.mrb[0].mxu0 %v673
      %v1994 = vpop.f32.mrb[0].mxu0
      %v1995 = vadd.f32 0.0, %v1994
      %v1996 = vpop.f32.mrb[0].mxu0
      %v1997 = vpop.f32.mrb[0].mxu0
      %v1998 = vadd.f32 0.0, %v1997
      %v1999 = vpop.f32.mrb[0].mxu0
      %2000 = vmatprep.mubr.bf16.mxu0 0
      %2001 = vmatmul.mubr.bf16.gmra.mrb[0].mxu0 %v685
      %v2002 = vpop.f32.mrb[0].mxu0
      %v2003 = vadd.f32 0.0, %v2002
      %v2004 = vpop.f32.mrb[0].mxu0
      %v2005 = vpop.f32.mrb[0].mxu0
      %v2006 = vadd.f32 0.0, %v2005
      %v2007 = vpop.f32.mrb[0].mxu0
      %2008 = vmatprep.mubr.bf16.mxu0 0
      %2009 = vmatmul.mubr.bf16.gmra.mrb[0].mxu0 %v697
      %v2010 = vpop.f32.mrb[0].mxu0
      %v2011 = vadd.f32 0.0, %v2010
      %v2012 = vpop.f32.mrb[0].mxu0
      %v2013 = vpop.f32.mrb[0].mxu0
      %v2014 = vadd.f32 0.0, %v2013
      %v2015 = vpop.f32.mrb[0].mxu0
      %2016 = vmatprep.mubr.bf16.mxu0 0
      %2017 = vmatmul.mubr.bf16.gmra.mrb[0].mxu0 %v709
      %v2018 = vpop.f32.mrb[0].mxu0
      %v2019 = vadd.f32 0.0, %v2018
      %v2020 = vpop.f32.mrb[0].mxu0
      %v2021 = vpop.f32.mrb[0].mxu0
      %v2022 = vadd.f32 0.0, %v2021
      %v2023 = vpop.f32.mrb[0].mxu0
      %2024 = vmatprep.mubr.bf16.mxu0 0
      %2025 = vmatmul.mubr.bf16.gmra.mrb[0].mxu0 %v721
      %v2026 = vpop.f32.mrb[0].mxu0
      %v2027 = vadd.f32 0.0, %v2026
      %v2028 = vpop.f32.mrb[0].mxu0
      %v2029 = vpop.f32.mrb[0].mxu0
      %v2030 = vadd.f32 0.0, %v2029
      %v2031 = vpop.f32.mrb[0].mxu0
      %2032 = vmatprep.mubr.bf16.mxu0 0
      %2033 = vmatmul.mubr.bf16.gmra.mrb[0].mxu0 %v733
      %v2034 = vpop.f32.mrb[0].mxu0
      %v2035 = vadd.f32 0.0, %v2034
      %v2036 = vpop.f32.mrb[0].mxu0
      %v2037 = vpop.f32.mrb[0].mxu0
      %v2038 = vadd.f32 0.0, %v2037
      %v2039 = vpop.f32.mrb[0].mxu0
      %2040 = vmatprep.mubr.bf16.mxu0 0
      %2041 = vmatmul.mubr.bf16.gmra.mrb[0].mxu0 %v745
      %v2042 = vpop.f32.mrb[0].mxu0
      %v2043 = vadd.f32 0.0, %v2042
      %v2044 = vpop.f32.mrb[0].mxu0
      %v2045 = vpop.f32.mrb[0].mxu0
      %v2046 = vadd.f32 0.0, %v2045
      %v2047 = vpop.f32.mrb[0].mxu0
      %2048 = vmatprep.mubr.bf16.mxu0 0
      %2049 = vmatmul.mubr.bf16.gmra.mrb[0].mxu0 %v757
      %v2050 = vpop.f32.mrb[0].mxu0
      %v2051 = vadd.f32 0.0, %v2050
      %v2052 = vpop.f32.mrb[0].mxu0
      %v2053 = vpop.f32.mrb[0].mxu0
      %v2054 = vadd.f32 0.0, %v2053
      %v2055 = vpop.f32.mrb[0].mxu0
      %2056 = vmatprep.mubr.bf16.mxu0 0
      %2057 = vmatmul.mubr.bf16.gmra.mrb[0].mxu0 %v769
      %v2058 = vpop.f32.mrb[0].mxu0
      %v2059 = vadd.f32 0.0, %v2058
      %v2060 = vpop.f32.mrb[0].mxu0
      %v2061 = vpop.f32.mrb[0].mxu0
      %v2062 = vadd.f32 0.0, %v2061
      %v2063 = vpop.f32.mrb[0].mxu0
      %2064 = vmatprep.mubr.bf16.mxu0 0
      %2065 = vmatmul.mubr.bf16.gmra.mrb[0].mxu0 %v1845
      %v2066 = vpop.f32.mrb[0].mxu0
      %v2067 = vadd.f32 0.0, %v2066
      %v2068 = vpop.f32.mrb[0].mxu0
      %v2069 = vpop.f32.mrb[0].mxu0
      %v2070 = vadd.f32 0.0, %v2069
      %v2071 = vpop.f32.mrb[0].mxu0
      %2072 = vdwg.mxu0
      %v2073 = vadd.f32 %v1802, %v1947
      %v2074 = vadd.f32 %v1803, %v1950
      %v2075 = vadd.f32 %v1804, %v1955
      %v2076 = vadd.f32 %v1805, %v1958
      %v2077 = vadd.f32 %v1806, %v1963
      %v2078 = vadd.f32 %v1807, %v1966
      %v2079 = vadd.f32 %v1808, %v1971
      %v2080 = vadd.f32 %v1809, %v1974
      %v2081 = vadd.f32 %v1810, %v1979
      %v2082 = vadd.f32 %v1811, %v1982
      %v2083 = vadd.f32 %v1812, %v1987
      %v2084 = vadd.f32 %v1813, %v1990
      %v2085 = vadd.f32 %v1814, %v1995
      %v2086 = vadd.f32 %v1815, %v1998
      %v2087 = vadd.f32 %v1816, %v2003
      %v2088 = vadd.f32 %v1817, %v2006
      %v2089 = vadd.f32 %v1818, %v2011
      %v2090 = vadd.f32 %v1819, %v2014
      %v2091 = vadd.f32 %v1820, %v2019
      %v2092 = vadd.f32 %v1821, %v2022
      %v2093 = vadd.f32 %v1822, %v2027
      %v2094 = vadd.f32 %v1823, %v2030
      %v2095 = vadd.f32 %v1824, %v2035
      %v2096 = vadd.f32 %v1825, %v2038
      %v2097 = vadd.f32 %v1826, %v2043
      %v2098 = vadd.f32 %v1827, %v2046
      %v2099 = vadd.f32 %v1828, %v2051
      %v2100 = vadd.f32 %v1829, %v2054
      %v2101 = vadd.f32 %v1830, %v2059
      %v2102 = vadd.f32 %v1831, %v2062
      %v2103 = vadd.f32 %v1832, %v2067
      %v2104 = vadd.f32 %v1833, %v2070
      %v2107 = vrot.slane %v543, 1
      %v2108 = vrot.slane %v560, 1
      %v2109 = vsel %vm1253, %v2107, %v2108
      %s2111 = scalar_lea.vmem %s237, 320
      %v2112 = vld [vmem:[%s2111] sm:$0xf]
      %v2113 = vld [vmem:[%s2111 + $0x4] sm:$0xf]
      %v2114 = vld [vmem:[%s2111 + $0x8] sm:$0xf]
      %v2115 = vld [vmem:[%s2111 + $0xc] sm:$0xf]
      %v2116 = vld [vmem:[%s2111 + $0x10] sm:$0xf]
      %v2117 = vld [vmem:[%s2111 + $0x14] sm:$0xf]
      %v2118 = vld [vmem:[%s2111 + $0x18] sm:$0xf]
      %v2119 = vld [vmem:[%s2111 + $0x1c] sm:$0xf]
      %v2120 = vld [vmem:[%s2111 + $0x20] sm:$0xf]
      %v2121 = vld [vmem:[%s2111 + $0x24] sm:$0xf]
      %v2122 = vld [vmem:[%s2111 + $0x28] sm:$0xf]
      %v2123 = vld [vmem:[%s2111 + $0x2c] sm:$0xf]
      %v2124 = vld [vmem:[%s2111 + $0x30] sm:$0xf]
      %v2125 = vld [vmem:[%s2111 + $0x34] sm:$0xf]
      %v2126 = vld [vmem:[%s2111 + $0x38] sm:$0xf]
      %v2127 = vld [vmem:[%s2111 + $0x3c] sm:$0xf]
      %v2144 = vunpack.c.l.b16 %v2112
      %v2145 = vunpack.c.l.b16 %v2113
      %v2146 = vunpack.c.l.b16 %v2114
      %v2147 = vunpack.c.l.b16 %v2115
      %v2148 = vunpack.c.l.b16 %v2116
      %v2149 = vunpack.c.l.b16 %v2117
      %v2150 = vunpack.c.l.b16 %v2118
      %v2151 = vunpack.c.l.b16 %v2119
      %v2152 = vunpack.c.l.b16 %v2120
      %v2153 = vunpack.c.l.b16 %v2121
      %v2154 = vunpack.c.l.b16 %v2122
      %v2155 = vunpack.c.l.b16 %v2123
      %v2156 = vunpack.c.l.b16 %v2124
      %v2157 = vunpack.c.l.b16 %v2125
      %v2158 = vunpack.c.l.b16 %v2126
      %v2159 = vunpack.c.l.b16 %v2127
      %v2160 = vpack.c.b16 %v2145, %v2144
      %v2161 = vpack.c.b16 %v2147, %v2146
      %v2162 = vpack.c.b16 %v2149, %v2148
      %v2163 = vpack.c.b16 %v2151, %v2150
      %v2164 = vpack.c.b16 %v2153, %v2152
      %v2165 = vpack.c.b16 %v2155, %v2154
      %v2166 = vpack.c.b16 %v2157, %v2156
      %v2167 = vpack.c.b16 %v2159, %v2158
      %2176 = vmatprep.subr.bf16.mxu0 0
      %2177 = vmatpush1.bf16.msra.mxu0 %v2160
      %2178 = vmatprep.subr.bf16.mxu0 0
      %2179 = vmatpush1.bf16.msra.mxu0 %v2161
      %2180 = vmatprep.subr.bf16.mxu0 0
      %2181 = vmatpush1.bf16.msra.mxu0 %v2162
      %2182 = vmatprep.subr.bf16.mxu0 0
      %2183 = vmatpush1.bf16.msra.mxu0 %v2163
      %2184 = vmatprep.subr.bf16.mxu0 0
      %2185 = vmatpush1.bf16.msra.mxu0 %v2164
      %2186 = vmatprep.subr.bf16.mxu0 0
      %2187 = vmatpush1.bf16.msra.mxu0 %v2165
      %2188 = vmatprep.subr.bf16.mxu0 0
      %2189 = vmatpush1.bf16.msra.mxu0 %v2166
      %2190 = vmatprep.subr.bf16.mxu0 0
      %2191 = vmatpush1.bf16.msra.mxu0 %v2167
      %2192 = vmatprep.subr.bf16.mxu0 0
      %2193 = vmatpush1.bf16.msra.mxu0 0
      %2194 = vmatprep.subr.bf16.mxu0 0
      %2195 = vmatpush1.bf16.msra.mxu0 0
      %2196 = vmatprep.subr.bf16.mxu0 0
      %2197 = vmatpush1.bf16.msra.mxu0 0
      %2198 = vmatprep.subr.bf16.mxu0 0
      %2199 = vmatpush1.bf16.msra.mxu0 0
      %2200 = vmatprep.subr.bf16.mxu0 0
      %2201 = vmatpush1.bf16.msra.mxu0 0
      %2202 = vmatprep.subr.bf16.mxu0 0
      %2203 = vmatpush1.bf16.msra.mxu0 0
      %2204 = vmatprep.subr.bf16.mxu0 0
      %2205 = vmatpush1.bf16.msra.mxu0 0
      %2206 = vmatprep.subr.bf16.mxu0 0
      %2207 = vmatpush1.bf16.msra.mxu0 0
      %2208 = vmatprep.mubr.bf16.mxu0 0
      %2209 = vmatmul.mubr.bf16.gmra.mrb[0].mxu0 %v1259
      %v2210 = vpop.f32.mrb[0].mxu0
      %v2211 = vadd.f32 0.0, %v2210
      %v2212 = vpop.f32.mrb[0].mxu0
      %v2213 = vpop.f32.mrb[0].mxu0
      %v2214 = vadd.f32 0.0, %v2213
      %v2215 = vpop.f32.mrb[0].mxu0
      %2216 = vmatprep.mubr.bf16.mxu0 0
      %2217 = vmatmul.mubr.bf16.gmra.mrb[0].mxu0 %v1262
      %v2218 = vpop.f32.mrb[0].mxu0
      %v2219 = vadd.f32 0.0, %v2218
      %v2220 = vpop.f32.mrb[0].mxu0
      %v2221 = vpop.f32.mrb[0].mxu0
      %v2222 = vadd.f32 0.0, %v2221
      %v2223 = vpop.f32.mrb[0].mxu0
      %2224 = vmatprep.mubr.bf16.mxu0 0
      %2225 = vmatmul.mubr.bf16.gmra.mrb[0].mxu0 %v1265
      %v2226 = vpop.f32.mrb[0].mxu0
      %v2227 = vadd.f32 0.0, %v2226
      %v2228 = vpop.f32.mrb[0].mxu0
      %v2229 = vpop.f32.mrb[0].mxu0
      %v2230 = vadd.f32 0.0, %v2229
      %v2231 = vpop.f32.mrb[0].mxu0
      %2232 = vmatprep.mubr.bf16.mxu0 0
      %2233 = vmatmul.mubr.bf16.gmra.mrb[0].mxu0 %v1268
      %v2234 = vpop.f32.mrb[0].mxu0
      %v2235 = vadd.f32 0.0, %v2234
      %v2236 = vpop.f32.mrb[0].mxu0
      %v2237 = vpop.f32.mrb[0].mxu0
      %v2238 = vadd.f32 0.0, %v2237
      %v2239 = vpop.f32.mrb[0].mxu0
      %2240 = vmatprep.mubr.bf16.mxu0 0
      %2241 = vmatmul.mubr.bf16.gmra.mrb[0].mxu0 %v1271
      %v2242 = vpop.f32.mrb[0].mxu0
      %v2243 = vadd.f32 0.0, %v2242
      %v2244 = vpop.f32.mrb[0].mxu0
      %v2245 = vpop.f32.mrb[0].mxu0
      %v2246 = vadd.f32 0.0, %v2245
      %v2247 = vpop.f32.mrb[0].mxu0
      %2248 = vmatprep.mubr.bf16.mxu0 0
      %2249 = vmatmul.mubr.bf16.gmra.mrb[0].mxu0 %v1274
      %v2250 = vpop.f32.mrb[0].mxu0
      %v2251 = vadd.f32 0.0, %v2250
      %v2252 = vpop.f32.mrb[0].mxu0
      %v2253 = vpop.f32.mrb[0].mxu0
      %v2254 = vadd.f32 0.0, %v2253
      %v2255 = vpop.f32.mrb[0].mxu0
      %2256 = vmatprep.mubr.bf16.mxu0 0
      %2257 = vmatmul.mubr.bf16.gmra.mrb[0].mxu0 %v1277
      %v2258 = vpop.f32.mrb[0].mxu0
      %v2259 = vadd.f32 0.0, %v2258
      %v2260 = vpop.f32.mrb[0].mxu0
      %v2261 = vpop.f32.mrb[0].mxu0
      %v2262 = vadd.f32 0.0, %v2261
      %v2263 = vpop.f32.mrb[0].mxu0
      %2264 = vmatprep.mubr.bf16.mxu0 0
      %2265 = vmatmul.mubr.bf16.gmra.mrb[0].mxu0 %v1280
      %v2266 = vpop.f32.mrb[0].mxu0
      %v2267 = vadd.f32 0.0, %v2266
      %v2268 = vpop.f32.mrb[0].mxu0
      %v2269 = vpop.f32.mrb[0].mxu0
      %v2270 = vadd.f32 0.0, %v2269
      %v2271 = vpop.f32.mrb[0].mxu0
      %2272 = vmatprep.mubr.bf16.mxu0 0
      %2273 = vmatmul.mubr.bf16.gmra.mrb[0].mxu0 %v1283
      %v2274 = vpop.f32.mrb[0].mxu0
      %v2275 = vadd.f32 0.0, %v2274
      %v2276 = vpop.f32.mrb[0].mxu0
      %v2277 = vpop.f32.mrb[0].mxu0
      %v2278 = vadd.f32 0.0, %v2277
      %v2279 = vpop.f32.mrb[0].mxu0
      %2280 = vmatprep.mubr.bf16.mxu0 0
      %2281 = vmatmul.mubr.bf16.gmra.mrb[0].mxu0 %v1286
      %v2282 = vpop.f32.mrb[0].mxu0
      %v2283 = vadd.f32 0.0, %v2282
      %v2284 = vpop.f32.mrb[0].mxu0
      %v2285 = vpop.f32.mrb[0].mxu0
      %v2286 = vadd.f32 0.0, %v2285
      %v2287 = vpop.f32.mrb[0].mxu0
      %2288 = vmatprep.mubr.bf16.mxu0 0
      %2289 = vmatmul.mubr.bf16.gmra.mrb[0].mxu0 %v1289
      %v2290 = vpop.f32.mrb[0].mxu0
      %v2291 = vadd.f32 0.0, %v2290
      %v2292 = vpop.f32.mrb[0].mxu0
      %v2293 = vpop.f32.mrb[0].mxu0
      %v2294 = vadd.f32 0.0, %v2293
      %v2295 = vpop.f32.mrb[0].mxu0
      %2296 = vmatprep.mubr.bf16.mxu0 0
      %2297 = vmatmul.mubr.bf16.gmra.mrb[0].mxu0 %v1292
      %v2298 = vpop.f32.mrb[0].mxu0
      %v2299 = vadd.f32 0.0, %v2298
      %v2300 = vpop.f32.mrb[0].mxu0
      %v2301 = vpop.f32.mrb[0].mxu0
      %v2302 = vadd.f32 0.0, %v2301
      %v2303 = vpop.f32.mrb[0].mxu0
      %2304 = vmatprep.mubr.bf16.mxu0 0
      %2305 = vmatmul.mubr.bf16.gmra.mrb[0].mxu0 %v1295
      %v2306 = vpop.f32.mrb[0].mxu0
      %v2307 = vadd.f32 0.0, %v2306
      %v2308 = vpop.f32.mrb[0].mxu0
      %v2309 = vpop.f32.mrb[0].mxu0
      %v2310 = vadd.f32 0.0, %v2309
      %v2311 = vpop.f32.mrb[0].mxu0
      %2312 = vmatprep.mubr.bf16.mxu0 0
      %2313 = vmatmul.mubr.bf16.gmra.mrb[0].mxu0 %v1298
      %v2314 = vpop.f32.mrb[0].mxu0
      %v2315 = vadd.f32 0.0, %v2314
      %v2316 = vpop.f32.mrb[0].mxu0
      %v2317 = vpop.f32.mrb[0].mxu0
      %v2318 = vadd.f32 0.0, %v2317
      %v2319 = vpop.f32.mrb[0].mxu0
      %2320 = vmatprep.mubr.bf16.mxu0 0
      %2321 = vmatmul.mubr.bf16.gmra.mrb[0].mxu0 %v1301
      %v2322 = vpop.f32.mrb[0].mxu0
      %v2323 = vadd.f32 0.0, %v2322
      %v2324 = vpop.f32.mrb[0].mxu0
      %v2325 = vpop.f32.mrb[0].mxu0
      %v2326 = vadd.f32 0.0, %v2325
      %v2327 = vpop.f32.mrb[0].mxu0
      %2328 = vmatprep.mubr.bf16.mxu0 0
      %2329 = vmatmul.mubr.bf16.gmra.mrb[0].mxu0 %v2109
      %v2330 = vpop.f32.mrb[0].mxu0
      %v2331 = vadd.f32 0.0, %v2330
      %v2332 = vpop.f32.mrb[0].mxu0
      %v2333 = vpop.f32.mrb[0].mxu0
      %v2334 = vadd.f32 0.0, %v2333
      %v2335 = vpop.f32.mrb[0].mxu0
      %2336 = vdwg.mxu0
      %v2337 = vadd.f32 %v2073, %v2211
      %v2338 = vadd.f32 %v2074, %v2214
      %v2339 = vadd.f32 %v2075, %v2219
      %v2340 = vadd.f32 %v2076, %v2222
      %v2341 = vadd.f32 %v2077, %v2227
      %v2342 = vadd.f32 %v2078, %v2230
      %v2343 = vadd.f32 %v2079, %v2235
      %v2344 = vadd.f32 %v2080, %v2238
      %v2345 = vadd.f32 %v2081, %v2243
      %v2346 = vadd.f32 %v2082, %v2246
      %v2347 = vadd.f32 %v2083, %v2251
      %v2348 = vadd.f32 %v2084, %v2254
      %v2349 = vadd.f32 %v2085, %v2259
      %v2350 = vadd.f32 %v2086, %v2262
      %v2351 = vadd.f32 %v2087, %v2267
      %v2352 = vadd.f32 %v2088, %v2270
      %v2353 = vadd.f32 %v2089, %v2275
      %v2354 = vadd.f32 %v2090, %v2278
      %v2355 = vadd.f32 %v2091, %v2283
      %v2356 = vadd.f32 %v2092, %v2286
      %v2357 = vadd.f32 %v2093, %v2291
      %v2358 = vadd.f32 %v2094, %v2294
      %v2359 = vadd.f32 %v2095, %v2299
      %v2360 = vadd.f32 %v2096, %v2302
      %v2361 = vadd.f32 %v2097, %v2307
      %v2362 = vadd.f32 %v2098, %v2310
      %v2363 = vadd.f32 %v2099, %v2315
      %v2364 = vadd.f32 %v2100, %v2318
      %v2365 = vadd.f32 %v2101, %v2323
      %v2366 = vadd.f32 %v2102, %v2326
      %v2367 = vadd.f32 %v2103, %v2331
      %v2368 = vadd.f32 %v2104, %v2334
      %s2369 = scalar_lea.vmem %s237, 384
      %v2370 = vld [vmem:[%s2369] sm:$0xf]
      %v2371 = vld [vmem:[%s2369 + $0x4] sm:$0xf]
      %v2372 = vld [vmem:[%s2369 + $0x8] sm:$0xf]
      %v2373 = vld [vmem:[%s2369 + $0xc] sm:$0xf]
      %v2374 = vld [vmem:[%s2369 + $0x10] sm:$0xf]
      %v2375 = vld [vmem:[%s2369 + $0x14] sm:$0xf]
      %v2376 = vld [vmem:[%s2369 + $0x18] sm:$0xf]
      %v2377 = vld [vmem:[%s2369 + $0x1c] sm:$0xf]
      %v2378 = vld [vmem:[%s2369 + $0x20] sm:$0xf]
      %v2379 = vld [vmem:[%s2369 + $0x24] sm:$0xf]
      %v2380 = vld [vmem:[%s2369 + $0x28] sm:$0xf]
      %v2381 = vld [vmem:[%s2369 + $0x2c] sm:$0xf]
      %v2382 = vld [vmem:[%s2369 + $0x30] sm:$0xf]
      %v2383 = vld [vmem:[%s2369 + $0x34] sm:$0xf]
      %v2384 = vld [vmem:[%s2369 + $0x38] sm:$0xf]
      %v2385 = vld [vmem:[%s2369 + $0x3c] sm:$0xf]
      %v2402 = vunpack.c.l.b16 %v2370
      %v2403 = vunpack.c.l.b16 %v2371
      %v2404 = vunpack.c.l.b16 %v2372
      %v2405 = vunpack.c.l.b16 %v2373
      %v2406 = vunpack.c.l.b16 %v2374
      %v2407 = vunpack.c.l.b16 %v2375
      %v2408 = vunpack.c.l.b16 %v2376
      %v2409 = vunpack.c.l.b16 %v2377
      %v2410 = vunpack.c.l.b16 %v2378
      %v2411 = vunpack.c.l.b16 %v2379
      %v2412 = vunpack.c.l.b16 %v2380
      %v2413 = vunpack.c.l.b16 %v2381
      %v2414 = vunpack.c.l.b16 %v2382
      %v2415 = vunpack.c.l.b16 %v2383
      %v2416 = vunpack.c.l.b16 %v2384
      %v2417 = vunpack.c.l.b16 %v2385
      %v2418 = vpack.c.b16 %v2403, %v2402
      %v2419 = vpack.c.b16 %v2405, %v2404
      %v2420 = vpack.c.b16 %v2407, %v2406
      %v2421 = vpack.c.b16 %v2409, %v2408
      %v2422 = vpack.c.b16 %v2411, %v2410
      %v2423 = vpack.c.b16 %v2413, %v2412
      %v2424 = vpack.c.b16 %v2415, %v2414
      %v2425 = vpack.c.b16 %v2417, %v2416
      %2434 = vmatprep.subr.bf16.mxu0 0
      %2435 = vmatpush1.bf16.msra.mxu0 %v2418
      %2436 = vmatprep.subr.bf16.mxu0 0
      %2437 = vmatpush1.bf16.msra.mxu0 %v2419
      %2438 = vmatprep.subr.bf16.mxu0 0
      %2439 = vmatpush1.bf16.msra.mxu0 %v2420
      %2440 = vmatprep.subr.bf16.mxu0 0
      %2441 = vmatpush1.bf16.msra.mxu0 %v2421
      %2442 = vmatprep.subr.bf16.mxu0 0
      %2443 = vmatpush1.bf16.msra.mxu0 %v2422
      %2444 = vmatprep.subr.bf16.mxu0 0
      %2445 = vmatpush1.bf16.msra.mxu0 %v2423
      %2446 = vmatprep.subr.bf16.mxu0 0
      %2447 = vmatpush1.bf16.msra.mxu0 %v2424
      %2448 = vmatprep.subr.bf16.mxu0 0
      %2449 = vmatpush1.bf16.msra.mxu0 %v2425
      %2450 = vmatprep.subr.bf16.mxu0 0
      %2451 = vmatpush1.bf16.msra.mxu0 0
      %2452 = vmatprep.subr.bf16.mxu0 0
      %2453 = vmatpush1.bf16.msra.mxu0 0
      %2454 = vmatprep.subr.bf16.mxu0 0
      %2455 = vmatpush1.bf16.msra.mxu0 0
      %2456 = vmatprep.subr.bf16.mxu0 0
      %2457 = vmatpush1.bf16.msra.mxu0 0
      %2458 = vmatprep.subr.bf16.mxu0 0
      %2459 = vmatpush1.bf16.msra.mxu0 0
      %2460 = vmatprep.subr.bf16.mxu0 0
      %2461 = vmatpush1.bf16.msra.mxu0 0
      %2462 = vmatprep.subr.bf16.mxu0 0
      %2463 = vmatpush1.bf16.msra.mxu0 0
      %2464 = vmatprep.subr.bf16.mxu0 0
      %2465 = vmatpush1.bf16.msra.mxu0 0
      %2466 = vmatprep.mubr.bf16.mxu0 0
      %2467 = vmatmul.mubr.bf16.gmra.mrb[0].mxu0 %v529
      %v2468 = vpop.f32.mrb[0].mxu0
      %v2469 = vadd.f32 0.0, %v2468
      %v2470 = vpop.f32.mrb[0].mxu0
      %v2471 = vpop.f32.mrb[0].mxu0
      %v2472 = vadd.f32 0.0, %v2471
      %v2473 = vpop.f32.mrb[0].mxu0
      %2474 = vmatprep.mubr.bf16.mxu0 0
      %2475 = vmatmul.mubr.bf16.gmra.mrb[0].mxu0 %v530
      %v2476 = vpop.f32.mrb[0].mxu0
      %v2477 = vadd.f32 0.0, %v2476
      %v2478 = vpop.f32.mrb[0].mxu0
      %v2479 = vpop.f32.mrb[0].mxu0
      %v2480 = vadd.f32 0.0, %v2479
      %v2481 = vpop.f32.mrb[0].mxu0
      %2482 = vmatprep.mubr.bf16.mxu0 0
      %2483 = vmatmul.mubr.bf16.gmra.mrb[0].mxu0 %v531
      %v2484 = vpop.f32.mrb[0].mxu0
      %v2485 = vadd.f32 0.0, %v2484
      %v2486 = vpop.f32.mrb[0].mxu0
      %v2487 = vpop.f32.mrb[0].mxu0
      %v2488 = vadd.f32 0.0, %v2487
      %v2489 = vpop.f32.mrb[0].mxu0
      %2490 = vmatprep.mubr.bf16.mxu0 0
      %2491 = vmatmul.mubr.bf16.gmra.mrb[0].mxu0 %v532
      %v2492 = vpop.f32.mrb[0].mxu0
      %v2493 = vadd.f32 0.0, %v2492
      %v2494 = vpop.f32.mrb[0].mxu0
      %v2495 = vpop.f32.mrb[0].mxu0
      %v2496 = vadd.f32 0.0, %v2495
      %v2497 = vpop.f32.mrb[0].mxu0
      %2498 = vmatprep.mubr.bf16.mxu0 0
      %2499 = vmatmul.mubr.bf16.gmra.mrb[0].mxu0 %v533
      %v2500 = vpop.f32.mrb[0].mxu0
      %v2501 = vadd.f32 0.0, %v2500
      %v2502 = vpop.f32.mrb[0].mxu0
      %v2503 = vpop.f32.mrb[0].mxu0
      %v2504 = vadd.f32 0.0, %v2503
      %v2505 = vpop.f32.mrb[0].mxu0
      %2506 = vmatprep.mubr.bf16.mxu0 0
      %2507 = vmatmul.mubr.bf16.gmra.mrb[0].mxu0 %v534
      %v2508 = vpop.f32.mrb[0].mxu0
      %v2509 = vadd.f32 0.0, %v2508
      %v2510 = vpop.f32.mrb[0].mxu0
      %v2511 = vpop.f32.mrb[0].mxu0
      %v2512 = vadd.f32 0.0, %v2511
      %v2513 = vpop.f32.mrb[0].mxu0
      %2514 = vmatprep.mubr.bf16.mxu0 0
      %2515 = vmatmul.mubr.bf16.gmra.mrb[0].mxu0 %v535
      %v2516 = vpop.f32.mrb[0].mxu0
      %v2517 = vadd.f32 0.0, %v2516
      %v2518 = vpop.f32.mrb[0].mxu0
      %v2519 = vpop.f32.mrb[0].mxu0
      %v2520 = vadd.f32 0.0, %v2519
      %v2521 = vpop.f32.mrb[0].mxu0
      %2522 = vmatprep.mubr.bf16.mxu0 0
      %2523 = vmatmul.mubr.bf16.gmra.mrb[0].mxu0 %v536
      %v2524 = vpop.f32.mrb[0].mxu0
      %v2525 = vadd.f32 0.0, %v2524
      %v2526 = vpop.f32.mrb[0].mxu0
      %v2527 = vpop.f32.mrb[0].mxu0
      %v2528 = vadd.f32 0.0, %v2527
      %v2529 = vpop.f32.mrb[0].mxu0
      %2530 = vmatprep.mubr.bf16.mxu0 0
      %2531 = vmatmul.mubr.bf16.gmra.mrb[0].mxu0 %v537
      %v2532 = vpop.f32.mrb[0].mxu0
      %v2533 = vadd.f32 0.0, %v2532
      %v2534 = vpop.f32.mrb[0].mxu0
      %v2535 = vpop.f32.mrb[0].mxu0
      %v2536 = vadd.f32 0.0, %v2535
      %v2537 = vpop.f32.mrb[0].mxu0
      %2538 = vmatprep.mubr.bf16.mxu0 0
      %2539 = vmatmul.mubr.bf16.gmra.mrb[0].mxu0 %v538
      %v2540 = vpop.f32.mrb[0].mxu0
      %v2541 = vadd.f32 0.0, %v2540
      %v2542 = vpop.f32.mrb[0].mxu0
      %v2543 = vpop.f32.mrb[0].mxu0
      %v2544 = vadd.f32 0.0, %v2543
      %v2545 = vpop.f32.mrb[0].mxu0
      %2546 = vmatprep.mubr.bf16.mxu0 0
      %2547 = vmatmul.mubr.bf16.gmra.mrb[0].mxu0 %v539
      %v2548 = vpop.f32.mrb[0].mxu0
      %v2549 = vadd.f32 0.0, %v2548
      %v2550 = vpop.f32.mrb[0].mxu0
      %v2551 = vpop.f32.mrb[0].mxu0
      %v2552 = vadd.f32 0.0, %v2551
      %v2553 = vpop.f32.mrb[0].mxu0
      %2554 = vmatprep.mubr.bf16.mxu0 0
      %2555 = vmatmul.mubr.bf16.gmra.mrb[0].mxu0 %v540
      %v2556 = vpop.f32.mrb[0].mxu0
      %v2557 = vadd.f32 0.0, %v2556
      %v2558 = vpop.f32.mrb[0].mxu0
      %v2559 = vpop.f32.mrb[0].mxu0
      %v2560 = vadd.f32 0.0, %v2559
      %v2561 = vpop.f32.mrb[0].mxu0
      %2562 = vmatprep.mubr.bf16.mxu0 0
      %2563 = vmatmul.mubr.bf16.gmra.mrb[0].mxu0 %v541
      %v2564 = vpop.f32.mrb[0].mxu0
      %v2565 = vadd.f32 0.0, %v2564
      %v2566 = vpop.f32.mrb[0].mxu0
      %v2567 = vpop.f32.mrb[0].mxu0
      %v2568 = vadd.f32 0.0, %v2567
      %v2569 = vpop.f32.mrb[0].mxu0
      %2570 = vmatprep.mubr.bf16.mxu0 0
      %2571 = vmatmul.mubr.bf16.gmra.mrb[0].mxu0 %v542
      %v2572 = vpop.f32.mrb[0].mxu0
      %v2573 = vadd.f32 0.0, %v2572
      %v2574 = vpop.f32.mrb[0].mxu0
      %v2575 = vpop.f32.mrb[0].mxu0
      %v2576 = vadd.f32 0.0, %v2575
      %v2577 = vpop.f32.mrb[0].mxu0
      %2578 = vmatprep.mubr.bf16.mxu0 0
      %2579 = vmatmul.mubr.bf16.gmra.mrb[0].mxu0 %v543
      %v2580 = vpop.f32.mrb[0].mxu0
      %v2581 = vadd.f32 0.0, %v2580
      %v2582 = vpop.f32.mrb[0].mxu0
      %v2583 = vpop.f32.mrb[0].mxu0
      %v2584 = vadd.f32 0.0, %v2583
      %v2585 = vpop.f32.mrb[0].mxu0
      %2586 = vmatprep.mubr.bf16.mxu0 0
      %2587 = vmatmul.mubr.bf16.gmra.mrb[0].mxu0 %v527
      %v2588 = vpop.f32.mrb[0].mxu0
      %v2589 = vadd.f32 0.0, %v2588
      %v2590 = vpop.f32.mrb[0].mxu0
      %v2591 = vpop.f32.mrb[0].mxu0
      %v2592 = vadd.f32 0.0, %v2591
      %v2593 = vpop.f32.mrb[0].mxu0
      %2594 = vdwg.mxu0
      %v2595 = vadd.f32 %v2337, %v2469
      %v2596 = vadd.f32 %v2338, %v2472
      %v2597 = vadd.f32 %v2339, %v2477
      %v2598 = vadd.f32 %v2340, %v2480
      %v2599 = vadd.f32 %v2341, %v2485
      %v2600 = vadd.f32 %v2342, %v2488
      %v2601 = vadd.f32 %v2343, %v2493
      %v2602 = vadd.f32 %v2344, %v2496
      %v2603 = vadd.f32 %v2345, %v2501
      %v2604 = vadd.f32 %v2346, %v2504
      %v2605 = vadd.f32 %v2347, %v2509
      %v2606 = vadd.f32 %v2348, %v2512
      %v2607 = vadd.f32 %v2349, %v2517
      %v2608 = vadd.f32 %v2350, %v2520
      %v2609 = vadd.f32 %v2351, %v2525
      %v2610 = vadd.f32 %v2352, %v2528
      %v2611 = vadd.f32 %v2353, %v2533
      %v2612 = vadd.f32 %v2354, %v2536
      %v2613 = vadd.f32 %v2355, %v2541
      %v2614 = vadd.f32 %v2356, %v2544
      %v2615 = vadd.f32 %v2357, %v2549
      %v2616 = vadd.f32 %v2358, %v2552
      %v2617 = vadd.f32 %v2359, %v2557
      %v2618 = vadd.f32 %v2360, %v2560
      %v2619 = vadd.f32 %v2361, %v2565
      %v2620 = vadd.f32 %v2362, %v2568
      %v2621 = vadd.f32 %v2363, %v2573
      %v2622 = vadd.f32 %v2364, %v2576
      %v2623 = vadd.f32 %v2365, %v2581
      %v2624 = vadd.f32 %v2366, %v2584
      %v2625 = vadd.f32 %v2367, %v2589
      %v2626 = vadd.f32 %v2368, %v2592
      %s2627 = scalar_lea.vmem %s237, 448
      %v2628 = vld [vmem:[%s2627] sm:$0xf]
      %v2629 = vld [vmem:[%s2627 + $0x4] sm:$0xf]
      %v2630 = vld [vmem:[%s2627 + $0x8] sm:$0xf]
      %v2631 = vld [vmem:[%s2627 + $0xc] sm:$0xf]
      %v2632 = vld [vmem:[%s2627 + $0x10] sm:$0xf]
      %v2633 = vld [vmem:[%s2627 + $0x14] sm:$0xf]
      %v2634 = vld [vmem:[%s2627 + $0x18] sm:$0xf]
      %v2635 = vld [vmem:[%s2627 + $0x1c] sm:$0xf]
      %v2636 = vld [vmem:[%s2627 + $0x20] sm:$0xf]
      %v2637 = vld [vmem:[%s2627 + $0x24] sm:$0xf]
      %v2638 = vld [vmem:[%s2627 + $0x28] sm:$0xf]
      %v2639 = vld [vmem:[%s2627 + $0x2c] sm:$0xf]
      %v2640 = vld [vmem:[%s2627 + $0x30] sm:$0xf]
      %v2641 = vld [vmem:[%s2627 + $0x34] sm:$0xf]
      %v2642 = vld [vmem:[%s2627 + $0x38] sm:$0xf]
      %v2643 = vld [vmem:[%s2627 + $0x3c] sm:$0xf]
      %v2660 = vunpack.c.l.b16 %v2628
      %v2661 = vunpack.c.l.b16 %v2629
      %v2662 = vunpack.c.l.b16 %v2630
      %v2663 = vunpack.c.l.b16 %v2631
      %v2664 = vunpack.c.l.b16 %v2632
      %v2665 = vunpack.c.l.b16 %v2633
      %v2666 = vunpack.c.l.b16 %v2634
      %v2667 = vunpack.c.l.b16 %v2635
      %v2668 = vunpack.c.l.b16 %v2636
      %v2669 = vunpack.c.l.b16 %v2637
      %v2670 = vunpack.c.l.b16 %v2638
      %v2671 = vunpack.c.l.b16 %v2639
      %v2672 = vunpack.c.l.b16 %v2640
      %v2673 = vunpack.c.l.b16 %v2641
      %v2674 = vunpack.c.l.b16 %v2642
      %v2675 = vunpack.c.l.b16 %v2643
      %v2676 = vpack.c.b16 %v2661, %v2660
      %v2677 = vpack.c.b16 %v2663, %v2662
      %v2678 = vpack.c.b16 %v2665, %v2664
      %v2679 = vpack.c.b16 %v2667, %v2666
      %v2680 = vpack.c.b16 %v2669, %v2668
      %v2681 = vpack.c.b16 %v2671, %v2670
      %v2682 = vpack.c.b16 %v2673, %v2672
      %v2683 = vpack.c.b16 %v2675, %v2674
      %2692 = vmatprep.subr.bf16.mxu0 0
      %2693 = vmatpush1.bf16.msra.mxu0 %v2676
      %2694 = vmatprep.subr.bf16.mxu0 0
      %2695 = vmatpush1.bf16.msra.mxu0 %v2677
      %2696 = vmatprep.subr.bf16.mxu0 0
      %2697 = vmatpush1.bf16.msra.mxu0 %v2678
      %2698 = vmatprep.subr.bf16.mxu0 0
      %2699 = vmatpush1.bf16.msra.mxu0 %v2679
      %2700 = vmatprep.subr.bf16.mxu0 0
      %2701 = vmatpush1.bf16.msra.mxu0 %v2680
      %2702 = vmatprep.subr.bf16.mxu0 0
      %2703 = vmatpush1.bf16.msra.mxu0 %v2681
      %2704 = vmatprep.subr.bf16.mxu0 0
      %2705 = vmatpush1.bf16.msra.mxu0 %v2682
      %2706 = vmatprep.subr.bf16.mxu0 0
      %2707 = vmatpush1.bf16.msra.mxu0 %v2683
      %2708 = vmatprep.subr.bf16.mxu0 0
      %2709 = vmatpush1.bf16.msra.mxu0 0
      %2710 = vmatprep.subr.bf16.mxu0 0
      %2711 = vmatpush1.bf16.msra.mxu0 0
      %2712 = vmatprep.subr.bf16.mxu0 0
      %2713 = vmatpush1.bf16.msra.mxu0 0
      %2714 = vmatprep.subr.bf16.mxu0 0
      %2715 = vmatpush1.bf16.msra.mxu0 0
      %2716 = vmatprep.subr.bf16.mxu0 0
      %2717 = vmatpush1.bf16.msra.mxu0 0
      %2718 = vmatprep.subr.bf16.mxu0 0
      %2719 = vmatpush1.bf16.msra.mxu0 0
      %2720 = vmatprep.subr.bf16.mxu0 0
      %2721 = vmatpush1.bf16.msra.mxu0 0
      %2722 = vmatprep.subr.bf16.mxu0 0
      %2723 = vmatpush1.bf16.msra.mxu0 0
      %2724 = vmatprep.mubr.bf16.mxu0 0
      %2725 = vmatmul.mubr.bf16.gmra.mrb[0].mxu0 %v613
      %v2726 = vpop.f32.mrb[0].mxu0
      %v2727 = vadd.f32 0.0, %v2726
      %v2728 = vpop.f32.mrb[0].mxu0
      %v2729 = vpop.f32.mrb[0].mxu0
      %v2730 = vadd.f32 0.0, %v2729
      %v2731 = vpop.f32.mrb[0].mxu0
      %2732 = vmatprep.mubr.bf16.mxu0 0
      %2733 = vmatmul.mubr.bf16.gmra.mrb[0].mxu0 %v625
      %v2734 = vpop.f32.mrb[0].mxu0
      %v2735 = vadd.f32 0.0, %v2734
      %v2736 = vpop.f32.mrb[0].mxu0
      %v2737 = vpop.f32.mrb[0].mxu0
      %v2738 = vadd.f32 0.0, %v2737
      %v2739 = vpop.f32.mrb[0].mxu0
      %2740 = vmatprep.mubr.bf16.mxu0 0
      %2741 = vmatmul.mubr.bf16.gmra.mrb[0].mxu0 %v637
      %v2742 = vpop.f32.mrb[0].mxu0
      %v2743 = vadd.f32 0.0, %v2742
      %v2744 = vpop.f32.mrb[0].mxu0
      %v2745 = vpop.f32.mrb[0].mxu0
      %v2746 = vadd.f32 0.0, %v2745
      %v2747 = vpop.f32.mrb[0].mxu0
      %2748 = vmatprep.mubr.bf16.mxu0 0
      %2749 = vmatmul.mubr.bf16.gmra.mrb[0].mxu0 %v649
      %v2750 = vpop.f32.mrb[0].mxu0
      %v2751 = vadd.f32 0.0, %v2750
      %v2752 = vpop.f32.mrb[0].mxu0
      %v2753 = vpop.f32.mrb[0].mxu0
      %v2754 = vadd.f32 0.0, %v2753
      %v2755 = vpop.f32.mrb[0].mxu0
      %2756 = vmatprep.mubr.bf16.mxu0 0
      %2757 = vmatmul.mubr.bf16.gmra.mrb[0].mxu0 %v661
      %v2758 = vpop.f32.mrb[0].mxu0
      %v2759 = vadd.f32 0.0, %v2758
      %v2760 = vpop.f32.mrb[0].mxu0
      %v2761 = vpop.f32.mrb[0].mxu0
      %v2762 = vadd.f32 0.0, %v2761
      %v2763 = vpop.f32.mrb[0].mxu0
      %2764 = vmatprep.mubr.bf16.mxu0 0
      %2765 = vmatmul.mubr.bf16.gmra.mrb[0].mxu0 %v673
      %v2766 = vpop.f32.mrb[0].mxu0
      %v2767 = vadd.f32 0.0, %v2766
      %v2768 = vpop.f32.mrb[0].mxu0
      %v2769 = vpop.f32.mrb[0].mxu0
      %v2770 = vadd.f32 0.0, %v2769
      %v2771 = vpop.f32.mrb[0].mxu0
      %2772 = vmatprep.mubr.bf16.mxu0 0
      %2773 = vmatmul.mubr.bf16.gmra.mrb[0].mxu0 %v685
      %v2774 = vpop.f32.mrb[0].mxu0
      %v2775 = vadd.f32 0.0, %v2774
      %v2776 = vpop.f32.mrb[0].mxu0
      %v2777 = vpop.f32.mrb[0].mxu0
      %v2778 = vadd.f32 0.0, %v2777
      %v2779 = vpop.f32.mrb[0].mxu0
      %2780 = vmatprep.mubr.bf16.mxu0 0
      %2781 = vmatmul.mubr.bf16.gmra.mrb[0].mxu0 %v697
      %v2782 = vpop.f32.mrb[0].mxu0
      %v2783 = vadd.f32 0.0, %v2782
      %v2784 = vpop.f32.mrb[0].mxu0
      %v2785 = vpop.f32.mrb[0].mxu0
      %v2786 = vadd.f32 0.0, %v2785
      %v2787 = vpop.f32.mrb[0].mxu0
      %2788 = vmatprep.mubr.bf16.mxu0 0
      %2789 = vmatmul.mubr.bf16.gmra.mrb[0].mxu0 %v709
      %v2790 = vpop.f32.mrb[0].mxu0
      %v2791 = vadd.f32 0.0, %v2790
      %v2792 = vpop.f32.mrb[0].mxu0
      %v2793 = vpop.f32.mrb[0].mxu0
      %v2794 = vadd.f32 0.0, %v2793
      %v2795 = vpop.f32.mrb[0].mxu0
      %2796 = vmatprep.mubr.bf16.mxu0 0
      %2797 = vmatmul.mubr.bf16.gmra.mrb[0].mxu0 %v721
      %v2798 = vpop.f32.mrb[0].mxu0
      %v2799 = vadd.f32 0.0, %v2798
      %v2800 = vpop.f32.mrb[0].mxu0
      %v2801 = vpop.f32.mrb[0].mxu0
      %v2802 = vadd.f32 0.0, %v2801
      %v2803 = vpop.f32.mrb[0].mxu0
      %2804 = vmatprep.mubr.bf16.mxu0 0
      %2805 = vmatmul.mubr.bf16.gmra.mrb[0].mxu0 %v733
      %v2806 = vpop.f32.mrb[0].mxu0
      %v2807 = vadd.f32 0.0, %v2806
      %v2808 = vpop.f32.mrb[0].mxu0
      %v2809 = vpop.f32.mrb[0].mxu0
      %v2810 = vadd.f32 0.0, %v2809
      %v2811 = vpop.f32.mrb[0].mxu0
      %2812 = vmatprep.mubr.bf16.mxu0 0
      %2813 = vmatmul.mubr.bf16.gmra.mrb[0].mxu0 %v745
      %v2814 = vpop.f32.mrb[0].mxu0
      %v2815 = vadd.f32 0.0, %v2814
      %v2816 = vpop.f32.mrb[0].mxu0
      %v2817 = vpop.f32.mrb[0].mxu0
      %v2818 = vadd.f32 0.0, %v2817
      %v2819 = vpop.f32.mrb[0].mxu0
      %2820 = vmatprep.mubr.bf16.mxu0 0
      %2821 = vmatmul.mubr.bf16.gmra.mrb[0].mxu0 %v757
      %v2822 = vpop.f32.mrb[0].mxu0
      %v2823 = vadd.f32 0.0, %v2822
      %v2824 = vpop.f32.mrb[0].mxu0
      %v2825 = vpop.f32.mrb[0].mxu0
      %v2826 = vadd.f32 0.0, %v2825
      %v2827 = vpop.f32.mrb[0].mxu0
      %2828 = vmatprep.mubr.bf16.mxu0 0
      %2829 = vmatmul.mubr.bf16.gmra.mrb[0].mxu0 %v769
      %v2830 = vpop.f32.mrb[0].mxu0
      %v2831 = vadd.f32 0.0, %v2830
      %v2832 = vpop.f32.mrb[0].mxu0
      %v2833 = vpop.f32.mrb[0].mxu0
      %v2834 = vadd.f32 0.0, %v2833
      %v2835 = vpop.f32.mrb[0].mxu0
      %2836 = vmatprep.mubr.bf16.mxu0 0
      %2837 = vmatmul.mubr.bf16.gmra.mrb[0].mxu0 %v1845
      %v2838 = vpop.f32.mrb[0].mxu0
      %v2839 = vadd.f32 0.0, %v2838
      %v2840 = vpop.f32.mrb[0].mxu0
      %v2841 = vpop.f32.mrb[0].mxu0
      %v2842 = vadd.f32 0.0, %v2841
      %v2843 = vpop.f32.mrb[0].mxu0
      %2844 = vmatprep.mubr.bf16.mxu0 0
      %2845 = vmatmul.mubr.bf16.gmra.mrb[0].mxu0 %v589
      %v2846 = vpop.f32.mrb[0].mxu0
      %v2847 = vadd.f32 0.0, %v2846
      %v2848 = vpop.f32.mrb[0].mxu0
      %v2849 = vpop.f32.mrb[0].mxu0
      %v2850 = vadd.f32 0.0, %v2849
      %v2851 = vpop.f32.mrb[0].mxu0
      %2852 = vdwg.mxu0
      %v2853 = vadd.f32 %v2595, %v2727
      %v2854 = vadd.f32 %v2596, %v2730
      %v2855 = vadd.f32 %v2597, %v2735
      %v2856 = vadd.f32 %v2598, %v2738
      %v2857 = vadd.f32 %v2599, %v2743
      %v2858 = vadd.f32 %v2600, %v2746
      %v2859 = vadd.f32 %v2601, %v2751
      %v2860 = vadd.f32 %v2602, %v2754
      %v2861 = vadd.f32 %v2603, %v2759
      %v2862 = vadd.f32 %v2604, %v2762
      %v2863 = vadd.f32 %v2605, %v2767
      %v2864 = vadd.f32 %v2606, %v2770
      %v2865 = vadd.f32 %v2607, %v2775
      %v2866 = vadd.f32 %v2608, %v2778
      %v2867 = vadd.f32 %v2609, %v2783
      %v2868 = vadd.f32 %v2610, %v2786
      %v2869 = vadd.f32 %v2611, %v2791
      %v2870 = vadd.f32 %v2612, %v2794
      %v2871 = vadd.f32 %v2613, %v2799
      %v2872 = vadd.f32 %v2614, %v2802
      %v2873 = vadd.f32 %v2615, %v2807
      %v2874 = vadd.f32 %v2616, %v2810
      %v2875 = vadd.f32 %v2617, %v2815
      %v2876 = vadd.f32 %v2618, %v2818
      %v2877 = vadd.f32 %v2619, %v2823
      %v2878 = vadd.f32 %v2620, %v2826
      %v2879 = vadd.f32 %v2621, %v2831
      %v2880 = vadd.f32 %v2622, %v2834
      %v2881 = vadd.f32 %v2623, %v2839
      %v2882 = vadd.f32 %v2624, %v2842
      %v2883 = vadd.f32 %v2625, %v2847
      %v2884 = vadd.f32 %v2626, %v2850
      %s2885 = scalar_lea.vmem %s237, 512
      %v2886 = vld [vmem:[%s2885] sm:$0xf]
      %v2887 = vld [vmem:[%s2885 + $0x4] sm:$0xf]
      %v2888 = vld [vmem:[%s2885 + $0x8] sm:$0xf]
      %v2889 = vld [vmem:[%s2885 + $0xc] sm:$0xf]
      %v2890 = vld [vmem:[%s2885 + $0x10] sm:$0xf]
      %v2891 = vld [vmem:[%s2885 + $0x14] sm:$0xf]
      %v2892 = vld [vmem:[%s2885 + $0x18] sm:$0xf]
      %v2893 = vld [vmem:[%s2885 + $0x1c] sm:$0xf]
      %v2894 = vld [vmem:[%s2885 + $0x20] sm:$0xf]
      %v2895 = vld [vmem:[%s2885 + $0x24] sm:$0xf]
      %v2896 = vld [vmem:[%s2885 + $0x28] sm:$0xf]
      %v2897 = vld [vmem:[%s2885 + $0x2c] sm:$0xf]
      %v2898 = vld [vmem:[%s2885 + $0x30] sm:$0xf]
      %v2899 = vld [vmem:[%s2885 + $0x34] sm:$0xf]
      %v2900 = vld [vmem:[%s2885 + $0x38] sm:$0xf]
      %v2901 = vld [vmem:[%s2885 + $0x3c] sm:$0xf]
      %v2918 = vunpack.c.l.b16 %v2886
      %v2919 = vunpack.c.l.b16 %v2887
      %v2920 = vunpack.c.l.b16 %v2888
      %v2921 = vunpack.c.l.b16 %v2889
      %v2922 = vunpack.c.l.b16 %v2890
      %v2923 = vunpack.c.l.b16 %v2891
      %v2924 = vunpack.c.l.b16 %v2892
      %v2925 = vunpack.c.l.b16 %v2893
      %v2926 = vunpack.c.l.b16 %v2894
      %v2927 = vunpack.c.l.b16 %v2895
      %v2928 = vunpack.c.l.b16 %v2896
      %v2929 = vunpack.c.l.b16 %v2897
      %v2930 = vunpack.c.l.b16 %v2898
      %v2931 = vunpack.c.l.b16 %v2899
      %v2932 = vunpack.c.l.b16 %v2900
      %v2933 = vunpack.c.l.b16 %v2901
      %v2934 = vpack.c.b16 %v2919, %v2918
      %v2935 = vpack.c.b16 %v2921, %v2920
      %v2936 = vpack.c.b16 %v2923, %v2922
      %v2937 = vpack.c.b16 %v2925, %v2924
      %v2938 = vpack.c.b16 %v2927, %v2926
      %v2939 = vpack.c.b16 %v2929, %v2928
      %v2940 = vpack.c.b16 %v2931, %v2930
      %v2941 = vpack.c.b16 %v2933, %v2932
      %2950 = vmatprep.subr.bf16.mxu0 0
      %2951 = vmatpush1.bf16.msra.mxu0 %v2934
      %2952 = vmatprep.subr.bf16.mxu0 0
      %2953 = vmatpush1.bf16.msra.mxu0 %v2935
      %2954 = vmatprep.subr.bf16.mxu0 0
      %2955 = vmatpush1.bf16.msra.mxu0 %v2936
      %2956 = vmatprep.subr.bf16.mxu0 0
      %2957 = vmatpush1.bf16.msra.mxu0 %v2937
      %2958 = vmatprep.subr.bf16.mxu0 0
      %2959 = vmatpush1.bf16.msra.mxu0 %v2938
      %2960 = vmatprep.subr.bf16.mxu0 0
      %2961 = vmatpush1.bf16.msra.mxu0 %v2939
      %2962 = vmatprep.subr.bf16.mxu0 0
      %2963 = vmatpush1.bf16.msra.mxu0 %v2940
      %2964 = vmatprep.subr.bf16.mxu0 0
      %2965 = vmatpush1.bf16.msra.mxu0 %v2941
      %2966 = vmatprep.subr.bf16.mxu0 0
      %2967 = vmatpush1.bf16.msra.mxu0 0
      %2968 = vmatprep.subr.bf16.mxu0 0
      %2969 = vmatpush1.bf16.msra.mxu0 0
      %2970 = vmatprep.subr.bf16.mxu0 0
      %2971 = vmatpush1.bf16.msra.mxu0 0
      %2972 = vmatprep.subr.bf16.mxu0 0
      %2973 = vmatpush1.bf16.msra.mxu0 0
      %2974 = vmatprep.subr.bf16.mxu0 0
      %2975 = vmatpush1.bf16.msra.mxu0 0
      %2976 = vmatprep.subr.bf16.mxu0 0
      %2977 = vmatpush1.bf16.msra.mxu0 0
      %2978 = vmatprep.subr.bf16.mxu0 0
      %2979 = vmatpush1.bf16.msra.mxu0 0
      %2980 = vmatprep.subr.bf16.mxu0 0
      %2981 = vmatpush1.bf16.msra.mxu0 0
      %2982 = vmatprep.mubr.bf16.mxu0 0
      %2983 = vmatmul.mubr.bf16.gmra.mrb[0].mxu0 %v1262
      %v2984 = vpop.f32.mrb[0].mxu0
      %v2985 = vadd.f32 0.0, %v2984
      %v2986 = vpop.f32.mrb[0].mxu0
      %v2987 = vpop.f32.mrb[0].mxu0
      %v2988 = vadd.f32 0.0, %v2987
      %v2989 = vpop.f32.mrb[0].mxu0
      %2990 = vmatprep.mubr.bf16.mxu0 0
      %2991 = vmatmul.mubr.bf16.gmra.mrb[0].mxu0 %v1265
      %v2992 = vpop.f32.mrb[0].mxu0
      %v2993 = vadd.f32 0.0, %v2992
      %v2994 = vpop.f32.mrb[0].mxu0
      %v2995 = vpop.f32.mrb[0].mxu0
      %v2996 = vadd.f32 0.0, %v2995
      %v2997 = vpop.f32.mrb[0].mxu0
      %2998 = vmatprep.mubr.bf16.mxu0 0
      %2999 = vmatmul.mubr.bf16.gmra.mrb[0].mxu0 %v1268
      %v3000 = vpop.f32.mrb[0].mxu0
      %v3001 = vadd.f32 0.0, %v3000
      %v3002 = vpop.f32.mrb[0].mxu0
      %v3003 = vpop.f32.mrb[0].mxu0
      %v3004 = vadd.f32 0.0, %v3003
      %v3005 = vpop.f32.mrb[0].mxu0
      %3006 = vmatprep.mubr.bf16.mxu0 0
      %3007 = vmatmul.mubr.bf16.gmra.mrb[0].mxu0 %v1271
      %v3008 = vpop.f32.mrb[0].mxu0
      %v3009 = vadd.f32 0.0, %v3008
      %v3010 = vpop.f32.mrb[0].mxu0
      %v3011 = vpop.f32.mrb[0].mxu0
      %v3012 = vadd.f32 0.0, %v3011
      %v3013 = vpop.f32.mrb[0].mxu0
      %3014 = vmatprep.mubr.bf16.mxu0 0
      %3015 = vmatmul.mubr.bf16.gmra.mrb[0].mxu0 %v1274
      %v3016 = vpop.f32.mrb[0].mxu0
      %v3017 = vadd.f32 0.0, %v3016
      %v3018 = vpop.f32.mrb[0].mxu0
      %v3019 = vpop.f32.mrb[0].mxu0
      %v3020 = vadd.f32 0.0, %v3019
      %v3021 = vpop.f32.mrb[0].mxu0
      %3022 = vmatprep.mubr.bf16.mxu0 0
      %3023 = vmatmul.mubr.bf16.gmra.mrb[0].mxu0 %v1277
      %v3024 = vpop.f32.mrb[0].mxu0
      %v3025 = vadd.f32 0.0, %v3024
      %v3026 = vpop.f32.mrb[0].mxu0
      %v3027 = vpop.f32.mrb[0].mxu0
      %v3028 = vadd.f32 0.0, %v3027
      %v3029 = vpop.f32.mrb[0].mxu0
      %3030 = vmatprep.mubr.bf16.mxu0 0
      %3031 = vmatmul.mubr.bf16.gmra.mrb[0].mxu0 %v1280
      %v3032 = vpop.f32.mrb[0].mxu0
      %v3033 = vadd.f32 0.0, %v3032
      %v3034 = vpop.f32.mrb[0].mxu0
      %v3035 = vpop.f32.mrb[0].mxu0
      %v3036 = vadd.f32 0.0, %v3035
      %v3037 = vpop.f32.mrb[0].mxu0
      %3038 = vmatprep.mubr.bf16.mxu0 0
      %3039 = vmatmul.mubr.bf16.gmra.mrb[0].mxu0 %v1283
      %v3040 = vpop.f32.mrb[0].mxu0
      %v3041 = vadd.f32 0.0, %v3040
      %v3042 = vpop.f32.mrb[0].mxu0
      %v3043 = vpop.f32.mrb[0].mxu0
      %v3044 = vadd.f32 0.0, %v3043
      %v3045 = vpop.f32.mrb[0].mxu0
      %3046 = vmatprep.mubr.bf16.mxu0 0
      %3047 = vmatmul.mubr.bf16.gmra.mrb[0].mxu0 %v1286
      %v3048 = vpop.f32.mrb[0].mxu0
      %v3049 = vadd.f32 0.0, %v3048
      %v3050 = vpop.f32.mrb[0].mxu0
      %v3051 = vpop.f32.mrb[0].mxu0
      %v3052 = vadd.f32 0.0, %v3051
      %v3053 = vpop.f32.mrb[0].mxu0
      %3054 = vmatprep.mubr.bf16.mxu0 0
      %3055 = vmatmul.mubr.bf16.gmra.mrb[0].mxu0 %v1289
      %v3056 = vpop.f32.mrb[0].mxu0
      %v3057 = vadd.f32 0.0, %v3056
      %v3058 = vpop.f32.mrb[0].mxu0
      %v3059 = vpop.f32.mrb[0].mxu0
      %v3060 = vadd.f32 0.0, %v3059
      %v3061 = vpop.f32.mrb[0].mxu0
      %3062 = vmatprep.mubr.bf16.mxu0 0
      %3063 = vmatmul.mubr.bf16.gmra.mrb[0].mxu0 %v1292
      %v3064 = vpop.f32.mrb[0].mxu0
      %v3065 = vadd.f32 0.0, %v3064
      %v3066 = vpop.f32.mrb[0].mxu0
      %v3067 = vpop.f32.mrb[0].mxu0
      %v3068 = vadd.f32 0.0, %v3067
      %v3069 = vpop.f32.mrb[0].mxu0
      %3070 = vmatprep.mubr.bf16.mxu0 0
      %3071 = vmatmul.mubr.bf16.gmra.mrb[0].mxu0 %v1295
      %v3072 = vpop.f32.mrb[0].mxu0
      %v3073 = vadd.f32 0.0, %v3072
      %v3074 = vpop.f32.mrb[0].mxu0
      %v3075 = vpop.f32.mrb[0].mxu0
      %v3076 = vadd.f32 0.0, %v3075
      %v3077 = vpop.f32.mrb[0].mxu0
      %3078 = vmatprep.mubr.bf16.mxu0 0
      %3079 = vmatmul.mubr.bf16.gmra.mrb[0].mxu0 %v1298
      %v3080 = vpop.f32.mrb[0].mxu0
      %v3081 = vadd.f32 0.0, %v3080
      %v3082 = vpop.f32.mrb[0].mxu0
      %v3083 = vpop.f32.mrb[0].mxu0
      %v3084 = vadd.f32 0.0, %v3083
      %v3085 = vpop.f32.mrb[0].mxu0
      %3086 = vmatprep.mubr.bf16.mxu0 0
      %3087 = vmatmul.mubr.bf16.gmra.mrb[0].mxu0 %v1301
      %v3088 = vpop.f32.mrb[0].mxu0
      %v3089 = vadd.f32 0.0, %v3088
      %v3090 = vpop.f32.mrb[0].mxu0
      %v3091 = vpop.f32.mrb[0].mxu0
      %v3092 = vadd.f32 0.0, %v3091
      %v3093 = vpop.f32.mrb[0].mxu0
      %3094 = vmatprep.mubr.bf16.mxu0 0
      %3095 = vmatmul.mubr.bf16.gmra.mrb[0].mxu0 %v2109
      %v3096 = vpop.f32.mrb[0].mxu0
      %v3097 = vadd.f32 0.0, %v3096
      %v3098 = vpop.f32.mrb[0].mxu0
      %v3099 = vpop.f32.mrb[0].mxu0
      %v3100 = vadd.f32 0.0, %v3099
      %v3101 = vpop.f32.mrb[0].mxu0
      %3102 = vmatprep.mubr.bf16.mxu0 0
      %3103 = vmatmul.mubr.bf16.gmra.mrb[0].mxu0 %v1256
      %v3104 = vpop.f32.mrb[0].mxu0
      %v3105 = vadd.f32 0.0, %v3104
      %v3106 = vpop.f32.mrb[0].mxu0
      %v3107 = vpop.f32.mrb[0].mxu0
      %v3108 = vadd.f32 0.0, %v3107
      %v3109 = vpop.f32.mrb[0].mxu0
      %3110 = vdwg.mxu0
      %v3111 = vadd.f32 %v2853, %v2985
      %v3112 = vadd.f32 %v2854, %v2988
      %v3113 = vadd.f32 %v2855, %v2993
      %v3114 = vadd.f32 %v2856, %v2996
      %v3115 = vadd.f32 %v2857, %v3001
      %v3116 = vadd.f32 %v2858, %v3004
      %v3117 = vadd.f32 %v2859, %v3009
      %v3118 = vadd.f32 %v2860, %v3012
      %v3119 = vadd.f32 %v2861, %v3017
      %v3120 = vadd.f32 %v2862, %v3020
      %v3121 = vadd.f32 %v2863, %v3025
      %v3122 = vadd.f32 %v2864, %v3028
      %v3123 = vadd.f32 %v2865, %v3033
      %v3124 = vadd.f32 %v2866, %v3036
      %v3125 = vadd.f32 %v2867, %v3041
      %v3126 = vadd.f32 %v2868, %v3044
      %v3127 = vadd.f32 %v2869, %v3049
      %v3128 = vadd.f32 %v2870, %v3052
      %v3129 = vadd.f32 %v2871, %v3057
      %v3130 = vadd.f32 %v2872, %v3060
      %v3131 = vadd.f32 %v2873, %v3065
      %v3132 = vadd.f32 %v2874, %v3068
      %v3133 = vadd.f32 %v2875, %v3073
      %v3134 = vadd.f32 %v2876, %v3076
      %v3135 = vadd.f32 %v2877, %v3081
      %v3136 = vadd.f32 %v2878, %v3084
      %v3137 = vadd.f32 %v2879, %v3089
      %v3138 = vadd.f32 %v2880, %v3092
      %v3139 = vadd.f32 %v2881, %v3097
      %v3140 = vadd.f32 %v2882, %v3100
      %v3141 = vadd.f32 %v2883, %v3105
      %v3142 = vadd.f32 %v2884, %v3108
      %v3143 = vpack.c.bf16 %v3112, %v3111
      %v3144 = vpack.c.bf16 %v3114, %v3113
      %v3145 = vpack.c.bf16 %v3116, %v3115
      %v3146 = vpack.c.bf16 %v3118, %v3117
      %v3147 = vpack.c.bf16 %v3120, %v3119
      %v3148 = vpack.c.bf16 %v3122, %v3121
      %v3149 = vpack.c.bf16 %v3124, %v3123
      %v3150 = vpack.c.bf16 %v3126, %v3125
      %v3151 = vpack.c.bf16 %v3128, %v3127
      %v3152 = vpack.c.bf16 %v3130, %v3129
      %v3153 = vpack.c.bf16 %v3132, %v3131
      %v3154 = vpack.c.bf16 %v3134, %v3133
      %v3155 = vpack.c.bf16 %v3136, %v3135
      %v3156 = vpack.c.bf16 %v3138, %v3137
      %v3157 = vpack.c.bf16 %v3140, %v3139
      %v3158 = vpack.c.bf16 %v3142, %v3141
      %v3175 = vunpack.c.l.b16 %v3143
      %v3176 = vunpack.c.h.b16 %v3143
      %v3177 = vunpack.c.l.b16 %v3144
      %v3178 = vunpack.c.h.b16 %v3144
      %v3179 = vunpack.c.l.b16 %v3145
      %v3180 = vunpack.c.h.b16 %v3145
      %v3181 = vunpack.c.l.b16 %v3146
      %v3182 = vunpack.c.h.b16 %v3146
      %v3183 = vunpack.c.l.b16 %v3147
      %v3184 = vunpack.c.h.b16 %v3147
      %v3185 = vunpack.c.l.b16 %v3148
      %v3186 = vunpack.c.h.b16 %v3148
      %v3187 = vunpack.c.l.b16 %v3149
      %v3188 = vunpack.c.h.b16 %v3149
      %v3189 = vunpack.c.l.b16 %v3150
      %v3190 = vunpack.c.h.b16 %v3150
      %v3191 = vunpack.c.l.b16 %v3151
      %v3192 = vunpack.c.h.b16 %v3151
      %v3193 = vunpack.c.l.b16 %v3152
      %v3194 = vunpack.c.h.b16 %v3152
      %v3195 = vunpack.c.l.b16 %v3153
      %v3196 = vunpack.c.h.b16 %v3153
      %v3197 = vunpack.c.l.b16 %v3154
      %v3198 = vunpack.c.h.b16 %v3154
      %v3199 = vunpack.c.l.b16 %v3155
      %v3200 = vunpack.c.h.b16 %v3155
      %v3201 = vunpack.c.l.b16 %v3156
      %v3202 = vunpack.c.h.b16 %v3156
      %v3203 = vunpack.c.l.b16 %v3157
      %v3204 = vunpack.c.h.b16 %v3157
      %v3205 = vunpack.c.l.b16 %v3158
      %v3206 = vunpack.c.h.b16 %v3158
      %v3207 = vpack.c.b16 %v3175, %v3175
      %v3208 = vpack.c.b16 %v3176, %v3176
      %v3209 = vpack.c.b16 %v3177, %v3177
      %v3210 = vpack.c.b16 %v3178, %v3178
      %v3211 = vpack.c.b16 %v3179, %v3179
      %v3212 = vpack.c.b16 %v3180, %v3180
      %v3213 = vpack.c.b16 %v3181, %v3181
      %v3214 = vpack.c.b16 %v3182, %v3182
      %v3215 = vpack.c.b16 %v3183, %v3183
      %v3216 = vpack.c.b16 %v3184, %v3184
      %v3217 = vpack.c.b16 %v3185, %v3185
      %v3218 = vpack.c.b16 %v3186, %v3186
      %v3219 = vpack.c.b16 %v3187, %v3187
      %v3220 = vpack.c.b16 %v3188, %v3188
      %v3221 = vpack.c.b16 %v3189, %v3189
      %v3222 = vpack.c.b16 %v3190, %v3190
      %v3223 = vpack.c.b16 %v3191, %v3191
      %v3224 = vpack.c.b16 %v3192, %v3192
      %v3225 = vpack.c.b16 %v3193, %v3193
      %v3226 = vpack.c.b16 %v3194, %v3194
      %v3227 = vpack.c.b16 %v3195, %v3195
      %v3228 = vpack.c.b16 %v3196, %v3196
      %v3229 = vpack.c.b16 %v3197, %v3197
      %v3230 = vpack.c.b16 %v3198, %v3198
      %v3231 = vpack.c.b16 %v3199, %v3199
      %v3232 = vpack.c.b16 %v3200, %v3200
      %v3233 = vpack.c.b16 %v3201, %v3201
      %v3234 = vpack.c.b16 %v3202, %v3202
      %v3235 = vpack.c.b16 %v3203, %v3203
      %v3236 = vpack.c.b16 %v3204, %v3204
      %v3237 = vpack.c.b16 %v3205, %v3205
      %v3238 = vpack.c.b16 %v3206, %v3206
      %3271 = vst [vmem:[%s245] sm:$0xf] %v3207
      %3272 = vst [vmem:[%s245 + $0x4] sm:$0xf] %v3208
      %3273 = vst [vmem:[%s245 + $0x8] sm:$0xf] %v3209
      %3274 = vst [vmem:[%s245 + $0xc] sm:$0xf] %v3210
      %3275 = vst [vmem:[%s245 + $0x10] sm:$0xf] %v3211
      %3276 = vst [vmem:[%s245 + $0x14] sm:$0xf] %v3212
      %3277 = vst [vmem:[%s245 + $0x18] sm:$0xf] %v3213
      %3278 = vst [vmem:[%s245 + $0x1c] sm:$0xf] %v3214
      %3279 = vst [vmem:[%s245 + $0x20] sm:$0xf] %v3215
      %3280 = vst [vmem:[%s245 + $0x24] sm:$0xf] %v3216
      %3281 = vst [vmem:[%s245 + $0x28] sm:$0xf] %v3217
      %3282 = vst [vmem:[%s245 + $0x2c] sm:$0xf] %v3218
      %3283 = vst [vmem:[%s245 + $0x30] sm:$0xf] %v3219
      %3284 = vst [vmem:[%s245 + $0x34] sm:$0xf] %v3220
      %3285 = vst [vmem:[%s245 + $0x38] sm:$0xf] %v3221
      %3286 = vst [vmem:[%s245 + $0x3c] sm:$0xf] %v3222
      %3287 = vst [vmem:[%s245 + $0x40] sm:$0xf] %v3223
      %3288 = vst [vmem:[%s245 + $0x44] sm:$0xf] %v3224
      %3289 = vst [vmem:[%s245 + $0x48] sm:$0xf] %v3225
      %3290 = vst [vmem:[%s245 + $0x4c] sm:$0xf] %v3226
      %3291 = vst [vmem:[%s245 + $0x50] sm:$0xf] %v3227
      %3292 = vst [vmem:[%s245 + $0x54] sm:$0xf] %v3228
      %3293 = vst [vmem:[%s245 + $0x58] sm:$0xf] %v3229
      %3294 = vst [vmem:[%s245 + $0x5c] sm:$0xf] %v3230
      %3295 = vst [vmem:[%s245 + $0x60] sm:$0xf] %v3231
      %3296 = vst [vmem:[%s245 + $0x64] sm:$0xf] %v3232
      %3297 = vst [vmem:[%s245 + $0x68] sm:$0xf] %v3233
      %3298 = vst [vmem:[%s245 + $0x6c] sm:$0xf] %v3234
      %3299 = vst [vmem:[%s245 + $0x70] sm:$0xf] %v3235
      %3300 = vst [vmem:[%s245 + $0x74] sm:$0xf] %v3236
      %3301 = vst [vmem:[%s245 + $0x78] sm:$0xf] %v3237
      %3302 = vst [vmem:[%s245 + $0x7c] sm:$0xf] %v3238
      %v3303 = vld [vmem:[%s248] sm:$0x1]
      %v3304 = vadd.f32 %v3111, %v3112
      %v3305 = vadd.f32 %v3304, %v3113
      %v3306 = vadd.f32 %v3305, %v3114
      %v3307 = vadd.f32 %v3306, %v3115
      %v3308 = vadd.f32 %v3307, %v3116
      %v3309 = vadd.f32 %v3308, %v3117
      %v3310 = vadd.f32 %v3309, %v3118
      %v3311 = vadd.f32 %v3310, %v3119
      %v3312 = vadd.f32 %v3311, %v3120
      %v3313 = vadd.f32 %v3312, %v3121
      %v3314 = vadd.f32 %v3313, %v3122
      %v3315 = vadd.f32 %v3314, %v3123
      %v3316 = vadd.f32 %v3315, %v3124
      %v3317 = vadd.f32 %v3316, %v3125
      %v3318 = vadd.f32 %v3317, %v3126
      %v3319 = vadd.f32 %v3318, %v3127
      %v3320 = vadd.f32 %v3319, %v3128
      %v3321 = vadd.f32 %v3320, %v3129
      %v3322 = vadd.f32 %v3321, %v3130
      %v3323 = vadd.f32 %v3322, %v3131
      %v3324 = vadd.f32 %v3323, %v3132
      %v3325 = vadd.f32 %v3324, %v3133
      %v3326 = vadd.f32 %v3325, %v3134
      %v3327 = vadd.f32 %v3326, %v3135
      %v3328 = vadd.f32 %v3327, %v3136
      %v3329 = vadd.f32 %v3328, %v3137
      %v3330 = vadd.f32 %v3329, %v3138
      %v3331 = vadd.f32 %v3330, %v3139
      %v3332 = vadd.f32 %v3331, %v3140
      %v3333 = vadd.f32 %v3332, %v3141
      %v3334 = vadd.f32 %v3333, %v3142
      %v3335 = vrot.slane %v3334, 4
      %v3336 = vadd.f32 %v3334, %v3335
      %v3337 = vrot.slane %v3336, 2
      %v3338 = vadd.f32 %v3336, %v3337
      %v3339 = vrot.slane %v3338, 1
      %v3340 = vadd.f32 %v3338, %v3339
      %v3341 = vadd.f32 %v3303, %v3340
      %3342 = vst [vmem:[%s248] sm:$0x1] %v3341
      %v3343 = vld [vmem:[%s251] sm:$0x1]
      %v3344 = vmul.f32 %v3111, %v3111
      %v3345 = vmul.f32 %v3112, %v3112
      %v3346 = vmul.f32 %v3113, %v3113
      %v3347 = vmul.f32 %v3114, %v3114
      %v3348 = vmul.f32 %v3115, %v3115
      %v3349 = vmul.f32 %v3116, %v3116
      %v3350 = vmul.f32 %v3117, %v3117
      %v3351 = vmul.f32 %v3118, %v3118
      %v3352 = vmul.f32 %v3119, %v3119
      %v3353 = vmul.f32 %v3120, %v3120
      %v3354 = vmul.f32 %v3121, %v3121
      %v3355 = vmul.f32 %v3122, %v3122
      %v3356 = vmul.f32 %v3123, %v3123
      %v3357 = vmul.f32 %v3124, %v3124
      %v3358 = vmul.f32 %v3125, %v3125
      %v3359 = vmul.f32 %v3126, %v3126
      %v3360 = vmul.f32 %v3127, %v3127
      %v3361 = vmul.f32 %v3128, %v3128
      %v3362 = vmul.f32 %v3129, %v3129
      %v3363 = vmul.f32 %v3130, %v3130
      %v3364 = vmul.f32 %v3131, %v3131
      %v3365 = vmul.f32 %v3132, %v3132
      %v3366 = vmul.f32 %v3133, %v3133
      %v3367 = vmul.f32 %v3134, %v3134
      %v3368 = vmul.f32 %v3135, %v3135
      %v3369 = vmul.f32 %v3136, %v3136
      %v3370 = vmul.f32 %v3137, %v3137
      %v3371 = vmul.f32 %v3138, %v3138
      %v3372 = vmul.f32 %v3139, %v3139
      %v3373 = vmul.f32 %v3140, %v3140
      %v3374 = vmul.f32 %v3141, %v3141
      %v3375 = vmul.f32 %v3142, %v3142
      %v3376 = vadd.f32 %v3344, %v3345
      %v3377 = vadd.f32 %v3376, %v3346
      %v3378 = vadd.f32 %v3377, %v3347
      %v3379 = vadd.f32 %v3378, %v3348
      %v3380 = vadd.f32 %v3379, %v3349
      %v3381 = vadd.f32 %v3380, %v3350
      %v3382 = vadd.f32 %v3381, %v3351
      %v3383 = vadd.f32 %v3382, %v3352
      %v3384 = vadd.f32 %v3383, %v3353
      %v3385 = vadd.f32 %v3384, %v3354
      %v3386 = vadd.f32 %v3385, %v3355
      %v3387 = vadd.f32 %v3386, %v3356
      %v3388 = vadd.f32 %v3387, %v3357
      %v3389 = vadd.f32 %v3388, %v3358
      %v3390 = vadd.f32 %v3389, %v3359
      %v3391 = vadd.f32 %v3390, %v3360
      %v3392 = vadd.f32 %v3391, %v3361
      %v3393 = vadd.f32 %v3392, %v3362
      %v3394 = vadd.f32 %v3393, %v3363
      %v3395 = vadd.f32 %v3394, %v3364
      %v3396 = vadd.f32 %v3395, %v3365
      %v3397 = vadd.f32 %v3396, %v3366
      %v3398 = vadd.f32 %v3397, %v3367
      %v3399 = vadd.f32 %v3398, %v3368
      %v3400 = vadd.f32 %v3399, %v3369
      %v3401 = vadd.f32 %v3400, %v3370
      %v3402 = vadd.f32 %v3401, %v3371
      %v3403 = vadd.f32 %v3402, %v3372
      %v3404 = vadd.f32 %v3403, %v3373
      %v3405 = vadd.f32 %v3404, %v3374
      %v3406 = vadd.f32 %v3405, %v3375
      %v3407 = vrot.slane %v3406, 4
      %v3408 = vadd.f32 %v3406, %v3407
      %v3409 = vrot.slane %v3408, 2
      %v3410 = vadd.f32 %v3408, %v3409
      %v3411 = vrot.slane %v3410, 1
      %v3412 = vadd.f32 %v3410, %v3411
      %v3413 = vadd.f32 %v3343, %v3412
      %3414 = vst [vmem:[%s251] sm:$0x1] %v3413
      %p3415 = scmp.lt.s32.totalorder %s21, 1
      %s3416 = scalar_select %p3415, %s21, 1
      %p3417 = scmp.lt.s32.totalorder %s20, 0
      %s3418 = scalar_select %p3417, %s20, 0
      %s3419 = smul.addr %s3416, 32
      %s3420 = sadd.s32 %s3418, %s3419
      %s3421 = smul.addr %s3420, 4
      %s3422 = scalar_lea.vmem %s2, %s3421
      %p3423 = scmp.lt.s32.totalorder %s20, 0
      %s3424 = scalar_select %p3423, %s20, 0
      %s3425 = scalar_lea.vmem %s3, %s3424
      %p3426 = scmp.lt.s32.totalorder %s20, 0
      %s3427 = scalar_select %p3426, %s20, 0
      %s3428 = scalar_lea.vmem %s4, %s3427
      // Predicated region
      $region33: #{double_conv.3} parent=27 // pred_check
        %p3429 = pneg %p100
      $region34: #{double_conv.3} parent=27 // pred_check_branch
        %3431 = sbr.rel (%p3429) target = $region36
      $region35: #{double_conv.3} parent=27 // pred_region
        _
      $region36: #{double_conv.3} parent=27 // pred_fallthru
        _
      // Predicated region
      $region37: #{double_conv.3} parent=27 // pred_check
        %p3432 = pneg %p126
      $region38: #{double_conv.3} parent=27 // pred_check_branch
        %3434 = sbr.rel (%p3432) target = $region40
      $region39: #{double_conv.3} parent=27 // pred_region
        _
      $region40: #{double_conv.3} parent=27 // pred_fallthru
        _
      // Predicated region
      $region41: #{double_conv.3} parent=27 // pred_check
        %p3435 = pneg %p152
      $region42: #{double_conv.3} parent=27 // pred_check_branch
        %3437 = sbr.rel (%p3435) target = $region44
      $region43: #{double_conv.3} parent=27 // pred_region
        _
      $region44: #{double_conv.3} parent=27 // pred_fallthru
        _
      // Predicated region
      $region45: #{double_conv.3} parent=27 // pred_check
        %p3438 = pneg %p126
      $region46: #{double_conv.3} parent=27 // pred_check_branch
        %3440 = sbr.rel (%p3438) target = $region48
      $region47: #{double_conv.3} parent=27 // pred_region
        %p3441 = scmp.lt.s32.totalorder %s20, 0
        %s3442 = scalar_select %p3441, %s20, 0
        %s3443 = scalar_lea.vmem %s3, %s3442
      $region48: #{double_conv.3} parent=27 // pred_fallthru
        _
      // Predicated region
      $region49: #{double_conv.3} parent=27 // pred_check
        %p3444 = pneg %p152
      $region50: #{double_conv.3} parent=27 // pred_check_branch
        %3446 = sbr.rel (%p3444) target = $region52
      $region51: #{double_conv.3} parent=27 // pred_region
        %p3447 = scmp.lt.s32.totalorder %s20, 0
        %s3448 = scalar_select %p3447, %s20, 0
        %s3449 = scalar_lea.vmem %s4, %s3448
      $region52: #{double_conv.3} parent=27 // pred_fallthru
        _
    $region28: #{double_conv.3} parent=5 // pred_fallthru
      _
    %p3450 = scmp.le.s32.totalorder 2, %s11
    // Predicated region
    $region53: #{double_conv.3} parent=5 // pred_check
      %p3451 = pneg %p3450
    $region54: #{double_conv.3} parent=5 // pred_check_branch
      %3453 = sbr.rel (%p3451) target = $region56
    $region55: #{double_conv.3} parent=5 // pred_region
      %s3454 = ssub.s32 %s11, 2
      // Predicated region
      $region57: #{double_conv.3} parent=55 // pred_check
        %p3455 = pneg %p106
      $region58: #{double_conv.3} parent=55 // pred_check_branch
        %3457 = sbr.rel (%p3455) target = $region60
      $region59: #{double_conv.3} parent=55 // pred_region
        %p3458 = scmp.lt.s32.totalorder %s23, 1
        %s3459 = scalar_select %p3458, %s23, 1
        %p3460 = scmp.lt.s32.totalorder %s22, 0
        %s3461 = scalar_select %p3460, %s22, 0
        %s3462 = smul.addr %s3459, 32
        %s3463 = sadd.s32 %s3461, %s3462
        %s3464 = smul.addr %s3463, 4
        %s3465 = scalar_lea.vmem %s2, %s3464
      $region60: #{double_conv.3} parent=55 // pred_fallthru
        _
    $region56: #{double_conv.3} parent=5 // pred_fallthru
      _
  $region6: #{double_conv.3} parent=0 // loop_footer
    %s15 = sadd.s32 1, %s11
  $region7: #{double_conv.3} parent=0 // loop_footer_branch
    %10 = sbr.rel target = $region3
  $region8: #{double_conv.3} parent=0 // loop_exit
    _

// kernel: double_conv.4
$region0: #{double_conv.4}
  #allocation0 [shape = 'u32[]', space=smem, size = 0x4, offset = 0x4, fixed_abs, tag = 'smem constant byte address 0x4 - core index']
  #allocation1 [shape = 'u32[144,128]{1,0:T(1,128)}', space=vmem, size = 0x12000, scoped, tag = 'internal scratch']
  %s0 = inlined_call_operand.vmem [shape: bf16[2,16,16,128], index: 0, kind: input, shape index: {}]
  %s1 = inlined_call_operand.vmem [shape: f32[1,128], index: 1, kind: input, shape index: {}]
  %s2 = inlined_call_operand.vmem [shape: f32[1,128], index: 2, kind: input, shape index: {}]
  %s3 = inlined_call_operand.vmem [shape: f32[1,128], index: 3, kind: input, shape index: {}]
  %s4 = inlined_call_operand.vmem [shape: f32[1,128], index: 4, kind: input, shape index: {}]
  %s5 = inlined_call_operand.vmem [shape: bf16[9,128,128], index: 5, kind: input, shape index: {}]
  %s6 = inlined_call_operand.vmem [shape: bf16[2,16,16,128], index: 6, kind: output, shape index: {0}]
  %s7 = inlined_call_operand.vmem [shape: f32[1,128], index: 7, kind: output, shape index: {1}]
  %s8 = inlined_call_operand.vmem [shape: f32[1,128], index: 8, kind: output, shape index: {2}]
  %9 = xla_tuple %s6, %s7, %s8
  %s10 = sld [smem:[#allocation0]]
  $region77: #{double_conv.4} parent=0
    _
  %s12 = ssub.s32 1, %s10
  %s13 = scalar_select 0, %s12, %s10
  loop: start=0, step=1, limit=4
  $region2: #{double_conv.4} parent=0 // loop_pre_header
    _
  $region3: #{double_conv.4} parent=0 // loop_header
    %s15 = sphi 0, %s19
    %p16 = scmp.ge.s32.totalorder %s15, 4
    %s22 = sphi 0, %s34
    %s23 = sphi 0, %s30
    %s24 = sphi 0, %s22
    %s25 = sphi 0, %s23
    %s26 = sphi 0, %s24
    %s27 = sphi 0, %s25
    %s37 = sphi 0, %s39
    %s40 = sphi 0, %s37
    %s41 = sphi 0, %s40
    %s57 = sphi 0, %s41
    %s61 = sphi 0, %s61
    %s63 = sphi 0, %s61
    %s64 = sphi 0, %s63
    %s78 = sphi 0, %s64
    %s82 = sphi 0, %s82
    %s84 = sphi 0, %s82
    %s85 = sphi 0, %s84
    %s99 = sphi 0, %s85
    %s103 = sphi 0, %s103
    %s105 = sphi 0, %s103
    %s106 = sphi 0, %s105
    %s120 = sphi 0, %s106
    %s124 = sphi 0, %s124
    %s126 = sphi 0, %s124
    %s127 = sphi 0, %s126
    %s141 = sphi 0, %s127
    %s147 = sphi 0, %s149
    %s150 = sphi 0, %s147
    %s151 = sphi 0, %s150
    %s167 = sphi 0, %s151
    %s175 = sphi 0, %s177
    %s178 = sphi 0, %s175
    %s179 = sphi 0, %s178
    %s195 = sphi 0, %s179
    %s201 = sphi 0, %s203
    %s204 = sphi 0, %s201
    %s205 = sphi 0, %s204
    %s221 = sphi 0, %s205
    %s227 = sphi 0, %s229
    %s230 = sphi 0, %s227
    %s231 = sphi 0, %s230
    %s247 = sphi 0, %s231
  $region4: #{double_conv.4} parent=0 // loop_header_branch
    %18 = sbr.rel (%p16) target = $region8
  $region5: #{double_conv.4} parent=0 // loop_body
    %s20 = ssub.s32 %s15, 1
    %s21 = ssub.s32 %s15, 2
    %s28 = sadd.s32 1, %s23
    %p29 = scmp.ge.s32.totalorder %s28, 2
    %s30 = scalar_select %p29, 0, %s28
    %s31 = sadd.s32 1, %s22
    %s32 = scalar_select %p29, %s31, %s22
    %p33 = scmp.ge.s32.totalorder %s32, 1
    %s34 = scalar_select %p33, 0, %s32
    %s35 = ssub.s32 %s23, %s30
    %p36 = scmp.eq.s32.totalorder %s35, 0
    %s38 = sadd.s32 %s37, 1
    %s39 = scalar_select %p36, %s37, %s38
    %p42 = pneg %p36
    %p43 = scmp.eq.s32.totalorder %s15, 1
    %p44 = por %p42, %p43
    %p45 = scmp.ne.s32.totalorder %s37, %s40
    %p46 = scmp.eq.s32.totalorder %s15, 0
    %p47 = por %p45, %p46
    %p48 = scmp.ne.s32.totalorder %s37, %s40
    %p49 = scmp.eq.s32.totalorder %s20, 1
    %p50 = por %p48, %p49
    %p51 = scmp.ne.s32.totalorder %s40, %s41
    %p52 = scmp.eq.s32.totalorder %s20, 0
    %p53 = por %p51, %p52
    %p54 = scmp.ne.s32.totalorder %s40, %s41
    %p55 = scmp.eq.s32.totalorder %s21, 1
    %p56 = por %p54, %p55
    %p58 = scmp.ne.s32.totalorder %s41, %s57
    %p59 = scmp.eq.s32.totalorder %s21, 0
    %p60 = por %p58, %p59
    %s62 = sadd.s32 %s61, 1
    %p65 = scmp.eq.s32.totalorder %s15, 1
    %p66 = scmp.ne.s32.totalorder %s61, %s63
    %p67 = scmp.eq.s32.totalorder %s15, 0
    %p68 = por %p66, %p67
    %p69 = scmp.ne.s32.totalorder %s61, %s63
    %p70 = scmp.eq.s32.totalorder %s20, 1
    %p71 = por %p69, %p70
    %p72 = scmp.ne.s32.totalorder %s63, %s64
    %p73 = scmp.eq.s32.totalorder %s20, 0
    %p74 = por %p72, %p73
    %p75 = scmp.ne.s32.totalorder %s63, %s64
    %p76 = scmp.eq.s32.totalorder %s21, 1
    %p77 = por %p75, %p76
    %p79 = scmp.ne.s32.totalorder %s64, %s78
    %p80 = scmp.eq.s32.totalorder %s21, 0
    %p81 = por %p79, %p80
    %s83 = sadd.s32 %s82, 1
    %p86 = scmp.eq.s32.totalorder %s15, 1
    %p87 = scmp.ne.s32.totalorder %s82, %s84
    %p88 = scmp.eq.s32.totalorder %s15, 0
    %p89 = por %p87, %p88
    %p90 = scmp.ne.s32.totalorder %s82, %s84
    %p91 = scmp.eq.s32.totalorder %s20, 1
    %p92 = por %p90, %p91
    %p93 = scmp.ne.s32.totalorder %s84, %s85
    %p94 = scmp.eq.s32.totalorder %s20, 0
    %p95 = por %p93, %p94
    %p96 = scmp.ne.s32.totalorder %s84, %s85
    %p97 = scmp.eq.s32.totalorder %s21, 1
    %p98 = por %p96, %p97
    %p100 = scmp.ne.s32.totalorder %s85, %s99
    %p101 = scmp.eq.s32.totalorder %s21, 0
    %p102 = por %p100, %p101
    %s104 = sadd.s32 %s103, 1
    %p107 = scmp.eq.s32.totalorder %s15, 1
    %p108 = scmp.ne.s32.totalorder %s103, %s105
    %p109 = scmp.eq.s32.totalorder %s15, 0
    %p110 = por %p108, %p109
    %p111 = scmp.ne.s32.totalorder %s103, %s105
    %p112 = scmp.eq.s32.totalorder %s20, 1
    %p113 = por %p111, %p112
    %p114 = scmp.ne.s32.totalorder %s105, %s106
    %p115 = scmp.eq.s32.totalorder %s20, 0
    %p116 = por %p114, %p115
    %p117 = scmp.ne.s32.totalorder %s105, %s106
    %p118 = scmp.eq.s32.totalorder %s21, 1
    %p119 = por %p117, %p118
    %p121 = scmp.ne.s32.totalorder %s106, %s120
    %p122 = scmp.eq.s32.totalorder %s21, 0
    %p123 = por %p121, %p122
    %s125 = sadd.s32 %s124, 1
    %p128 = scmp.eq.s32.totalorder %s15, 1
    %p129 = scmp.ne.s32.totalorder %s124, %s126
    %p130 = scmp.eq.s32.totalorder %s15, 0
    %p131 = por %p129, %p130
    %p132 = scmp.ne.s32.totalorder %s124, %s126
    %p133 = scmp.eq.s32.totalorder %s20, 1
    %p134 = por %p132, %p133
    %p135 = scmp.ne.s32.totalorder %s126, %s127
    %p136 = scmp.eq.s32.totalorder %s20, 0
    %p137 = por %p135, %p136
    %p138 = scmp.ne.s32.totalorder %s126, %s127
    %p139 = scmp.eq.s32.totalorder %s21, 1
    %p140 = por %p138, %p139
    %p142 = scmp.ne.s32.totalorder %s127, %s141
    %p143 = scmp.eq.s32.totalorder %s21, 0
    %p144 = por %p142, %p143
    %s145 = ssub.s32 %s22, %s34
    %p146 = scmp.eq.s32.totalorder %s145, 0
    %s148 = sadd.s32 %s147, 1
    %s149 = scalar_select %p146, %s147, %s148
    %p152 = pneg %p146
    %p153 = scmp.eq.s32.totalorder %s15, 1
    %p154 = por %p152, %p153
    %p155 = scmp.ne.s32.totalorder %s147, %s150
    %p156 = scmp.eq.s32.totalorder %s15, 0
    %p157 = por %p155, %p156
    %p158 = scmp.ne.s32.totalorder %s147, %s150
    %p159 = scmp.eq.s32.totalorder %s20, 1
    %p160 = por %p158, %p159
    %p161 = scmp.ne.s32.totalorder %s150, %s151
    %p162 = scmp.eq.s32.totalorder %s20, 0
    %p163 = por %p161, %p162
    %p164 = scmp.ne.s32.totalorder %s150, %s151
    %p165 = scmp.eq.s32.totalorder %s21, 1
    %p166 = por %p164, %p165
    %p168 = scmp.ne.s32.totalorder %s151, %s167
    %p169 = scmp.eq.s32.totalorder %s21, 0
    %p170 = por %p168, %p169
    %s171 = ssub.s32 %s23, %s30
    %s172 = ssub.s32 %s22, %s34
    %s173 = sor.u32 %s171, %s172
    %p174 = scmp.eq.s32.totalorder %s173, 0
    %s176 = sadd.s32 %s175, 1
    %s177 = scalar_select %p174, %s175, %s176
    %p180 = pneg %p174
    %p181 = scmp.eq.s32.totalorder %s15, 1
    %p182 = por %p180, %p181
    %p183 = scmp.ne.s32.totalorder %s175, %s178
    %p184 = scmp.eq.s32.totalorder %s15, 0
    %p185 = por %p183, %p184
    %p186 = scmp.ne.s32.totalorder %s175, %s178
    %p187 = scmp.eq.s32.totalorder %s20, 1
    %p188 = por %p186, %p187
    %p189 = scmp.ne.s32.totalorder %s178, %s179
    %p190 = scmp.eq.s32.totalorder %s20, 0
    %p191 = por %p189, %p190
    %p192 = scmp.ne.s32.totalorder %s178, %s179
    %p193 = scmp.eq.s32.totalorder %s21, 1
    %p194 = por %p192, %p193
    %p196 = scmp.ne.s32.totalorder %s179, %s195
    %p197 = scmp.eq.s32.totalorder %s21, 0
    %p198 = por %p196, %p197
    %s199 = ssub.s32 %s22, %s34
    %p200 = scmp.eq.s32.totalorder %s199, 0
    %s202 = sadd.s32 %s201, 1
    %s203 = scalar_select %p200, %s201, %s202
    %p206 = pneg %p200
    %p207 = scmp.eq.s32.totalorder %s15, 1
    %p208 = por %p206, %p207
    %p209 = scmp.ne.s32.totalorder %s201, %s204
    %p210 = scmp.eq.s32.totalorder %s15, 0
    %p211 = por %p209, %p210
    %p212 = scmp.ne.s32.totalorder %s201, %s204
    %p213 = scmp.eq.s32.totalorder %s20, 1
    %p214 = por %p212, %p213
    %p215 = scmp.ne.s32.totalorder %s204, %s205
    %p216 = scmp.eq.s32.totalorder %s20, 0
    %p217 = por %p215, %p216
    %p218 = scmp.ne.s32.totalorder %s204, %s205
    %p219 = scmp.eq.s32.totalorder %s21, 1
    %p220 = por %p218, %p219
    %p222 = scmp.ne.s32.totalorder %s205, %s221
    %p223 = scmp.eq.s32.totalorder %s21, 0
    %p224 = por %p222, %p223
    %s225 = ssub.s32 %s22, %s34
    %p226 = scmp.eq.s32.totalorder %s225, 0
    %s228 = sadd.s32 %s227, 1
    %s229 = scalar_select %p226, %s227, %s228
    %p232 = pneg %p226
    %p233 = scmp.eq.s32.totalorder %s15, 1
    %p234 = por %p232, %p233
    %p235 = scmp.ne.s32.totalorder %s227, %s230
    %p236 = scmp.eq.s32.totalorder %s15, 0
    %p237 = por %p235, %p236
    %p238 = scmp.ne.s32.totalorder %s227, %s230
    %p239 = scmp.eq.s32.totalorder %s20, 1
    %p240 = por %p238, %p239
    %p241 = scmp.ne.s32.totalorder %s230, %s231
    %p242 = scmp.eq.s32.totalorder %s20, 0
    %p243 = por %p241, %p242
    %p244 = scmp.ne.s32.totalorder %s230, %s231
    %p245 = scmp.eq.s32.totalorder %s21, 1
    %p246 = por %p244, %p245
    %p248 = scmp.ne.s32.totalorder %s231, %s247
    %p249 = scmp.eq.s32.totalorder %s21, 0
    %p250 = por %p248, %p249
    %p251 = scmp.le.s32.totalorder 1, %s15
    %p252 = scmp.lt.s32.totalorder %s15, 3
    %p253 = pnand %p251, %p252
    %p254 = pneg %p253
    // Predicated region
    $region9: #{double_conv.4} parent=5 // pred_check
      _
    $region10: #{double_conv.4} parent=5 // pred_check_branch
      %256 = sbr.rel (%p253) target = $region12
    $region11: #{double_conv.4} parent=5 // pred_region
      %s257 = ssub.s32 %s15, 1
      // Predicated region
      $region13: #{double_conv.4} parent=11 // pred_check
        %p258 = pneg %p74
      $region14: #{double_conv.4} parent=11 // pred_check_branch
        %260 = sbr.rel (%p258) target = $region16
      $region15: #{double_conv.4} parent=11 // pred_region
        _
      $region16: #{double_conv.4} parent=11 // pred_fallthru
        _
      // Predicated region
      $region17: #{double_conv.4} parent=11 // pred_check
        %p261 = pneg %p95
      $region18: #{double_conv.4} parent=11 // pred_check_branch
        %263 = sbr.rel (%p261) target = $region20
      $region19: #{double_conv.4} parent=11 // pred_region
        _
      $region20: #{double_conv.4} parent=11 // pred_fallthru
        _
      // Predicated region
      $region21: #{double_conv.4} parent=11 // pred_check
        %p264 = pneg %p116
      $region22: #{double_conv.4} parent=11 // pred_check_branch
        %266 = sbr.rel (%p264) target = $region24
      $region23: #{double_conv.4} parent=11 // pred_region
        _
      $region24: #{double_conv.4} parent=11 // pred_fallthru
        _
      // Predicated region
      $region25: #{double_conv.4} parent=11 // pred_check
        %p267 = pneg %p137
      $region26: #{double_conv.4} parent=11 // pred_check_branch
        %269 = sbr.rel (%p267) target = $region28
      $region27: #{double_conv.4} parent=11 // pred_region
        _
      $region28: #{double_conv.4} parent=11 // pred_fallthru
        _
      // Predicated region
      $region29: #{double_conv.4} parent=11 // pred_check
        %p270 = pneg %p163
      $region30: #{double_conv.4} parent=11 // pred_check_branch
        %272 = sbr.rel (%p270) target = $region32
      $region31: #{double_conv.4} parent=11 // pred_region
        %p273 = scmp.lt.s32.totalorder %s24, 0
        %s274 = scalar_select %p273, %s24, 0
        %s275 = smul.addr %s274, 4
        %s276 = scalar_lea.vmem %s5, %s275
      $region32: #{double_conv.4} parent=11 // pred_fallthru
        _
    $region12: #{double_conv.4} parent=5 // pred_fallthru
      _
    %p277 = scmp.lt.s32.totalorder %s15, 2
    // Predicated region
    $region33: #{double_conv.4} parent=5 // pred_check
      %p278 = pneg %p277
    $region34: #{double_conv.4} parent=5 // pred_check_branch
      %280 = sbr.rel (%p278) target = $region36
    $region35: #{double_conv.4} parent=5 // pred_region
      // Predicated region
      $region37: #{double_conv.4} parent=35 // pred_check
        %p281 = pneg %p47
      $region38: #{double_conv.4} parent=35 // pred_check_branch
        %283 = sbr.rel (%p281) target = $region40
      $region39: #{double_conv.4} parent=35 // pred_region
        %p284 = scmp.lt.s32.totalorder %s23, 1
        %s285 = scalar_select %p284, %s23, 1
        %s286 = smul.addr %s285, 32
        %s287 = smul.addr %s286, 4
        %s288 = scalar_lea.vmem %s0, %s287
      $region40: #{double_conv.4} parent=35 // pred_fallthru
        _
    $region36: #{double_conv.4} parent=5 // pred_fallthru
      _
    %p289 = scmp.le.s32.totalorder 1, %s15
    %p290 = scmp.lt.s32.totalorder %s15, 3
    %p291 = pnand %p289, %p290
    %p292 = pneg %p291
    // Predicated region
    $region41: #{double_conv.4} parent=5 // pred_check
      _
    $region42: #{double_conv.4} parent=5 // pred_check_branch
      %294 = sbr.rel (%p291) target = $region44
    $region43: #{double_conv.4} parent=5 // pred_region
      %s295 = ssub.s32 %s15, 1
      %p296 = scmp.lt.s32.totalorder %s25, 1
      %s297 = scalar_select %p296, %s25, 1
      %s298 = smul.addr %s297, 32
      %s299 = smul.addr %s298, 4
      %s300 = scalar_lea.vmem %s0, %s299
      %p301 = pneg %p53
      %p302 = pneg %p50
      %p303 = pneg %p74
      %p304 = pneg %p71
      %p305 = pneg %p95
      %p306 = pneg %p92
      %p307 = pneg %p116
      %p308 = pneg %p113
      %p309 = pneg %p137
      %p310 = pneg %p134
      %p311 = scmp.lt.s32.totalorder %s24, 0
      %s312 = scalar_select %p311, %s24, 0
      %s313 = smul.addr %s312, 4
      %s314 = scalar_lea.vmem %s5, %s313
      %p315 = pneg %p163
      %p316 = pneg %p160
      %p317 = pneg %p191
      %p318 = pneg %p188
      %p319 = scmp.lt.s32.totalorder %s25, 1
      %s320 = scalar_select %p319, %s25, 1
      %p321 = scmp.lt.s32.totalorder %s24, 0
      %s322 = scalar_select %p321, %s24, 0
      %s323 = smul.addr %s320, 32
      %s324 = sadd.s32 %s322, %s323
      %s325 = smul.addr %s324, 4
      %s326 = scalar_lea.vmem %s6, %s325
      %p327 = pneg %p217
      %p328 = pneg %p214
      %p329 = scmp.lt.s32.totalorder %s24, 0
      %s330 = scalar_select %p329, %s24, 0
      %s331 = scalar_lea.vmem %s7, %s330
      %p332 = pneg %p243
      %p333 = pneg %p240
      %p334 = scmp.lt.s32.totalorder %s24, 0
      %s335 = scalar_select %p334, %s24, 0
      %s336 = scalar_lea.vmem %s8, %s335
      %p337 = scmp.lt.s32.totalorder %s25, 1
      %s338 = scalar_select %p337, %s25, 1
      %s339 = smul.addr %s338, 32
      %s340 = smul.addr %s339, 4
      %s341 = scalar_lea.vmem %s0, %s340
      %p342 = scmp.lt.s32.totalorder %s24, 0
      %s343 = scalar_select %p342, %s24, 0
      %s344 = smul.addr %s343, 4
      %s345 = scalar_lea.vmem %s5, %s344
      %p346 = scmp.lt.s32.totalorder %s25, 1
      %s347 = scalar_select %p346, %s25, 1
      %p348 = scmp.lt.s32.totalorder %s24, 0
      %s349 = scalar_select %p348, %s24, 0
      %s350 = smul.addr %s347, 32
      %s351 = sadd.s32 %s349, %s350
      %s352 = smul.addr %s351, 4
      %s353 = scalar_lea.vmem %s6, %s352
      %p354 = scmp.lt.s32.totalorder %s24, 0
      %s355 = scalar_select %p354, %s24, 0
      %s356 = scalar_lea.vmem %s7, %s355
      %p357 = scmp.lt.s32.totalorder %s24, 0
      %s358 = scalar_select %p357, %s24, 0
      %s359 = scalar_lea.vmem %s8, %s358
      %p361 = scmp.eq.s32.totalorder %s25, 0
      // Predicated region
      $region45: #{double_conv.4} parent=43 // pred_check
        %p362 = pneg %p361
      $region46: #{double_conv.4} parent=43 // pred_check_branch
        %364 = sbr.rel (%p362) target = $region48
      $region47: #{double_conv.4} parent=43 // pred_region
        %365 = vst [vmem:[%s356] sm:$0x1] 0.0
        %366 = vst [vmem:[%s359] sm:$0x1] 0.0
      $region48: #{double_conv.4} parent=43 // pred_fallthru
        _
      %v367 = vld [vmem:[%s1] sm:$0x1]
      %v368 = vmul.f32 %v367, 0.001953125
      %v369 = vld [vmem:[%s2] sm:$0x1]
      %v370 = vmul.f32 %v369, 0.001953125
      %v371 = vmul.f32 %v368, %v368
      %v372 = vsub.f32 %v370, %v371
      %v373 = vmax.f32 %v372, 0.0
      %v374 = vld [vmem:[%s3] sm:$0x1]
      %v375 = vadd.f32 %v373, 1e-05
      %v376 = vrsqrt.pop %v375
      %v377 = vmul.f32 %v374, %v376
      %v378 = vld [vmem:[%s4] sm:$0x1]
      %v379 = vmul.f32 %v368, %v377
      %v380 = vsub.f32 %v378, %v379
      %v381 = vld [vmem:[%s341] sm:$0xf]
      %v382 = vld [vmem:[%s341 + $0x4] sm:$0xf]
      %v383 = vld [vmem:[%s341 + $0x8] sm:$0xf]
      %v384 = vld [vmem:[%s341 + $0xc] sm:$0xf]
      %v385 = vld [vmem:[%s341 + $0x10] sm:$0xf]
      %v386 = vld [vmem:[%s341 + $0x14] sm:$0xf]
      %v387 = vld [vmem:[%s341 + $0x18] sm:$0xf]
      %v388 = vld [vmem:[%s341 + $0x1c] sm:$0xf]
      %v389 = vld [vmem:[%s341 + $0x20] sm:$0xf]
      %v390 = vld [vmem:[%s341 + $0x24] sm:$0xf]
      %v391 = vld [vmem:[%s341 + $0x28] sm:$0xf]
      %v392 = vld [vmem:[%s341 + $0x2c] sm:$0xf]
      %v393 = vld [vmem:[%s341 + $0x30] sm:$0xf]
      %v394 = vld [vmem:[%s341 + $0x34] sm:$0xf]
      %v395 = vld [vmem:[%s341 + $0x38] sm:$0xf]
      %v396 = vld [vmem:[%s341 + $0x3c] sm:$0xf]
      %v397 = vld [vmem:[%s341 + $0x40] sm:$0xf]
      %v398 = vld [vmem:[%s341 + $0x44] sm:$0xf]
      %v399 = vld [vmem:[%s341 + $0x48] sm:$0xf]
      %v400 = vld [vmem:[%s341 + $0x4c] sm:$0xf]
      %v401 = vld [vmem:[%s341 + $0x50] sm:$0xf]
      %v402 = vld [vmem:[%s341 + $0x54] sm:$0xf]
      %v403 = vld [vmem:[%s341 + $0x58] sm:$0xf]
      %v404 = vld [vmem:[%s341 + $0x5c] sm:$0xf]
      %v405 = vld [vmem:[%s341 + $0x60] sm:$0xf]
      %v406 = vld [vmem:[%s341 + $0x64] sm:$0xf]
      %v407 = vld [vmem:[%s341 + $0x68] sm:$0xf]
      %v408 = vld [vmem:[%s341 + $0x6c] sm:$0xf]
      %v409 = vld [vmem:[%s341 + $0x70] sm:$0xf]
      %v410 = vld [vmem:[%s341 + $0x74] sm:$0xf]
      %v411 = vld [vmem:[%s341 + $0x78] sm:$0xf]
      %v412 = vld [vmem:[%s341 + $0x7c] sm:$0xf]
      %v413 = vunpack.c.l.bf16 %v381
      %v414 = vunpack.c.l.bf16 %v382
      %v415 = vunpack.c.l.bf16 %v383
      %v416 = vunpack.c.l.bf16 %v384
      %v417 = vunpack.c.l.bf16 %v385
      %v418 = vunpack.c.l.bf16 %v386
      %v419 = vunpack.c.l.bf16 %v387
      %v420 = vunpack.c.l.bf16 %v388
      %v421 = vunpack.c.l.bf16 %v389
      %v422 = vunpack.c.l.bf16 %v390
      %v423 = vunpack.c.l.bf16 %v391
      %v424 = vunpack.c.l.bf16 %v392
      %v425 = vunpack.c.l.bf16 %v393
      %v426 = vunpack.c.l.bf16 %v394
      %v427 = vunpack.c.l.bf16 %v395
      %v428 = vunpack.c.l.bf16 %v396
      %v429 = vunpack.c.l.bf16 %v397
      %v430 = vunpack.c.l.bf16 %v398
      %v431 = vunpack.c.l.bf16 %v399
      %v432 = vunpack.c.l.bf16 %v400
      %v433 = vunpack.c.l.bf16 %v401
      %v434 = vunpack.c.l.bf16 %v402
      %v435 = vunpack.c.l.bf16 %v403
      %v436 = vunpack.c.l.bf16 %v404
      %v437 = vunpack.c.l.bf16 %v405
      %v438 = vunpack.c.l.bf16 %v406
      %v439 = vunpack.c.l.bf16 %v407
      %v440 = vunpack.c.l.bf16 %v408
      %v441 = vunpack.c.l.bf16 %v409
      %v442 = vunpack.c.l.bf16 %v410
      %v443 = vunpack.c.l.bf16 %v411
      %v444 = vunpack.c.l.bf16 %v412
      %v446 = vlaneseq
      %v447 = vshrl.u32 %v446, 7
      %v448 = vsub.s32 0, %v447
      %v449 = vrot.slane %v377, %v448
      %v451 = vmul.f32 %v413, %v449
      %v452 = vmul.f32 %v414, %v449
      %v453 = vmul.f32 %v415, %v449
      %v454 = vmul.f32 %v416, %v449
      %v455 = vmul.f32 %v417, %v449
      %v456 = vmul.f32 %v418, %v449
      %v457 = vmul.f32 %v419, %v449
      %v458 = vmul.f32 %v420, %v449
      %v459 = vmul.f32 %v421, %v449
      %v460 = vmul.f32 %v422, %v449
      %v461 = vmul.f32 %v423, %v449
      %v462 = vmul.f32 %v424, %v449
      %v463 = vmul.f32 %v425, %v449
      %v464 = vmul.f32 %v426, %v449
      %v465 = vmul.f32 %v427, %v449
      %v466 = vmul.f32 %v428, %v449
      %v467 = vmul.f32 %v429, %v449
      %v468 = vmul.f32 %v430, %v449
      %v469 = vmul.f32 %v431, %v449
      %v470 = vmul.f32 %v432, %v449
      %v471 = vmul.f32 %v433, %v449
      %v472 = vmul.f32 %v434, %v449
      %v473 = vmul.f32 %v435, %v449
      %v474 = vmul.f32 %v436, %v449
      %v475 = vmul.f32 %v437, %v449
      %v476 = vmul.f32 %v438, %v449
      %v477 = vmul.f32 %v439, %v449
      %v478 = vmul.f32 %v440, %v449
      %v479 = vmul.f32 %v441, %v449
      %v480 = vmul.f32 %v442, %v449
      %v481 = vmul.f32 %v443, %v449
      %v482 = vmul.f32 %v444, %v449
      %v484 = vlaneseq
      %v485 = vshrl.u32 %v484, 7
      %v486 = vsub.s32 0, %v485
      %v487 = vrot.slane %v380, %v486
      %v489 = vadd.f32 %v451, %v487
      %v490 = vadd.f32 %v452, %v487
      %v491 = vadd.f32 %v453, %v487
      %v492 = vadd.f32 %v454, %v487
      %v493 = vadd.f32 %v455, %v487
      %v494 = vadd.f32 %v456, %v487
      %v495 = vadd.f32 %v457, %v487
      %v496 = vadd.f32 %v458, %v487
      %v497 = vadd.f32 %v459, %v487
      %v498 = vadd.f32 %v460, %v487
      %v499 = vadd.f32 %v461, %v487
      %v500 = vadd.f32 %v462, %v487
      %v501 = vadd.f32 %v463, %v487
      %v502 = vadd.f32 %v464, %v487
      %v503 = vadd.f32 %v465, %v487
      %v504 = vadd.f32 %v466, %v487
      %v505 = vadd.f32 %v467, %v487
      %v506 = vadd.f32 %v468, %v487
      %v507 = vadd.f32 %v469, %v487
      %v508 = vadd.f32 %v470, %v487
      %v509 = vadd.f32 %v471, %v487
      %v510 = vadd.f32 %v472, %v487
      %v511 = vadd.f32 %v473, %v487
      %v512 = vadd.f32 %v474, %v487
      %v513 = vadd.f32 %v475, %v487
      %v514 = vadd.f32 %v476, %v487
      %v515 = vadd.f32 %v477, %v487
      %v516 = vadd.f32 %v478, %v487
      %v517 = vadd.f32 %v479, %v487
      %v518 = vadd.f32 %v480, %v487
      %v519 = vadd.f32 %v481, %v487
      %v520 = vadd.f32 %v482, %v487
      %v521 = vmax.f32 %v489, 0.0
      %v522 = vmax.f32 %v490, 0.0
      %v523 = vmax.f32 %v491, 0.0
      %v524 = vmax.f32 %v492, 0.0
      %v525 = vmax.f32 %v493, 0.0
      %v526 = vmax.f32 %v494, 0.0
      %v527 = vmax.f32 %v495, 0.0
      %v528 = vmax.f32 %v496, 0.0
      %v529 = vmax.f32 %v497, 0.0
      %v530 = vmax.f32 %v498, 0.0
      %v531 = vmax.f32 %v499, 0.0
      %v532 = vmax.f32 %v500, 0.0
      %v533 = vmax.f32 %v501, 0.0
      %v534 = vmax.f32 %v502, 0.0
      %v535 = vmax.f32 %v503, 0.0
      %v536 = vmax.f32 %v504, 0.0
      %v537 = vmax.f32 %v505, 0.0
      %v538 = vmax.f32 %v506, 0.0
      %v539 = vmax.f32 %v507, 0.0
      %v540 = vmax.f32 %v508, 0.0
      %v541 = vmax.f32 %v509, 0.0
      %v542 = vmax.f32 %v510, 0.0
      %v543 = vmax.f32 %v511, 0.0
      %v544 = vmax.f32 %v512, 0.0
      %v545 = vmax.f32 %v513, 0.0
      %v546 = vmax.f32 %v514, 0.0
      %v547 = vmax.f32 %v515, 0.0
      %v548 = vmax.f32 %v516, 0.0
      %v549 = vmax.f32 %v517, 0.0
      %v550 = vmax.f32 %v518, 0.0
      %v551 = vmax.f32 %v519, 0.0
      %v552 = vmax.f32 %v520, 0.0
      %v553 = vpack.c.bf16 %v522, %v521
      %v554 = vpack.c.bf16 %v524, %v523
      %v555 = vpack.c.bf16 %v526, %v525
      %v556 = vpack.c.bf16 %v528, %v527
      %v557 = vpack.c.bf16 %v530, %v529
      %v558 = vpack.c.bf16 %v532, %v531
      %v559 = vpack.c.bf16 %v534, %v533
      %v560 = vpack.c.bf16 %v536, %v535
      %v561 = vpack.c.bf16 %v538, %v537
      %v562 = vpack.c.bf16 %v540, %v539
      %v563 = vpack.c.bf16 %v542, %v541
      %v564 = vpack.c.bf16 %v544, %v543
      %v565 = vpack.c.bf16 %v546, %v545
      %v566 = vpack.c.bf16 %v548, %v547
      %v567 = vpack.c.bf16 %v550, %v549
      %v568 = vpack.c.bf16 %v552, %v551
      %v570 = vshrl.u32 0, 16
      %v572 = vrot.slane %v570, 7
      %v573 = vshll.u32 0, 16
      %v575 = vor.u32 %v572, %v573
      %v577 = vshrl.u32 %v553, 16
      %v579 = vrot.slane %v577, 7
      %v580 = vshll.u32 %v553, 16
      %v582 = vor.u32 %v579, %v580
      %v584 = vshrl.u32 %v554, 16
      %v586 = vrot.slane %v584, 7
      %v587 = vshll.u32 %v554, 16
      %v589 = vor.u32 %v586, %v587
      %v591 = vshrl.u32 %v555, 16
      %v593 = vrot.slane %v591, 7
      %v594 = vshll.u32 %v555, 16
      %v596 = vor.u32 %v593, %v594
      %v598 = vshrl.u32 %v556, 16
      %v600 = vrot.slane %v598, 7
      %v601 = vshll.u32 %v556, 16
      %v603 = vor.u32 %v600, %v601
      %v605 = vshrl.u32 %v557, 16
      %v607 = vrot.slane %v605, 7
      %v608 = vshll.u32 %v557, 16
      %v610 = vor.u32 %v607, %v608
      %v612 = vshrl.u32 %v558, 16
      %v614 = vrot.slane %v612, 7
      %v615 = vshll.u32 %v558, 16
      %v617 = vor.u32 %v614, %v615
      %v619 = vshrl.u32 %v559, 16
      %v621 = vrot.slane %v619, 7
      %v622 = vshll.u32 %v559, 16
      %v624 = vor.u32 %v621, %v622
      %v626 = vshrl.u32 %v560, 16
      %v628 = vrot.slane %v626, 7
      %v629 = vshll.u32 %v560, 16
      %v631 = vor.u32 %v628, %v629
      %v633 = vshrl.u32 %v561, 16
      %v635 = vrot.slane %v633, 7
      %v636 = vshll.u32 %v561, 16
      %v638 = vor.u32 %v635, %v636
      %v640 = vshrl.u32 %v562, 16
      %v642 = vrot.slane %v640, 7
      %v643 = vshll.u32 %v562, 16
      %v645 = vor.u32 %v642, %v643
      %v647 = vshrl.u32 %v563, 16
      %v649 = vrot.slane %v647, 7
      %v650 = vshll.u32 %v563, 16
      %v652 = vor.u32 %v649, %v650
      %v654 = vshrl.u32 %v564, 16
      %v656 = vrot.slane %v654, 7
      %v657 = vshll.u32 %v564, 16
      %v659 = vor.u32 %v656, %v657
      %v661 = vshrl.u32 %v565, 16
      %v663 = vrot.slane %v661, 7
      %v664 = vshll.u32 %v565, 16
      %v666 = vor.u32 %v663, %v664
      %v668 = vshrl.u32 %v566, 16
      %v670 = vrot.slane %v668, 7
      %v671 = vshll.u32 %v566, 16
      %v673 = vor.u32 %v670, %v671
      %v675 = vshrl.u32 %v567, 16
      %v677 = vrot.slane %v675, 7
      %v678 = vshll.u32 %v567, 16
      %v680 = vor.u32 %v677, %v678
      %v682 = vshrl.u32 %v568, 16
      %v684 = vrot.slane %v682, 7
      %v685 = vshll.u32 %v568, 16
      %v687 = vor.u32 %v684, %v685
      %vm722 = vcmask 1040384
      %vm723 = vsmask.f32 256
      %vm724 = vmand %vm722, %vm723
      %v725 = vsel %vm724, 0, %v575
      %v726 = vsel %vm724, 0, %v582
      %v727 = vsel %vm724, 0, %v589
      %v728 = vsel %vm724, 0, %v596
      %v729 = vsel %vm724, 0, %v603
      %v730 = vsel %vm724, 0, %v610
      %v731 = vsel %vm724, 0, %v617
      %v732 = vsel %vm724, 0, %v624
      %v733 = vsel %vm724, 0, %v631
      %v734 = vsel %vm724, 0, %v638
      %v735 = vsel %vm724, 0, %v645
      %v736 = vsel %vm724, 0, %v652
      %v737 = vsel %vm724, 0, %v659
      %v738 = vsel %vm724, 0, %v666
      %v739 = vsel %vm724, 0, %v673
      %v740 = vsel %vm724, 0, %v680
      %v741 = vsel %vm724, 0, %v687
      %v742 = vsel %vm724, %v572, 0
      %v743 = vsel %vm724, %v579, 0
      %v744 = vsel %vm724, %v586, 0
      %v745 = vsel %vm724, %v593, 0
      %v746 = vsel %vm724, %v600, 0
      %v747 = vsel %vm724, %v607, 0
      %v748 = vsel %vm724, %v614, 0
      %v749 = vsel %vm724, %v621, 0
      %v750 = vsel %vm724, %v628, 0
      %v751 = vsel %vm724, %v635, 0
      %v752 = vsel %vm724, %v642, 0
      %v753 = vsel %vm724, %v649, 0
      %v754 = vsel %vm724, %v656, 0
      %v755 = vsel %vm724, %v663, 0
      %v756 = vsel %vm724, %v670, 0
      %v757 = vsel %vm724, %v677, 0
      %v758 = vsel %vm724, %v684, 0
      %v759 = vld [vmem:[%s345] sm:$0xf]
      %v760 = vld [vmem:[%s345 + $0x4] sm:$0xf]
      %v761 = vld [vmem:[%s345 + $0x8] sm:$0xf]
      %v762 = vld [vmem:[%s345 + $0xc] sm:$0xf]
      %v763 = vld [vmem:[%s345 + $0x10] sm:$0xf]
      %v764 = vld [vmem:[%s345 + $0x14] sm:$0xf]
      %v765 = vld [vmem:[%s345 + $0x18] sm:$0xf]
      %v766 = vld [vmem:[%s345 + $0x1c] sm:$0xf]
      %v767 = vld [vmem:[%s345 + $0x20] sm:$0xf]
      %v768 = vld [vmem:[%s345 + $0x24] sm:$0xf]
      %v769 = vld [vmem:[%s345 + $0x28] sm:$0xf]
      %v770 = vld [vmem:[%s345 + $0x2c] sm:$0xf]
      %v771 = vld [vmem:[%s345 + $0x30] sm:$0xf]
      %v772 = vld [vmem:[%s345 + $0x34] sm:$0xf]
      %v773 = vld [vmem:[%s345 + $0x38] sm:$0xf]
      %v774 = vld [vmem:[%s345 + $0x3c] sm:$0xf]
      %vm775 = vsmask.f32 7424
      %v777 = vshrl.u32 %v725, 16
      %v779 = vshll.u32 %v725, 16
      %v781 = vrot.slane %v779, 1
      %v782 = vor.u32 %v777, %v781
      %v784 = vshll.u32 %v742, 16
      %v786 = vrot.slane %v784, 1
      %v787 = vsel %vm775, %v782, %v786
      %v789 = vshrl.u32 %v726, 16
      %v791 = vshll.u32 %v726, 16
      %v793 = vrot.slane %v791, 1
      %v794 = vor.u32 %v789, %v793
      %v796 = vshll.u32 %v743, 16
      %v798 = vrot.slane %v796, 1
      %v799 = vsel %vm775, %v794, %v798
      %v801 = vshrl.u32 %v727, 16
      %v803 = vshll.u32 %v727, 16
      %v805 = vrot.slane %v803, 1
      %v806 = vor.u32 %v801, %v805
      %v808 = vshll.u32 %v744, 16
      %v810 = vrot.slane %v808, 1
      %v811 = vsel %vm775, %v806, %v810
      %v813 = vshrl.u32 %v728, 16
      %v815 = vshll.u32 %v728, 16
      %v817 = vrot.slane %v815, 1
      %v818 = vor.u32 %v813, %v817
      %v820 = vshll.u32 %v745, 16
      %v822 = vrot.slane %v820, 1
      %v823 = vsel %vm775, %v818, %v822
      %v825 = vshrl.u32 %v729, 16
      %v827 = vshll.u32 %v729, 16
      %v829 = vrot.slane %v827, 1
      %v830 = vor.u32 %v825, %v829
      %v832 = vshll.u32 %v746, 16
      %v834 = vrot.slane %v832, 1
      %v835 = vsel %vm775, %v830, %v834
      %v837 = vshrl.u32 %v730, 16
      %v839 = vshll.u32 %v730, 16
      %v841 = vrot.slane %v839, 1
      %v842 = vor.u32 %v837, %v841
      %v844 = vshll.u32 %v747, 16
      %v846 = vrot.slane %v844, 1
      %v847 = vsel %vm775, %v842, %v846
      %v849 = vshrl.u32 %v731, 16
      %v851 = vshll.u32 %v731, 16
      %v853 = vrot.slane %v851, 1
      %v854 = vor.u32 %v849, %v853
      %v856 = vshll.u32 %v748, 16
      %v858 = vrot.slane %v856, 1
      %v859 = vsel %vm775, %v854, %v858
      %v861 = vshrl.u32 %v732, 16
      %v863 = vshll.u32 %v732, 16
      %v865 = vrot.slane %v863, 1
      %v866 = vor.u32 %v861, %v865
      %v868 = vshll.u32 %v749, 16
      %v870 = vrot.slane %v868, 1
      %v871 = vsel %vm775, %v866, %v870
      %v873 = vshrl.u32 %v733, 16
      %v875 = vshll.u32 %v733, 16
      %v877 = vrot.slane %v875, 1
      %v878 = vor.u32 %v873, %v877
      %v880 = vshll.u32 %v750, 16
      %v882 = vrot.slane %v880, 1
      %v883 = vsel %vm775, %v878, %v882
      %v885 = vshrl.u32 %v734, 16
      %v887 = vshll.u32 %v734, 16
      %v889 = vrot.slane %v887, 1
      %v890 = vor.u32 %v885, %v889
      %v892 = vshll.u32 %v751, 16
      %v894 = vrot.slane %v892, 1
      %v895 = vsel %vm775, %v890, %v894
      %v897 = vshrl.u32 %v735, 16
      %v899 = vshll.u32 %v735, 16
      %v901 = vrot.slane %v899, 1
      %v902 = vor.u32 %v897, %v901
      %v904 = vshll.u32 %v752, 16
      %v906 = vrot.slane %v904, 1
      %v907 = vsel %vm775, %v902, %v906
      %v909 = vshrl.u32 %v736, 16
      %v911 = vshll.u32 %v736, 16
      %v913 = vrot.slane %v911, 1
      %v914 = vor.u32 %v909, %v913
      %v916 = vshll.u32 %v753, 16
      %v918 = vrot.slane %v916, 1
      %v919 = vsel %vm775, %v914, %v918
      %v921 = vshrl.u32 %v737, 16
      %v923 = vshll.u32 %v737, 16
      %v925 = vrot.slane %v923, 1
      %v926 = vor.u32 %v921, %v925
      %v928 = vshll.u32 %v754, 16
      %v930 = vrot.slane %v928, 1
      %v931 = vsel %vm775, %v926, %v930
      %v933 = vshrl.u32 %v738, 16
      %v935 = vshll.u32 %v738, 16
      %v937 = vrot.slane %v935, 1
      %v938 = vor.u32 %v933, %v937
      %v940 = vshll.u32 %v755, 16
      %v942 = vrot.slane %v940, 1
      %v943 = vsel %vm775, %v938, %v942
      %v945 = vshrl.u32 %v739, 16
      %v947 = vshll.u32 %v739, 16
      %v949 = vrot.slane %v947, 1
      %v950 = vor.u32 %v945, %v949
      %v952 = vshll.u32 %v756, 16
      %v954 = vrot.slane %v952, 1
      %v955 = vsel %vm775, %v950, %v954
      %v957 = vshrl.u32 %v740, 16
      %v959 = vshll.u32 %v740, 16
      %v961 = vrot.slane %v959, 1
      %v962 = vor.u32 %v957, %v961
      %v964 = vshll.u32 %v757, 16
      %v966 = vrot.slane %v964, 1
      %v967 = vsel %vm775, %v962, %v966
      %s984 = scalar_lea.vmem %s345, 64
      %v985 = vld [vmem:[%s984] sm:$0xf]
      %v986 = vld [vmem:[%s984 + $0x4] sm:$0xf]
      %v987 = vld [vmem:[%s984 + $0x8] sm:$0xf]
      %v988 = vld [vmem:[%s984 + $0xc] sm:$0xf]
      %v989 = vld [vmem:[%s984 + $0x10] sm:$0xf]
      %v990 = vld [vmem:[%s984 + $0x14] sm:$0xf]
      %v991 = vld [vmem:[%s984 + $0x18] sm:$0xf]
      %v992 = vld [vmem:[%s984 + $0x1c] sm:$0xf]
      %v993 = vld [vmem:[%s984 + $0x20] sm:$0xf]
      %v994 = vld [vmem:[%s984 + $0x24] sm:$0xf]
      %v995 = vld [vmem:[%s984 + $0x28] sm:$0xf]
      %v996 = vld [vmem:[%s984 + $0x2c] sm:$0xf]
      %v997 = vld [vmem:[%s984 + $0x30] sm:$0xf]
      %v998 = vld [vmem:[%s984 + $0x34] sm:$0xf]
      %v999 = vld [vmem:[%s984 + $0x38] sm:$0xf]
      %v1000 = vld [vmem:[%s984 + $0x3c] sm:$0xf]
      %v1017 = vunpack.c.l.b16 %v985
      %v1018 = vunpack.c.l.b16 %v986
      %v1019 = vunpack.c.l.b16 %v987
      %v1020 = vunpack.c.l.b16 %v988
      %v1021 = vunpack.c.l.b16 %v989
      %v1022 = vunpack.c.l.b16 %v990
      %v1023 = vunpack.c.l.b16 %v991
      %v1024 = vunpack.c.l.b16 %v992
      %v1025 = vunpack.c.l.b16 %v993
      %v1026 = vunpack.c.l.b16 %v994
      %v1027 = vunpack.c.l.b16 %v995
      %v1028 = vunpack.c.l.b16 %v996
      %v1029 = vunpack.c.l.b16 %v997
      %v1030 = vunpack.c.l.b16 %v998
      %v1031 = vunpack.c.l.b16 %v999
      %v1032 = vunpack.c.l.b16 %v1000
      %v1033 = vpack.c.b16 %v1018, %v1017
      %v1034 = vpack.c.b16 %v1020, %v1019
      %v1035 = vpack.c.b16 %v1022, %v1021
      %v1036 = vpack.c.b16 %v1024, %v1023
      %v1037 = vpack.c.b16 %v1026, %v1025
      %v1038 = vpack.c.b16 %v1028, %v1027
      %v1039 = vpack.c.b16 %v1030, %v1029
      %v1040 = vpack.c.b16 %v1032, %v1031
      %1049 = vmatprep.subr.bf16.mxu0 0
      %1050 = vmatpush1.bf16.msra.mxu0 %v1033
      %1051 = vmatprep.subr.bf16.mxu0 0
      %1052 = vmatpush1.bf16.msra.mxu0 %v1034
      %1053 = vmatprep.subr.bf16.mxu0 0
      %1054 = vmatpush1.bf16.msra.mxu0 %v1035
      %1055 = vmatprep.subr.bf16.mxu0 0
      %1056 = vmatpush1.bf16.msra.mxu0 %v1036
      %1057 = vmatprep.subr.bf16.mxu0 0
      %1058 = vmatpush1.bf16.msra.mxu0 %v1037
      %1059 = vmatprep.subr.bf16.mxu0 0
      %1060 = vmatpush1.bf16.msra.mxu0 %v1038
      %1061 = vmatprep.subr.bf16.mxu0 0
      %1062 = vmatpush1.bf16.msra.mxu0 %v1039
      %1063 = vmatprep.subr.bf16.mxu0 0
      %1064 = vmatpush1.bf16.msra.mxu0 %v1040
      %1065 = vmatprep.subr.bf16.mxu0 0
      %1066 = vmatpush1.bf16.msra.mxu0 0
      %1067 = vmatprep.subr.bf16.mxu0 0
      %1068 = vmatpush1.bf16.msra.mxu0 0
      %1069 = vmatprep.subr.bf16.mxu0 0
      %1070 = vmatpush1.bf16.msra.mxu0 0
      %1071 = vmatprep.subr.bf16.mxu0 0
      %1072 = vmatpush1.bf16.msra.mxu0 0
      %1073 = vmatprep.subr.bf16.mxu0 0
      %1074 = vmatpush1.bf16.msra.mxu0 0
      %1075 = vmatprep.subr.bf16.mxu0 0
      %1076 = vmatpush1.bf16.msra.mxu0 0
      %1077 = vmatprep.subr.bf16.mxu0 0
      %1078 = vmatpush1.bf16.msra.mxu0 0
      %1079 = vmatprep.subr.bf16.mxu0 0
      %1080 = vmatpush1.bf16.msra.mxu0 0
      %1081 = vmatprep.mubr.bf16.mxu0 0
      %1082 = vmatmul.mubr.bf16.gmra.mrb[0].mxu0 %v787
      %v1083 = vpop.f32.mrb[0].mxu0
      %v1084 = vadd.f32 0.0, %v1083
      %v1085 = vpop.f32.mrb[0].mxu0
      %v1086 = vpop.f32.mrb[0].mxu0
      %v1087 = vadd.f32 0.0, %v1086
      %v1088 = vpop.f32.mrb[0].mxu0
      %1089 = vmatprep.mubr.bf16.mxu0 0
      %1090 = vmatmul.mubr.bf16.gmra.mrb[0].mxu0 %v799
      %v1091 = vpop.f32.mrb[0].mxu0
      %v1092 = vadd.f32 0.0, %v1091
      %v1093 = vpop.f32.mrb[0].mxu0
      %v1094 = vpop.f32.mrb[0].mxu0
      %v1095 = vadd.f32 0.0, %v1094
      %v1096 = vpop.f32.mrb[0].mxu0
      %1097 = vmatprep.mubr.bf16.mxu0 0
      %1098 = vmatmul.mubr.bf16.gmra.mrb[0].mxu0 %v811
      %v1099 = vpop.f32.mrb[0].mxu0
      %v1100 = vadd.f32 0.0, %v1099
      %v1101 = vpop.f32.mrb[0].mxu0
      %v1102 = vpop.f32.mrb[0].mxu0
      %v1103 = vadd.f32 0.0, %v1102
      %v1104 = vpop.f32.mrb[0].mxu0
      %1105 = vmatprep.mubr.bf16.mxu0 0
      %1106 = vmatmul.mubr.bf16.gmra.mrb[0].mxu0 %v823
      %v1107 = vpop.f32.mrb[0].mxu0
      %v1108 = vadd.f32 0.0, %v1107
      %v1109 = vpop.f32.mrb[0].mxu0
      %v1110 = vpop.f32.mrb[0].mxu0
      %v1111 = vadd.f32 0.0, %v1110
      %v1112 = vpop.f32.mrb[0].mxu0
      %1113 = vmatprep.mubr.bf16.mxu0 0
      %1114 = vmatmul.mubr.bf16.gmra.mrb[0].mxu0 %v835
      %v1115 = vpop.f32.mrb[0].mxu0
      %v1116 = vadd.f32 0.0, %v1115
      %v1117 = vpop.f32.mrb[0].mxu0
      %v1118 = vpop.f32.mrb[0].mxu0
      %v1119 = vadd.f32 0.0, %v1118
      %v1120 = vpop.f32.mrb[0].mxu0
      %1121 = vmatprep.mubr.bf16.mxu0 0
      %1122 = vmatmul.mubr.bf16.gmra.mrb[0].mxu0 %v847
      %v1123 = vpop.f32.mrb[0].mxu0
      %v1124 = vadd.f32 0.0, %v1123
      %v1125 = vpop.f32.mrb[0].mxu0
      %v1126 = vpop.f32.mrb[0].mxu0
      %v1127 = vadd.f32 0.0, %v1126
      %v1128 = vpop.f32.mrb[0].mxu0
      %1129 = vmatprep.mubr.bf16.mxu0 0
      %1130 = vmatmul.mubr.bf16.gmra.mrb[0].mxu0 %v859
      %v1131 = vpop.f32.mrb[0].mxu0
      %v1132 = vadd.f32 0.0, %v1131
      %v1133 = vpop.f32.mrb[0].mxu0
      %v1134 = vpop.f32.mrb[0].mxu0
      %v1135 = vadd.f32 0.0, %v1134
      %v1136 = vpop.f32.mrb[0].mxu0
      %1137 = vmatprep.mubr.bf16.mxu0 0
      %1138 = vmatmul.mubr.bf16.gmra.mrb[0].mxu0 %v871
      %v1139 = vpop.f32.mrb[0].mxu0
      %v1140 = vadd.f32 0.0, %v1139
      %v1141 = vpop.f32.mrb[0].mxu0
      %v1142 = vpop.f32.mrb[0].mxu0
      %v1143 = vadd.f32 0.0, %v1142
      %v1144 = vpop.f32.mrb[0].mxu0
      %1145 = vmatprep.mubr.bf16.mxu0 0
      %1146 = vmatmul.mubr.bf16.gmra.mrb[0].mxu0 %v883
      %v1147 = vpop.f32.mrb[0].mxu0
      %v1148 = vadd.f32 0.0, %v1147
      %v1149 = vpop.f32.mrb[0].mxu0
      %v1150 = vpop.f32.mrb[0].mxu0
      %v1151 = vadd.f32 0.0, %v1150
      %v1152 = vpop.f32.mrb[0].mxu0
      %1153 = vmatprep.mubr.bf16.mxu0 0
      %1154 = vmatmul.mubr.bf16.gmra.mrb[0].mxu0 %v895
      %v1155 = vpop.f32.mrb[0].mxu0
      %v1156 = vadd.f32 0.0, %v1155
      %v1157 = vpop.f32.mrb[0].mxu0
      %v1158 = vpop.f32.mrb[0].mxu0
      %v1159 = vadd.f32 0.0, %v1158
      %v1160 = vpop.f32.mrb[0].mxu0
      %1161 = vmatprep.mubr.bf16.mxu0 0
      %1162 = vmatmul.mubr.bf16.gmra.mrb[0].mxu0 %v907
      %v1163 = vpop.f32.mrb[0].mxu0
      %v1164 = vadd.f32 0.0, %v1163
      %v1165 = vpop.f32.mrb[0].mxu0
      %v1166 = vpop.f32.mrb[0].mxu0
      %v1167 = vadd.f32 0.0, %v1166
      %v1168 = vpop.f32.mrb[0].mxu0
      %1169 = vmatprep.mubr.bf16.mxu0 0
      %1170 = vmatmul.mubr.bf16.gmra.mrb[0].mxu0 %v919
      %v1171 = vpop.f32.mrb[0].mxu0
      %v1172 = vadd.f32 0.0, %v1171
      %v1173 = vpop.f32.mrb[0].mxu0
      %v1174 = vpop.f32.mrb[0].mxu0
      %v1175 = vadd.f32 0.0, %v1174
      %v1176 = vpop.f32.mrb[0].mxu0
      %1177 = vmatprep.mubr.bf16.mxu0 0
      %1178 = vmatmul.mubr.bf16.gmra.mrb[0].mxu0 %v931
      %v1179 = vpop.f32.mrb[0].mxu0
      %v1180 = vadd.f32 0.0, %v1179
      %v1181 = vpop.f32.mrb[0].mxu0
      %v1182 = vpop.f32.mrb[0].mxu0
      %v1183 = vadd.f32 0.0, %v1182
      %v1184 = vpop.f32.mrb[0].mxu0
      %1185 = vmatprep.mubr.bf16.mxu0 0
      %1186 = vmatmul.mubr.bf16.gmra.mrb[0].mxu0 %v943
      %v1187 = vpop.f32.mrb[0].mxu0
      %v1188 = vadd.f32 0.0, %v1187
      %v1189 = vpop.f32.mrb[0].mxu0
      %v1190 = vpop.f32.mrb[0].mxu0
      %v1191 = vadd.f32 0.0, %v1190
      %v1192 = vpop.f32.mrb[0].mxu0
      %1193 = vmatprep.mubr.bf16.mxu0 0
      %1194 = vmatmul.mubr.bf16.gmra.mrb[0].mxu0 %v955
      %v1195 = vpop.f32.mrb[0].mxu0
      %v1196 = vadd.f32 0.0, %v1195
      %v1197 = vpop.f32.mrb[0].mxu0
      %v1198 = vpop.f32.mrb[0].mxu0
      %v1199 = vadd.f32 0.0, %v1198
      %v1200 = vpop.f32.mrb[0].mxu0
      %1201 = vmatprep.mubr.bf16.mxu0 0
      %1202 = vmatmul.mubr.bf16.gmra.mrb[0].mxu0 %v967
      %v1203 = vpop.f32.mrb[0].mxu0
      %v1204 = vadd.f32 0.0, %v1203
      %v1205 = vpop.f32.mrb[0].mxu0
      %v1206 = vpop.f32.mrb[0].mxu0
      %v1207 = vadd.f32 0.0, %v1206
      %v1208 = vpop.f32.mrb[0].mxu0
      %1209 = vdwg.mxu0
      %v1226 = vunpack.c.l.b16 %v759
      %v1227 = vunpack.c.l.b16 %v760
      %v1228 = vunpack.c.l.b16 %v761
      %v1229 = vunpack.c.l.b16 %v762
      %v1230 = vunpack.c.l.b16 %v763
      %v1231 = vunpack.c.l.b16 %v764
      %v1232 = vunpack.c.l.b16 %v765
      %v1233 = vunpack.c.l.b16 %v766
      %v1234 = vunpack.c.l.b16 %v767
      %v1235 = vunpack.c.l.b16 %v768
      %v1236 = vunpack.c.l.b16 %v769
      %v1237 = vunpack.c.l.b16 %v770
      %v1238 = vunpack.c.l.b16 %v771
      %v1239 = vunpack.c.l.b16 %v772
      %v1240 = vunpack.c.l.b16 %v773
      %v1241 = vunpack.c.l.b16 %v774
      %v1242 = vpack.c.b16 %v1227, %v1226
      %v1243 = vpack.c.b16 %v1229, %v1228
      %v1244 = vpack.c.b16 %v1231, %v1230
      %v1245 = vpack.c.b16 %v1233, %v1232
      %v1246 = vpack.c.b16 %v1235, %v1234
      %v1247 = vpack.c.b16 %v1237, %v1236
      %v1248 = vpack.c.b16 %v1239, %v1238
      %v1249 = vpack.c.b16 %v1241, %v1240
      %1258 = vmatprep.subr.bf16.mxu0 0
      %1259 = vmatpush1.bf16.msra.mxu0 %v1242
      %1260 = vmatprep.subr.bf16.mxu0 0
      %1261 = vmatpush1.bf16.msra.mxu0 %v1243
      %1262 = vmatprep.subr.bf16.mxu0 0
      %1263 = vmatpush1.bf16.msra.mxu0 %v1244
      %1264 = vmatprep.subr.bf16.mxu0 0
      %1265 = vmatpush1.bf16.msra.mxu0 %v1245
      %1266 = vmatprep.subr.bf16.mxu0 0
      %1267 = vmatpush1.bf16.msra.mxu0 %v1246
      %1268 = vmatprep.subr.bf16.mxu0 0
      %1269 = vmatpush1.bf16.msra.mxu0 %v1247
      %1270 = vmatprep.subr.bf16.mxu0 0
      %1271 = vmatpush1.bf16.msra.mxu0 %v1248
      %1272 = vmatprep.subr.bf16.mxu0 0
      %1273 = vmatpush1.bf16.msra.mxu0 %v1249
      %1274 = vmatprep.subr.bf16.mxu0 0
      %1275 = vmatpush1.bf16.msra.mxu0 0
      %1276 = vmatprep.subr.bf16.mxu0 0
      %1277 = vmatpush1.bf16.msra.mxu0 0
      %1278 = vmatprep.subr.bf16.mxu0 0
      %1279 = vmatpush1.bf16.msra.mxu0 0
      %1280 = vmatprep.subr.bf16.mxu0 0
      %1281 = vmatpush1.bf16.msra.mxu0 0
      %1282 = vmatprep.subr.bf16.mxu0 0
      %1283 = vmatpush1.bf16.msra.mxu0 0
      %1284 = vmatprep.subr.bf16.mxu0 0
      %1285 = vmatpush1.bf16.msra.mxu0 0
      %1286 = vmatprep.subr.bf16.mxu0 0
      %1287 = vmatpush1.bf16.msra.mxu0 0
      %1288 = vmatprep.subr.bf16.mxu0 0
      %1289 = vmatpush1.bf16.msra.mxu0 0
      %1290 = vmatprep.mubr.bf16.mxu0 0
      %1291 = vmatmul.mubr.bf16.gmra.mrb[0].mxu0 %v725
      %v1292 = vpop.f32.mrb[0].mxu0
      %v1293 = vadd.f32 %v1084, %v1292
      %v1294 = vpop.f32.mrb[0].mxu0
      %v1295 = vpop.f32.mrb[0].mxu0
      %v1296 = vadd.f32 %v1087, %v1295
      %v1297 = vpop.f32.mrb[0].mxu0
      %1298 = vmatprep.mubr.bf16.mxu0 0
      %1299 = vmatmul.mubr.bf16.gmra.mrb[0].mxu0 %v726
      %v1300 = vpop.f32.mrb[0].mxu0
      %v1301 = vadd.f32 %v1092, %v1300
      %v1302 = vpop.f32.mrb[0].mxu0
      %v1303 = vpop.f32.mrb[0].mxu0
      %v1304 = vadd.f32 %v1095, %v1303
      %v1305 = vpop.f32.mrb[0].mxu0
      %1306 = vmatprep.mubr.bf16.mxu0 0
      %1307 = vmatmul.mubr.bf16.gmra.mrb[0].mxu0 %v727
      %v1308 = vpop.f32.mrb[0].mxu0
      %v1309 = vadd.f32 %v1100, %v1308
      %v1310 = vpop.f32.mrb[0].mxu0
      %v1311 = vpop.f32.mrb[0].mxu0
      %v1312 = vadd.f32 %v1103, %v1311
      %v1313 = vpop.f32.mrb[0].mxu0
      %1314 = vmatprep.mubr.bf16.mxu0 0
      %1315 = vmatmul.mubr.bf16.gmra.mrb[0].mxu0 %v728
      %v1316 = vpop.f32.mrb[0].mxu0
      %v1317 = vadd.f32 %v1108, %v1316
      %v1318 = vpop.f32.mrb[0].mxu0
      %v1319 = vpop.f32.mrb[0].mxu0
      %v1320 = vadd.f32 %v1111, %v1319
      %v1321 = vpop.f32.mrb[0].mxu0
      %1322 = vmatprep.mubr.bf16.mxu0 0
      %1323 = vmatmul.mubr.bf16.gmra.mrb[0].mxu0 %v729
      %v1324 = vpop.f32.mrb[0].mxu0
      %v1325 = vadd.f32 %v1116, %v1324
      %v1326 = vpop.f32.mrb[0].mxu0
      %v1327 = vpop.f32.mrb[0].mxu0
      %v1328 = vadd.f32 %v1119, %v1327
      %v1329 = vpop.f32.mrb[0].mxu0
      %1330 = vmatprep.mubr.bf16.mxu0 0
      %1331 = vmatmul.mubr.bf16.gmra.mrb[0].mxu0 %v730
      %v1332 = vpop.f32.mrb[0].mxu0
      %v1333 = vadd.f32 %v1124, %v1332
      %v1334 = vpop.f32.mrb[0].mxu0
      %v1335 = vpop.f32.mrb[0].mxu0
      %v1336 = vadd.f32 %v1127, %v1335
      %v1337 = vpop.f32.mrb[0].mxu0
      %1338 = vmatprep.mubr.bf16.mxu0 0
      %1339 = vmatmul.mubr.bf16.gmra.mrb[0].mxu0 %v731
      %v1340 = vpop.f32.mrb[0].mxu0
      %v1341 = vadd.f32 %v1132, %v1340
      %v1342 = vpop.f32.mrb[0].mxu0
      %v1343 = vpop.f32.mrb[0].mxu0
      %v1344 = vadd.f32 %v1135, %v1343
      %v1345 = vpop.f32.mrb[0].mxu0
      %1346 = vmatprep.mubr.bf16.mxu0 0
      %1347 = vmatmul.mubr.bf16.gmra.mrb[0].mxu0 %v732
      %v1348 = vpop.f32.mrb[0].mxu0
      %v1349 = vadd.f32 %v1140, %v1348
      %v1350 = vpop.f32.mrb[0].mxu0
      %v1351 = vpop.f32.mrb[0].mxu0
      %v1352 = vadd.f32 %v1143, %v1351
      %v1353 = vpop.f32.mrb[0].mxu0
      %1354 = vmatprep.mubr.bf16.mxu0 0
      %1355 = vmatmul.mubr.bf16.gmra.mrb[0].mxu0 %v733
      %v1356 = vpop.f32.mrb[0].mxu0
      %v1357 = vadd.f32 %v1148, %v1356
      %v1358 = vpop.f32.mrb[0].mxu0
      %v1359 = vpop.f32.mrb[0].mxu0
      %v1360 = vadd.f32 %v1151, %v1359
      %v1361 = vpop.f32.mrb[0].mxu0
      %1362 = vmatprep.mubr.bf16.mxu0 0
      %1363 = vmatmul.mubr.bf16.gmra.mrb[0].mxu0 %v734
      %v1364 = vpop.f32.mrb[0].mxu0
      %v1365 = vadd.f32 %v1156, %v1364
      %v1366 = vpop.f32.mrb[0].mxu0
      %v1367 = vpop.f32.mrb[0].mxu0
      %v1368 = vadd.f32 %v1159, %v1367
      %v1369 = vpop.f32.mrb[0].mxu0
      %1370 = vmatprep.mubr.bf16.mxu0 0
      %1371 = vmatmul.mubr.bf16.gmra.mrb[0].mxu0 %v735
      %v1372 = vpop.f32.mrb[0].mxu0
      %v1373 = vadd.f32 %v1164, %v1372
      %v1374 = vpop.f32.mrb[0].mxu0
      %v1375 = vpop.f32.mrb[0].mxu0
      %v1376 = vadd.f32 %v1167, %v1375
      %v1377 = vpop.f32.mrb[0].mxu0
      %1378 = vmatprep.mubr.bf16.mxu0 0
      %1379 = vmatmul.mubr.bf16.gmra.mrb[0].mxu0 %v736
      %v1380 = vpop.f32.mrb[0].mxu0
      %v1381 = vadd.f32 %v1172, %v1380
      %v1382 = vpop.f32.mrb[0].mxu0
      %v1383 = vpop.f32.mrb[0].mxu0
      %v1384 = vadd.f32 %v1175, %v1383
      %v1385 = vpop.f32.mrb[0].mxu0
      %1386 = vmatprep.mubr.bf16.mxu0 0
      %1387 = vmatmul.mubr.bf16.gmra.mrb[0].mxu0 %v737
      %v1388 = vpop.f32.mrb[0].mxu0
      %v1389 = vadd.f32 %v1180, %v1388
      %v1390 = vpop.f32.mrb[0].mxu0
      %v1391 = vpop.f32.mrb[0].mxu0
      %v1392 = vadd.f32 %v1183, %v1391
      %v1393 = vpop.f32.mrb[0].mxu0
      %1394 = vmatprep.mubr.bf16.mxu0 0
      %1395 = vmatmul.mubr.bf16.gmra.mrb[0].mxu0 %v738
      %v1396 = vpop.f32.mrb[0].mxu0
      %v1397 = vadd.f32 %v1188, %v1396
      %v1398 = vpop.f32.mrb[0].mxu0
      %v1399 = vpop.f32.mrb[0].mxu0
      %v1400 = vadd.f32 %v1191, %v1399
      %v1401 = vpop.f32.mrb[0].mxu0
      %1402 = vmatprep.mubr.bf16.mxu0 0
      %1403 = vmatmul.mubr.bf16.gmra.mrb[0].mxu0 %v739
      %v1404 = vpop.f32.mrb[0].mxu0
      %v1405 = vadd.f32 %v1196, %v1404
      %v1406 = vpop.f32.mrb[0].mxu0
      %v1407 = vpop.f32.mrb[0].mxu0
      %v1408 = vadd.f32 %v1199, %v1407
      %v1409 = vpop.f32.mrb[0].mxu0
      %1410 = vmatprep.mubr.bf16.mxu0 0
      %1411 = vmatmul.mubr.bf16.gmra.mrb[0].mxu0 %v740
      %v1412 = vpop.f32.mrb[0].mxu0
      %v1413 = vadd.f32 %v1204, %v1412
      %v1414 = vpop.f32.mrb[0].mxu0
      %v1415 = vpop.f32.mrb[0].mxu0
      %v1416 = vadd.f32 %v1207, %v1415
      %v1417 = vpop.f32.mrb[0].mxu0
      %1418 = vdwg.mxu0
      %vm1451 = vcmask 1046528
      %v1452 = vrot.slane %v725, 1
      %v1453 = vrot.slane %v742, 1
      %v1454 = vsel %vm1451, %v1452, %v1453
      %v1455 = vrot.slane %v726, 1
      %v1456 = vrot.slane %v743, 1
      %v1457 = vsel %vm1451, %v1455, %v1456
      %v1458 = vrot.slane %v727, 1
      %v1459 = vrot.slane %v744, 1
      %v1460 = vsel %vm1451, %v1458, %v1459
      %v1461 = vrot.slane %v728, 1
      %v1462 = vrot.slane %v745, 1
      %v1463 = vsel %vm1451, %v1461, %v1462
      %v1464 = vrot.slane %v729, 1
      %v1465 = vrot.slane %v746, 1
      %v1466 = vsel %vm1451, %v1464, %v1465
      %v1467 = vrot.slane %v730, 1
      %v1468 = vrot.slane %v747, 1
      %v1469 = vsel %vm1451, %v1467, %v1468
      %v1470 = vrot.slane %v731, 1
      %v1471 = vrot.slane %v748, 1
      %v1472 = vsel %vm1451, %v1470, %v1471
      %v1473 = vrot.slane %v732, 1
      %v1474 = vrot.slane %v749, 1
      %v1475 = vsel %vm1451, %v1473, %v1474
      %v1476 = vrot.slane %v733, 1
      %v1477 = vrot.slane %v750, 1
      %v1478 = vsel %vm1451, %v1476, %v1477
      %v1479 = vrot.slane %v734, 1
      %v1480 = vrot.slane %v751, 1
      %v1481 = vsel %vm1451, %v1479, %v1480
      %v1482 = vrot.slane %v735, 1
      %v1483 = vrot.slane %v752, 1
      %v1484 = vsel %vm1451, %v1482, %v1483
      %v1485 = vrot.slane %v736, 1
      %v1486 = vrot.slane %v753, 1
      %v1487 = vsel %vm1451, %v1485, %v1486
      %v1488 = vrot.slane %v737, 1
      %v1489 = vrot.slane %v754, 1
      %v1490 = vsel %vm1451, %v1488, %v1489
      %v1491 = vrot.slane %v738, 1
      %v1492 = vrot.slane %v755, 1
      %v1493 = vsel %vm1451, %v1491, %v1492
      %v1494 = vrot.slane %v739, 1
      %v1495 = vrot.slane %v756, 1
      %v1496 = vsel %vm1451, %v1494, %v1495
      %v1497 = vrot.slane %v740, 1
      %v1498 = vrot.slane %v757, 1
      %v1499 = vsel %vm1451, %v1497, %v1498
      %s1516 = scalar_lea.vmem %s345, 128
      %v1517 = vld [vmem:[%s1516] sm:$0xf]
      %v1518 = vld [vmem:[%s1516 + $0x4] sm:$0xf]
      %v1519 = vld [vmem:[%s1516 + $0x8] sm:$0xf]
      %v1520 = vld [vmem:[%s1516 + $0xc] sm:$0xf]
      %v1521 = vld [vmem:[%s1516 + $0x10] sm:$0xf]
      %v1522 = vld [vmem:[%s1516 + $0x14] sm:$0xf]
      %v1523 = vld [vmem:[%s1516 + $0x18] sm:$0xf]
      %v1524 = vld [vmem:[%s1516 + $0x1c] sm:$0xf]
      %v1525 = vld [vmem:[%s1516 + $0x20] sm:$0xf]
      %v1526 = vld [vmem:[%s1516 + $0x24] sm:$0xf]
      %v1527 = vld [vmem:[%s1516 + $0x28] sm:$0xf]
      %v1528 = vld [vmem:[%s1516 + $0x2c] sm:$0xf]
      %v1529 = vld [vmem:[%s1516 + $0x30] sm:$0xf]
      %v1530 = vld [vmem:[%s1516 + $0x34] sm:$0xf]
      %v1531 = vld [vmem:[%s1516 + $0x38] sm:$0xf]
      %v1532 = vld [vmem:[%s1516 + $0x3c] sm:$0xf]
      %v1549 = vunpack.c.l.b16 %v1517
      %v1550 = vunpack.c.l.b16 %v1518
      %v1551 = vunpack.c.l.b16 %v1519
      %v1552 = vunpack.c.l.b16 %v1520
      %v1553 = vunpack.c.l.b16 %v1521
      %v1554 = vunpack.c.l.b16 %v1522
      %v1555 = vunpack.c.l.b16 %v1523
      %v1556 = vunpack.c.l.b16 %v1524
      %v1557 = vunpack.c.l.b16 %v1525
      %v1558 = vunpack.c.l.b16 %v1526
      %v1559 = vunpack.c.l.b16 %v1527
      %v1560 = vunpack.c.l.b16 %v1528
      %v1561 = vunpack.c.l.b16 %v1529
      %v1562 = vunpack.c.l.b16 %v1530
      %v1563 = vunpack.c.l.b16 %v1531
      %v1564 = vunpack.c.l.b16 %v1532
      %v1565 = vpack.c.b16 %v1550, %v1549
      %v1566 = vpack.c.b16 %v1552, %v1551
      %v1567 = vpack.c.b16 %v1554, %v1553
      %v1568 = vpack.c.b16 %v1556, %v1555
      %v1569 = vpack.c.b16 %v1558, %v1557
      %v1570 = vpack.c.b16 %v1560, %v1559
      %v1571 = vpack.c.b16 %v1562, %v1561
      %v1572 = vpack.c.b16 %v1564, %v1563
      %1581 = vmatprep.subr.bf16.mxu0 0
      %1582 = vmatpush1.bf16.msra.mxu0 %v1565
      %1583 = vmatprep.subr.bf16.mxu0 0
      %1584 = vmatpush1.bf16.msra.mxu0 %v1566
      %1585 = vmatprep.subr.bf16.mxu0 0
      %1586 = vmatpush1.bf16.msra.mxu0 %v1567
      %1587 = vmatprep.subr.bf16.mxu0 0
      %1588 = vmatpush1.bf16.msra.mxu0 %v1568
      %1589 = vmatprep.subr.bf16.mxu0 0
      %1590 = vmatpush1.bf16.msra.mxu0 %v1569
      %1591 = vmatprep.subr.bf16.mxu0 0
      %1592 = vmatpush1.bf16.msra.mxu0 %v1570
      %1593 = vmatprep.subr.bf16.mxu0 0
      %1594 = vmatpush1.bf16.msra.mxu0 %v1571
      %1595 = vmatprep.subr.bf16.mxu0 0
      %1596 = vmatpush1.bf16.msra.mxu0 %v1572
      %1597 = vmatprep.subr.bf16.mxu0 0
      %1598 = vmatpush1.bf16.msra.mxu0 0
      %1599 = vmatprep.subr.bf16.mxu0 0
      %1600 = vmatpush1.bf16.msra.mxu0 0
      %1601 = vmatprep.subr.bf16.mxu0 0
      %1602 = vmatpush1.bf16.msra.mxu0 0
      %1603 = vmatprep.subr.bf16.mxu0 0
      %1604 = vmatpush1.bf16.msra.mxu0 0
      %1605 = vmatprep.subr.bf16.mxu0 0
      %1606 = vmatpush1.bf16.msra.mxu0 0
      %1607 = vmatprep.subr.bf16.mxu0 0
      %1608 = vmatpush1.bf16.msra.mxu0 0
      %1609 = vmatprep.subr.bf16.mxu0 0
      %1610 = vmatpush1.bf16.msra.mxu0 0
      %1611 = vmatprep.subr.bf16.mxu0 0
      %1612 = vmatpush1.bf16.msra.mxu0 0
      %1613 = vmatprep.mubr.bf16.mxu0 0
      %1614 = vmatmul.mubr.bf16.gmra.mrb[0].mxu0 %v1454
      %v1615 = vpop.f32.mrb[0].mxu0
      %v1616 = vadd.f32 0.0, %v1615
      %v1617 = vpop.f32.mrb[0].mxu0
      %v1618 = vpop.f32.mrb[0].mxu0
      %v1619 = vadd.f32 0.0, %v1618
      %v1620 = vpop.f32.mrb[0].mxu0
      %1621 = vmatprep.mubr.bf16.mxu0 0
      %1622 = vmatmul.mubr.bf16.gmra.mrb[0].mxu0 %v1457
      %v1623 = vpop.f32.mrb[0].mxu0
      %v1624 = vadd.f32 0.0, %v1623
      %v1625 = vpop.f32.mrb[0].mxu0
      %v1626 = vpop.f32.mrb[0].mxu0
      %v1627 = vadd.f32 0.0, %v1626
      %v1628 = vpop.f32.mrb[0].mxu0
      %1629 = vmatprep.mubr.bf16.mxu0 0
      %1630 = vmatmul.mubr.bf16.gmra.mrb[0].mxu0 %v1460
      %v1631 = vpop.f32.mrb[0].mxu0
      %v1632 = vadd.f32 0.0, %v1631
      %v1633 = vpop.f32.mrb[0].mxu0
      %v1634 = vpop.f32.mrb[0].mxu0
      %v1635 = vadd.f32 0.0, %v1634
      %v1636 = vpop.f32.mrb[0].mxu0
      %1637 = vmatprep.mubr.bf16.mxu0 0
      %1638 = vmatmul.mubr.bf16.gmra.mrb[0].mxu0 %v1463
      %v1639 = vpop.f32.mrb[0].mxu0
      %v1640 = vadd.f32 0.0, %v1639
      %v1641 = vpop.f32.mrb[0].mxu0
      %v1642 = vpop.f32.mrb[0].mxu0
      %v1643 = vadd.f32 0.0, %v1642
      %v1644 = vpop.f32.mrb[0].mxu0
      %1645 = vmatprep.mubr.bf16.mxu0 0
      %1646 = vmatmul.mubr.bf16.gmra.mrb[0].mxu0 %v1466
      %v1647 = vpop.f32.mrb[0].mxu0
      %v1648 = vadd.f32 0.0, %v1647
      %v1649 = vpop.f32.mrb[0].mxu0
      %v1650 = vpop.f32.mrb[0].mxu0
      %v1651 = vadd.f32 0.0, %v1650
      %v1652 = vpop.f32.mrb[0].mxu0
      %1653 = vmatprep.mubr.bf16.mxu0 0
      %1654 = vmatmul.mubr.bf16.gmra.mrb[0].mxu0 %v1469
      %v1655 = vpop.f32.mrb[0].mxu0
      %v1656 = vadd.f32 0.0, %v1655
      %v1657 = vpop.f32.mrb[0].mxu0
      %v1658 = vpop.f32.mrb[0].mxu0
      %v1659 = vadd.f32 0.0, %v1658
      %v1660 = vpop.f32.mrb[0].mxu0
      %1661 = vmatprep.mubr.bf16.mxu0 0
      %1662 = vmatmul.mubr.bf16.gmra.mrb[0].mxu0 %v1472
      %v1663 = vpop.f32.mrb[0].mxu0
      %v1664 = vadd.f32 0.0, %v1663
      %v1665 = vpop.f32.mrb[0].mxu0
      %v1666 = vpop.f32.mrb[0].mxu0
      %v1667 = vadd.f32 0.0, %v1666
      %v1668 = vpop.f32.mrb[0].mxu0
      %1669 = vmatprep.mubr.bf16.mxu0 0
      %1670 = vmatmul.mubr.bf16.gmra.mrb[0].mxu0 %v1475
      %v1671 = vpop.f32.mrb[0].mxu0
      %v1672 = vadd.f32 0.0, %v1671
      %v1673 = vpop.f32.mrb[0].mxu0
      %v1674 = vpop.f32.mrb[0].mxu0
      %v1675 = vadd.f32 0.0, %v1674
      %v1676 = vpop.f32.mrb[0].mxu0
      %1677 = vmatprep.mubr.bf16.mxu0 0
      %1678 = vmatmul.mubr.bf16.gmra.mrb[0].mxu0 %v1478
      %v1679 = vpop.f32.mrb[0].mxu0
      %v1680 = vadd.f32 0.0, %v1679
      %v1681 = vpop.f32.mrb[0].mxu0
      %v1682 = vpop.f32.mrb[0].mxu0
      %v1683 = vadd.f32 0.0, %v1682
      %v1684 = vpop.f32.mrb[0].mxu0
      %1685 = vmatprep.mubr.bf16.mxu0 0
      %1686 = vmatmul.mubr.bf16.gmra.mrb[0].mxu0 %v1481
      %v1687 = vpop.f32.mrb[0].mxu0
      %v1688 = vadd.f32 0.0, %v1687
      %v1689 = vpop.f32.mrb[0].mxu0
      %v1690 = vpop.f32.mrb[0].mxu0
      %v1691 = vadd.f32 0.0, %v1690
      %v1692 = vpop.f32.mrb[0].mxu0
      %1693 = vmatprep.mubr.bf16.mxu0 0
      %1694 = vmatmul.mubr.bf16.gmra.mrb[0].mxu0 %v1484
      %v1695 = vpop.f32.mrb[0].mxu0
      %v1696 = vadd.f32 0.0, %v1695
      %v1697 = vpop.f32.mrb[0].mxu0
      %v1698 = vpop.f32.mrb[0].mxu0
      %v1699 = vadd.f32 0.0, %v1698
      %v1700 = vpop.f32.mrb[0].mxu0
      %1701 = vmatprep.mubr.bf16.mxu0 0
      %1702 = vmatmul.mubr.bf16.gmra.mrb[0].mxu0 %v1487
      %v1703 = vpop.f32.mrb[0].mxu0
      %v1704 = vadd.f32 0.0, %v1703
      %v1705 = vpop.f32.mrb[0].mxu0
      %v1706 = vpop.f32.mrb[0].mxu0
      %v1707 = vadd.f32 0.0, %v1706
      %v1708 = vpop.f32.mrb[0].mxu0
      %1709 = vmatprep.mubr.bf16.mxu0 0
      %1710 = vmatmul.mubr.bf16.gmra.mrb[0].mxu0 %v1490
      %v1711 = vpop.f32.mrb[0].mxu0
      %v1712 = vadd.f32 0.0, %v1711
      %v1713 = vpop.f32.mrb[0].mxu0
      %v1714 = vpop.f32.mrb[0].mxu0
      %v1715 = vadd.f32 0.0, %v1714
      %v1716 = vpop.f32.mrb[0].mxu0
      %1717 = vmatprep.mubr.bf16.mxu0 0
      %1718 = vmatmul.mubr.bf16.gmra.mrb[0].mxu0 %v1493
      %v1719 = vpop.f32.mrb[0].mxu0
      %v1720 = vadd.f32 0.0, %v1719
      %v1721 = vpop.f32.mrb[0].mxu0
      %v1722 = vpop.f32.mrb[0].mxu0
      %v1723 = vadd.f32 0.0, %v1722
      %v1724 = vpop.f32.mrb[0].mxu0
      %1725 = vmatprep.mubr.bf16.mxu0 0
      %1726 = vmatmul.mubr.bf16.gmra.mrb[0].mxu0 %v1496
      %v1727 = vpop.f32.mrb[0].mxu0
      %v1728 = vadd.f32 0.0, %v1727
      %v1729 = vpop.f32.mrb[0].mxu0
      %v1730 = vpop.f32.mrb[0].mxu0
      %v1731 = vadd.f32 0.0, %v1730
      %v1732 = vpop.f32.mrb[0].mxu0
      %1733 = vmatprep.mubr.bf16.mxu0 0
      %1734 = vmatmul.mubr.bf16.gmra.mrb[0].mxu0 %v1499
      %v1735 = vpop.f32.mrb[0].mxu0
      %v1736 = vadd.f32 0.0, %v1735
      %v1737 = vpop.f32.mrb[0].mxu0
      %v1738 = vpop.f32.mrb[0].mxu0
      %v1739 = vadd.f32 0.0, %v1738
      %v1740 = vpop.f32.mrb[0].mxu0
      %1741 = vdwg.mxu0
      %v1742 = vadd.f32 %v1293, %v1616
      %v1743 = vadd.f32 %v1296, %v1619
      %v1744 = vadd.f32 %v1301, %v1624
      %v1745 = vadd.f32 %v1304, %v1627
      %v1746 = vadd.f32 %v1309, %v1632
      %v1747 = vadd.f32 %v1312, %v1635
      %v1748 = vadd.f32 %v1317, %v1640
      %v1749 = vadd.f32 %v1320, %v1643
      %v1750 = vadd.f32 %v1325, %v1648
      %v1751 = vadd.f32 %v1328, %v1651
      %v1752 = vadd.f32 %v1333, %v1656
      %v1753 = vadd.f32 %v1336, %v1659
      %v1754 = vadd.f32 %v1341, %v1664
      %v1755 = vadd.f32 %v1344, %v1667
      %v1756 = vadd.f32 %v1349, %v1672
      %v1757 = vadd.f32 %v1352, %v1675
      %v1758 = vadd.f32 %v1357, %v1680
      %v1759 = vadd.f32 %v1360, %v1683
      %v1760 = vadd.f32 %v1365, %v1688
      %v1761 = vadd.f32 %v1368, %v1691
      %v1762 = vadd.f32 %v1373, %v1696
      %v1763 = vadd.f32 %v1376, %v1699
      %v1764 = vadd.f32 %v1381, %v1704
      %v1765 = vadd.f32 %v1384, %v1707
      %v1766 = vadd.f32 %v1389, %v1712
      %v1767 = vadd.f32 %v1392, %v1715
      %v1768 = vadd.f32 %v1397, %v1720
      %v1769 = vadd.f32 %v1400, %v1723
      %v1770 = vadd.f32 %v1405, %v1728
      %v1771 = vadd.f32 %v1408, %v1731
      %v1772 = vadd.f32 %v1413, %v1736
      %v1773 = vadd.f32 %v1416, %v1739
      %s1774 = scalar_lea.vmem %s345, 192
      %v1775 = vld [vmem:[%s1774] sm:$0xf]
      %v1776 = vld [vmem:[%s1774 + $0x4] sm:$0xf]
      %v1777 = vld [vmem:[%s1774 + $0x8] sm:$0xf]
      %v1778 = vld [vmem:[%s1774 + $0xc] sm:$0xf]
      %v1779 = vld [vmem:[%s1774 + $0x10] sm:$0xf]
      %v1780 = vld [vmem:[%s1774 + $0x14] sm:$0xf]
      %v1781 = vld [vmem:[%s1774 + $0x18] sm:$0xf]
      %v1782 = vld [vmem:[%s1774 + $0x1c] sm:$0xf]
      %v1783 = vld [vmem:[%s1774 + $0x20] sm:$0xf]
      %v1784 = vld [vmem:[%s1774 + $0x24] sm:$0xf]
      %v1785 = vld [vmem:[%s1774 + $0x28] sm:$0xf]
      %v1786 = vld [vmem:[%s1774 + $0x2c] sm:$0xf]
      %v1787 = vld [vmem:[%s1774 + $0x30] sm:$0xf]
      %v1788 = vld [vmem:[%s1774 + $0x34] sm:$0xf]
      %v1789 = vld [vmem:[%s1774 + $0x38] sm:$0xf]
      %v1790 = vld [vmem:[%s1774 + $0x3c] sm:$0xf]
      %v1807 = vunpack.c.l.b16 %v1775
      %v1808 = vunpack.c.l.b16 %v1776
      %v1809 = vunpack.c.l.b16 %v1777
      %v1810 = vunpack.c.l.b16 %v1778
      %v1811 = vunpack.c.l.b16 %v1779
      %v1812 = vunpack.c.l.b16 %v1780
      %v1813 = vunpack.c.l.b16 %v1781
      %v1814 = vunpack.c.l.b16 %v1782
      %v1815 = vunpack.c.l.b16 %v1783
      %v1816 = vunpack.c.l.b16 %v1784
      %v1817 = vunpack.c.l.b16 %v1785
      %v1818 = vunpack.c.l.b16 %v1786
      %v1819 = vunpack.c.l.b16 %v1787
      %v1820 = vunpack.c.l.b16 %v1788
      %v1821 = vunpack.c.l.b16 %v1789
      %v1822 = vunpack.c.l.b16 %v1790
      %v1823 = vpack.c.b16 %v1808, %v1807
      %v1824 = vpack.c.b16 %v1810, %v1809
      %v1825 = vpack.c.b16 %v1812, %v1811
      %v1826 = vpack.c.b16 %v1814, %v1813
      %v1827 = vpack.c.b16 %v1816, %v1815
      %v1828 = vpack.c.b16 %v1818, %v1817
      %v1829 = vpack.c.b16 %v1820, %v1819
      %v1830 = vpack.c.b16 %v1822, %v1821
      %1839 = vmatprep.subr.bf16.mxu0 0
      %1840 = vmatpush1.bf16.msra.mxu0 %v1823
      %1841 = vmatprep.subr.bf16.mxu0 0
      %1842 = vmatpush1.bf16.msra.mxu0 %v1824
      %1843 = vmatprep.subr.bf16.mxu0 0
      %1844 = vmatpush1.bf16.msra.mxu0 %v1825
      %1845 = vmatprep.subr.bf16.mxu0 0
      %1846 = vmatpush1.bf16.msra.mxu0 %v1826
      %1847 = vmatprep.subr.bf16.mxu0 0
      %1848 = vmatpush1.bf16.msra.mxu0 %v1827
      %1849 = vmatprep.subr.bf16.mxu0 0
      %1850 = vmatpush1.bf16.msra.mxu0 %v1828
      %1851 = vmatprep.subr.bf16.mxu0 0
      %1852 = vmatpush1.bf16.msra.mxu0 %v1829
      %1853 = vmatprep.subr.bf16.mxu0 0
      %1854 = vmatpush1.bf16.msra.mxu0 %v1830
      %1855 = vmatprep.subr.bf16.mxu0 0
      %1856 = vmatpush1.bf16.msra.mxu0 0
      %1857 = vmatprep.subr.bf16.mxu0 0
      %1858 = vmatpush1.bf16.msra.mxu0 0
      %1859 = vmatprep.subr.bf16.mxu0 0
      %1860 = vmatpush1.bf16.msra.mxu0 0
      %1861 = vmatprep.subr.bf16.mxu0 0
      %1862 = vmatpush1.bf16.msra.mxu0 0
      %1863 = vmatprep.subr.bf16.mxu0 0
      %1864 = vmatpush1.bf16.msra.mxu0 0
      %1865 = vmatprep.subr.bf16.mxu0 0
      %1866 = vmatpush1.bf16.msra.mxu0 0
      %1867 = vmatprep.subr.bf16.mxu0 0
      %1868 = vmatpush1.bf16.msra.mxu0 0
      %1869 = vmatprep.subr.bf16.mxu0 0
      %1870 = vmatpush1.bf16.msra.mxu0 0
      %1871 = vmatprep.mubr.bf16.mxu0 0
      %1872 = vmatmul.mubr.bf16.gmra.mrb[0].mxu0 %v726
      %v1873 = vpop.f32.mrb[0].mxu0
      %v1874 = vadd.f32 0.0, %v1873
      %v1875 = vpop.f32.mrb[0].mxu0
      %v1876 = vpop.f32.mrb[0].mxu0
      %v1877 = vadd.f32 0.0, %v1876
      %v1878 = vpop.f32.mrb[0].mxu0
      %1879 = vmatprep.mubr.bf16.mxu0 0
      %1880 = vmatmul.mubr.bf16.gmra.mrb[0].mxu0 %v727
      %v1881 = vpop.f32.mrb[0].mxu0
      %v1882 = vadd.f32 0.0, %v1881
      %v1883 = vpop.f32.mrb[0].mxu0
      %v1884 = vpop.f32.mrb[0].mxu0
      %v1885 = vadd.f32 0.0, %v1884
      %v1886 = vpop.f32.mrb[0].mxu0
      %1887 = vmatprep.mubr.bf16.mxu0 0
      %1888 = vmatmul.mubr.bf16.gmra.mrb[0].mxu0 %v728
      %v1889 = vpop.f32.mrb[0].mxu0
      %v1890 = vadd.f32 0.0, %v1889
      %v1891 = vpop.f32.mrb[0].mxu0
      %v1892 = vpop.f32.mrb[0].mxu0
      %v1893 = vadd.f32 0.0, %v1892
      %v1894 = vpop.f32.mrb[0].mxu0
      %1895 = vmatprep.mubr.bf16.mxu0 0
      %1896 = vmatmul.mubr.bf16.gmra.mrb[0].mxu0 %v729
      %v1897 = vpop.f32.mrb[0].mxu0
      %v1898 = vadd.f32 0.0, %v1897
      %v1899 = vpop.f32.mrb[0].mxu0
      %v1900 = vpop.f32.mrb[0].mxu0
      %v1901 = vadd.f32 0.0, %v1900
      %v1902 = vpop.f32.mrb[0].mxu0
      %1903 = vmatprep.mubr.bf16.mxu0 0
      %1904 = vmatmul.mubr.bf16.gmra.mrb[0].mxu0 %v730
      %v1905 = vpop.f32.mrb[0].mxu0
      %v1906 = vadd.f32 0.0, %v1905
      %v1907 = vpop.f32.mrb[0].mxu0
      %v1908 = vpop.f32.mrb[0].mxu0
      %v1909 = vadd.f32 0.0, %v1908
      %v1910 = vpop.f32.mrb[0].mxu0
      %1911 = vmatprep.mubr.bf16.mxu0 0
      %1912 = vmatmul.mubr.bf16.gmra.mrb[0].mxu0 %v731
      %v1913 = vpop.f32.mrb[0].mxu0
      %v1914 = vadd.f32 0.0, %v1913
      %v1915 = vpop.f32.mrb[0].mxu0
      %v1916 = vpop.f32.mrb[0].mxu0
      %v1917 = vadd.f32 0.0, %v1916
      %v1918 = vpop.f32.mrb[0].mxu0
      %1919 = vmatprep.mubr.bf16.mxu0 0
      %1920 = vmatmul.mubr.bf16.gmra.mrb[0].mxu0 %v732
      %v1921 = vpop.f32.mrb[0].mxu0
      %v1922 = vadd.f32 0.0, %v1921
      %v1923 = vpop.f32.mrb[0].mxu0
      %v1924 = vpop.f32.mrb[0].mxu0
      %v1925 = vadd.f32 0.0, %v1924
      %v1926 = vpop.f32.mrb[0].mxu0
      %1927 = vmatprep.mubr.bf16.mxu0 0
      %1928 = vmatmul.mubr.bf16.gmra.mrb[0].mxu0 %v733
      %v1929 = vpop.f32.mrb[0].mxu0
      %v1930 = vadd.f32 0.0, %v1929
      %v1931 = vpop.f32.mrb[0].mxu0
      %v1932 = vpop.f32.mrb[0].mxu0
      %v1933 = vadd.f32 0.0, %v1932
      %v1934 = vpop.f32.mrb[0].mxu0
      %1935 = vmatprep.mubr.bf16.mxu0 0
      %1936 = vmatmul.mubr.bf16.gmra.mrb[0].mxu0 %v734
      %v1937 = vpop.f32.mrb[0].mxu0
      %v1938 = vadd.f32 0.0, %v1937
      %v1939 = vpop.f32.mrb[0].mxu0
      %v1940 = vpop.f32.mrb[0].mxu0
      %v1941 = vadd.f32 0.0, %v1940
      %v1942 = vpop.f32.mrb[0].mxu0
      %1943 = vmatprep.mubr.bf16.mxu0 0
      %1944 = vmatmul.mubr.bf16.gmra.mrb[0].mxu0 %v735
      %v1945 = vpop.f32.mrb[0].mxu0
      %v1946 = vadd.f32 0.0, %v1945
      %v1947 = vpop.f32.mrb[0].mxu0
      %v1948 = vpop.f32.mrb[0].mxu0
      %v1949 = vadd.f32 0.0, %v1948
      %v1950 = vpop.f32.mrb[0].mxu0
      %1951 = vmatprep.mubr.bf16.mxu0 0
      %1952 = vmatmul.mubr.bf16.gmra.mrb[0].mxu0 %v736
      %v1953 = vpop.f32.mrb[0].mxu0
      %v1954 = vadd.f32 0.0, %v1953
      %v1955 = vpop.f32.mrb[0].mxu0
      %v1956 = vpop.f32.mrb[0].mxu0
      %v1957 = vadd.f32 0.0, %v1956
      %v1958 = vpop.f32.mrb[0].mxu0
      %1959 = vmatprep.mubr.bf16.mxu0 0
      %1960 = vmatmul.mubr.bf16.gmra.mrb[0].mxu0 %v737
      %v1961 = vpop.f32.mrb[0].mxu0
      %v1962 = vadd.f32 0.0, %v1961
      %v1963 = vpop.f32.mrb[0].mxu0
      %v1964 = vpop.f32.mrb[0].mxu0
      %v1965 = vadd.f32 0.0, %v1964
      %v1966 = vpop.f32.mrb[0].mxu0
      %1967 = vmatprep.mubr.bf16.mxu0 0
      %1968 = vmatmul.mubr.bf16.gmra.mrb[0].mxu0 %v738
      %v1969 = vpop.f32.mrb[0].mxu0
      %v1970 = vadd.f32 0.0, %v1969
      %v1971 = vpop.f32.mrb[0].mxu0
      %v1972 = vpop.f32.mrb[0].mxu0
      %v1973 = vadd.f32 0.0, %v1972
      %v1974 = vpop.f32.mrb[0].mxu0
      %1975 = vmatprep.mubr.bf16.mxu0 0
      %1976 = vmatmul.mubr.bf16.gmra.mrb[0].mxu0 %v739
      %v1977 = vpop.f32.mrb[0].mxu0
      %v1978 = vadd.f32 0.0, %v1977
      %v1979 = vpop.f32.mrb[0].mxu0
      %v1980 = vpop.f32.mrb[0].mxu0
      %v1981 = vadd.f32 0.0, %v1980
      %v1982 = vpop.f32.mrb[0].mxu0
      %1983 = vmatprep.mubr.bf16.mxu0 0
      %1984 = vmatmul.mubr.bf16.gmra.mrb[0].mxu0 %v740
      %v1985 = vpop.f32.mrb[0].mxu0
      %v1986 = vadd.f32 0.0, %v1985
      %v1987 = vpop.f32.mrb[0].mxu0
      %v1988 = vpop.f32.mrb[0].mxu0
      %v1989 = vadd.f32 0.0, %v1988
      %v1990 = vpop.f32.mrb[0].mxu0
      %1991 = vmatprep.mubr.bf16.mxu0 0
      %1992 = vmatmul.mubr.bf16.gmra.mrb[0].mxu0 %v741
      %v1993 = vpop.f32.mrb[0].mxu0
      %v1994 = vadd.f32 0.0, %v1993
      %v1995 = vpop.f32.mrb[0].mxu0
      %v1996 = vpop.f32.mrb[0].mxu0
      %v1997 = vadd.f32 0.0, %v1996
      %v1998 = vpop.f32.mrb[0].mxu0
      %1999 = vdwg.mxu0
      %v2000 = vadd.f32 %v1742, %v1874
      %v2001 = vadd.f32 %v1743, %v1877
      %v2002 = vadd.f32 %v1744, %v1882
      %v2003 = vadd.f32 %v1745, %v1885
      %v2004 = vadd.f32 %v1746, %v1890
      %v2005 = vadd.f32 %v1747, %v1893
      %v2006 = vadd.f32 %v1748, %v1898
      %v2007 = vadd.f32 %v1749, %v1901
      %v2008 = vadd.f32 %v1750, %v1906
      %v2009 = vadd.f32 %v1751, %v1909
      %v2010 = vadd.f32 %v1752, %v1914
      %v2011 = vadd.f32 %v1753, %v1917
      %v2012 = vadd.f32 %v1754, %v1922
      %v2013 = vadd.f32 %v1755, %v1925
      %v2014 = vadd.f32 %v1756, %v1930
      %v2015 = vadd.f32 %v1757, %v1933
      %v2016 = vadd.f32 %v1758, %v1938
      %v2017 = vadd.f32 %v1759, %v1941
      %v2018 = vadd.f32 %v1760, %v1946
      %v2019 = vadd.f32 %v1761, %v1949
      %v2020 = vadd.f32 %v1762, %v1954
      %v2021 = vadd.f32 %v1763, %v1957
      %v2022 = vadd.f32 %v1764, %v1962
      %v2023 = vadd.f32 %v1765, %v1965
      %v2024 = vadd.f32 %v1766, %v1970
      %v2025 = vadd.f32 %v1767, %v1973
      %v2026 = vadd.f32 %v1768, %v1978
      %v2027 = vadd.f32 %v1769, %v1981
      %v2028 = vadd.f32 %v1770, %v1986
      %v2029 = vadd.f32 %v1771, %v1989
      %v2030 = vadd.f32 %v1772, %v1994
      %v2031 = vadd.f32 %v1773, %v1997
      %v2033 = vshrl.u32 %v741, 16
      %v2035 = vshll.u32 %v741, 16
      %v2037 = vrot.slane %v2035, 1
      %v2038 = vor.u32 %v2033, %v2037
      %v2040 = vshll.u32 %v758, 16
      %v2042 = vrot.slane %v2040, 1
      %v2043 = vsel %vm775, %v2038, %v2042
      %s2045 = scalar_lea.vmem %s345, 256
      %v2046 = vld [vmem:[%s2045] sm:$0xf]
      %v2047 = vld [vmem:[%s2045 + $0x4] sm:$0xf]
      %v2048 = vld [vmem:[%s2045 + $0x8] sm:$0xf]
      %v2049 = vld [vmem:[%s2045 + $0xc] sm:$0xf]
      %v2050 = vld [vmem:[%s2045 + $0x10] sm:$0xf]
      %v2051 = vld [vmem:[%s2045 + $0x14] sm:$0xf]
      %v2052 = vld [vmem:[%s2045 + $0x18] sm:$0xf]
      %v2053 = vld [vmem:[%s2045 + $0x1c] sm:$0xf]
      %v2054 = vld [vmem:[%s2045 + $0x20] sm:$0xf]
      %v2055 = vld [vmem:[%s2045 + $0x24] sm:$0xf]
      %v2056 = vld [vmem:[%s2045 + $0x28] sm:$0xf]
      %v2057 = vld [vmem:[%s2045 + $0x2c] sm:$0xf]
      %v2058 = vld [vmem:[%s2045 + $0x30] sm:$0xf]
      %v2059 = vld [vmem:[%s2045 + $0x34] sm:$0xf]
      %v2060 = vld [vmem:[%s2045 + $0x38] sm:$0xf]
      %v2061 = vld [vmem:[%s2045 + $0x3c] sm:$0xf]
      %v2078 = vunpack.c.l.b16 %v2046
      %v2079 = vunpack.c.l.b16 %v2047
      %v2080 = vunpack.c.l.b16 %v2048
      %v2081 = vunpack.c.l.b16 %v2049
      %v2082 = vunpack.c.l.b16 %v2050
      %v2083 = vunpack.c.l.b16 %v2051
      %v2084 = vunpack.c.l.b16 %v2052
      %v2085 = vunpack.c.l.b16 %v2053
      %v2086 = vunpack.c.l.b16 %v2054
      %v2087 = vunpack.c.l.b16 %v2055
      %v2088 = vunpack.c.l.b16 %v2056
      %v2089 = vunpack.c.l.b16 %v2057
      %v2090 = vunpack.c.l.b16 %v2058
      %v2091 = vunpack.c.l.b16 %v2059
      %v2092 = vunpack.c.l.b16 %v2060
      %v2093 = vunpack.c.l.b16 %v2061
      %v2094 = vpack.c.b16 %v2079, %v2078
      %v2095 = vpack.c.b16 %v2081, %v2080
      %v2096 = vpack.c.b16 %v2083, %v2082
      %v2097 = vpack.c.b16 %v2085, %v2084
      %v2098 = vpack.c.b16 %v2087, %v2086
      %v2099 = vpack.c.b16 %v2089, %v2088
      %v2100 = vpack.c.b16 %v2091, %v2090
      %v2101 = vpack.c.b16 %v2093, %v2092
      %2110 = vmatprep.subr.bf16.mxu0 0
      %2111 = vmatpush1.bf16.msra.mxu0 %v2094
      %2112 = vmatprep.subr.bf16.mxu0 0
      %2113 = vmatpush1.bf16.msra.mxu0 %v2095
      %2114 = vmatprep.subr.bf16.mxu0 0
      %2115 = vmatpush1.bf16.msra.mxu0 %v2096
      %2116 = vmatprep.subr.bf16.mxu0 0
      %2117 = vmatpush1.bf16.msra.mxu0 %v2097
      %2118 = vmatprep.subr.bf16.mxu0 0
      %2119 = vmatpush1.bf16.msra.mxu0 %v2098
      %2120 = vmatprep.subr.bf16.mxu0 0
      %2121 = vmatpush1.bf16.msra.mxu0 %v2099
      %2122 = vmatprep.subr.bf16.mxu0 0
      %2123 = vmatpush1.bf16.msra.mxu0 %v2100
      %2124 = vmatprep.subr.bf16.mxu0 0
      %2125 = vmatpush1.bf16.msra.mxu0 %v2101
      %2126 = vmatprep.subr.bf16.mxu0 0
      %2127 = vmatpush1.bf16.msra.mxu0 0
      %2128 = vmatprep.subr.bf16.mxu0 0
      %2129 = vmatpush1.bf16.msra.mxu0 0
      %2130 = vmatprep.subr.bf16.mxu0 0
      %2131 = vmatpush1.bf16.msra.mxu0 0
      %2132 = vmatprep.subr.bf16.mxu0 0
      %2133 = vmatpush1.bf16.msra.mxu0 0
      %2134 = vmatprep.subr.bf16.mxu0 0
      %2135 = vmatpush1.bf16.msra.mxu0 0
      %2136 = vmatprep.subr.bf16.mxu0 0
      %2137 = vmatpush1.bf16.msra.mxu0 0
      %2138 = vmatprep.subr.bf16.mxu0 0
      %2139 = vmatpush1.bf16.msra.mxu0 0
      %2140 = vmatprep.subr.bf16.mxu0 0
      %2141 = vmatpush1.bf16.msra.mxu0 0
      %2142 = vmatprep.mubr.bf16.mxu0 0
      %2143 = vmatmul.mubr.bf16.gmra.mrb[0].mxu0 %v799
      %v2144 = vpop.f32.mrb[0].mxu0
      %v2145 = vadd.f32 0.0, %v2144
      %v2146 = vpop.f32.mrb[0].mxu0
      %v2147 = vpop.f32.mrb[0].mxu0
      %v2148 = vadd.f32 0.0, %v2147
      %v2149 = vpop.f32.mrb[0].mxu0
      %2150 = vmatprep.mubr.bf16.mxu0 0
      %2151 = vmatmul.mubr.bf16.gmra.mrb[0].mxu0 %v811
      %v2152 = vpop.f32.mrb[0].mxu0
      %v2153 = vadd.f32 0.0, %v2152
      %v2154 = vpop.f32.mrb[0].mxu0
      %v2155 = vpop.f32.mrb[0].mxu0
      %v2156 = vadd.f32 0.0, %v2155
      %v2157 = vpop.f32.mrb[0].mxu0
      %2158 = vmatprep.mubr.bf16.mxu0 0
      %2159 = vmatmul.mubr.bf16.gmra.mrb[0].mxu0 %v823
      %v2160 = vpop.f32.mrb[0].mxu0
      %v2161 = vadd.f32 0.0, %v2160
      %v2162 = vpop.f32.mrb[0].mxu0
      %v2163 = vpop.f32.mrb[0].mxu0
      %v2164 = vadd.f32 0.0, %v2163
      %v2165 = vpop.f32.mrb[0].mxu0
      %2166 = vmatprep.mubr.bf16.mxu0 0
      %2167 = vmatmul.mubr.bf16.gmra.mrb[0].mxu0 %v835
      %v2168 = vpop.f32.mrb[0].mxu0
      %v2169 = vadd.f32 0.0, %v2168
      %v2170 = vpop.f32.mrb[0].mxu0
      %v2171 = vpop.f32.mrb[0].mxu0
      %v2172 = vadd.f32 0.0, %v2171
      %v2173 = vpop.f32.mrb[0].mxu0
      %2174 = vmatprep.mubr.bf16.mxu0 0
      %2175 = vmatmul.mubr.bf16.gmra.mrb[0].mxu0 %v847
      %v2176 = vpop.f32.mrb[0].mxu0
      %v2177 = vadd.f32 0.0, %v2176
      %v2178 = vpop.f32.mrb[0].mxu0
      %v2179 = vpop.f32.mrb[0].mxu0
      %v2180 = vadd.f32 0.0, %v2179
      %v2181 = vpop.f32.mrb[0].mxu0
      %2182 = vmatprep.mubr.bf16.mxu0 0
      %2183 = vmatmul.mubr.bf16.gmra.mrb[0].mxu0 %v859
      %v2184 = vpop.f32.mrb[0].mxu0
      %v2185 = vadd.f32 0.0, %v2184
      %v2186 = vpop.f32.mrb[0].mxu0
      %v2187 = vpop.f32.mrb[0].mxu0
      %v2188 = vadd.f32 0.0, %v2187
      %v2189 = vpop.f32.mrb[0].mxu0
      %2190 = vmatprep.mubr.bf16.mxu0 0
      %2191 = vmatmul.mubr.bf16.gmra.mrb[0].mxu0 %v871
      %v2192 = vpop.f32.mrb[0].mxu0
      %v2193 = vadd.f32 0.0, %v2192
      %v2194 = vpop.f32.mrb[0].mxu0
      %v2195 = vpop.f32.mrb[0].mxu0
      %v2196 = vadd.f32 0.0, %v2195
      %v2197 = vpop.f32.mrb[0].mxu0
      %2198 = vmatprep.mubr.bf16.mxu0 0
      %2199 = vmatmul.mubr.bf16.gmra.mrb[0].mxu0 %v883
      %v2200 = vpop.f32.mrb[0].mxu0
      %v2201 = vadd.f32 0.0, %v2200
      %v2202 = vpop.f32.mrb[0].mxu0
      %v2203 = vpop.f32.mrb[0].mxu0
      %v2204 = vadd.f32 0.0, %v2203
      %v2205 = vpop.f32.mrb[0].mxu0
      %2206 = vmatprep.mubr.bf16.mxu0 0
      %2207 = vmatmul.mubr.bf16.gmra.mrb[0].mxu0 %v895
      %v2208 = vpop.f32.mrb[0].mxu0
      %v2209 = vadd.f32 0.0, %v2208
      %v2210 = vpop.f32.mrb[0].mxu0
      %v2211 = vpop.f32.mrb[0].mxu0
      %v2212 = vadd.f32 0.0, %v2211
      %v2213 = vpop.f32.mrb[0].mxu0
      %2214 = vmatprep.mubr.bf16.mxu0 0
      %2215 = vmatmul.mubr.bf16.gmra.mrb[0].mxu0 %v907
      %v2216 = vpop.f32.mrb[0].mxu0
      %v2217 = vadd.f32 0.0, %v2216
      %v2218 = vpop.f32.mrb[0].mxu0
      %v2219 = vpop.f32.mrb[0].mxu0
      %v2220 = vadd.f32 0.0, %v2219
      %v2221 = vpop.f32.mrb[0].mxu0
      %2222 = vmatprep.mubr.bf16.mxu0 0
      %2223 = vmatmul.mubr.bf16.gmra.mrb[0].mxu0 %v919
      %v2224 = vpop.f32.mrb[0].mxu0
      %v2225 = vadd.f32 0.0, %v2224
      %v2226 = vpop.f32.mrb[0].mxu0
      %v2227 = vpop.f32.mrb[0].mxu0
      %v2228 = vadd.f32 0.0, %v2227
      %v2229 = vpop.f32.mrb[0].mxu0
      %2230 = vmatprep.mubr.bf16.mxu0 0
      %2231 = vmatmul.mubr.bf16.gmra.mrb[0].mxu0 %v931
      %v2232 = vpop.f32.mrb[0].mxu0
      %v2233 = vadd.f32 0.0, %v2232
      %v2234 = vpop.f32.mrb[0].mxu0
      %v2235 = vpop.f32.mrb[0].mxu0
      %v2236 = vadd.f32 0.0, %v2235
      %v2237 = vpop.f32.mrb[0].mxu0
      %2238 = vmatprep.mubr.bf16.mxu0 0
      %2239 = vmatmul.mubr.bf16.gmra.mrb[0].mxu0 %v943
      %v2240 = vpop.f32.mrb[0].mxu0
      %v2241 = vadd.f32 0.0, %v2240
      %v2242 = vpop.f32.mrb[0].mxu0
      %v2243 = vpop.f32.mrb[0].mxu0
      %v2244 = vadd.f32 0.0, %v2243
      %v2245 = vpop.f32.mrb[0].mxu0
      %2246 = vmatprep.mubr.bf16.mxu0 0
      %2247 = vmatmul.mubr.bf16.gmra.mrb[0].mxu0 %v955
      %v2248 = vpop.f32.mrb[0].mxu0
      %v2249 = vadd.f32 0.0, %v2248
      %v2250 = vpop.f32.mrb[0].mxu0
      %v2251 = vpop.f32.mrb[0].mxu0
      %v2252 = vadd.f32 0.0, %v2251
      %v2253 = vpop.f32.mrb[0].mxu0
      %2254 = vmatprep.mubr.bf16.mxu0 0
      %2255 = vmatmul.mubr.bf16.gmra.mrb[0].mxu0 %v967
      %v2256 = vpop.f32.mrb[0].mxu0
      %v2257 = vadd.f32 0.0, %v2256
      %v2258 = vpop.f32.mrb[0].mxu0
      %v2259 = vpop.f32.mrb[0].mxu0
      %v2260 = vadd.f32 0.0, %v2259
      %v2261 = vpop.f32.mrb[0].mxu0
      %2262 = vmatprep.mubr.bf16.mxu0 0
      %2263 = vmatmul.mubr.bf16.gmra.mrb[0].mxu0 %v2043
      %v2264 = vpop.f32.mrb[0].mxu0
      %v2265 = vadd.f32 0.0, %v2264
      %v2266 = vpop.f32.mrb[0].mxu0
      %v2267 = vpop.f32.mrb[0].mxu0
      %v2268 = vadd.f32 0.0, %v2267
      %v2269 = vpop.f32.mrb[0].mxu0
      %2270 = vdwg.mxu0
      %v2271 = vadd.f32 %v2000, %v2145
      %v2272 = vadd.f32 %v2001, %v2148
      %v2273 = vadd.f32 %v2002, %v2153
      %v2274 = vadd.f32 %v2003, %v2156
      %v2275 = vadd.f32 %v2004, %v2161
      %v2276 = vadd.f32 %v2005, %v2164
      %v2277 = vadd.f32 %v2006, %v2169
      %v2278 = vadd.f32 %v2007, %v2172
      %v2279 = vadd.f32 %v2008, %v2177
      %v2280 = vadd.f32 %v2009, %v2180
      %v2281 = vadd.f32 %v2010, %v2185
      %v2282 = vadd.f32 %v2011, %v2188
      %v2283 = vadd.f32 %v2012, %v2193
      %v2284 = vadd.f32 %v2013, %v2196
      %v2285 = vadd.f32 %v2014, %v2201
      %v2286 = vadd.f32 %v2015, %v2204
      %v2287 = vadd.f32 %v2016, %v2209
      %v2288 = vadd.f32 %v2017, %v2212
      %v2289 = vadd.f32 %v2018, %v2217
      %v2290 = vadd.f32 %v2019, %v2220
      %v2291 = vadd.f32 %v2020, %v2225
      %v2292 = vadd.f32 %v2021, %v2228
      %v2293 = vadd.f32 %v2022, %v2233
      %v2294 = vadd.f32 %v2023, %v2236
      %v2295 = vadd.f32 %v2024, %v2241
      %v2296 = vadd.f32 %v2025, %v2244
      %v2297 = vadd.f32 %v2026, %v2249
      %v2298 = vadd.f32 %v2027, %v2252
      %v2299 = vadd.f32 %v2028, %v2257
      %v2300 = vadd.f32 %v2029, %v2260
      %v2301 = vadd.f32 %v2030, %v2265
      %v2302 = vadd.f32 %v2031, %v2268
      %v2305 = vrot.slane %v741, 1
      %v2306 = vrot.slane %v758, 1
      %v2307 = vsel %vm1451, %v2305, %v2306
      %s2309 = scalar_lea.vmem %s345, 320
      %v2310 = vld [vmem:[%s2309] sm:$0xf]
      %v2311 = vld [vmem:[%s2309 + $0x4] sm:$0xf]
      %v2312 = vld [vmem:[%s2309 + $0x8] sm:$0xf]
      %v2313 = vld [vmem:[%s2309 + $0xc] sm:$0xf]
      %v2314 = vld [vmem:[%s2309 + $0x10] sm:$0xf]
      %v2315 = vld [vmem:[%s2309 + $0x14] sm:$0xf]
      %v2316 = vld [vmem:[%s2309 + $0x18] sm:$0xf]
      %v2317 = vld [vmem:[%s2309 + $0x1c] sm:$0xf]
      %v2318 = vld [vmem:[%s2309 + $0x20] sm:$0xf]
      %v2319 = vld [vmem:[%s2309 + $0x24] sm:$0xf]
      %v2320 = vld [vmem:[%s2309 + $0x28] sm:$0xf]
      %v2321 = vld [vmem:[%s2309 + $0x2c] sm:$0xf]
      %v2322 = vld [vmem:[%s2309 + $0x30] sm:$0xf]
      %v2323 = vld [vmem:[%s2309 + $0x34] sm:$0xf]
      %v2324 = vld [vmem:[%s2309 + $0x38] sm:$0xf]
      %v2325 = vld [vmem:[%s2309 + $0x3c] sm:$0xf]
      %v2342 = vunpack.c.l.b16 %v2310
      %v2343 = vunpack.c.l.b16 %v2311
      %v2344 = vunpack.c.l.b16 %v2312
      %v2345 = vunpack.c.l.b16 %v2313
      %v2346 = vunpack.c.l.b16 %v2314
      %v2347 = vunpack.c.l.b16 %v2315
      %v2348 = vunpack.c.l.b16 %v2316
      %v2349 = vunpack.c.l.b16 %v2317
      %v2350 = vunpack.c.l.b16 %v2318
      %v2351 = vunpack.c.l.b16 %v2319
      %v2352 = vunpack.c.l.b16 %v2320
      %v2353 = vunpack.c.l.b16 %v2321
      %v2354 = vunpack.c.l.b16 %v2322
      %v2355 = vunpack.c.l.b16 %v2323
      %v2356 = vunpack.c.l.b16 %v2324
      %v2357 = vunpack.c.l.b16 %v2325
      %v2358 = vpack.c.b16 %v2343, %v2342
      %v2359 = vpack.c.b16 %v2345, %v2344
      %v2360 = vpack.c.b16 %v2347, %v2346
      %v2361 = vpack.c.b16 %v2349, %v2348
      %v2362 = vpack.c.b16 %v2351, %v2350
      %v2363 = vpack.c.b16 %v2353, %v2352
      %v2364 = vpack.c.b16 %v2355, %v2354
      %v2365 = vpack.c.b16 %v2357, %v2356
      %2374 = vmatprep.subr.bf16.mxu0 0
      %2375 = vmatpush1.bf16.msra.mxu0 %v2358
      %2376 = vmatprep.subr.bf16.mxu0 0
      %2377 = vmatpush1.bf16.msra.mxu0 %v2359
      %2378 = vmatprep.subr.bf16.mxu0 0
      %2379 = vmatpush1.bf16.msra.mxu0 %v2360
      %2380 = vmatprep.subr.bf16.mxu0 0
      %2381 = vmatpush1.bf16.msra.mxu0 %v2361
      %2382 = vmatprep.subr.bf16.mxu0 0
      %2383 = vmatpush1.bf16.msra.mxu0 %v2362
      %2384 = vmatprep.subr.bf16.mxu0 0
      %2385 = vmatpush1.bf16.msra.mxu0 %v2363
      %2386 = vmatprep.subr.bf16.mxu0 0
      %2387 = vmatpush1.bf16.msra.mxu0 %v2364
      %2388 = vmatprep.subr.bf16.mxu0 0
      %2389 = vmatpush1.bf16.msra.mxu0 %v2365
      %2390 = vmatprep.subr.bf16.mxu0 0
      %2391 = vmatpush1.bf16.msra.mxu0 0
      %2392 = vmatprep.subr.bf16.mxu0 0
      %2393 = vmatpush1.bf16.msra.mxu0 0
      %2394 = vmatprep.subr.bf16.mxu0 0
      %2395 = vmatpush1.bf16.msra.mxu0 0
      %2396 = vmatprep.subr.bf16.mxu0 0
      %2397 = vmatpush1.bf16.msra.mxu0 0
      %2398 = vmatprep.subr.bf16.mxu0 0
      %2399 = vmatpush1.bf16.msra.mxu0 0
      %2400 = vmatprep.subr.bf16.mxu0 0
      %2401 = vmatpush1.bf16.msra.mxu0 0
      %2402 = vmatprep.subr.bf16.mxu0 0
      %2403 = vmatpush1.bf16.msra.mxu0 0
      %2404 = vmatprep.subr.bf16.mxu0 0
      %2405 = vmatpush1.bf16.msra.mxu0 0
      %2406 = vmatprep.mubr.bf16.mxu0 0
      %2407 = vmatmul.mubr.bf16.gmra.mrb[0].mxu0 %v1457
      %v2408 = vpop.f32.mrb[0].mxu0
      %v2409 = vadd.f32 0.0, %v2408
      %v2410 = vpop.f32.mrb[0].mxu0
      %v2411 = vpop.f32.mrb[0].mxu0
      %v2412 = vadd.f32 0.0, %v2411
      %v2413 = vpop.f32.mrb[0].mxu0
      %2414 = vmatprep.mubr.bf16.mxu0 0
      %2415 = vmatmul.mubr.bf16.gmra.mrb[0].mxu0 %v1460
      %v2416 = vpop.f32.mrb[0].mxu0
      %v2417 = vadd.f32 0.0, %v2416
      %v2418 = vpop.f32.mrb[0].mxu0
      %v2419 = vpop.f32.mrb[0].mxu0
      %v2420 = vadd.f32 0.0, %v2419
      %v2421 = vpop.f32.mrb[0].mxu0
      %2422 = vmatprep.mubr.bf16.mxu0 0
      %2423 = vmatmul.mubr.bf16.gmra.mrb[0].mxu0 %v1463
      %v2424 = vpop.f32.mrb[0].mxu0
      %v2425 = vadd.f32 0.0, %v2424
      %v2426 = vpop.f32.mrb[0].mxu0
      %v2427 = vpop.f32.mrb[0].mxu0
      %v2428 = vadd.f32 0.0, %v2427
      %v2429 = vpop.f32.mrb[0].mxu0
      %2430 = vmatprep.mubr.bf16.mxu0 0
      %2431 = vmatmul.mubr.bf16.gmra.mrb[0].mxu0 %v1466
      %v2432 = vpop.f32.mrb[0].mxu0
      %v2433 = vadd.f32 0.0, %v2432
      %v2434 = vpop.f32.mrb[0].mxu0
      %v2435 = vpop.f32.mrb[0].mxu0
      %v2436 = vadd.f32 0.0, %v2435
      %v2437 = vpop.f32.mrb[0].mxu0
      %2438 = vmatprep.mubr.bf16.mxu0 0
      %2439 = vmatmul.mubr.bf16.gmra.mrb[0].mxu0 %v1469
      %v2440 = vpop.f32.mrb[0].mxu0
      %v2441 = vadd.f32 0.0, %v2440
      %v2442 = vpop.f32.mrb[0].mxu0
      %v2443 = vpop.f32.mrb[0].mxu0
      %v2444 = vadd.f32 0.0, %v2443
      %v2445 = vpop.f32.mrb[0].mxu0
      %2446 = vmatprep.mubr.bf16.mxu0 0
      %2447 = vmatmul.mubr.bf16.gmra.mrb[0].mxu0 %v1472
      %v2448 = vpop.f32.mrb[0].mxu0
      %v2449 = vadd.f32 0.0, %v2448
      %v2450 = vpop.f32.mrb[0].mxu0
      %v2451 = vpop.f32.mrb[0].mxu0
      %v2452 = vadd.f32 0.0, %v2451
      %v2453 = vpop.f32.mrb[0].mxu0
      %2454 = vmatprep.mubr.bf16.mxu0 0
      %2455 = vmatmul.mubr.bf16.gmra.mrb[0].mxu0 %v1475
      %v2456 = vpop.f32.mrb[0].mxu0
      %v2457 = vadd.f32 0.0, %v2456
      %v2458 = vpop.f32.mrb[0].mxu0
      %v2459 = vpop.f32.mrb[0].mxu0
      %v2460 = vadd.f32 0.0, %v2459
      %v2461 = vpop.f32.mrb[0].mxu0
      %2462 = vmatprep.mubr.bf16.mxu0 0
      %2463 = vmatmul.mubr.bf16.gmra.mrb[0].mxu0 %v1478
      %v2464 = vpop.f32.mrb[0].mxu0
      %v2465 = vadd.f32 0.0, %v2464
      %v2466 = vpop.f32.mrb[0].mxu0
      %v2467 = vpop.f32.mrb[0].mxu0
      %v2468 = vadd.f32 0.0, %v2467
      %v2469 = vpop.f32.mrb[0].mxu0
      %2470 = vmatprep.mubr.bf16.mxu0 0
      %2471 = vmatmul.mubr.bf16.gmra.mrb[0].mxu0 %v1481
      %v2472 = vpop.f32.mrb[0].mxu0
      %v2473 = vadd.f32 0.0, %v2472
      %v2474 = vpop.f32.mrb[0].mxu0
      %v2475 = vpop.f32.mrb[0].mxu0
      %v2476 = vadd.f32 0.0, %v2475
      %v2477 = vpop.f32.mrb[0].mxu0
      %2478 = vmatprep.mubr.bf16.mxu0 0
      %2479 = vmatmul.mubr.bf16.gmra.mrb[0].mxu0 %v1484
      %v2480 = vpop.f32.mrb[0].mxu0
      %v2481 = vadd.f32 0.0, %v2480
      %v2482 = vpop.f32.mrb[0].mxu0
      %v2483 = vpop.f32.mrb[0].mxu0
      %v2484 = vadd.f32 0.0, %v2483
      %v2485 = vpop.f32.mrb[0].mxu0
      %2486 = vmatprep.mubr.bf16.mxu0 0
      %2487 = vmatmul.mubr.bf16.gmra.mrb[0].mxu0 %v1487
      %v2488 = vpop.f32.mrb[0].mxu0
      %v2489 = vadd.f32 0.0, %v2488
      %v2490 = vpop.f32.mrb[0].mxu0
      %v2491 = vpop.f32.mrb[0].mxu0
      %v2492 = vadd.f32 0.0, %v2491
      %v2493 = vpop.f32.mrb[0].mxu0
      %2494 = vmatprep.mubr.bf16.mxu0 0
      %2495 = vmatmul.mubr.bf16.gmra.mrb[0].mxu0 %v1490
      %v2496 = vpop.f32.mrb[0].mxu0
      %v2497 = vadd.f32 0.0, %v2496
      %v2498 = vpop.f32.mrb[0].mxu0
      %v2499 = vpop.f32.mrb[0].mxu0
      %v2500 = vadd.f32 0.0, %v2499
      %v2501 = vpop.f32.mrb[0].mxu0
      %2502 = vmatprep.mubr.bf16.mxu0 0
      %2503 = vmatmul.mubr.bf16.gmra.mrb[0].mxu0 %v1493
      %v2504 = vpop.f32.mrb[0].mxu0
      %v2505 = vadd.f32 0.0, %v2504
      %v2506 = vpop.f32.mrb[0].mxu0
      %v2507 = vpop.f32.mrb[0].mxu0
      %v2508 = vadd.f32 0.0, %v2507
      %v2509 = vpop.f32.mrb[0].mxu0
      %2510 = vmatprep.mubr.bf16.mxu0 0
      %2511 = vmatmul.mubr.bf16.gmra.mrb[0].mxu0 %v1496
      %v2512 = vpop.f32.mrb[0].mxu0
      %v2513 = vadd.f32 0.0, %v2512
      %v2514 = vpop.f32.mrb[0].mxu0
      %v2515 = vpop.f32.mrb[0].mxu0
      %v2516 = vadd.f32 0.0, %v2515
      %v2517 = vpop.f32.mrb[0].mxu0
      %2518 = vmatprep.mubr.bf16.mxu0 0
      %2519 = vmatmul.mubr.bf16.gmra.mrb[0].mxu0 %v1499
      %v2520 = vpop.f32.mrb[0].mxu0
      %v2521 = vadd.f32 0.0, %v2520
      %v2522 = vpop.f32.mrb[0].mxu0
      %v2523 = vpop.f32.mrb[0].mxu0
      %v2524 = vadd.f32 0.0, %v2523
      %v2525 = vpop.f32.mrb[0].mxu0
      %2526 = vmatprep.mubr.bf16.mxu0 0
      %2527 = vmatmul.mubr.bf16.gmra.mrb[0].mxu0 %v2307
      %v2528 = vpop.f32.mrb[0].mxu0
      %v2529 = vadd.f32 0.0, %v2528
      %v2530 = vpop.f32.mrb[0].mxu0
      %v2531 = vpop.f32.mrb[0].mxu0
      %v2532 = vadd.f32 0.0, %v2531
      %v2533 = vpop.f32.mrb[0].mxu0
      %2534 = vdwg.mxu0
      %v2535 = vadd.f32 %v2271, %v2409
      %v2536 = vadd.f32 %v2272, %v2412
      %v2537 = vadd.f32 %v2273, %v2417
      %v2538 = vadd.f32 %v2274, %v2420
      %v2539 = vadd.f32 %v2275, %v2425
      %v2540 = vadd.f32 %v2276, %v2428
      %v2541 = vadd.f32 %v2277, %v2433
      %v2542 = vadd.f32 %v2278, %v2436
      %v2543 = vadd.f32 %v2279, %v2441
      %v2544 = vadd.f32 %v2280, %v2444
      %v2545 = vadd.f32 %v2281, %v2449
      %v2546 = vadd.f32 %v2282, %v2452
      %v2547 = vadd.f32 %v2283, %v2457
      %v2548 = vadd.f32 %v2284, %v2460
      %v2549 = vadd.f32 %v2285, %v2465
      %v2550 = vadd.f32 %v2286, %v2468
      %v2551 = vadd.f32 %v2287, %v2473
      %v2552 = vadd.f32 %v2288, %v2476
      %v2553 = vadd.f32 %v2289, %v2481
      %v2554 = vadd.f32 %v2290, %v2484
      %v2555 = vadd.f32 %v2291, %v2489
      %v2556 = vadd.f32 %v2292, %v2492
      %v2557 = vadd.f32 %v2293, %v2497
      %v2558 = vadd.f32 %v2294, %v2500
      %v2559 = vadd.f32 %v2295, %v2505
      %v2560 = vadd.f32 %v2296, %v2508
      %v2561 = vadd.f32 %v2297, %v2513
      %v2562 = vadd.f32 %v2298, %v2516
      %v2563 = vadd.f32 %v2299, %v2521
      %v2564 = vadd.f32 %v2300, %v2524
      %v2565 = vadd.f32 %v2301, %v2529
      %v2566 = vadd.f32 %v2302, %v2532
      %s2567 = scalar_lea.vmem %s345, 384
      %v2568 = vld [vmem:[%s2567] sm:$0xf]
      %v2569 = vld [vmem:[%s2567 + $0x4] sm:$0xf]
      %v2570 = vld [vmem:[%s2567 + $0x8] sm:$0xf]
      %v2571 = vld [vmem:[%s2567 + $0xc] sm:$0xf]
      %v2572 = vld [vmem:[%s2567 + $0x10] sm:$0xf]
      %v2573 = vld [vmem:[%s2567 + $0x14] sm:$0xf]
      %v2574 = vld [vmem:[%s2567 + $0x18] sm:$0xf]
      %v2575 = vld [vmem:[%s2567 + $0x1c] sm:$0xf]
      %v2576 = vld [vmem:[%s2567 + $0x20] sm:$0xf]
      %v2577 = vld [vmem:[%s2567 + $0x24] sm:$0xf]
      %v2578 = vld [vmem:[%s2567 + $0x28] sm:$0xf]
      %v2579 = vld [vmem:[%s2567 + $0x2c] sm:$0xf]
      %v2580 = vld [vmem:[%s2567 + $0x30] sm:$0xf]
      %v2581 = vld [vmem:[%s2567 + $0x34] sm:$0xf]
      %v2582 = vld [vmem:[%s2567 + $0x38] sm:$0xf]
      %v2583 = vld [vmem:[%s2567 + $0x3c] sm:$0xf]
      %v2600 = vunpack.c.l.b16 %v2568
      %v2601 = vunpack.c.l.b16 %v2569
      %v2602 = vunpack.c.l.b16 %v2570
      %v2603 = vunpack.c.l.b16 %v2571
      %v2604 = vunpack.c.l.b16 %v2572
      %v2605 = vunpack.c.l.b16 %v2573
      %v2606 = vunpack.c.l.b16 %v2574
      %v2607 = vunpack.c.l.b16 %v2575
      %v2608 = vunpack.c.l.b16 %v2576
      %v2609 = vunpack.c.l.b16 %v2577
      %v2610 = vunpack.c.l.b16 %v2578
      %v2611 = vunpack.c.l.b16 %v2579
      %v2612 = vunpack.c.l.b16 %v2580
      %v2613 = vunpack.c.l.b16 %v2581
      %v2614 = vunpack.c.l.b16 %v2582
      %v2615 = vunpack.c.l.b16 %v2583
      %v2616 = vpack.c.b16 %v2601, %v2600
      %v2617 = vpack.c.b16 %v2603, %v2602
      %v2618 = vpack.c.b16 %v2605, %v2604
      %v2619 = vpack.c.b16 %v2607, %v2606
      %v2620 = vpack.c.b16 %v2609, %v2608
      %v2621 = vpack.c.b16 %v2611, %v2610
      %v2622 = vpack.c.b16 %v2613, %v2612
      %v2623 = vpack.c.b16 %v2615, %v2614
      %2632 = vmatprep.subr.bf16.mxu0 0
      %2633 = vmatpush1.bf16.msra.mxu0 %v2616
      %2634 = vmatprep.subr.bf16.mxu0 0
      %2635 = vmatpush1.bf16.msra.mxu0 %v2617
      %2636 = vmatprep.subr.bf16.mxu0 0
      %2637 = vmatpush1.bf16.msra.mxu0 %v2618
      %2638 = vmatprep.subr.bf16.mxu0 0
      %2639 = vmatpush1.bf16.msra.mxu0 %v2619
      %2640 = vmatprep.subr.bf16.mxu0 0
      %2641 = vmatpush1.bf16.msra.mxu0 %v2620
      %2642 = vmatprep.subr.bf16.mxu0 0
      %2643 = vmatpush1.bf16.msra.mxu0 %v2621
      %2644 = vmatprep.subr.bf16.mxu0 0
      %2645 = vmatpush1.bf16.msra.mxu0 %v2622
      %2646 = vmatprep.subr.bf16.mxu0 0
      %2647 = vmatpush1.bf16.msra.mxu0 %v2623
      %2648 = vmatprep.subr.bf16.mxu0 0
      %2649 = vmatpush1.bf16.msra.mxu0 0
      %2650 = vmatprep.subr.bf16.mxu0 0
      %2651 = vmatpush1.bf16.msra.mxu0 0
      %2652 = vmatprep.subr.bf16.mxu0 0
      %2653 = vmatpush1.bf16.msra.mxu0 0
      %2654 = vmatprep.subr.bf16.mxu0 0
      %2655 = vmatpush1.bf16.msra.mxu0 0
      %2656 = vmatprep.subr.bf16.mxu0 0
      %2657 = vmatpush1.bf16.msra.mxu0 0
      %2658 = vmatprep.subr.bf16.mxu0 0
      %2659 = vmatpush1.bf16.msra.mxu0 0
      %2660 = vmatprep.subr.bf16.mxu0 0
      %2661 = vmatpush1.bf16.msra.mxu0 0
      %2662 = vmatprep.subr.bf16.mxu0 0
      %2663 = vmatpush1.bf16.msra.mxu0 0
      %2664 = vmatprep.mubr.bf16.mxu0 0
      %2665 = vmatmul.mubr.bf16.gmra.mrb[0].mxu0 %v727
      %v2666 = vpop.f32.mrb[0].mxu0
      %v2667 = vadd.f32 0.0, %v2666
      %v2668 = vpop.f32.mrb[0].mxu0
      %v2669 = vpop.f32.mrb[0].mxu0
      %v2670 = vadd.f32 0.0, %v2669
      %v2671 = vpop.f32.mrb[0].mxu0
      %2672 = vmatprep.mubr.bf16.mxu0 0
      %2673 = vmatmul.mubr.bf16.gmra.mrb[0].mxu0 %v728
      %v2674 = vpop.f32.mrb[0].mxu0
      %v2675 = vadd.f32 0.0, %v2674
      %v2676 = vpop.f32.mrb[0].mxu0
      %v2677 = vpop.f32.mrb[0].mxu0
      %v2678 = vadd.f32 0.0, %v2677
      %v2679 = vpop.f32.mrb[0].mxu0
      %2680 = vmatprep.mubr.bf16.mxu0 0
      %2681 = vmatmul.mubr.bf16.gmra.mrb[0].mxu0 %v729
      %v2682 = vpop.f32.mrb[0].mxu0
      %v2683 = vadd.f32 0.0, %v2682
      %v2684 = vpop.f32.mrb[0].mxu0
      %v2685 = vpop.f32.mrb[0].mxu0
      %v2686 = vadd.f32 0.0, %v2685
      %v2687 = vpop.f32.mrb[0].mxu0
      %2688 = vmatprep.mubr.bf16.mxu0 0
      %2689 = vmatmul.mubr.bf16.gmra.mrb[0].mxu0 %v730
      %v2690 = vpop.f32.mrb[0].mxu0
      %v2691 = vadd.f32 0.0, %v2690
      %v2692 = vpop.f32.mrb[0].mxu0
      %v2693 = vpop.f32.mrb[0].mxu0
      %v2694 = vadd.f32 0.0, %v2693
      %v2695 = vpop.f32.mrb[0].mxu0
      %2696 = vmatprep.mubr.bf16.mxu0 0
      %2697 = vmatmul.mubr.bf16.gmra.mrb[0].mxu0 %v731
      %v2698 = vpop.f32.mrb[0].mxu0
      %v2699 = vadd.f32 0.0, %v2698
      %v2700 = vpop.f32.mrb[0].mxu0
      %v2701 = vpop.f32.mrb[0].mxu0
      %v2702 = vadd.f32 0.0, %v2701
      %v2703 = vpop.f32.mrb[0].mxu0
      %2704 = vmatprep.mubr.bf16.mxu0 0
      %2705 = vmatmul.mubr.bf16.gmra.mrb[0].mxu0 %v732
      %v2706 = vpop.f32.mrb[0].mxu0
      %v2707 = vadd.f32 0.0, %v2706
      %v2708 = vpop.f32.mrb[0].mxu0
      %v2709 = vpop.f32.mrb[0].mxu0
      %v2710 = vadd.f32 0.0, %v2709
      %v2711 = vpop.f32.mrb[0].mxu0
      %2712 = vmatprep.mubr.bf16.mxu0 0
      %2713 = vmatmul.mubr.bf16.gmra.mrb[0].mxu0 %v733
      %v2714 = vpop.f32.mrb[0].mxu0
      %v2715 = vadd.f32 0.0, %v2714
      %v2716 = vpop.f32.mrb[0].mxu0
      %v2717 = vpop.f32.mrb[0].mxu0
      %v2718 = vadd.f32 0.0, %v2717
      %v2719 = vpop.f32.mrb[0].mxu0
      %2720 = vmatprep.mubr.bf16.mxu0 0
      %2721 = vmatmul.mubr.bf16.gmra.mrb[0].mxu0 %v734
      %v2722 = vpop.f32.mrb[0].mxu0
      %v2723 = vadd.f32 0.0, %v2722
      %v2724 = vpop.f32.mrb[0].mxu0
      %v2725 = vpop.f32.mrb[0].mxu0
      %v2726 = vadd.f32 0.0, %v2725
      %v2727 = vpop.f32.mrb[0].mxu0
      %2728 = vmatprep.mubr.bf16.mxu0 0
      %2729 = vmatmul.mubr.bf16.gmra.mrb[0].mxu0 %v735
      %v2730 = vpop.f32.mrb[0].mxu0
      %v2731 = vadd.f32 0.0, %v2730
      %v2732 = vpop.f32.mrb[0].mxu0
      %v2733 = vpop.f32.mrb[0].mxu0
      %v2734 = vadd.f32 0.0, %v2733
      %v2735 = vpop.f32.mrb[0].mxu0
      %2736 = vmatprep.mubr.bf16.mxu0 0
      %2737 = vmatmul.mubr.bf16.gmra.mrb[0].mxu0 %v736
      %v2738 = vpop.f32.mrb[0].mxu0
      %v2739 = vadd.f32 0.0, %v2738
      %v2740 = vpop.f32.mrb[0].mxu0
      %v2741 = vpop.f32.mrb[0].mxu0
      %v2742 = vadd.f32 0.0, %v2741
      %v2743 = vpop.f32.mrb[0].mxu0
      %2744 = vmatprep.mubr.bf16.mxu0 0
      %2745 = vmatmul.mubr.bf16.gmra.mrb[0].mxu0 %v737
      %v2746 = vpop.f32.mrb[0].mxu0
      %v2747 = vadd.f32 0.0, %v2746
      %v2748 = vpop.f32.mrb[0].mxu0
      %v2749 = vpop.f32.mrb[0].mxu0
      %v2750 = vadd.f32 0.0, %v2749
      %v2751 = vpop.f32.mrb[0].mxu0
      %2752 = vmatprep.mubr.bf16.mxu0 0
      %2753 = vmatmul.mubr.bf16.gmra.mrb[0].mxu0 %v738
      %v2754 = vpop.f32.mrb[0].mxu0
      %v2755 = vadd.f32 0.0, %v2754
      %v2756 = vpop.f32.mrb[0].mxu0
      %v2757 = vpop.f32.mrb[0].mxu0
      %v2758 = vadd.f32 0.0, %v2757
      %v2759 = vpop.f32.mrb[0].mxu0
      %2760 = vmatprep.mubr.bf16.mxu0 0
      %2761 = vmatmul.mubr.bf16.gmra.mrb[0].mxu0 %v739
      %v2762 = vpop.f32.mrb[0].mxu0
      %v2763 = vadd.f32 0.0, %v2762
      %v2764 = vpop.f32.mrb[0].mxu0
      %v2765 = vpop.f32.mrb[0].mxu0
      %v2766 = vadd.f32 0.0, %v2765
      %v2767 = vpop.f32.mrb[0].mxu0
      %2768 = vmatprep.mubr.bf16.mxu0 0
      %2769 = vmatmul.mubr.bf16.gmra.mrb[0].mxu0 %v740
      %v2770 = vpop.f32.mrb[0].mxu0
      %v2771 = vadd.f32 0.0, %v2770
      %v2772 = vpop.f32.mrb[0].mxu0
      %v2773 = vpop.f32.mrb[0].mxu0
      %v2774 = vadd.f32 0.0, %v2773
      %v2775 = vpop.f32.mrb[0].mxu0
      %2776 = vmatprep.mubr.bf16.mxu0 0
      %2777 = vmatmul.mubr.bf16.gmra.mrb[0].mxu0 %v741
      %v2778 = vpop.f32.mrb[0].mxu0
      %v2779 = vadd.f32 0.0, %v2778
      %v2780 = vpop.f32.mrb[0].mxu0
      %v2781 = vpop.f32.mrb[0].mxu0
      %v2782 = vadd.f32 0.0, %v2781
      %v2783 = vpop.f32.mrb[0].mxu0
      %2784 = vmatprep.mubr.bf16.mxu0 0
      %2785 = vmatmul.mubr.bf16.gmra.mrb[0].mxu0 %v725
      %v2786 = vpop.f32.mrb[0].mxu0
      %v2787 = vadd.f32 0.0, %v2786
      %v2788 = vpop.f32.mrb[0].mxu0
      %v2789 = vpop.f32.mrb[0].mxu0
      %v2790 = vadd.f32 0.0, %v2789
      %v2791 = vpop.f32.mrb[0].mxu0
      %2792 = vdwg.mxu0
      %v2793 = vadd.f32 %v2535, %v2667
      %v2794 = vadd.f32 %v2536, %v2670
      %v2795 = vadd.f32 %v2537, %v2675
      %v2796 = vadd.f32 %v2538, %v2678
      %v2797 = vadd.f32 %v2539, %v2683
      %v2798 = vadd.f32 %v2540, %v2686
      %v2799 = vadd.f32 %v2541, %v2691
      %v2800 = vadd.f32 %v2542, %v2694
      %v2801 = vadd.f32 %v2543, %v2699
      %v2802 = vadd.f32 %v2544, %v2702
      %v2803 = vadd.f32 %v2545, %v2707
      %v2804 = vadd.f32 %v2546, %v2710
      %v2805 = vadd.f32 %v2547, %v2715
      %v2806 = vadd.f32 %v2548, %v2718
      %v2807 = vadd.f32 %v2549, %v2723
      %v2808 = vadd.f32 %v2550, %v2726
      %v2809 = vadd.f32 %v2551, %v2731
      %v2810 = vadd.f32 %v2552, %v2734
      %v2811 = vadd.f32 %v2553, %v2739
      %v2812 = vadd.f32 %v2554, %v2742
      %v2813 = vadd.f32 %v2555, %v2747
      %v2814 = vadd.f32 %v2556, %v2750
      %v2815 = vadd.f32 %v2557, %v2755
      %v2816 = vadd.f32 %v2558, %v2758
      %v2817 = vadd.f32 %v2559, %v2763
      %v2818 = vadd.f32 %v2560, %v2766
      %v2819 = vadd.f32 %v2561, %v2771
      %v2820 = vadd.f32 %v2562, %v2774
      %v2821 = vadd.f32 %v2563, %v2779
      %v2822 = vadd.f32 %v2564, %v2782
      %v2823 = vadd.f32 %v2565, %v2787
      %v2824 = vadd.f32 %v2566, %v2790
      %s2825 = scalar_lea.vmem %s345, 448
      %v2826 = vld [vmem:[%s2825] sm:$0xf]
      %v2827 = vld [vmem:[%s2825 + $0x4] sm:$0xf]
      %v2828 = vld [vmem:[%s2825 + $0x8] sm:$0xf]
      %v2829 = vld [vmem:[%s2825 + $0xc] sm:$0xf]
      %v2830 = vld [vmem:[%s2825 + $0x10] sm:$0xf]
      %v2831 = vld [vmem:[%s2825 + $0x14] sm:$0xf]
      %v2832 = vld [vmem:[%s2825 + $0x18] sm:$0xf]
      %v2833 = vld [vmem:[%s2825 + $0x1c] sm:$0xf]
      %v2834 = vld [vmem:[%s2825 + $0x20] sm:$0xf]
      %v2835 = vld [vmem:[%s2825 + $0x24] sm:$0xf]
      %v2836 = vld [vmem:[%s2825 + $0x28] sm:$0xf]
      %v2837 = vld [vmem:[%s2825 + $0x2c] sm:$0xf]
      %v2838 = vld [vmem:[%s2825 + $0x30] sm:$0xf]
      %v2839 = vld [vmem:[%s2825 + $0x34] sm:$0xf]
      %v2840 = vld [vmem:[%s2825 + $0x38] sm:$0xf]
      %v2841 = vld [vmem:[%s2825 + $0x3c] sm:$0xf]
      %v2858 = vunpack.c.l.b16 %v2826
      %v2859 = vunpack.c.l.b16 %v2827
      %v2860 = vunpack.c.l.b16 %v2828
      %v2861 = vunpack.c.l.b16 %v2829
      %v2862 = vunpack.c.l.b16 %v2830
      %v2863 = vunpack.c.l.b16 %v2831
      %v2864 = vunpack.c.l.b16 %v2832
      %v2865 = vunpack.c.l.b16 %v2833
      %v2866 = vunpack.c.l.b16 %v2834
      %v2867 = vunpack.c.l.b16 %v2835
      %v2868 = vunpack.c.l.b16 %v2836
      %v2869 = vunpack.c.l.b16 %v2837
      %v2870 = vunpack.c.l.b16 %v2838
      %v2871 = vunpack.c.l.b16 %v2839
      %v2872 = vunpack.c.l.b16 %v2840
      %v2873 = vunpack.c.l.b16 %v2841
      %v2874 = vpack.c.b16 %v2859, %v2858
      %v2875 = vpack.c.b16 %v2861, %v2860
      %v2876 = vpack.c.b16 %v2863, %v2862
      %v2877 = vpack.c.b16 %v2865, %v2864
      %v2878 = vpack.c.b16 %v2867, %v2866
      %v2879 = vpack.c.b16 %v2869, %v2868
      %v2880 = vpack.c.b16 %v2871, %v2870
      %v2881 = vpack.c.b16 %v2873, %v2872
      %2890 = vmatprep.subr.bf16.mxu0 0
      %2891 = vmatpush1.bf16.msra.mxu0 %v2874
      %2892 = vmatprep.subr.bf16.mxu0 0
      %2893 = vmatpush1.bf16.msra.mxu0 %v2875
      %2894 = vmatprep.subr.bf16.mxu0 0
      %2895 = vmatpush1.bf16.msra.mxu0 %v2876
      %2896 = vmatprep.subr.bf16.mxu0 0
      %2897 = vmatpush1.bf16.msra.mxu0 %v2877
      %2898 = vmatprep.subr.bf16.mxu0 0
      %2899 = vmatpush1.bf16.msra.mxu0 %v2878
      %2900 = vmatprep.subr.bf16.mxu0 0
      %2901 = vmatpush1.bf16.msra.mxu0 %v2879
      %2902 = vmatprep.subr.bf16.mxu0 0
      %2903 = vmatpush1.bf16.msra.mxu0 %v2880
      %2904 = vmatprep.subr.bf16.mxu0 0
      %2905 = vmatpush1.bf16.msra.mxu0 %v2881
      %2906 = vmatprep.subr.bf16.mxu0 0
      %2907 = vmatpush1.bf16.msra.mxu0 0
      %2908 = vmatprep.subr.bf16.mxu0 0
      %2909 = vmatpush1.bf16.msra.mxu0 0
      %2910 = vmatprep.subr.bf16.mxu0 0
      %2911 = vmatpush1.bf16.msra.mxu0 0
      %2912 = vmatprep.subr.bf16.mxu0 0
      %2913 = vmatpush1.bf16.msra.mxu0 0
      %2914 = vmatprep.subr.bf16.mxu0 0
      %2915 = vmatpush1.bf16.msra.mxu0 0
      %2916 = vmatprep.subr.bf16.mxu0 0
      %2917 = vmatpush1.bf16.msra.mxu0 0
      %2918 = vmatprep.subr.bf16.mxu0 0
      %2919 = vmatpush1.bf16.msra.mxu0 0
      %2920 = vmatprep.subr.bf16.mxu0 0
      %2921 = vmatpush1.bf16.msra.mxu0 0
      %2922 = vmatprep.mubr.bf16.mxu0 0
      %2923 = vmatmul.mubr.bf16.gmra.mrb[0].mxu0 %v811
      %v2924 = vpop.f32.mrb[0].mxu0
      %v2925 = vadd.f32 0.0, %v2924
      %v2926 = vpop.f32.mrb[0].mxu0
      %v2927 = vpop.f32.mrb[0].mxu0
      %v2928 = vadd.f32 0.0, %v2927
      %v2929 = vpop.f32.mrb[0].mxu0
      %2930 = vmatprep.mubr.bf16.mxu0 0
      %2931 = vmatmul.mubr.bf16.gmra.mrb[0].mxu0 %v823
      %v2932 = vpop.f32.mrb[0].mxu0
      %v2933 = vadd.f32 0.0, %v2932
      %v2934 = vpop.f32.mrb[0].mxu0
      %v2935 = vpop.f32.mrb[0].mxu0
      %v2936 = vadd.f32 0.0, %v2935
      %v2937 = vpop.f32.mrb[0].mxu0
      %2938 = vmatprep.mubr.bf16.mxu0 0
      %2939 = vmatmul.mubr.bf16.gmra.mrb[0].mxu0 %v835
      %v2940 = vpop.f32.mrb[0].mxu0
      %v2941 = vadd.f32 0.0, %v2940
      %v2942 = vpop.f32.mrb[0].mxu0
      %v2943 = vpop.f32.mrb[0].mxu0
      %v2944 = vadd.f32 0.0, %v2943
      %v2945 = vpop.f32.mrb[0].mxu0
      %2946 = vmatprep.mubr.bf16.mxu0 0
      %2947 = vmatmul.mubr.bf16.gmra.mrb[0].mxu0 %v847
      %v2948 = vpop.f32.mrb[0].mxu0
      %v2949 = vadd.f32 0.0, %v2948
      %v2950 = vpop.f32.mrb[0].mxu0
      %v2951 = vpop.f32.mrb[0].mxu0
      %v2952 = vadd.f32 0.0, %v2951
      %v2953 = vpop.f32.mrb[0].mxu0
      %2954 = vmatprep.mubr.bf16.mxu0 0
      %2955 = vmatmul.mubr.bf16.gmra.mrb[0].mxu0 %v859
      %v2956 = vpop.f32.mrb[0].mxu0
      %v2957 = vadd.f32 0.0, %v2956
      %v2958 = vpop.f32.mrb[0].mxu0
      %v2959 = vpop.f32.mrb[0].mxu0
      %v2960 = vadd.f32 0.0, %v2959
      %v2961 = vpop.f32.mrb[0].mxu0
      %2962 = vmatprep.mubr.bf16.mxu0 0
      %2963 = vmatmul.mubr.bf16.gmra.mrb[0].mxu0 %v871
      %v2964 = vpop.f32.mrb[0].mxu0
      %v2965 = vadd.f32 0.0, %v2964
      %v2966 = vpop.f32.mrb[0].mxu0
      %v2967 = vpop.f32.mrb[0].mxu0
      %v2968 = vadd.f32 0.0, %v2967
      %v2969 = vpop.f32.mrb[0].mxu0
      %2970 = vmatprep.mubr.bf16.mxu0 0
      %2971 = vmatmul.mubr.bf16.gmra.mrb[0].mxu0 %v883
      %v2972 = vpop.f32.mrb[0].mxu0
      %v2973 = vadd.f32 0.0, %v2972
      %v2974 = vpop.f32.mrb[0].mxu0
      %v2975 = vpop.f32.mrb[0].mxu0
      %v2976 = vadd.f32 0.0, %v2975
      %v2977 = vpop.f32.mrb[0].mxu0
      %2978 = vmatprep.mubr.bf16.mxu0 0
      %2979 = vmatmul.mubr.bf16.gmra.mrb[0].mxu0 %v895
      %v2980 = vpop.f32.mrb[0].mxu0
      %v2981 = vadd.f32 0.0, %v2980
      %v2982 = vpop.f32.mrb[0].mxu0
      %v2983 = vpop.f32.mrb[0].mxu0
      %v2984 = vadd.f32 0.0, %v2983
      %v2985 = vpop.f32.mrb[0].mxu0
      %2986 = vmatprep.mubr.bf16.mxu0 0
      %2987 = vmatmul.mubr.bf16.gmra.mrb[0].mxu0 %v907
      %v2988 = vpop.f32.mrb[0].mxu0
      %v2989 = vadd.f32 0.0, %v2988
      %v2990 = vpop.f32.mrb[0].mxu0
      %v2991 = vpop.f32.mrb[0].mxu0
      %v2992 = vadd.f32 0.0, %v2991
      %v2993 = vpop.f32.mrb[0].mxu0
      %2994 = vmatprep.mubr.bf16.mxu0 0
      %2995 = vmatmul.mubr.bf16.gmra.mrb[0].mxu0 %v919
      %v2996 = vpop.f32.mrb[0].mxu0
      %v2997 = vadd.f32 0.0, %v2996
      %v2998 = vpop.f32.mrb[0].mxu0
      %v2999 = vpop.f32.mrb[0].mxu0
      %v3000 = vadd.f32 0.0, %v2999
      %v3001 = vpop.f32.mrb[0].mxu0
      %3002 = vmatprep.mubr.bf16.mxu0 0
      %3003 = vmatmul.mubr.bf16.gmra.mrb[0].mxu0 %v931
      %v3004 = vpop.f32.mrb[0].mxu0
      %v3005 = vadd.f32 0.0, %v3004
      %v3006 = vpop.f32.mrb[0].mxu0
      %v3007 = vpop.f32.mrb[0].mxu0
      %v3008 = vadd.f32 0.0, %v3007
      %v3009 = vpop.f32.mrb[0].mxu0
      %3010 = vmatprep.mubr.bf16.mxu0 0
      %3011 = vmatmul.mubr.bf16.gmra.mrb[0].mxu0 %v943
      %v3012 = vpop.f32.mrb[0].mxu0
      %v3013 = vadd.f32 0.0, %v3012
      %v3014 = vpop.f32.mrb[0].mxu0
      %v3015 = vpop.f32.mrb[0].mxu0
      %v3016 = vadd.f32 0.0, %v3015
      %v3017 = vpop.f32.mrb[0].mxu0
      %3018 = vmatprep.mubr.bf16.mxu0 0
      %3019 = vmatmul.mubr.bf16.gmra.mrb[0].mxu0 %v955
      %v3020 = vpop.f32.mrb[0].mxu0
      %v3021 = vadd.f32 0.0, %v3020
      %v3022 = vpop.f32.mrb[0].mxu0
      %v3023 = vpop.f32.mrb[0].mxu0
      %v3024 = vadd.f32 0.0, %v3023
      %v3025 = vpop.f32.mrb[0].mxu0
      %3026 = vmatprep.mubr.bf16.mxu0 0
      %3027 = vmatmul.mubr.bf16.gmra.mrb[0].mxu0 %v967
      %v3028 = vpop.f32.mrb[0].mxu0
      %v3029 = vadd.f32 0.0, %v3028
      %v3030 = vpop.f32.mrb[0].mxu0
      %v3031 = vpop.f32.mrb[0].mxu0
      %v3032 = vadd.f32 0.0, %v3031
      %v3033 = vpop.f32.mrb[0].mxu0
      %3034 = vmatprep.mubr.bf16.mxu0 0
      %3035 = vmatmul.mubr.bf16.gmra.mrb[0].mxu0 %v2043
      %v3036 = vpop.f32.mrb[0].mxu0
      %v3037 = vadd.f32 0.0, %v3036
      %v3038 = vpop.f32.mrb[0].mxu0
      %v3039 = vpop.f32.mrb[0].mxu0
      %v3040 = vadd.f32 0.0, %v3039
      %v3041 = vpop.f32.mrb[0].mxu0
      %3042 = vmatprep.mubr.bf16.mxu0 0
      %3043 = vmatmul.mubr.bf16.gmra.mrb[0].mxu0 %v787
      %v3044 = vpop.f32.mrb[0].mxu0
      %v3045 = vadd.f32 0.0, %v3044
      %v3046 = vpop.f32.mrb[0].mxu0
      %v3047 = vpop.f32.mrb[0].mxu0
      %v3048 = vadd.f32 0.0, %v3047
      %v3049 = vpop.f32.mrb[0].mxu0
      %3050 = vdwg.mxu0
      %v3051 = vadd.f32 %v2793, %v2925
      %v3052 = vadd.f32 %v2794, %v2928
      %v3053 = vadd.f32 %v2795, %v2933
      %v3054 = vadd.f32 %v2796, %v2936
      %v3055 = vadd.f32 %v2797, %v2941
      %v3056 = vadd.f32 %v2798, %v2944
      %v3057 = vadd.f32 %v2799, %v2949
      %v3058 = vadd.f32 %v2800, %v2952
      %v3059 = vadd.f32 %v2801, %v2957
      %v3060 = vadd.f32 %v2802, %v2960
      %v3061 = vadd.f32 %v2803, %v2965
      %v3062 = vadd.f32 %v2804, %v2968
      %v3063 = vadd.f32 %v2805, %v2973
      %v3064 = vadd.f32 %v2806, %v2976
      %v3065 = vadd.f32 %v2807, %v2981
      %v3066 = vadd.f32 %v2808, %v2984
      %v3067 = vadd.f32 %v2809, %v2989
      %v3068 = vadd.f32 %v2810, %v2992
      %v3069 = vadd.f32 %v2811, %v2997
      %v3070 = vadd.f32 %v2812, %v3000
      %v3071 = vadd.f32 %v2813, %v3005
      %v3072 = vadd.f32 %v2814, %v3008
      %v3073 = vadd.f32 %v2815, %v3013
      %v3074 = vadd.f32 %v2816, %v3016
      %v3075 = vadd.f32 %v2817, %v3021
      %v3076 = vadd.f32 %v2818, %v3024
      %v3077 = vadd.f32 %v2819, %v3029
      %v3078 = vadd.f32 %v2820, %v3032
      %v3079 = vadd.f32 %v2821, %v3037
      %v3080 = vadd.f32 %v2822, %v3040
      %v3081 = vadd.f32 %v2823, %v3045
      %v3082 = vadd.f32 %v2824, %v3048
      %s3083 = scalar_lea.vmem %s345, 512
      %v3084 = vld [vmem:[%s3083] sm:$0xf]
      %v3085 = vld [vmem:[%s3083 + $0x4] sm:$0xf]
      %v3086 = vld [vmem:[%s3083 + $0x8] sm:$0xf]
      %v3087 = vld [vmem:[%s3083 + $0xc] sm:$0xf]
      %v3088 = vld [vmem:[%s3083 + $0x10] sm:$0xf]
      %v3089 = vld [vmem:[%s3083 + $0x14] sm:$0xf]
      %v3090 = vld [vmem:[%s3083 + $0x18] sm:$0xf]
      %v3091 = vld [vmem:[%s3083 + $0x1c] sm:$0xf]
      %v3092 = vld [vmem:[%s3083 + $0x20] sm:$0xf]
      %v3093 = vld [vmem:[%s3083 + $0x24] sm:$0xf]
      %v3094 = vld [vmem:[%s3083 + $0x28] sm:$0xf]
      %v3095 = vld [vmem:[%s3083 + $0x2c] sm:$0xf]
      %v3096 = vld [vmem:[%s3083 + $0x30] sm:$0xf]
      %v3097 = vld [vmem:[%s3083 + $0x34] sm:$0xf]
      %v3098 = vld [vmem:[%s3083 + $0x38] sm:$0xf]
      %v3099 = vld [vmem:[%s3083 + $0x3c] sm:$0xf]
      %v3116 = vunpack.c.l.b16 %v3084
      %v3117 = vunpack.c.l.b16 %v3085
      %v3118 = vunpack.c.l.b16 %v3086
      %v3119 = vunpack.c.l.b16 %v3087
      %v3120 = vunpack.c.l.b16 %v3088
      %v3121 = vunpack.c.l.b16 %v3089
      %v3122 = vunpack.c.l.b16 %v3090
      %v3123 = vunpack.c.l.b16 %v3091
      %v3124 = vunpack.c.l.b16 %v3092
      %v3125 = vunpack.c.l.b16 %v3093
      %v3126 = vunpack.c.l.b16 %v3094
      %v3127 = vunpack.c.l.b16 %v3095
      %v3128 = vunpack.c.l.b16 %v3096
      %v3129 = vunpack.c.l.b16 %v3097
      %v3130 = vunpack.c.l.b16 %v3098
      %v3131 = vunpack.c.l.b16 %v3099
      %v3132 = vpack.c.b16 %v3117, %v3116
      %v3133 = vpack.c.b16 %v3119, %v3118
      %v3134 = vpack.c.b16 %v3121, %v3120
      %v3135 = vpack.c.b16 %v3123, %v3122
      %v3136 = vpack.c.b16 %v3125, %v3124
      %v3137 = vpack.c.b16 %v3127, %v3126
      %v3138 = vpack.c.b16 %v3129, %v3128
      %v3139 = vpack.c.b16 %v3131, %v3130
      %3148 = vmatprep.subr.bf16.mxu0 0
      %3149 = vmatpush1.bf16.msra.mxu0 %v3132
      %3150 = vmatprep.subr.bf16.mxu0 0
      %3151 = vmatpush1.bf16.msra.mxu0 %v3133
      %3152 = vmatprep.subr.bf16.mxu0 0
      %3153 = vmatpush1.bf16.msra.mxu0 %v3134
      %3154 = vmatprep.subr.bf16.mxu0 0
      %3155 = vmatpush1.bf16.msra.mxu0 %v3135
      %3156 = vmatprep.subr.bf16.mxu0 0
      %3157 = vmatpush1.bf16.msra.mxu0 %v3136
      %3158 = vmatprep.subr.bf16.mxu0 0
      %3159 = vmatpush1.bf16.msra.mxu0 %v3137
      %3160 = vmatprep.subr.bf16.mxu0 0
      %3161 = vmatpush1.bf16.msra.mxu0 %v3138
      %3162 = vmatprep.subr.bf16.mxu0 0
      %3163 = vmatpush1.bf16.msra.mxu0 %v3139
      %3164 = vmatprep.subr.bf16.mxu0 0
      %3165 = vmatpush1.bf16.msra.mxu0 0
      %3166 = vmatprep.subr.bf16.mxu0 0
      %3167 = vmatpush1.bf16.msra.mxu0 0
      %3168 = vmatprep.subr.bf16.mxu0 0
      %3169 = vmatpush1.bf16.msra.mxu0 0
      %3170 = vmatprep.subr.bf16.mxu0 0
      %3171 = vmatpush1.bf16.msra.mxu0 0
      %3172 = vmatprep.subr.bf16.mxu0 0
      %3173 = vmatpush1.bf16.msra.mxu0 0
      %3174 = vmatprep.subr.bf16.mxu0 0
      %3175 = vmatpush1.bf16.msra.mxu0 0
      %3176 = vmatprep.subr.bf16.mxu0 0
      %3177 = vmatpush1.bf16.msra.mxu0 0
      %3178 = vmatprep.subr.bf16.mxu0 0
      %3179 = vmatpush1.bf16.msra.mxu0 0
      %3180 = vmatprep.mubr.bf16.mxu0 0
      %3181 = vmatmul.mubr.bf16.gmra.mrb[0].mxu0 %v1460
      %v3182 = vpop.f32.mrb[0].mxu0
      %v3183 = vadd.f32 0.0, %v3182
      %v3184 = vpop.f32.mrb[0].mxu0
      %v3185 = vpop.f32.mrb[0].mxu0
      %v3186 = vadd.f32 0.0, %v3185
      %v3187 = vpop.f32.mrb[0].mxu0
      %3188 = vmatprep.mubr.bf16.mxu0 0
      %3189 = vmatmul.mubr.bf16.gmra.mrb[0].mxu0 %v1463
      %v3190 = vpop.f32.mrb[0].mxu0
      %v3191 = vadd.f32 0.0, %v3190
      %v3192 = vpop.f32.mrb[0].mxu0
      %v3193 = vpop.f32.mrb[0].mxu0
      %v3194 = vadd.f32 0.0, %v3193
      %v3195 = vpop.f32.mrb[0].mxu0
      %3196 = vmatprep.mubr.bf16.mxu0 0
      %3197 = vmatmul.mubr.bf16.gmra.mrb[0].mxu0 %v1466
      %v3198 = vpop.f32.mrb[0].mxu0
      %v3199 = vadd.f32 0.0, %v3198
      %v3200 = vpop.f32.mrb[0].mxu0
      %v3201 = vpop.f32.mrb[0].mxu0
      %v3202 = vadd.f32 0.0, %v3201
      %v3203 = vpop.f32.mrb[0].mxu0
      %3204 = vmatprep.mubr.bf16.mxu0 0
      %3205 = vmatmul.mubr.bf16.gmra.mrb[0].mxu0 %v1469
      %v3206 = vpop.f32.mrb[0].mxu0
      %v3207 = vadd.f32 0.0, %v3206
      %v3208 = vpop.f32.mrb[0].mxu0
      %v3209 = vpop.f32.mrb[0].mxu0
      %v3210 = vadd.f32 0.0, %v3209
      %v3211 = vpop.f32.mrb[0].mxu0
      %3212 = vmatprep.mubr.bf16.mxu0 0
      %3213 = vmatmul.mubr.bf16.gmra.mrb[0].mxu0 %v1472
      %v3214 = vpop.f32.mrb[0].mxu0
      %v3215 = vadd.f32 0.0, %v3214
      %v3216 = vpop.f32.mrb[0].mxu0
      %v3217 = vpop.f32.mrb[0].mxu0
      %v3218 = vadd.f32 0.0, %v3217
      %v3219 = vpop.f32.mrb[0].mxu0
      %3220 = vmatprep.mubr.bf16.mxu0 0
      %3221 = vmatmul.mubr.bf16.gmra.mrb[0].mxu0 %v1475
      %v3222 = vpop.f32.mrb[0].mxu0
      %v3223 = vadd.f32 0.0, %v3222
      %v3224 = vpop.f32.mrb[0].mxu0
      %v3225 = vpop.f32.mrb[0].mxu0
      %v3226 = vadd.f32 0.0, %v3225
      %v3227 = vpop.f32.mrb[0].mxu0
      %3228 = vmatprep.mubr.bf16.mxu0 0
      %3229 = vmatmul.mubr.bf16.gmra.mrb[0].mxu0 %v1478
      %v3230 = vpop.f32.mrb[0].mxu0
      %v3231 = vadd.f32 0.0, %v3230
      %v3232 = vpop.f32.mrb[0].mxu0
      %v3233 = vpop.f32.mrb[0].mxu0
      %v3234 = vadd.f32 0.0, %v3233
      %v3235 = vpop.f32.mrb[0].mxu0
      %3236 = vmatprep.mubr.bf16.mxu0 0
      %3237 = vmatmul.mubr.bf16.gmra.mrb[0].mxu0 %v1481
      %v3238 = vpop.f32.mrb[0].mxu0
      %v3239 = vadd.f32 0.0, %v3238
      %v3240 = vpop.f32.mrb[0].mxu0
      %v3241 = vpop.f32.mrb[0].mxu0
      %v3242 = vadd.f32 0.0, %v3241
      %v3243 = vpop.f32.mrb[0].mxu0
      %3244 = vmatprep.mubr.bf16.mxu0 0
      %3245 = vmatmul.mubr.bf16.gmra.mrb[0].mxu0 %v1484
      %v3246 = vpop.f32.mrb[0].mxu0
      %v3247 = vadd.f32 0.0, %v3246
      %v3248 = vpop.f32.mrb[0].mxu0
      %v3249 = vpop.f32.mrb[0].mxu0
      %v3250 = vadd.f32 0.0, %v3249
      %v3251 = vpop.f32.mrb[0].mxu0
      %3252 = vmatprep.mubr.bf16.mxu0 0
      %3253 = vmatmul.mubr.bf16.gmra.mrb[0].mxu0 %v1487
      %v3254 = vpop.f32.mrb[0].mxu0
      %v3255 = vadd.f32 0.0, %v3254
      %v3256 = vpop.f32.mrb[0].mxu0
      %v3257 = vpop.f32.mrb[0].mxu0
      %v3258 = vadd.f32 0.0, %v3257
      %v3259 = vpop.f32.mrb[0].mxu0
      %3260 = vmatprep.mubr.bf16.mxu0 0
      %3261 = vmatmul.mubr.bf16.gmra.mrb[0].mxu0 %v1490
      %v3262 = vpop.f32.mrb[0].mxu0
      %v3263 = vadd.f32 0.0, %v3262
      %v3264 = vpop.f32.mrb[0].mxu0
      %v3265 = vpop.f32.mrb[0].mxu0
      %v3266 = vadd.f32 0.0, %v3265
      %v3267 = vpop.f32.mrb[0].mxu0
      %3268 = vmatprep.mubr.bf16.mxu0 0
      %3269 = vmatmul.mubr.bf16.gmra.mrb[0].mxu0 %v1493
      %v3270 = vpop.f32.mrb[0].mxu0
      %v3271 = vadd.f32 0.0, %v3270
      %v3272 = vpop.f32.mrb[0].mxu0
      %v3273 = vpop.f32.mrb[0].mxu0
      %v3274 = vadd.f32 0.0, %v3273
      %v3275 = vpop.f32.mrb[0].mxu0
      %3276 = vmatprep.mubr.bf16.mxu0 0
      %3277 = vmatmul.mubr.bf16.gmra.mrb[0].mxu0 %v1496
      %v3278 = vpop.f32.mrb[0].mxu0
      %v3279 = vadd.f32 0.0, %v3278
      %v3280 = vpop.f32.mrb[0].mxu0
      %v3281 = vpop.f32.mrb[0].mxu0
      %v3282 = vadd.f32 0.0, %v3281
      %v3283 = vpop.f32.mrb[0].mxu0
      %3284 = vmatprep.mubr.bf16.mxu0 0
      %3285 = vmatmul.mubr.bf16.gmra.mrb[0].mxu0 %v1499
      %v3286 = vpop.f32.mrb[0].mxu0
      %v3287 = vadd.f32 0.0, %v3286
      %v3288 = vpop.f32.mrb[0].mxu0
      %v3289 = vpop.f32.mrb[0].mxu0
      %v3290 = vadd.f32 0.0, %v3289
      %v3291 = vpop.f32.mrb[0].mxu0
      %3292 = vmatprep.mubr.bf16.mxu0 0
      %3293 = vmatmul.mubr.bf16.gmra.mrb[0].mxu0 %v2307
      %v3294 = vpop.f32.mrb[0].mxu0
      %v3295 = vadd.f32 0.0, %v3294
      %v3296 = vpop.f32.mrb[0].mxu0
      %v3297 = vpop.f32.mrb[0].mxu0
      %v3298 = vadd.f32 0.0, %v3297
      %v3299 = vpop.f32.mrb[0].mxu0
      %3300 = vmatprep.mubr.bf16.mxu0 0
      %3301 = vmatmul.mubr.bf16.gmra.mrb[0].mxu0 %v1454
      %v3302 = vpop.f32.mrb[0].mxu0
      %v3303 = vadd.f32 0.0, %v3302
      %v3304 = vpop.f32.mrb[0].mxu0
      %v3305 = vpop.f32.mrb[0].mxu0
      %v3306 = vadd.f32 0.0, %v3305
      %v3307 = vpop.f32.mrb[0].mxu0
      %3308 = vdwg.mxu0
      %v3309 = vadd.f32 %v3051, %v3183
      %v3310 = vadd.f32 %v3052, %v3186
      %v3311 = vadd.f32 %v3053, %v3191
      %v3312 = vadd.f32 %v3054, %v3194
      %v3313 = vadd.f32 %v3055, %v3199
      %v3314 = vadd.f32 %v3056, %v3202
      %v3315 = vadd.f32 %v3057, %v3207
      %v3316 = vadd.f32 %v3058, %v3210
      %v3317 = vadd.f32 %v3059, %v3215
      %v3318 = vadd.f32 %v3060, %v3218
      %v3319 = vadd.f32 %v3061, %v3223
      %v3320 = vadd.f32 %v3062, %v3226
      %v3321 = vadd.f32 %v3063, %v3231
      %v3322 = vadd.f32 %v3064, %v3234
      %v3323 = vadd.f32 %v3065, %v3239
      %v3324 = vadd.f32 %v3066, %v3242
      %v3325 = vadd.f32 %v3067, %v3247
      %v3326 = vadd.f32 %v3068, %v3250
      %v3327 = vadd.f32 %v3069, %v3255
      %v3328 = vadd.f32 %v3070, %v3258
      %v3329 = vadd.f32 %v3071, %v3263
      %v3330 = vadd.f32 %v3072, %v3266
      %v3331 = vadd.f32 %v3073, %v3271
      %v3332 = vadd.f32 %v3074, %v3274
      %v3333 = vadd.f32 %v3075, %v3279
      %v3334 = vadd.f32 %v3076, %v3282
      %v3335 = vadd.f32 %v3077, %v3287
      %v3336 = vadd.f32 %v3078, %v3290
      %v3337 = vadd.f32 %v3079, %v3295
      %v3338 = vadd.f32 %v3080, %v3298
      %v3339 = vadd.f32 %v3081, %v3303
      %v3340 = vadd.f32 %v3082, %v3306
      %v3341 = vpack.c.bf16 %v3310, %v3309
      %v3342 = vpack.c.bf16 %v3312, %v3311
      %v3343 = vpack.c.bf16 %v3314, %v3313
      %v3344 = vpack.c.bf16 %v3316, %v3315
      %v3345 = vpack.c.bf16 %v3318, %v3317
      %v3346 = vpack.c.bf16 %v3320, %v3319
      %v3347 = vpack.c.bf16 %v3322, %v3321
      %v3348 = vpack.c.bf16 %v3324, %v3323
      %v3349 = vpack.c.bf16 %v3326, %v3325
      %v3350 = vpack.c.bf16 %v3328, %v3327
      %v3351 = vpack.c.bf16 %v3330, %v3329
      %v3352 = vpack.c.bf16 %v3332, %v3331
      %v3353 = vpack.c.bf16 %v3334, %v3333
      %v3354 = vpack.c.bf16 %v3336, %v3335
      %v3355 = vpack.c.bf16 %v3338, %v3337
      %v3356 = vpack.c.bf16 %v3340, %v3339
      %v3373 = vunpack.c.l.b16 %v3341
      %v3374 = vunpack.c.h.b16 %v3341
      %v3375 = vunpack.c.l.b16 %v3342
      %v3376 = vunpack.c.h.b16 %v3342
      %v3377 = vunpack.c.l.b16 %v3343
      %v3378 = vunpack.c.h.b16 %v3343
      %v3379 = vunpack.c.l.b16 %v3344
      %v3380 = vunpack.c.h.b16 %v3344
      %v3381 = vunpack.c.l.b16 %v3345
      %v3382 = vunpack.c.h.b16 %v3345
      %v3383 = vunpack.c.l.b16 %v3346
      %v3384 = vunpack.c.h.b16 %v3346
      %v3385 = vunpack.c.l.b16 %v3347
      %v3386 = vunpack.c.h.b16 %v3347
      %v3387 = vunpack.c.l.b16 %v3348
      %v3388 = vunpack.c.h.b16 %v3348
      %v3389 = vunpack.c.l.b16 %v3349
      %v3390 = vunpack.c.h.b16 %v3349
      %v3391 = vunpack.c.l.b16 %v3350
      %v3392 = vunpack.c.h.b16 %v3350
      %v3393 = vunpack.c.l.b16 %v3351
      %v3394 = vunpack.c.h.b16 %v3351
      %v3395 = vunpack.c.l.b16 %v3352
      %v3396 = vunpack.c.h.b16 %v3352
      %v3397 = vunpack.c.l.b16 %v3353
      %v3398 = vunpack.c.h.b16 %v3353
      %v3399 = vunpack.c.l.b16 %v3354
      %v3400 = vunpack.c.h.b16 %v3354
      %v3401 = vunpack.c.l.b16 %v3355
      %v3402 = vunpack.c.h.b16 %v3355
      %v3403 = vunpack.c.l.b16 %v3356
      %v3404 = vunpack.c.h.b16 %v3356
      %v3405 = vpack.c.b16 %v3373, %v3373
      %v3406 = vpack.c.b16 %v3374, %v3374
      %v3407 = vpack.c.b16 %v3375, %v3375
      %v3408 = vpack.c.b16 %v3376, %v3376
      %v3409 = vpack.c.b16 %v3377, %v3377
      %v3410 = vpack.c.b16 %v3378, %v3378
      %v3411 = vpack.c.b16 %v3379, %v3379
      %v3412 = vpack.c.b16 %v3380, %v3380
      %v3413 = vpack.c.b16 %v3381, %v3381
      %v3414 = vpack.c.b16 %v3382, %v3382
      %v3415 = vpack.c.b16 %v3383, %v3383
      %v3416 = vpack.c.b16 %v3384, %v3384
      %v3417 = vpack.c.b16 %v3385, %v3385
      %v3418 = vpack.c.b16 %v3386, %v3386
      %v3419 = vpack.c.b16 %v3387, %v3387
      %v3420 = vpack.c.b16 %v3388, %v3388
      %v3421 = vpack.c.b16 %v3389, %v3389
      %v3422 = vpack.c.b16 %v3390, %v3390
      %v3423 = vpack.c.b16 %v3391, %v3391
      %v3424 = vpack.c.b16 %v3392, %v3392
      %v3425 = vpack.c.b16 %v3393, %v3393
      %v3426 = vpack.c.b16 %v3394, %v3394
      %v3427 = vpack.c.b16 %v3395, %v3395
      %v3428 = vpack.c.b16 %v3396, %v3396
      %v3429 = vpack.c.b16 %v3397, %v3397
      %v3430 = vpack.c.b16 %v3398, %v3398
      %v3431 = vpack.c.b16 %v3399, %v3399
      %v3432 = vpack.c.b16 %v3400, %v3400
      %v3433 = vpack.c.b16 %v3401, %v3401
      %v3434 = vpack.c.b16 %v3402, %v3402
      %v3435 = vpack.c.b16 %v3403, %v3403
      %v3436 = vpack.c.b16 %v3404, %v3404
      %3469 = vst [vmem:[%s353] sm:$0xf] %v3405
      %3470 = vst [vmem:[%s353 + $0x4] sm:$0xf] %v3406
      %3471 = vst [vmem:[%s353 + $0x8] sm:$0xf] %v3407
      %3472 = vst [vmem:[%s353 + $0xc] sm:$0xf] %v3408
      %3473 = vst [vmem:[%s353 + $0x10] sm:$0xf] %v3409
      %3474 = vst [vmem:[%s353 + $0x14] sm:$0xf] %v3410
      %3475 = vst [vmem:[%s353 + $0x18] sm:$0xf] %v3411
      %3476 = vst [vmem:[%s353 + $0x1c] sm:$0xf] %v3412
      %3477 = vst [vmem:[%s353 + $0x20] sm:$0xf] %v3413
      %3478 = vst [vmem:[%s353 + $0x24] sm:$0xf] %v3414
      %3479 = vst [vmem:[%s353 + $0x28] sm:$0xf] %v3415
      %3480 = vst [vmem:[%s353 + $0x2c] sm:$0xf] %v3416
      %3481 = vst [vmem:[%s353 + $0x30] sm:$0xf] %v3417
      %3482 = vst [vmem:[%s353 + $0x34] sm:$0xf] %v3418
      %3483 = vst [vmem:[%s353 + $0x38] sm:$0xf] %v3419
      %3484 = vst [vmem:[%s353 + $0x3c] sm:$0xf] %v3420
      %3485 = vst [vmem:[%s353 + $0x40] sm:$0xf] %v3421
      %3486 = vst [vmem:[%s353 + $0x44] sm:$0xf] %v3422
      %3487 = vst [vmem:[%s353 + $0x48] sm:$0xf] %v3423
      %3488 = vst [vmem:[%s353 + $0x4c] sm:$0xf] %v3424
      %3489 = vst [vmem:[%s353 + $0x50] sm:$0xf] %v3425
      %3490 = vst [vmem:[%s353 + $0x54] sm:$0xf] %v3426
      %3491 = vst [vmem:[%s353 + $0x58] sm:$0xf] %v3427
      %3492 = vst [vmem:[%s353 + $0x5c] sm:$0xf] %v3428
      %3493 = vst [vmem:[%s353 + $0x60] sm:$0xf] %v3429
      %3494 = vst [vmem:[%s353 + $0x64] sm:$0xf] %v3430
      %3495 = vst [vmem:[%s353 + $0x68] sm:$0xf] %v3431
      %3496 = vst [vmem:[%s353 + $0x6c] sm:$0xf] %v3432
      %3497 = vst [vmem:[%s353 + $0x70] sm:$0xf] %v3433
      %3498 = vst [vmem:[%s353 + $0x74] sm:$0xf] %v3434
      %3499 = vst [vmem:[%s353 + $0x78] sm:$0xf] %v3435
      %3500 = vst [vmem:[%s353 + $0x7c] sm:$0xf] %v3436
      %v3501 = vld [vmem:[%s356] sm:$0x1]
      %v3502 = vadd.f32 %v3309, %v3310
      %v3503 = vadd.f32 %v3502, %v3311
      %v3504 = vadd.f32 %v3503, %v3312
      %v3505 = vadd.f32 %v3504, %v3313
      %v3506 = vadd.f32 %v3505, %v3314
      %v3507 = vadd.f32 %v3506, %v3315
      %v3508 = vadd.f32 %v3507, %v3316
      %v3509 = vadd.f32 %v3508, %v3317
      %v3510 = vadd.f32 %v3509, %v3318
      %v3511 = vadd.f32 %v3510, %v3319
      %v3512 = vadd.f32 %v3511, %v3320
      %v3513 = vadd.f32 %v3512, %v3321
      %v3514 = vadd.f32 %v3513, %v3322
      %v3515 = vadd.f32 %v3514, %v3323
      %v3516 = vadd.f32 %v3515, %v3324
      %v3517 = vadd.f32 %v3516, %v3325
      %v3518 = vadd.f32 %v3517, %v3326
      %v3519 = vadd.f32 %v3518, %v3327
      %v3520 = vadd.f32 %v3519, %v3328
      %v3521 = vadd.f32 %v3520, %v3329
      %v3522 = vadd.f32 %v3521, %v3330
      %v3523 = vadd.f32 %v3522, %v3331
      %v3524 = vadd.f32 %v3523, %v3332
      %v3525 = vadd.f32 %v3524, %v3333
      %v3526 = vadd.f32 %v3525, %v3334
      %v3527 = vadd.f32 %v3526, %v3335
      %v3528 = vadd.f32 %v3527, %v3336
      %v3529 = vadd.f32 %v3528, %v3337
      %v3530 = vadd.f32 %v3529, %v3338
      %v3531 = vadd.f32 %v3530, %v3339
      %v3532 = vadd.f32 %v3531, %v3340
      %v3533 = vrot.slane %v3532, 4
      %v3534 = vadd.f32 %v3532, %v3533
      %v3535 = vrot.slane %v3534, 2
      %v3536 = vadd.f32 %v3534, %v3535
      %v3537 = vrot.slane %v3536, 1
      %v3538 = vadd.f32 %v3536, %v3537
      %v3539 = vadd.f32 %v3501, %v3538
      %3540 = vst [vmem:[%s356] sm:$0x1] %v3539
      %v3541 = vld [vmem:[%s359] sm:$0x1]
      %v3542 = vmul.f32 %v3309, %v3309
      %v3543 = vmul.f32 %v3310, %v3310
      %v3544 = vmul.f32 %v3311, %v3311
      %v3545 = vmul.f32 %v3312, %v3312
      %v3546 = vmul.f32 %v3313, %v3313
      %v3547 = vmul.f32 %v3314, %v3314
      %v3548 = vmul.f32 %v3315, %v3315
      %v3549 = vmul.f32 %v3316, %v3316
      %v3550 = vmul.f32 %v3317, %v3317
      %v3551 = vmul.f32 %v3318, %v3318
      %v3552 = vmul.f32 %v3319, %v3319
      %v3553 = vmul.f32 %v3320, %v3320
      %v3554 = vmul.f32 %v3321, %v3321
      %v3555 = vmul.f32 %v3322, %v3322
      %v3556 = vmul.f32 %v3323, %v3323
      %v3557 = vmul.f32 %v3324, %v3324
      %v3558 = vmul.f32 %v3325, %v3325
      %v3559 = vmul.f32 %v3326, %v3326
      %v3560 = vmul.f32 %v3327, %v3327
      %v3561 = vmul.f32 %v3328, %v3328
      %v3562 = vmul.f32 %v3329, %v3329
      %v3563 = vmul.f32 %v3330, %v3330
      %v3564 = vmul.f32 %v3331, %v3331
      %v3565 = vmul.f32 %v3332, %v3332
      %v3566 = vmul.f32 %v3333, %v3333
      %v3567 = vmul.f32 %v3334, %v3334
      %v3568 = vmul.f32 %v3335, %v3335
      %v3569 = vmul.f32 %v3336, %v3336
      %v3570 = vmul.f32 %v3337, %v3337
      %v3571 = vmul.f32 %v3338, %v3338
      %v3572 = vmul.f32 %v3339, %v3339
      %v3573 = vmul.f32 %v3340, %v3340
      %v3574 = vadd.f32 %v3542, %v3543
      %v3575 = vadd.f32 %v3574, %v3544
      %v3576 = vadd.f32 %v3575, %v3545
      %v3577 = vadd.f32 %v3576, %v3546
      %v3578 = vadd.f32 %v3577, %v3547
      %v3579 = vadd.f32 %v3578, %v3548
      %v3580 = vadd.f32 %v3579, %v3549
      %v3581 = vadd.f32 %v3580, %v3550
      %v3582 = vadd.f32 %v3581, %v3551
      %v3583 = vadd.f32 %v3582, %v3552
      %v3584 = vadd.f32 %v3583, %v3553
      %v3585 = vadd.f32 %v3584, %v3554
      %v3586 = vadd.f32 %v3585, %v3555
      %v3587 = vadd.f32 %v3586, %v3556
      %v3588 = vadd.f32 %v3587, %v3557
      %v3589 = vadd.f32 %v3588, %v3558
      %v3590 = vadd.f32 %v3589, %v3559
      %v3591 = vadd.f32 %v3590, %v3560
      %v3592 = vadd.f32 %v3591, %v3561
      %v3593 = vadd.f32 %v3592, %v3562
      %v3594 = vadd.f32 %v3593, %v3563
      %v3595 = vadd.f32 %v3594, %v3564
      %v3596 = vadd.f32 %v3595, %v3565
      %v3597 = vadd.f32 %v3596, %v3566
      %v3598 = vadd.f32 %v3597, %v3567
      %v3599 = vadd.f32 %v3598, %v3568
      %v3600 = vadd.f32 %v3599, %v3569
      %v3601 = vadd.f32 %v3600, %v3570
      %v3602 = vadd.f32 %v3601, %v3571
      %v3603 = vadd.f32 %v3602, %v3572
      %v3604 = vadd.f32 %v3603, %v3573
      %v3605 = vrot.slane %v3604, 4
      %v3606 = vadd.f32 %v3604, %v3605
      %v3607 = vrot.slane %v3606, 2
      %v3608 = vadd.f32 %v3606, %v3607
      %v3609 = vrot.slane %v3608, 1
      %v3610 = vadd.f32 %v3608, %v3609
      %v3611 = vadd.f32 %v3541, %v3610
      %3612 = vst [vmem:[%s359] sm:$0x1] %v3611
      %p3613 = scmp.lt.s32.totalorder %s25, 1
      %s3614 = scalar_select %p3613, %s25, 1
      %p3615 = scmp.lt.s32.totalorder %s24, 0
      %s3616 = scalar_select %p3615, %s24, 0
      %s3617 = smul.addr %s3614, 32
      %s3618 = sadd.s32 %s3616, %s3617
      %s3619 = smul.addr %s3618, 4
      %s3620 = scalar_lea.vmem %s6, %s3619
      %p3621 = scmp.lt.s32.totalorder %s24, 0
      %s3622 = scalar_select %p3621, %s24, 0
      %s3623 = scalar_lea.vmem %s7, %s3622
      %p3624 = scmp.lt.s32.totalorder %s24, 0
      %s3625 = scalar_select %p3624, %s24, 0
      %s3626 = scalar_lea.vmem %s8, %s3625
      // Predicated region
      $region49: #{double_conv.4} parent=43 // pred_check
        %p3627 = pneg %p188
      $region50: #{double_conv.4} parent=43 // pred_check_branch
        %3629 = sbr.rel (%p3627) target = $region52
      $region51: #{double_conv.4} parent=43 // pred_region
        _
      $region52: #{double_conv.4} parent=43 // pred_fallthru
        _
      // Predicated region
      $region53: #{double_conv.4} parent=43 // pred_check
        %p3630 = pneg %p214
      $region54: #{double_conv.4} parent=43 // pred_check_branch
        %3632 = sbr.rel (%p3630) target = $region56
      $region55: #{double_conv.4} parent=43 // pred_region
        _
      $region56: #{double_conv.4} parent=43 // pred_fallthru
        _
      // Predicated region
      $region57: #{double_conv.4} parent=43 // pred_check
        %p3633 = pneg %p240
      $region58: #{double_conv.4} parent=43 // pred_check_branch
        %3635 = sbr.rel (%p3633) target = $region60
      $region59: #{double_conv.4} parent=43 // pred_region
        _
      $region60: #{double_conv.4} parent=43 // pred_fallthru
        _
      // Predicated region
      $region61: #{double_conv.4} parent=43 // pred_check
        %p3636 = pneg %p214
      $region62: #{double_conv.4} parent=43 // pred_check_branch
        %3638 = sbr.rel (%p3636) target = $region64
      $region63: #{double_conv.4} parent=43 // pred_region
        %p3639 = scmp.lt.s32.totalorder %s24, 0
        %s3640 = scalar_select %p3639, %s24, 0
        %s3641 = scalar_lea.vmem %s7, %s3640
      $region64: #{double_conv.4} parent=43 // pred_fallthru
        _
      // Predicated region
      $region65: #{double_conv.4} parent=43 // pred_check
        %p3642 = pneg %p240
      $region66: #{double_conv.4} parent=43 // pred_check_branch
        %3644 = sbr.rel (%p3642) target = $region68
      $region67: #{double_conv.4} parent=43 // pred_region
        %p3645 = scmp.lt.s32.totalorder %s24, 0
        %s3646 = scalar_select %p3645, %s24, 0
        %s3647 = scalar_lea.vmem %s8, %s3646
      $region68: #{double_conv.4} parent=43 // pred_fallthru
        _
    $region44: #{double_conv.4} parent=5 // pred_fallthru
      _
    %p3648 = scmp.le.s32.totalorder 2, %s15
    // Predicated region
    $region69: #{double_conv.4} parent=5 // pred_check
      %p3649 = pneg %p3648
    $region70: #{double_conv.4} parent=5 // pred_check_branch
      %3651 = sbr.rel (%p3649) target = $region72
    $region71: #{double_conv.4} parent=5 // pred_region
      %s3652 = ssub.s32 %s15, 2
      // Predicated region
      $region73: #{double_conv.4} parent=71 // pred_check
        %p3653 = pneg %p194
      $region74: #{double_conv.4} parent=71 // pred_check_branch
        %3655 = sbr.rel (%p3653) target = $region76
      $region75: #{double_conv.4} parent=71 // pred_region
        %p3656 = scmp.lt.s32.totalorder %s27, 1
        %s3657 = scalar_select %p3656, %s27, 1
        %p3658 = scmp.lt.s32.totalorder %s26, 0
        %s3659 = scalar_select %p3658, %s26, 0
        %s3660 = smul.addr %s3657, 32
        %s3661 = sadd.s32 %s3659, %s3660
        %s3662 = smul.addr %s3661, 4
        %s3663 = scalar_lea.vmem %s6, %s3662
      $region76: #{double_conv.4} parent=71 // pred_fallthru
        _
    $region72: #{double_conv.4} parent=5 // pred_fallthru
      _
  $region6: #{double_conv.4} parent=0 // loop_footer
    %s19 = sadd.s32 1, %s15
  $region7: #{double_conv.4} parent=0 // loop_footer_branch
    %14 = sbr.rel target = $region3
  $region8: #{double_conv.4} parent=0 // loop_exit
    _

</llo_original>
